<compile_context>
chip_gen: v6e
topology: v6e:2x2x1
jax: 0.10.0
libtpu: 0.0.40
codegen_flags: <defaults>
</compile_context>

<pallas_src>
import functools

import numpy as np

import jax
import jax.numpy as jnp
from jax.experimental import pallas as pl
from jax.experimental.pallas import tpu as pltpu


# --------------------------- fused Bottleneck kernel -------------------------

def _bottleneck_kernel(*refs, has_down):
    """relu(conv3(relu(conv2(relu(conv1(x))))) + identity), BN folded.

    All matmuls take bf16 operands and accumulate in f32 on the MXU; bias,
    residual add and ReLU happen in f32; only the final bf16 result is stored.
    The 3x3 conv (with its padding and stride) is expressed as 9 taps,
    tap t:  (S_t @ y1) @ W2_t,  where S_t is a precomputed 0/1 spatial
    selection matrix — no im2col tensor is ever materialized in HBM.
    """
    if has_down:
        (x_ref, w1_ref, b1_ref, s_ref, w2_ref, b2_ref,
         w3_ref, b3_ref, wd_ref, bd_ref, o_ref) = refs
    else:
        (x_ref, w1_ref, b1_ref, s_ref, w2_ref, b2_ref,
         w3_ref, b3_ref, o_ref) = refs

    f32 = jnp.float32
    bf16 = jnp.bfloat16
    x = x_ref[...]                                            # (HW, Cin) bf16

    # conv1: 1x1 + folded BN + ReLU (stays in VMEM).
    y1 = jnp.dot(x, w1_ref[...], preferred_element_type=f32) + b1_ref[...]
    y1 = jnp.maximum(y1, 0.0).astype(bf16)                    # (HW, P)

    # conv2: 3x3, pad=1, stride folded into S_t; 9-tap f32 accumulation.
    acc = None
    for t in range(9):
        tap = jnp.dot(s_ref[t], y1, preferred_element_type=f32).astype(bf16)
        part = jnp.dot(tap, w2_ref[t], preferred_element_type=f32)
        acc = part if acc is None else acc + part
    y2 = jnp.maximum(acc + b2_ref[...], 0.0).astype(bf16)     # (HWo, P)

    # conv3: 1x1 + folded BN (ReLU comes after the residual add).
    y3 = jnp.dot(y2, w3_ref[...], preferred_element_type=f32) + b3_ref[...]

    # identity / downsample path.
    if has_down:
        # The center tap (t=4) of S is exactly the 1x1 stride-s sampling of x.
        xs = jnp.dot(s_ref[4], x, preferred_element_type=f32).astype(bf16)
        idn = jnp.dot(xs, wd_ref[...], preferred_element_type=f32) + bd_ref[...]
    else:
        idn = x.astype(f32)

    o_ref[...] = jnp.maximum(y3 + idn, 0.0).astype(o_ref.dtype)


# ---------------------- host-side spatial tap selectors ----------------------

@functools.lru_cache(maxsize=None)
def _tap_selectors(h, w, stride):
    """0/1 selection matrices S[t] of shape (Ho*Wo, H*W) for a 3x3 conv with
    padding=1 and the given stride: (S[t] @ x_flat) is the t-th shifted /
    strided window of x, with zeros where the window falls in the padding."""
    ho = (h - 1) // stride + 1
    wo = (w - 1) // stride + 1
    sel = np.zeros((9, ho * wo, h * w), np.float32)
    for t in range(9):
        dy, dx = t // 3, t % 3
        for io in range(ho):
            iy = io * stride + dy - 1
            if not 0 <= iy < h:
                continue
            for jo in range(wo):
                jx = jo * stride + dx - 1
                if 0 <= jx < w:
                    sel[t, io * wo + jo, iy * w + jx] = 1.0
    return jnp.asarray(sel, dtype=jnp.bfloat16)     # exact 0/1 in bf16


# ------------------------------ block wrapper --------------------------------

def bottleneck_forward(x_nhwc, p):
    """One ResNet Bottleneck block == one pallas_call (grid over batch)."""
    n, h, w, cin = x_nhwc.shape
    stride = p["stride"]
    ho, wo = (h - 1) // stride + 1, (w - 1) // stride + 1
    hw, hwo = h * w, ho * wo
    planes = p["w1"].shape[1]
    cout = p["w3"].shape[1]
    has_down = p["wd"] is not None
    taps = _tap_selectors(h, w, stride)

    x2d = x_nhwc.reshape(n * hw, cin)
    ins = [x2d, p["w1"], p["b1"], taps, p["w2"], p["b2"], p["w3"], p["b3"]]
    in_specs = [
        pl.BlockSpec((hw, cin), lambda i: (i, 0)),             # per-image tile
        pl.BlockSpec((cin, planes), lambda i: (0, 0)),
        pl.BlockSpec((1, planes), lambda i: (0, 0)),
        pl.BlockSpec((9, hwo, hw), lambda i: (0, 0, 0)),
        pl.BlockSpec((9, planes, planes), lambda i: (0, 0, 0)),
        pl.BlockSpec((1, planes), lambda i: (0, 0)),
        pl.BlockSpec((planes, cout), lambda i: (0, 0)),
        pl.BlockSpec((1, cout), lambda i: (0, 0)),
    ]
    if has_down:
        ins += [p["wd"], p["bd"]]
        in_specs += [pl.BlockSpec((cin, cout), lambda i: (0, 0)),
                     pl.BlockSpec((1, cout), lambda i: (0, 0))]

    y2d = pl.pallas_call(
        functools.partial(_bottleneck_kernel, has_down=has_down),
        out_shape=jax.ShapeDtypeStruct((n * hwo, cout), jnp.bfloat16),
        grid_spec=pltpu.PrefetchScalarGridSpec(
            num_scalar_prefetch=0,
            grid=(n,),                        # >= 2 steps: both v7x TCs busy
            in_specs=in_specs,
            out_specs=pl.BlockSpec((hwo, cout), lambda i: (i, 0)),
        ),
        compiler_params=pltpu.CompilerParams(
            dimension_semantics=("parallel",),
            vmem_limit_bytes=32 * 1024 * 1024),   # v5e scoped default = 16 MiB
    )(*ins)
    return y2d.reshape(n, ho, wo, cout)


def shared_module_bh_forward(x_nchw, layer3_params, layer4_params):
    """Matches Shared_module_bh.forward for the resnet50 backbone:
       x_sh3 = layer3(x); x_sh4 = layer4(x_sh3); return (x_sh3, x_sh4).
       NCHW in / NCHW out (PyTorch convention); compute is NHWC / bf16.
       (A NHWC-native caller could drop the edge transposes entirely.)"""
    x = jnp.transpose(x_nchw, (0, 2, 3, 1)).astype(jnp.bfloat16)
    for p in layer3_params:
        x = bottleneck_forward(x, p)
    x_sh3 = x
    for p in layer4_params:
        x = bottleneck_forward(x, p)
    x_sh4 = x
    return (jnp.transpose(x_sh3, (0, 3, 1, 2)),
            jnp.transpose(x_sh4, (0, 3, 1, 2)))


# ------------------- pure-JAX reference (correctness check) ------------------

def _ref_bottleneck(x, p):
    """XLA reference mirroring the kernel's bf16-operand / f32-accumulate
    numerics and per-tap accumulation order (used only for verification)."""
    f32, bf16 = jnp.float32, jnp.bfloat16
    n, h, w, cin = x.shape
    stride = p["stride"]
    ho, wo = (h - 1) // stride + 1, (w - 1) // stride + 1
    planes = p["w1"].shape[1]
    cout = p["w3"].shape[1]

    def mm(a, wt):
        return jnp.dot(a, wt, preferred_element_type=f32)

    y1 = jnp.maximum(mm(x.reshape(-1, cin), p["w1"]) + p["b1"], 0.0)
    y1 = y1.astype(bf16).reshape(n, h, w, planes)
    yp = jnp.pad(y1, ((0, 0), (1, 1), (1, 1), (0, 0)))
    acc = jnp.zeros((n, ho, wo, planes), f32)
    for t in range(9):
        dy, dx = t // 3, t % 3
        win = yp[:, dy:dy + (ho - 1) * stride + 1:stride,
                 dx:dx + (wo - 1) * stride + 1:stride, :]
        acc = acc + mm(win.reshape(-1, planes),
                       p["w2"][t]).reshape(n, ho, wo, planes)
    y2 = jnp.maximum(acc + p["b2"], 0.0).astype(bf16)
    y3 = mm(y2.reshape(-1, planes), p["w3"]).reshape(n, ho, wo, cout) + p["b3"]
    if p["wd"] is not None:
        xs = x[:, ::stride, ::stride, :]
        idn = mm(xs.reshape(-1, cin), p["wd"]).reshape(n, ho, wo, cout) + p["bd"]
    else:
        idn = x.astype(f32)
    return jnp.maximum(y3 + idn, 0.0).astype(bf16)


def _ref_forward(x_nchw, layer3_params, layer4_params):
    x = jnp.transpose(x_nchw, (0, 2, 3, 1)).astype(jnp.bfloat16)
    for p in layer3_params:
        x = _ref_bottleneck(x, p)
    x3 = x
    for p in layer4_params:
        x = _ref_bottleneck(x, p)
    return (jnp.transpose(x3, (0, 3, 1, 2)), jnp.transpose(x, (0, 3, 1, 2)))


# ----------------------- deterministic parameter init ------------------------

def _fold_bn(key, w, cout, eps=1e-5):
    k1, k2, k3, k4 = jax.random.split(key, 4)
    gamma = 1.0 + 0.1 * jax.random.normal(k1, (cout,), jnp.float32)
    beta = 0.1 * jax.random.normal(k2, (cout,), jnp.float32)
    mean = 0.1 * jax.random.normal(k3, (cout,), jnp.float32)
    var = 1.0 + 0.1 * jax.random.uniform(k4, (cout,), jnp.float32)
    scale = gamma / jnp.sqrt(var + eps)
    return w * scale, beta - mean * scale


def init_bottleneck(key, cin, planes, stride, has_down, expansion=4):
    ks = jax.random.split(key, 8)
    bf16 = jnp.bfloat16
    cout = planes * expansion
    w1 = jax.random.normal(ks[0], (cin, planes), jnp.float32) / np.sqrt(cin)
    w1, b1 = _fold_bn(ks[1], w1, planes)
    w2 = jax.random.normal(ks[2], (3, 3, planes, planes),
                           jnp.float32) / np.sqrt(9 * planes)
    w2, b2 = _fold_bn(ks[3], w2, planes)
    w2 = w2.reshape(9, planes, planes)          # tap-major: t = 3*dy + dx
    w3 = jax.random.normal(ks[4], (planes, cout), jnp.float32) / np.sqrt(planes)
    w3, b3 = _fold_bn(ks[5], w3, cout)
    if has_down:
        wd = jax.random.normal(ks[6], (cin, cout), jnp.float32) / np.sqrt(cin)
        wd, bd = _fold_bn(ks[7], wd, cout)
        wd, bd = wd.astype(bf16), bd.reshape(1, cout)
    else:
        wd, bd = None, None
    return dict(w1=w1.astype(bf16), b1=b1.reshape(1, planes),
                w2=w2.astype(bf16), b2=b2.reshape(1, planes),
                w3=w3.astype(bf16), b3=b3.reshape(1, cout),
                wd=wd, bd=bd, stride=stride)


def init_layer(key, cin, planes, blocks, stride):
    keys = jax.random.split(key, blocks)
    params = [init_bottleneck(keys[0], cin, planes, stride, True)]
    for i in range(1, blocks):
        params.append(init_bottleneck(keys[i], planes * 4, planes, 1, False))
    return params


def _assert_close(got, want, name):
    g = got.astype(jnp.float32)
    w = want.astype(jnp.float32)
    err = float(jnp.max(jnp.abs(g - w)))
    tol = 5e-2 * max(1.0, float(jnp.max(jnp.abs(w))))
    assert err <= tol, f"{name}: max|diff|={err:.4f} tol={tol:.4f}"


# ----------------------------------- main ------------------------------------

if __name__ == "__main__":
    key = jax.random.PRNGKey(0)
    kx, k3, k4 = jax.random.split(key, 3)

    # Scaled-down ResNet50 layer3 input (real model: [N, 512, H, W]).
    # Widths chosen so every HBM-visible tensor is lane-dense (>=128 channels);
    # the narrow bottleneck intermediates stay inside the fused kernel.
    N, C, H, W = 2, 128, 16, 16
    planes3, planes4 = 32, 64            # block outputs 128 / 256 (expansion 4)
    x = jax.random.normal(kx, (N, C, H, W), jnp.float32)

    layer3_params = init_layer(k3, C, planes3, blocks=6, stride=2)
    layer4_params = init_layer(k4, planes3 * 4, planes4, blocks=3, stride=2)

    fwd = jax.jit(
        lambda xx: shared_module_bh_forward(xx, layer3_params, layer4_params))
    x_sh3, x_sh4 = fwd(x)
    jax.block_until_ready((x_sh3, x_sh4))

    assert x_sh3.shape == (N, planes3 * 4, H // 2, W // 2)
    assert x_sh4.shape == (N, planes4 * 4, H // 4, W // 4)
    assert bool(jnp.all(jnp.isfinite(x_sh3.astype(jnp.float32))))
    assert bool(jnp.all(jnp.isfinite(x_sh4.astype(jnp.float32))))

    # Verify against a pure-XLA reference with matched bf16/f32 numerics.
    r3, r4 = _ref_forward(x, layer3_params, layer4_params)
    _assert_close(x_sh3, r3, "x_sh3")
    _assert_close(x_sh4, r4, "x_sh4")

    print("KERNEL_OK")
</pallas_src>

<mosaic_0001>
module attributes {stable_mosaic.version = 11 : i64} {
  func.func @_bottleneck_kernel(%arg0: i32, %arg1: memref<64x128xbf16, #tpu.memory_space<vmem>>, %arg2: memref<128x64xbf16, #tpu.memory_space<vmem>>, %arg3: memref<1x64xf32, #tpu.memory_space<vmem>>, %arg4: memref<9x16x64xbf16, #tpu.memory_space<vmem>>, %arg5: memref<9x64x64xbf16, #tpu.memory_space<vmem>>, %arg6: memref<1x64xf32, #tpu.memory_space<vmem>>, %arg7: memref<64x256xbf16, #tpu.memory_space<vmem>>, %arg8: memref<1x256xf32, #tpu.memory_space<vmem>>, %arg9: memref<128x256xbf16, #tpu.memory_space<vmem>>, %arg10: memref<1x256xf32, #tpu.memory_space<vmem>>, %arg11: memref<16x256xbf16, #tpu.memory_space<vmem>>) attributes {dimension_semantics = [#tpu.dimension_semantics<parallel>], iteration_bounds = array<i64: 2>, scalar_prefetch = 0 : i64, scratch_operands = 0 : i64, tpu.core_type = #tpu.core_type<tc>, window_params = [{transform_indices = @transform_0, window_bounds = array<i64: 64, 128>}, {pipeline_mode = #tpu.pipeline_mode<synchronous>, transform_indices = @transform_1, window_bounds = array<i64: 128, 64>}, {pipeline_mode = #tpu.pipeline_mode<synchronous>, transform_indices = @transform_2, window_bounds = array<i64: 1, 64>}, {pipeline_mode = #tpu.pipeline_mode<synchronous>, transform_indices = @transform_3, window_bounds = array<i64: 9, 16, 64>}, {pipeline_mode = #tpu.pipeline_mode<synchronous>, transform_indices = @transform_4, window_bounds = array<i64: 9, 64, 64>}, {pipeline_mode = #tpu.pipeline_mode<synchronous>, transform_indices = @transform_5, window_bounds = array<i64: 1, 64>}, {pipeline_mode = #tpu.pipeline_mode<synchronous>, transform_indices = @transform_6, window_bounds = array<i64: 64, 256>}, {pipeline_mode = #tpu.pipeline_mode<synchronous>, transform_indices = @transform_7, window_bounds = array<i64: 1, 256>}, {pipeline_mode = #tpu.pipeline_mode<synchronous>, transform_indices = @transform_8, window_bounds = array<i64: 128, 256>}, {pipeline_mode = #tpu.pipeline_mode<synchronous>, transform_indices = @transform_9, window_bounds = array<i64: 1, 256>}, {transform_indices = @transform_10, window_bounds = array<i64: 16, 256>}]} {
    %c0 = arith.constant 0 : index
    %c0_0 = arith.constant 0 : index
    %0 = vector.load %arg1[%c0, %c0_0] : memref<64x128xbf16, #tpu.memory_space<vmem>>, vector<64x128xbf16>
    %c0_1 = arith.constant 0 : index
    %c0_2 = arith.constant 0 : index
    %1 = vector.load %arg2[%c0_1, %c0_2] : memref<128x64xbf16, #tpu.memory_space<vmem>>, vector<128x64xbf16>
    %cst = arith.constant dense<0.000000e+00> : vector<64x64xf32>
    %2 = tpu.matmul %0, %1, %cst {dimension_numbers = #tpu.dot_dimension_numbers<[1], [0], [0], [1], [0, 0, 1, 1], [], []>} : vector<64x128xbf16>, vector<128x64xbf16>, vector<64x64xf32> -> vector<64x64xf32>
    %c0_3 = arith.constant 0 : index
    %c0_4 = arith.constant 0 : index
    %3 = vector.load %arg3[%c0_3, %c0_4] : memref<1x64xf32, #tpu.memory_space<vmem>>, vector<1x64xf32>
    %4 = vector.broadcast %3 : vector<1x64xf32> to vector<64x64xf32>
    %5 = arith.addf %2, %4 : vector<64x64xf32>
    %cst_5 = arith.constant 0.000000e+00 : f32
    %6 = vector.broadcast %cst_5 : f32 to vector<64x64xf32>
    %7 = arith.maximumf %5, %6 : vector<64x64xf32>
    %8 = arith.truncf %7 : vector<64x64xf32> to vector<64x64xbf16>
    %c0_6 = arith.constant 0 : index
    %c0_7 = arith.constant 0 : index
    %c0_8 = arith.constant 0 : index
    %9 = vector.load %arg4[%c0_6, %c0_7, %c0_8] : memref<9x16x64xbf16, #tpu.memory_space<vmem>>, vector<1x16x64xbf16>
    %10 = vector.shape_cast %9 : vector<1x16x64xbf16> to vector<16x64xbf16>
    %cst_9 = arith.constant dense<0.000000e+00> : vector<16x64xf32>
    %11 = tpu.matmul %10, %8, %cst_9 {dimension_numbers = #tpu.dot_dimension_numbers<[1], [0], [0], [1], [0, 0, 1, 1], [], []>} : vector<16x64xbf16>, vector<64x64xbf16>, vector<16x64xf32> -> vector<16x64xf32>
    %12 = arith.truncf %11 : vector<16x64xf32> to vector<16x64xbf16>
    %c0_10 = arith.constant 0 : index
    %c0_11 = arith.constant 0 : index
    %c0_12 = arith.constant 0 : index
    %13 = vector.load %arg5[%c0_10, %c0_11, %c0_12] : memref<9x64x64xbf16, #tpu.memory_space<vmem>>, vector<1x64x64xbf16>
    %14 = vector.shape_cast %13 : vector<1x64x64xbf16> to vector<64x64xbf16>
    %cst_13 = arith.constant dense<0.000000e+00> : vector<16x64xf32>
    %15 = tpu.matmul %12, %14, %cst_13 {dimension_numbers = #tpu.dot_dimension_numbers<[1], [0], [0], [1], [0, 0, 1, 1], [], []>} : vector<16x64xbf16>, vector<64x64xbf16>, vector<16x64xf32> -> vector<16x64xf32>
    %c1 = arith.constant 1 : index
    %c0_14 = arith.constant 0 : index
    %c0_15 = arith.constant 0 : index
    %16 = vector.load %arg4[%c1, %c0_14, %c0_15] : memref<9x16x64xbf16, #tpu.memory_space<vmem>>, vector<1x16x64xbf16>
    %17 = vector.shape_cast %16 : vector<1x16x64xbf16> to vector<16x64xbf16>
    %cst_16 = arith.constant dense<0.000000e+00> : vector<16x64xf32>
    %18 = tpu.matmul %17, %8, %cst_16 {dimension_numbers = #tpu.dot_dimension_numbers<[1], [0], [0], [1], [0, 0, 1, 1], [], []>} : vector<16x64xbf16>, vector<64x64xbf16>, vector<16x64xf32> -> vector<16x64xf32>
    %19 = arith.truncf %18 : vector<16x64xf32> to vector<16x64xbf16>
    %c1_17 = arith.constant 1 : index
    %c0_18 = arith.constant 0 : index
    %c0_19 = arith.constant 0 : index
    %20 = vector.load %arg5[%c1_17, %c0_18, %c0_19] : memref<9x64x64xbf16, #tpu.memory_space<vmem>>, vector<1x64x64xbf16>
    %21 = vector.shape_cast %20 : vector<1x64x64xbf16> to vector<64x64xbf16>
    %cst_20 = arith.constant dense<0.000000e+00> : vector<16x64xf32>
    %22 = tpu.matmul %19, %21, %cst_20 {dimension_numbers = #tpu.dot_dimension_numbers<[1], [0], [0], [1], [0, 0, 1, 1], [], []>} : vector<16x64xbf16>, vector<64x64xbf16>, vector<16x64xf32> -> vector<16x64xf32>
    %23 = arith.addf %15, %22 : vector<16x64xf32>
    %c2 = arith.constant 2 : index
    %c0_21 = arith.constant 0 : index
    %c0_22 = arith.constant 0 : index
    %24 = vector.load %arg4[%c2, %c0_21, %c0_22] : memref<9x16x64xbf16, #tpu.memory_space<vmem>>, vector<1x16x64xbf16>
    %25 = vector.shape_cast %24 : vector<1x16x64xbf16> to vector<16x64xbf16>
    %cst_23 = arith.constant dense<0.000000e+00> : vector<16x64xf32>
    %26 = tpu.matmul %25, %8, %cst_23 {dimension_numbers = #tpu.dot_dimension_numbers<[1], [0], [0], [1], [0, 0, 1, 1], [], []>} : vector<16x64xbf16>, vector<64x64xbf16>, vector<16x64xf32> -> vector<16x64xf32>
    %27 = arith.truncf %26 : vector<16x64xf32> to vector<16x64xbf16>
    %c2_24 = arith.constant 2 : index
    %c0_25 = arith.constant 0 : index
    %c0_26 = arith.constant 0 : index
    %28 = vector.load %arg5[%c2_24, %c0_25, %c0_26] : memref<9x64x64xbf16, #tpu.memory_space<vmem>>, vector<1x64x64xbf16>
    %29 = vector.shape_cast %28 : vector<1x64x64xbf16> to vector<64x64xbf16>
    %cst_27 = arith.constant dense<0.000000e+00> : vector<16x64xf32>
    %30 = tpu.matmul %27, %29, %cst_27 {dimension_numbers = #tpu.dot_dimension_numbers<[1], [0], [0], [1], [0, 0, 1, 1], [], []>} : vector<16x64xbf16>, vector<64x64xbf16>, vector<16x64xf32> -> vector<16x64xf32>
    %31 = arith.addf %23, %30 : vector<16x64xf32>
    %c3 = arith.constant 3 : index
    %c0_28 = arith.constant 0 : index
    %c0_29 = arith.constant 0 : index
    %32 = vector.load %arg4[%c3, %c0_28, %c0_29] : memref<9x16x64xbf16, #tpu.memory_space<vmem>>, vector<1x16x64xbf16>
    %33 = vector.shape_cast %32 : vector<1x16x64xbf16> to vector<16x64xbf16>
    %cst_30 = arith.constant dense<0.000000e+00> : vector<16x64xf32>
    %34 = tpu.matmul %33, %8, %cst_30 {dimension_numbers = #tpu.dot_dimension_numbers<[1], [0], [0], [1], [0, 0, 1, 1], [], []>} : vector<16x64xbf16>, vector<64x64xbf16>, vector<16x64xf32> -> vector<16x64xf32>
    %35 = arith.truncf %34 : vector<16x64xf32> to vector<16x64xbf16>
    %c3_31 = arith.constant 3 : index
    %c0_32 = arith.constant 0 : index
    %c0_33 = arith.constant 0 : index
    %36 = vector.load %arg5[%c3_31, %c0_32, %c0_33] : memref<9x64x64xbf16, #tpu.memory_space<vmem>>, vector<1x64x64xbf16>
    %37 = vector.shape_cast %36 : vector<1x64x64xbf16> to vector<64x64xbf16>
    %cst_34 = arith.constant dense<0.000000e+00> : vector<16x64xf32>
    %38 = tpu.matmul %35, %37, %cst_34 {dimension_numbers = #tpu.dot_dimension_numbers<[1], [0], [0], [1], [0, 0, 1, 1], [], []>} : vector<16x64xbf16>, vector<64x64xbf16>, vector<16x64xf32> -> vector<16x64xf32>
    %39 = arith.addf %31, %38 : vector<16x64xf32>
    %c4 = arith.constant 4 : index
    %c0_35 = arith.constant 0 : index
    %c0_36 = arith.constant 0 : index
    %40 = vector.load %arg4[%c4, %c0_35, %c0_36] : memref<9x16x64xbf16, #tpu.memory_space<vmem>>, vector<1x16x64xbf16>
    %41 = vector.shape_cast %40 : vector<1x16x64xbf16> to vector<16x64xbf16>
    %cst_37 = arith.constant dense<0.000000e+00> : vector<16x64xf32>
    %42 = tpu.matmul %41, %8, %cst_37 {dimension_numbers = #tpu.dot_dimension_numbers<[1], [0], [0], [1], [0, 0, 1, 1], [], []>} : vector<16x64xbf16>, vector<64x64xbf16>, vector<16x64xf32> -> vector<16x64xf32>
    %43 = arith.truncf %42 : vector<16x64xf32> to vector<16x64xbf16>
    %c4_38 = arith.constant 4 : index
    %c0_39 = arith.constant 0 : index
    %c0_40 = arith.constant 0 : index
    %44 = vector.load %arg5[%c4_38, %c0_39, %c0_40] : memref<9x64x64xbf16, #tpu.memory_space<vmem>>, vector<1x64x64xbf16>
    %45 = vector.shape_cast %44 : vector<1x64x64xbf16> to vector<64x64xbf16>
    %cst_41 = arith.constant dense<0.000000e+00> : vector<16x64xf32>
    %46 = tpu.matmul %43, %45, %cst_41 {dimension_numbers = #tpu.dot_dimension_numbers<[1], [0], [0], [1], [0, 0, 1, 1], [], []>} : vector<16x64xbf16>, vector<64x64xbf16>, vector<16x64xf32> -> vector<16x64xf32>
    %47 = arith.addf %39, %46 : vector<16x64xf32>
    %c5 = arith.constant 5 : index
    %c0_42 = arith.constant 0 : index
    %c0_43 = arith.constant 0 : index
    %48 = vector.load %arg4[%c5, %c0_42, %c0_43] : memref<9x16x64xbf16, #tpu.memory_space<vmem>>, vector<1x16x64xbf16>
    %49 = vector.shape_cast %48 : vector<1x16x64xbf16> to vector<16x64xbf16>
    %cst_44 = arith.constant dense<0.000000e+00> : vector<16x64xf32>
    %50 = tpu.matmul %49, %8, %cst_44 {dimension_numbers = #tpu.dot_dimension_numbers<[1], [0], [0], [1], [0, 0, 1, 1], [], []>} : vector<16x64xbf16>, vector<64x64xbf16>, vector<16x64xf32> -> vector<16x64xf32>
    %51 = arith.truncf %50 : vector<16x64xf32> to vector<16x64xbf16>
    %c5_45 = arith.constant 5 : index
    %c0_46 = arith.constant 0 : index
    %c0_47 = arith.constant 0 : index
    %52 = vector.load %arg5[%c5_45, %c0_46, %c0_47] : memref<9x64x64xbf16, #tpu.memory_space<vmem>>, vector<1x64x64xbf16>
    %53 = vector.shape_cast %52 : vector<1x64x64xbf16> to vector<64x64xbf16>
    %cst_48 = arith.constant dense<0.000000e+00> : vector<16x64xf32>
    %54 = tpu.matmul %51, %53, %cst_48 {dimension_numbers = #tpu.dot_dimension_numbers<[1], [0], [0], [1], [0, 0, 1, 1], [], []>} : vector<16x64xbf16>, vector<64x64xbf16>, vector<16x64xf32> -> vector<16x64xf32>
    %55 = arith.addf %47, %54 : vector<16x64xf32>
    %c6 = arith.constant 6 : index
    %c0_49 = arith.constant 0 : index
    %c0_50 = arith.constant 0 : index
    %56 = vector.load %arg4[%c6, %c0_49, %c0_50] : memref<9x16x64xbf16, #tpu.memory_space<vmem>>, vector<1x16x64xbf16>
    %57 = vector.shape_cast %56 : vector<1x16x64xbf16> to vector<16x64xbf16>
    %cst_51 = arith.constant dense<0.000000e+00> : vector<16x64xf32>
    %58 = tpu.matmul %57, %8, %cst_51 {dimension_numbers = #tpu.dot_dimension_numbers<[1], [0], [0], [1], [0, 0, 1, 1], [], []>} : vector<16x64xbf16>, vector<64x64xbf16>, vector<16x64xf32> -> vector<16x64xf32>
    %59 = arith.truncf %58 : vector<16x64xf32> to vector<16x64xbf16>
    %c6_52 = arith.constant 6 : index
    %c0_53 = arith.constant 0 : index
    %c0_54 = arith.constant 0 : index
    %60 = vector.load %arg5[%c6_52, %c0_53, %c0_54] : memref<9x64x64xbf16, #tpu.memory_space<vmem>>, vector<1x64x64xbf16>
    %61 = vector.shape_cast %60 : vector<1x64x64xbf16> to vector<64x64xbf16>
    %cst_55 = arith.constant dense<0.000000e+00> : vector<16x64xf32>
    %62 = tpu.matmul %59, %61, %cst_55 {dimension_numbers = #tpu.dot_dimension_numbers<[1], [0], [0], [1], [0, 0, 1, 1], [], []>} : vector<16x64xbf16>, vector<64x64xbf16>, vector<16x64xf32> -> vector<16x64xf32>
    %63 = arith.addf %55, %62 : vector<16x64xf32>
    %c7 = arith.constant 7 : index
    %c0_56 = arith.constant 0 : index
    %c0_57 = arith.constant 0 : index
    %64 = vector.load %arg4[%c7, %c0_56, %c0_57] : memref<9x16x64xbf16, #tpu.memory_space<vmem>>, vector<1x16x64xbf16>
    %65 = vector.shape_cast %64 : vector<1x16x64xbf16> to vector<16x64xbf16>
    %cst_58 = arith.constant dense<0.000000e+00> : vector<16x64xf32>
    %66 = tpu.matmul %65, %8, %cst_58 {dimension_numbers = #tpu.dot_dimension_numbers<[1], [0], [0], [1], [0, 0, 1, 1], [], []>} : vector<16x64xbf16>, vector<64x64xbf16>, vector<16x64xf32> -> vector<16x64xf32>
    %67 = arith.truncf %66 : vector<16x64xf32> to vector<16x64xbf16>
    %c7_59 = arith.constant 7 : index
    %c0_60 = arith.constant 0 : index
    %c0_61 = arith.constant 0 : index
    %68 = vector.load %arg5[%c7_59, %c0_60, %c0_61] : memref<9x64x64xbf16, #tpu.memory_space<vmem>>, vector<1x64x64xbf16>
    %69 = vector.shape_cast %68 : vector<1x64x64xbf16> to vector<64x64xbf16>
    %cst_62 = arith.constant dense<0.000000e+00> : vector<16x64xf32>
    %70 = tpu.matmul %67, %69, %cst_62 {dimension_numbers = #tpu.dot_dimension_numbers<[1], [0], [0], [1], [0, 0, 1, 1], [], []>} : vector<16x64xbf16>, vector<64x64xbf16>, vector<16x64xf32> -> vector<16x64xf32>
    %71 = arith.addf %63, %70 : vector<16x64xf32>
    %c8 = arith.constant 8 : index
    %c0_63 = arith.constant 0 : index
    %c0_64 = arith.constant 0 : index
    %72 = vector.load %arg4[%c8, %c0_63, %c0_64] : memref<9x16x64xbf16, #tpu.memory_space<vmem>>, vector<1x16x64xbf16>
    %73 = vector.shape_cast %72 : vector<1x16x64xbf16> to vector<16x64xbf16>
    %cst_65 = arith.constant dense<0.000000e+00> : vector<16x64xf32>
    %74 = tpu.matmul %73, %8, %cst_65 {dimension_numbers = #tpu.dot_dimension_numbers<[1], [0], [0], [1], [0, 0, 1, 1], [], []>} : vector<16x64xbf16>, vector<64x64xbf16>, vector<16x64xf32> -> vector<16x64xf32>
    %75 = arith.truncf %74 : vector<16x64xf32> to vector<16x64xbf16>
    %c8_66 = arith.constant 8 : index
    %c0_67 = arith.constant 0 : index
    %c0_68 = arith.constant 0 : index
    %76 = vector.load %arg5[%c8_66, %c0_67, %c0_68] : memref<9x64x64xbf16, #tpu.memory_space<vmem>>, vector<1x64x64xbf16>
    %77 = vector.shape_cast %76 : vector<1x64x64xbf16> to vector<64x64xbf16>
    %cst_69 = arith.constant dense<0.000000e+00> : vector<16x64xf32>
    %78 = tpu.matmul %75, %77, %cst_69 {dimension_numbers = #tpu.dot_dimension_numbers<[1], [0], [0], [1], [0, 0, 1, 1], [], []>} : vector<16x64xbf16>, vector<64x64xbf16>, vector<16x64xf32> -> vector<16x64xf32>
    %79 = arith.addf %71, %78 : vector<16x64xf32>
    %c0_70 = arith.constant 0 : index
    %c0_71 = arith.constant 0 : index
    %80 = vector.load %arg6[%c0_70, %c0_71] : memref<1x64xf32, #tpu.memory_space<vmem>>, vector<1x64xf32>
    %81 = vector.broadcast %80 : vector<1x64xf32> to vector<16x64xf32>
    %82 = arith.addf %79, %81 : vector<16x64xf32>
    %cst_72 = arith.constant 0.000000e+00 : f32
    %83 = vector.broadcast %cst_72 : f32 to vector<16x64xf32>
    %84 = arith.maximumf %82, %83 : vector<16x64xf32>
    %85 = arith.truncf %84 : vector<16x64xf32> to vector<16x64xbf16>
    %c0_73 = arith.constant 0 : index
    %c0_74 = arith.constant 0 : index
    %86 = vector.load %arg7[%c0_73, %c0_74] : memref<64x256xbf16, #tpu.memory_space<vmem>>, vector<64x256xbf16>
    %cst_75 = arith.constant dense<0.000000e+00> : vector<16x256xf32>
    %87 = tpu.matmul %85, %86, %cst_75 {dimension_numbers = #tpu.dot_dimension_numbers<[1], [0], [0], [1], [0, 0, 1, 1], [], []>} : vector<16x64xbf16>, vector<64x256xbf16>, vector<16x256xf32> -> vector<16x256xf32>
    %c0_76 = arith.constant 0 : index
    %c0_77 = arith.constant 0 : index
    %88 = vector.load %arg8[%c0_76, %c0_77] : memref<1x256xf32, #tpu.memory_space<vmem>>, vector<1x256xf32>
    %89 = vector.broadcast %88 : vector<1x256xf32> to vector<16x256xf32>
    %90 = arith.addf %87, %89 : vector<16x256xf32>
    %c4_78 = arith.constant 4 : index
    %c0_79 = arith.constant 0 : index
    %c0_80 = arith.constant 0 : index
    %91 = vector.load %arg4[%c4_78, %c0_79, %c0_80] : memref<9x16x64xbf16, #tpu.memory_space<vmem>>, vector<1x16x64xbf16>
    %92 = vector.shape_cast %91 : vector<1x16x64xbf16> to vector<16x64xbf16>
    %cst_81 = arith.constant dense<0.000000e+00> : vector<16x128xf32>
    %93 = tpu.matmul %92, %0, %cst_81 {dimension_numbers = #tpu.dot_dimension_numbers<[1], [0], [0], [1], [0, 0, 1, 1], [], []>} : vector<16x64xbf16>, vector<64x128xbf16>, vector<16x128xf32> -> vector<16x128xf32>
    %94 = arith.truncf %93 : vector<16x128xf32> to vector<16x128xbf16>
    %c0_82 = arith.constant 0 : index
    %c0_83 = arith.constant 0 : index
    %95 = vector.load %arg9[%c0_82, %c0_83] : memref<128x256xbf16, #tpu.memory_space<vmem>>, vector<128x256xbf16>
    %cst_84 = arith.constant dense<0.000000e+00> : vector<16x256xf32>
    %96 = tpu.matmul %94, %95, %cst_84 {dimension_numbers = #tpu.dot_dimension_numbers<[1], [0], [0], [1], [0, 0, 1, 1], [], []>} : vector<16x128xbf16>, vector<128x256xbf16>, vector<16x256xf32> -> vector<16x256xf32>
    %c0_85 = arith.constant 0 : index
    %c0_86 = arith.constant 0 : index
    %97 = vector.load %arg10[%c0_85, %c0_86] : memref<1x256xf32, #tpu.memory_space<vmem>>, vector<1x256xf32>
    %98 = vector.broadcast %97 : vector<1x256xf32> to vector<16x256xf32>
    %99 = arith.addf %96, %98 : vector<16x256xf32>
    %100 = arith.addf %90, %99 : vector<16x256xf32>
    %cst_87 = arith.constant 0.000000e+00 : f32
    %101 = vector.broadcast %cst_87 : f32 to vector<16x256xf32>
    %102 = arith.maximumf %100, %101 : vector<16x256xf32>
    %103 = arith.truncf %102 : vector<16x256xf32> to vector<16x256xbf16>
    %c0_88 = arith.constant 0 : index
    %c0_89 = arith.constant 0 : index
    %104 = vector.load %arg11[%c0_88, %c0_89] : memref<16x256xbf16, #tpu.memory_space<vmem>>, vector<16x256xbf16>
    tpu.vector_store %arg11[%c0_88, %c0_89], %103 {strides = array<i32>} : memref<16x256xbf16, #tpu.memory_space<vmem>>, vector<16x256xbf16>,
    return
  }
  func.func @transform_0(%arg0: i32) -> (i32, i32) {
    %c0_i32 = arith.constant 0 : i32
    %c0_i32_0 = arith.constant 0 : i32
    return %arg0, %c0_i32 : i32, i32
  }
  func.func @transform_1(%arg0: i32) -> (i32, i32) {
    %c0_i32 = arith.constant 0 : i32
    %c0_i32_0 = arith.constant 0 : i32
    %c0_i32_1 = arith.constant 0 : i32
    return %c0_i32, %c0_i32_0 : i32, i32
  }
  func.func @transform_2(%arg0: i32) -> (i32, i32) {
    %c0_i32 = arith.constant 0 : i32
    %c0_i32_0 = arith.constant 0 : i32
    %c0_i32_1 = arith.constant 0 : i32
    return %c0_i32, %c0_i32_0 : i32, i32
  }
  func.func @transform_3(%arg0: i32) -> (i32, i32, i32) {
    %c0_i32 = arith.constant 0 : i32
    %c0_i32_0 = arith.constant 0 : i32
    %c0_i32_1 = arith.constant 0 : i32
    %c0_i32_2 = arith.constant 0 : i32
    return %c0_i32, %c0_i32_0, %c0_i32_1 : i32, i32, i32
  }
  func.func @transform_4(%arg0: i32) -> (i32, i32, i32) {
    %c0_i32 = arith.constant 0 : i32
    %c0_i32_0 = arith.constant 0 : i32
    %c0_i32_1 = arith.constant 0 : i32
    %c0_i32_2 = arith.constant 0 : i32
    return %c0_i32, %c0_i32_0, %c0_i32_1 : i32, i32, i32
  }
  func.func @transform_5(%arg0: i32) -> (i32, i32) {
    %c0_i32 = arith.constant 0 : i32
    %c0_i32_0 = arith.constant 0 : i32
    %c0_i32_1 = arith.constant 0 : i32
    return %c0_i32, %c0_i32_0 : i32, i32
  }
  func.func @transform_6(%arg0: i32) -> (i32, i32) {
    %c0_i32 = arith.constant 0 : i32
    %c0_i32_0 = arith.constant 0 : i32
    %c0_i32_1 = arith.constant 0 : i32
    return %c0_i32, %c0_i32_0 : i32, i32
  }
  func.func @transform_7(%arg0: i32) -> (i32, i32) {
    %c0_i32 = arith.constant 0 : i32
    %c0_i32_0 = arith.constant 0 : i32
    %c0_i32_1 = arith.constant 0 : i32
    return %c0_i32, %c0_i32_0 : i32, i32
  }
  func.func @transform_8(%arg0: i32) -> (i32, i32) {
    %c0_i32 = arith.constant 0 : i32
    %c0_i32_0 = arith.constant 0 : i32
    %c0_i32_1 = arith.constant 0 : i32
    return %c0_i32, %c0_i32_0 : i32, i32
  }
  func.func @transform_9(%arg0: i32) -> (i32, i32) {
    %c0_i32 = arith.constant 0 : i32
    %c0_i32_0 = arith.constant 0 : i32
    %c0_i32_1 = arith.constant 0 : i32
    return %c0_i32, %c0_i32_0 : i32, i32
  }
  func.func @transform_10(%arg0: i32) -> (i32, i32) {
    %c0_i32 = arith.constant 0 : i32
    %c0_i32_0 = arith.constant 0 : i32
    return %arg0, %c0_i32 : i32, i32
  }
}

module attributes {stable_mosaic.version = 11 : i64} {
  func.func @_bottleneck_kernel(%arg0: i32, %arg1: memref<256x128xbf16, #tpu.memory_space<vmem>>, %arg2: memref<128x32xbf16, #tpu.memory_space<vmem>>, %arg3: memref<1x32xf32, #tpu.memory_space<vmem>>, %arg4: memref<9x64x256xbf16, #tpu.memory_space<vmem>>, %arg5: memref<9x32x32xbf16, #tpu.memory_space<vmem>>, %arg6: memref<1x32xf32, #tpu.memory_space<vmem>>, %arg7: memref<32x128xbf16, #tpu.memory_space<vmem>>, %arg8: memref<1x128xf32, #tpu.memory_space<vmem>>, %arg9: memref<128x128xbf16, #tpu.memory_space<vmem>>, %arg10: memref<1x128xf32, #tpu.memory_space<vmem>>, %arg11: memref<64x128xbf16, #tpu.memory_space<vmem>>) attributes {dimension_semantics = [#tpu.dimension_semantics<parallel>], iteration_bounds = array<i64: 2>, scalar_prefetch = 0 : i64, scratch_operands = 0 : i64, tpu.core_type = #tpu.core_type<tc>, window_params = [{transform_indices = @transform_0, window_bounds = array<i64: 256, 128>}, {pipeline_mode = #tpu.pipeline_mode<synchronous>, transform_indices = @transform_1, window_bounds = array<i64: 128, 32>}, {pipeline_mode = #tpu.pipeline_mode<synchronous>, transform_indices = @transform_2, window_bounds = array<i64: 1, 32>}, {pipeline_mode = #tpu.pipeline_mode<synchronous>, transform_indices = @transform_3, window_bounds = array<i64: 9, 64, 256>}, {pipeline_mode = #tpu.pipeline_mode<synchronous>, transform_indices = @transform_4, window_bounds = array<i64: 9, 32, 32>}, {pipeline_mode = #tpu.pipeline_mode<synchronous>, transform_indices = @transform_5, window_bounds = array<i64: 1, 32>}, {pipeline_mode = #tpu.pipeline_mode<synchronous>, transform_indices = @transform_6, window_bounds = array<i64: 32, 128>}, {pipeline_mode = #tpu.pipeline_mode<synchronous>, transform_indices = @transform_7, window_bounds = array<i64: 1, 128>}, {pipeline_mode = #tpu.pipeline_mode<synchronous>, transform_indices = @transform_8, window_bounds = array<i64: 128, 128>}, {pipeline_mode = #tpu.pipeline_mode<synchronous>, transform_indices = @transform_9, window_bounds = array<i64: 1, 128>}, {transform_indices = @transform_10, window_bounds = array<i64: 64, 128>}]} {
    %c0 = arith.constant 0 : index
    %c0_0 = arith.constant 0 : index
    %0 = vector.load %arg1[%c0, %c0_0] : memref<256x128xbf16, #tpu.memory_space<vmem>>, vector<256x128xbf16>
    %c0_1 = arith.constant 0 : index
    %c0_2 = arith.constant 0 : index
    %1 = vector.load %arg2[%c0_1, %c0_2] : memref<128x32xbf16, #tpu.memory_space<vmem>>, vector<128x32xbf16>
    %cst = arith.constant dense<0.000000e+00> : vector<256x32xf32>
    %2 = tpu.matmul %0, %1, %cst {dimension_numbers = #tpu.dot_dimension_numbers<[1], [0], [0], [1], [0, 0, 1, 1], [], []>} : vector<256x128xbf16>, vector<128x32xbf16>, vector<256x32xf32> -> vector<256x32xf32>
    %c0_3 = arith.constant 0 : index
    %c0_4 = arith.constant 0 : index
    %3 = vector.load %arg3[%c0_3, %c0_4] : memref<1x32xf32, #tpu.memory_space<vmem>>, vector<1x32xf32>
    %4 = vector.broadcast %3 : vector<1x32xf32> to vector<256x32xf32>
    %5 = arith.addf %2, %4 : vector<256x32xf32>
    %cst_5 = arith.constant 0.000000e+00 : f32
    %6 = vector.broadcast %cst_5 : f32 to vector<256x32xf32>
    %7 = arith.maximumf %5, %6 : vector<256x32xf32>
    %8 = arith.truncf %7 : vector<256x32xf32> to vector<256x32xbf16>
    %c0_6 = arith.constant 0 : index
    %c0_7 = arith.constant 0 : index
    %c0_8 = arith.constant 0 : index
    %9 = vector.load %arg4[%c0_6, %c0_7, %c0_8] : memref<9x64x256xbf16, #tpu.memory_space<vmem>>, vector<1x64x256xbf16>
    %10 = vector.shape_cast %9 : vector<1x64x256xbf16> to vector<64x256xbf16>
    %cst_9 = arith.constant dense<0.000000e+00> : vector<64x32xf32>
    %11 = tpu.matmul %10, %8, %cst_9 {dimension_numbers = #tpu.dot_dimension_numbers<[1], [0], [0], [1], [0, 0, 1, 1], [], []>} : vector<64x256xbf16>, vector<256x32xbf16>, vector<64x32xf32> -> vector<64x32xf32>
    %12 = arith.truncf %11 : vector<64x32xf32> to vector<64x32xbf16>
    %c0_10 = arith.constant 0 : index
    %c0_11 = arith.constant 0 : index
    %c0_12 = arith.constant 0 : index
    %13 = vector.load %arg5[%c0_10, %c0_11, %c0_12] : memref<9x32x32xbf16, #tpu.memory_space<vmem>>, vector<1x32x32xbf16>
    %14 = vector.shape_cast %13 : vector<1x32x32xbf16> to vector<32x32xbf16>
    %cst_13 = arith.constant dense<0.000000e+00> : vector<64x32xf32>
    %15 = tpu.matmul %12, %14, %cst_13 {dimension_numbers = #tpu.dot_dimension_numbers<[1], [0], [0], [1], [0, 0, 1, 1], [], []>} : vector<64x32xbf16>, vector<32x32xbf16>, vector<64x32xf32> -> vector<64x32xf32>
    %c1 = arith.constant 1 : index
    %c0_14 = arith.constant 0 : index
    %c0_15 = arith.constant 0 : index
    %16 = vector.load %arg4[%c1, %c0_14, %c0_15] : memref<9x64x256xbf16, #tpu.memory_space<vmem>>, vector<1x64x256xbf16>
    %17 = vector.shape_cast %16 : vector<1x64x256xbf16> to vector<64x256xbf16>
    %cst_16 = arith.constant dense<0.000000e+00> : vector<64x32xf32>
    %18 = tpu.matmul %17, %8, %cst_16 {dimension_numbers = #tpu.dot_dimension_numbers<[1], [0], [0], [1], [0, 0, 1, 1], [], []>} : vector<64x256xbf16>, vector<256x32xbf16>, vector<64x32xf32> -> vector<64x32xf32>
    %19 = arith.truncf %18 : vector<64x32xf32> to vector<64x32xbf16>
    %c1_17 = arith.constant 1 : index
    %c0_18 = arith.constant 0 : index
    %c0_19 = arith.constant 0 : index
    %20 = vector.load %arg5[%c1_17, %c0_18, %c0_19] : memref<9x32x32xbf16, #tpu.memory_space<vmem>>, vector<1x32x32xbf16>
    %21 = vector.shape_cast %20 : vector<1x32x32xbf16> to vector<32x32xbf16>
    %cst_20 = arith.constant dense<0.000000e+00> : vector<64x32xf32>
    %22 = tpu.matmul %19, %21, %cst_20 {dimension_numbers = #tpu.dot_dimension_numbers<[1], [0], [0], [1], [0, 0, 1, 1], [], []>} : vector<64x32xbf16>, vector<32x32xbf16>, vector<64x32xf32> -> vector<64x32xf32>
    %23 = arith.addf %15, %22 : vector<64x32xf32>
    %c2 = arith.constant 2 : index
    %c0_21 = arith.constant 0 : index
    %c0_22 = arith.constant 0 : index
    %24 = vector.load %arg4[%c2, %c0_21, %c0_22] : memref<9x64x256xbf16, #tpu.memory_space<vmem>>, vector<1x64x256xbf16>
    %25 = vector.shape_cast %24 : vector<1x64x256xbf16> to vector<64x256xbf16>
    %cst_23 = arith.constant dense<0.000000e+00> : vector<64x32xf32>
    %26 = tpu.matmul %25, %8, %cst_23 {dimension_numbers = #tpu.dot_dimension_numbers<[1], [0], [0], [1], [0, 0, 1, 1], [], []>} : vector<64x256xbf16>, vector<256x32xbf16>, vector<64x32xf32> -> vector<64x32xf32>
    %27 = arith.truncf %26 : vector<64x32xf32> to vector<64x32xbf16>
    %c2_24 = arith.constant 2 : index
    %c0_25 = arith.constant 0 : index
    %c0_26 = arith.constant 0 : index
    %28 = vector.load %arg5[%c2_24, %c0_25, %c0_26] : memref<9x32x32xbf16, #tpu.memory_space<vmem>>, vector<1x32x32xbf16>
    %29 = vector.shape_cast %28 : vector<1x32x32xbf16> to vector<32x32xbf16>
    %cst_27 = arith.constant dense<0.000000e+00> : vector<64x32xf32>
    %30 = tpu.matmul %27, %29, %cst_27 {dimension_numbers = #tpu.dot_dimension_numbers<[1], [0], [0], [1], [0, 0, 1, 1], [], []>} : vector<64x32xbf16>, vector<32x32xbf16>, vector<64x32xf32> -> vector<64x32xf32>
    %31 = arith.addf %23, %30 : vector<64x32xf32>
    %c3 = arith.constant 3 : index
    %c0_28 = arith.constant 0 : index
    %c0_29 = arith.constant 0 : index
    %32 = vector.load %arg4[%c3, %c0_28, %c0_29] : memref<9x64x256xbf16, #tpu.memory_space<vmem>>, vector<1x64x256xbf16>
    %33 = vector.shape_cast %32 : vector<1x64x256xbf16> to vector<64x256xbf16>
    %cst_30 = arith.constant dense<0.000000e+00> : vector<64x32xf32>
    %34 = tpu.matmul %33, %8, %cst_30 {dimension_numbers = #tpu.dot_dimension_numbers<[1], [0], [0], [1], [0, 0, 1, 1], [], []>} : vector<64x256xbf16>, vector<256x32xbf16>, vector<64x32xf32> -> vector<64x32xf32>
    %35 = arith.truncf %34 : vector<64x32xf32> to vector<64x32xbf16>
    %c3_31 = arith.constant 3 : index
    %c0_32 = arith.constant 0 : index
    %c0_33 = arith.constant 0 : index
    %36 = vector.load %arg5[%c3_31, %c0_32, %c0_33] : memref<9x32x32xbf16, #tpu.memory_space<vmem>>, vector<1x32x32xbf16>
    %37 = vector.shape_cast %36 : vector<1x32x32xbf16> to vector<32x32xbf16>
    %cst_34 = arith.constant dense<0.000000e+00> : vector<64x32xf32>
    %38 = tpu.matmul %35, %37, %cst_34 {dimension_numbers = #tpu.dot_dimension_numbers<[1], [0], [0], [1], [0, 0, 1, 1], [], []>} : vector<64x32xbf16>, vector<32x32xbf16>, vector<64x32xf32> -> vector<64x32xf32>
    %39 = arith.addf %31, %38 : vector<64x32xf32>
    %c4 = arith.constant 4 : index
    %c0_35 = arith.constant 0 : index
    %c0_36 = arith.constant 0 : index
    %40 = vector.load %arg4[%c4, %c0_35, %c0_36] : memref<9x64x256xbf16, #tpu.memory_space<vmem>>, vector<1x64x256xbf16>
    %41 = vector.shape_cast %40 : vector<1x64x256xbf16> to vector<64x256xbf16>
    %cst_37 = arith.constant dense<0.000000e+00> : vector<64x32xf32>
    %42 = tpu.matmul %41, %8, %cst_37 {dimension_numbers = #tpu.dot_dimension_numbers<[1], [0], [0], [1], [0, 0, 1, 1], [], []>} : vector<64x256xbf16>, vector<256x32xbf16>, vector<64x32xf32> -> vector<64x32xf32>
    %43 = arith.truncf %42 : vector<64x32xf32> to vector<64x32xbf16>
    %c4_38 = arith.constant 4 : index
    %c0_39 = arith.constant 0 : index
    %c0_40 = arith.constant 0 : index
    %44 = vector.load %arg5[%c4_38, %c0_39, %c0_40] : memref<9x32x32xbf16, #tpu.memory_space<vmem>>, vector<1x32x32xbf16>
    %45 = vector.shape_cast %44 : vector<1x32x32xbf16> to vector<32x32xbf16>
    %cst_41 = arith.constant dense<0.000000e+00> : vector<64x32xf32>
    %46 = tpu.matmul %43, %45, %cst_41 {dimension_numbers = #tpu.dot_dimension_numbers<[1], [0], [0], [1], [0, 0, 1, 1], [], []>} : vector<64x32xbf16>, vector<32x32xbf16>, vector<64x32xf32> -> vector<64x32xf32>
    %47 = arith.addf %39, %46 : vector<64x32xf32>
    %c5 = arith.constant 5 : index
    %c0_42 = arith.constant 0 : index
    %c0_43 = arith.constant 0 : index
    %48 = vector.load %arg4[%c5, %c0_42, %c0_43] : memref<9x64x256xbf16, #tpu.memory_space<vmem>>, vector<1x64x256xbf16>
    %49 = vector.shape_cast %48 : vector<1x64x256xbf16> to vector<64x256xbf16>
    %cst_44 = arith.constant dense<0.000000e+00> : vector<64x32xf32>
    %50 = tpu.matmul %49, %8, %cst_44 {dimension_numbers = #tpu.dot_dimension_numbers<[1], [0], [0], [1], [0, 0, 1, 1], [], []>} : vector<64x256xbf16>, vector<256x32xbf16>, vector<64x32xf32> -> vector<64x32xf32>
    %51 = arith.truncf %50 : vector<64x32xf32> to vector<64x32xbf16>
    %c5_45 = arith.constant 5 : index
    %c0_46 = arith.constant 0 : index
    %c0_47 = arith.constant 0 : index
    %52 = vector.load %arg5[%c5_45, %c0_46, %c0_47] : memref<9x32x32xbf16, #tpu.memory_space<vmem>>, vector<1x32x32xbf16>
    %53 = vector.shape_cast %52 : vector<1x32x32xbf16> to vector<32x32xbf16>
    %cst_48 = arith.constant dense<0.000000e+00> : vector<64x32xf32>
    %54 = tpu.matmul %51, %53, %cst_48 {dimension_numbers = #tpu.dot_dimension_numbers<[1], [0], [0], [1], [0, 0, 1, 1], [], []>} : vector<64x32xbf16>, vector<32x32xbf16>, vector<64x32xf32> -> vector<64x32xf32>
    %55 = arith.addf %47, %54 : vector<64x32xf32>
    %c6 = arith.constant 6 : index
    %c0_49 = arith.constant 0 : index
    %c0_50 = arith.constant 0 : index
    %56 = vector.load %arg4[%c6, %c0_49, %c0_50] : memref<9x64x256xbf16, #tpu.memory_space<vmem>>, vector<1x64x256xbf16>
    %57 = vector.shape_cast %56 : vector<1x64x256xbf16> to vector<64x256xbf16>
    %cst_51 = arith.constant dense<0.000000e+00> : vector<64x32xf32>
    %58 = tpu.matmul %57, %8, %cst_51 {dimension_numbers = #tpu.dot_dimension_numbers<[1], [0], [0], [1], [0, 0, 1, 1], [], []>} : vector<64x256xbf16>, vector<256x32xbf16>, vector<64x32xf32> -> vector<64x32xf32>
    %59 = arith.truncf %58 : vector<64x32xf32> to vector<64x32xbf16>
    %c6_52 = arith.constant 6 : index
    %c0_53 = arith.constant 0 : index
    %c0_54 = arith.constant 0 : index
    %60 = vector.load %arg5[%c6_52, %c0_53, %c0_54] : memref<9x32x32xbf16, #tpu.memory_space<vmem>>, vector<1x32x32xbf16>
    %61 = vector.shape_cast %60 : vector<1x32x32xbf16> to vector<32x32xbf16>
    %cst_55 = arith.constant dense<0.000000e+00> : vector<64x32xf32>
    %62 = tpu.matmul %59, %61, %cst_55 {dimension_numbers = #tpu.dot_dimension_numbers<[1], [0], [0], [1], [0, 0, 1, 1], [], []>} : vector<64x32xbf16>, vector<32x32xbf16>, vector<64x32xf32> -> vector<64x32xf32>
    %63 = arith.addf %55, %62 : vector<64x32xf32>
    %c7 = arith.constant 7 : index
    %c0_56 = arith.constant 0 : index
    %c0_57 = arith.constant 0 : index
    %64 = vector.load %arg4[%c7, %c0_56, %c0_57] : memref<9x64x256xbf16, #tpu.memory_space<vmem>>, vector<1x64x256xbf16>
    %65 = vector.shape_cast %64 : vector<1x64x256xbf16> to vector<64x256xbf16>
    %cst_58 = arith.constant dense<0.000000e+00> : vector<64x32xf32>
    %66 = tpu.matmul %65, %8, %cst_58 {dimension_numbers = #tpu.dot_dimension_numbers<[1], [0], [0], [1], [0, 0, 1, 1], [], []>} : vector<64x256xbf16>, vector<256x32xbf16>, vector<64x32xf32> -> vector<64x32xf32>
    %67 = arith.truncf %66 : vector<64x32xf32> to vector<64x32xbf16>
    %c7_59 = arith.constant 7 : index
    %c0_60 = arith.constant 0 : index
    %c0_61 = arith.constant 0 : index
    %68 = vector.load %arg5[%c7_59, %c0_60, %c0_61] : memref<9x32x32xbf16, #tpu.memory_space<vmem>>, vector<1x32x32xbf16>
    %69 = vector.shape_cast %68 : vector<1x32x32xbf16> to vector<32x32xbf16>
    %cst_62 = arith.constant dense<0.000000e+00> : vector<64x32xf32>
    %70 = tpu.matmul %67, %69, %cst_62 {dimension_numbers = #tpu.dot_dimension_numbers<[1], [0], [0], [1], [0, 0, 1, 1], [], []>} : vector<64x32xbf16>, vector<32x32xbf16>, vector<64x32xf32> -> vector<64x32xf32>
    %71 = arith.addf %63, %70 : vector<64x32xf32>
    %c8 = arith.constant 8 : index
    %c0_63 = arith.constant 0 : index
    %c0_64 = arith.constant 0 : index
    %72 = vector.load %arg4[%c8, %c0_63, %c0_64] : memref<9x64x256xbf16, #tpu.memory_space<vmem>>, vector<1x64x256xbf16>
    %73 = vector.shape_cast %72 : vector<1x64x256xbf16> to vector<64x256xbf16>
    %cst_65 = arith.constant dense<0.000000e+00> : vector<64x32xf32>
    %74 = tpu.matmul %73, %8, %cst_65 {dimension_numbers = #tpu.dot_dimension_numbers<[1], [0], [0], [1], [0, 0, 1, 1], [], []>} : vector<64x256xbf16>, vector<256x32xbf16>, vector<64x32xf32> -> vector<64x32xf32>
    %75 = arith.truncf %74 : vector<64x32xf32> to vector<64x32xbf16>
    %c8_66 = arith.constant 8 : index
    %c0_67 = arith.constant 0 : index
    %c0_68 = arith.constant 0 : index
    %76 = vector.load %arg5[%c8_66, %c0_67, %c0_68] : memref<9x32x32xbf16, #tpu.memory_space<vmem>>, vector<1x32x32xbf16>
    %77 = vector.shape_cast %76 : vector<1x32x32xbf16> to vector<32x32xbf16>
    %cst_69 = arith.constant dense<0.000000e+00> : vector<64x32xf32>
    %78 = tpu.matmul %75, %77, %cst_69 {dimension_numbers = #tpu.dot_dimension_numbers<[1], [0], [0], [1], [0, 0, 1, 1], [], []>} : vector<64x32xbf16>, vector<32x32xbf16>, vector<64x32xf32> -> vector<64x32xf32>
    %79 = arith.addf %71, %78 : vector<64x32xf32>
    %c0_70 = arith.constant 0 : index
    %c0_71 = arith.constant 0 : index
    %80 = vector.load %arg6[%c0_70, %c0_71] : memref<1x32xf32, #tpu.memory_space<vmem>>, vector<1x32xf32>
    %81 = vector.broadcast %80 : vector<1x32xf32> to vector<64x32xf32>
    %82 = arith.addf %79, %81 : vector<64x32xf32>
    %cst_72 = arith.constant 0.000000e+00 : f32
    %83 = vector.broadcast %cst_72 : f32 to vector<64x32xf32>
    %84 = arith.maximumf %82, %83 : vector<64x32xf32>
    %85 = arith.truncf %84 : vector<64x32xf32> to vector<64x32xbf16>
    %c0_73 = arith.constant 0 : index
    %c0_74 = arith.constant 0 : index
    %86 = vector.load %arg7[%c0_73, %c0_74] : memref<32x128xbf16, #tpu.memory_space<vmem>>, vector<32x128xbf16>
    %cst_75 = arith.constant dense<0.000000e+00> : vector<64x128xf32>
    %87 = tpu.matmul %85, %86, %cst_75 {dimension_numbers = #tpu.dot_dimension_numbers<[1], [0], [0], [1], [0, 0, 1, 1], [], []>} : vector<64x32xbf16>, vector<32x128xbf16>, vector<64x128xf32> -> vector<64x128xf32>
    %c0_76 = arith.constant 0 : index
    %c0_77 = arith.constant 0 : index
    %88 = vector.load %arg8[%c0_76, %c0_77] : memref<1x128xf32, #tpu.memory_space<vmem>>, vector<1x128xf32>
    %89 = vector.broadcast %88 : vector<1x128xf32> to vector<64x128xf32>
    %90 = arith.addf %87, %89 : vector<64x128xf32>
    %c4_78 = arith.constant 4 : index
    %c0_79 = arith.constant 0 : index
    %c0_80 = arith.constant 0 : index
    %91 = vector.load %arg4[%c4_78, %c0_79, %c0_80] : memref<9x64x256xbf16, #tpu.memory_space<vmem>>, vector<1x64x256xbf16>
    %92 = vector.shape_cast %91 : vector<1x64x256xbf16> to vector<64x256xbf16>
    %cst_81 = arith.constant dense<0.000000e+00> : vector<64x128xf32>
    %93 = tpu.matmul %92, %0, %cst_81 {dimension_numbers = #tpu.dot_dimension_numbers<[1], [0], [0], [1], [0, 0, 1, 1], [], []>} : vector<64x256xbf16>, vector<256x128xbf16>, vector<64x128xf32> -> vector<64x128xf32>
    %94 = arith.truncf %93 : vector<64x128xf32> to vector<64x128xbf16>
    %c0_82 = arith.constant 0 : index
    %c0_83 = arith.constant 0 : index
    %95 = vector.load %arg9[%c0_82, %c0_83] : memref<128x128xbf16, #tpu.memory_space<vmem>>, vector<128x128xbf16>
    %cst_84 = arith.constant dense<0.000000e+00> : vector<64x128xf32>
    %96 = tpu.matmul %94, %95, %cst_84 {dimension_numbers = #tpu.dot_dimension_numbers<[1], [0], [0], [1], [0, 0, 1, 1], [], []>} : vector<64x128xbf16>, vector<128x128xbf16>, vector<64x128xf32> -> vector<64x128xf32>
    %c0_85 = arith.constant 0 : index
    %c0_86 = arith.constant 0 : index
    %97 = vector.load %arg10[%c0_85, %c0_86] : memref<1x128xf32, #tpu.memory_space<vmem>>, vector<1x128xf32>
    %98 = vector.broadcast %97 : vector<1x128xf32> to vector<64x128xf32>
    %99 = arith.addf %96, %98 : vector<64x128xf32>
    %100 = arith.addf %90, %99 : vector<64x128xf32>
    %cst_87 = arith.constant 0.000000e+00 : f32
    %101 = vector.broadcast %cst_87 : f32 to vector<64x128xf32>
    %102 = arith.maximumf %100, %101 : vector<64x128xf32>
    %103 = arith.truncf %102 : vector<64x128xf32> to vector<64x128xbf16>
    %c0_88 = arith.constant 0 : index
    %c0_89 = arith.constant 0 : index
    %104 = vector.load %arg11[%c0_88, %c0_89] : memref<64x128xbf16, #tpu.memory_space<vmem>>, vector<64x128xbf16>
    tpu.vector_store %arg11[%c0_88, %c0_89], %103 {strides = array<i32>} : memref<64x128xbf16, #tpu.memory_space<vmem>>, vector<64x128xbf16>,
    return
  }
  func.func @transform_0(%arg0: i32) -> (i32, i32) {
    %c0_i32 = arith.constant 0 : i32
    %c0_i32_0 = arith.constant 0 : i32
    return %arg0, %c0_i32 : i32, i32
  }
  func.func @transform_1(%arg0: i32) -> (i32, i32) {
    %c0_i32 = arith.constant 0 : i32
    %c0_i32_0 = arith.constant 0 : i32
    %c0_i32_1 = arith.constant 0 : i32
    return %c0_i32, %c0_i32_0 : i32, i32
  }
  func.func @transform_2(%arg0: i32) -> (i32, i32) {
    %c0_i32 = arith.constant 0 : i32
    %c0_i32_0 = arith.constant 0 : i32
    %c0_i32_1 = arith.constant 0 : i32
    return %c0_i32, %c0_i32_0 : i32, i32
  }
  func.func @transform_3(%arg0: i32) -> (i32, i32, i32) {
    %c0_i32 = arith.constant 0 : i32
    %c0_i32_0 = arith.constant 0 : i32
    %c0_i32_1 = arith.constant 0 : i32
    %c0_i32_2 = arith.constant 0 : i32
    return %c0_i32, %c0_i32_0, %c0_i32_1 : i32, i32, i32
  }
  func.func @transform_4(%arg0: i32) -> (i32, i32, i32) {
    %c0_i32 = arith.constant 0 : i32
    %c0_i32_0 = arith.constant 0 : i32
    %c0_i32_1 = arith.constant 0 : i32
    %c0_i32_2 = arith.constant 0 : i32
    return %c0_i32, %c0_i32_0, %c0_i32_1 : i32, i32, i32
  }
  func.func @transform_5(%arg0: i32) -> (i32, i32) {
    %c0_i32 = arith.constant 0 : i32
    %c0_i32_0 = arith.constant 0 : i32
    %c0_i32_1 = arith.constant 0 : i32
    return %c0_i32, %c0_i32_0 : i32, i32
  }
  func.func @transform_6(%arg0: i32) -> (i32, i32) {
    %c0_i32 = arith.constant 0 : i32
    %c0_i32_0 = arith.constant 0 : i32
    %c0_i32_1 = arith.constant 0 : i32
    return %c0_i32, %c0_i32_0 : i32, i32
  }
  func.func @transform_7(%arg0: i32) -> (i32, i32) {
    %c0_i32 = arith.constant 0 : i32
    %c0_i32_0 = arith.constant 0 : i32
    %c0_i32_1 = arith.constant 0 : i32
    return %c0_i32, %c0_i32_0 : i32, i32
  }
  func.func @transform_8(%arg0: i32) -> (i32, i32) {
    %c0_i32 = arith.constant 0 : i32
    %c0_i32_0 = arith.constant 0 : i32
    %c0_i32_1 = arith.constant 0 : i32
    return %c0_i32, %c0_i32_0 : i32, i32
  }
  func.func @transform_9(%arg0: i32) -> (i32, i32) {
    %c0_i32 = arith.constant 0 : i32
    %c0_i32_0 = arith.constant 0 : i32
    %c0_i32_1 = arith.constant 0 : i32
    return %c0_i32, %c0_i32_0 : i32, i32
  }
  func.func @transform_10(%arg0: i32) -> (i32, i32) {
    %c0_i32 = arith.constant 0 : i32
    %c0_i32_0 = arith.constant 0 : i32
    return %arg0, %c0_i32 : i32, i32
  }
}

module attributes {stable_mosaic.version = 11 : i64} {
  func.func @_bottleneck_kernel(%arg0: i32, %arg1: memref<64x128xbf16, #tpu.memory_space<vmem>>, %arg2: memref<128x32xbf16, #tpu.memory_space<vmem>>, %arg3: memref<1x32xf32, #tpu.memory_space<vmem>>, %arg4: memref<9x64x64xbf16, #tpu.memory_space<vmem>>, %arg5: memref<9x32x32xbf16, #tpu.memory_space<vmem>>, %arg6: memref<1x32xf32, #tpu.memory_space<vmem>>, %arg7: memref<32x128xbf16, #tpu.memory_space<vmem>>, %arg8: memref<1x128xf32, #tpu.memory_space<vmem>>, %arg9: memref<64x128xbf16, #tpu.memory_space<vmem>>) attributes {dimension_semantics = [#tpu.dimension_semantics<parallel>], iteration_bounds = array<i64: 2>, scalar_prefetch = 0 : i64, scratch_operands = 0 : i64, tpu.core_type = #tpu.core_type<tc>, window_params = [{transform_indices = @transform_0, window_bounds = array<i64: 64, 128>}, {pipeline_mode = #tpu.pipeline_mode<synchronous>, transform_indices = @transform_1, window_bounds = array<i64: 128, 32>}, {pipeline_mode = #tpu.pipeline_mode<synchronous>, transform_indices = @transform_2, window_bounds = array<i64: 1, 32>}, {pipeline_mode = #tpu.pipeline_mode<synchronous>, transform_indices = @transform_3, window_bounds = array<i64: 9, 64, 64>}, {pipeline_mode = #tpu.pipeline_mode<synchronous>, transform_indices = @transform_4, window_bounds = array<i64: 9, 32, 32>}, {pipeline_mode = #tpu.pipeline_mode<synchronous>, transform_indices = @transform_5, window_bounds = array<i64: 1, 32>}, {pipeline_mode = #tpu.pipeline_mode<synchronous>, transform_indices = @transform_6, window_bounds = array<i64: 32, 128>}, {pipeline_mode = #tpu.pipeline_mode<synchronous>, transform_indices = @transform_7, window_bounds = array<i64: 1, 128>}, {transform_indices = @transform_8, window_bounds = array<i64: 64, 128>}]} {
    %c0 = arith.constant 0 : index
    %c0_0 = arith.constant 0 : index
    %0 = vector.load %arg1[%c0, %c0_0] : memref<64x128xbf16, #tpu.memory_space<vmem>>, vector<64x128xbf16>
    %c0_1 = arith.constant 0 : index
    %c0_2 = arith.constant 0 : index
    %1 = vector.load %arg2[%c0_1, %c0_2] : memref<128x32xbf16, #tpu.memory_space<vmem>>, vector<128x32xbf16>
    %cst = arith.constant dense<0.000000e+00> : vector<64x32xf32>
    %2 = tpu.matmul %0, %1, %cst {dimension_numbers = #tpu.dot_dimension_numbers<[1], [0], [0], [1], [0, 0, 1, 1], [], []>} : vector<64x128xbf16>, vector<128x32xbf16>, vector<64x32xf32> -> vector<64x32xf32>
    %c0_3 = arith.constant 0 : index
    %c0_4 = arith.constant 0 : index
    %3 = vector.load %arg3[%c0_3, %c0_4] : memref<1x32xf32, #tpu.memory_space<vmem>>, vector<1x32xf32>
    %4 = vector.broadcast %3 : vector<1x32xf32> to vector<64x32xf32>
    %5 = arith.addf %2, %4 : vector<64x32xf32>
    %cst_5 = arith.constant 0.000000e+00 : f32
    %6 = vector.broadcast %cst_5 : f32 to vector<64x32xf32>
    %7 = arith.maximumf %5, %6 : vector<64x32xf32>
    %8 = arith.truncf %7 : vector<64x32xf32> to vector<64x32xbf16>
    %c0_6 = arith.constant 0 : index
    %c0_7 = arith.constant 0 : index
    %c0_8 = arith.constant 0 : index
    %9 = vector.load %arg4[%c0_6, %c0_7, %c0_8] : memref<9x64x64xbf16, #tpu.memory_space<vmem>>, vector<1x64x64xbf16>
    %10 = vector.shape_cast %9 : vector<1x64x64xbf16> to vector<64x64xbf16>
    %cst_9 = arith.constant dense<0.000000e+00> : vector<64x32xf32>
    %11 = tpu.matmul %10, %8, %cst_9 {dimension_numbers = #tpu.dot_dimension_numbers<[1], [0], [0], [1], [0, 0, 1, 1], [], []>} : vector<64x64xbf16>, vector<64x32xbf16>, vector<64x32xf32> -> vector<64x32xf32>
    %12 = arith.truncf %11 : vector<64x32xf32> to vector<64x32xbf16>
    %c0_10 = arith.constant 0 : index
    %c0_11 = arith.constant 0 : index
    %c0_12 = arith.constant 0 : index
    %13 = vector.load %arg5[%c0_10, %c0_11, %c0_12] : memref<9x32x32xbf16, #tpu.memory_space<vmem>>, vector<1x32x32xbf16>
    %14 = vector.shape_cast %13 : vector<1x32x32xbf16> to vector<32x32xbf16>
    %cst_13 = arith.constant dense<0.000000e+00> : vector<64x32xf32>
    %15 = tpu.matmul %12, %14, %cst_13 {dimension_numbers = #tpu.dot_dimension_numbers<[1], [0], [0], [1], [0, 0, 1, 1], [], []>} : vector<64x32xbf16>, vector<32x32xbf16>, vector<64x32xf32> -> vector<64x32xf32>
    %c1 = arith.constant 1 : index
    %c0_14 = arith.constant 0 : index
    %c0_15 = arith.constant 0 : index
    %16 = vector.load %arg4[%c1, %c0_14, %c0_15] : memref<9x64x64xbf16, #tpu.memory_space<vmem>>, vector<1x64x64xbf16>
    %17 = vector.shape_cast %16 : vector<1x64x64xbf16> to vector<64x64xbf16>
    %cst_16 = arith.constant dense<0.000000e+00> : vector<64x32xf32>
    %18 = tpu.matmul %17, %8, %cst_16 {dimension_numbers = #tpu.dot_dimension_numbers<[1], [0], [0], [1], [0, 0, 1, 1], [], []>} : vector<64x64xbf16>, vector<64x32xbf16>, vector<64x32xf32> -> vector<64x32xf32>
    %19 = arith.truncf %18 : vector<64x32xf32> to vector<64x32xbf16>
    %c1_17 = arith.constant 1 : index
    %c0_18 = arith.constant 0 : index
    %c0_19 = arith.constant 0 : index
    %20 = vector.load %arg5[%c1_17, %c0_18, %c0_19] : memref<9x32x32xbf16, #tpu.memory_space<vmem>>, vector<1x32x32xbf16>
    %21 = vector.shape_cast %20 : vector<1x32x32xbf16> to vector<32x32xbf16>
    %cst_20 = arith.constant dense<0.000000e+00> : vector<64x32xf32>
    %22 = tpu.matmul %19, %21, %cst_20 {dimension_numbers = #tpu.dot_dimension_numbers<[1], [0], [0], [1], [0, 0, 1, 1], [], []>} : vector<64x32xbf16>, vector<32x32xbf16>, vector<64x32xf32> -> vector<64x32xf32>
    %23 = arith.addf %15, %22 : vector<64x32xf32>
    %c2 = arith.constant 2 : index
    %c0_21 = arith.constant 0 : index
    %c0_22 = arith.constant 0 : index
    %24 = vector.load %arg4[%c2, %c0_21, %c0_22] : memref<9x64x64xbf16, #tpu.memory_space<vmem>>, vector<1x64x64xbf16>
    %25 = vector.shape_cast %24 : vector<1x64x64xbf16> to vector<64x64xbf16>
    %cst_23 = arith.constant dense<0.000000e+00> : vector<64x32xf32>
    %26 = tpu.matmul %25, %8, %cst_23 {dimension_numbers = #tpu.dot_dimension_numbers<[1], [0], [0], [1], [0, 0, 1, 1], [], []>} : vector<64x64xbf16>, vector<64x32xbf16>, vector<64x32xf32> -> vector<64x32xf32>
    %27 = arith.truncf %26 : vector<64x32xf32> to vector<64x32xbf16>
    %c2_24 = arith.constant 2 : index
    %c0_25 = arith.constant 0 : index
    %c0_26 = arith.constant 0 : index
    %28 = vector.load %arg5[%c2_24, %c0_25, %c0_26] : memref<9x32x32xbf16, #tpu.memory_space<vmem>>, vector<1x32x32xbf16>
    %29 = vector.shape_cast %28 : vector<1x32x32xbf16> to vector<32x32xbf16>
    %cst_27 = arith.constant dense<0.000000e+00> : vector<64x32xf32>
    %30 = tpu.matmul %27, %29, %cst_27 {dimension_numbers = #tpu.dot_dimension_numbers<[1], [0], [0], [1], [0, 0, 1, 1], [], []>} : vector<64x32xbf16>, vector<32x32xbf16>, vector<64x32xf32> -> vector<64x32xf32>
    %31 = arith.addf %23, %30 : vector<64x32xf32>
    %c3 = arith.constant 3 : index
    %c0_28 = arith.constant 0 : index
    %c0_29 = arith.constant 0 : index
    %32 = vector.load %arg4[%c3, %c0_28, %c0_29] : memref<9x64x64xbf16, #tpu.memory_space<vmem>>, vector<1x64x64xbf16>
    %33 = vector.shape_cast %32 : vector<1x64x64xbf16> to vector<64x64xbf16>
    %cst_30 = arith.constant dense<0.000000e+00> : vector<64x32xf32>
    %34 = tpu.matmul %33, %8, %cst_30 {dimension_numbers = #tpu.dot_dimension_numbers<[1], [0], [0], [1], [0, 0, 1, 1], [], []>} : vector<64x64xbf16>, vector<64x32xbf16>, vector<64x32xf32> -> vector<64x32xf32>
    %35 = arith.truncf %34 : vector<64x32xf32> to vector<64x32xbf16>
    %c3_31 = arith.constant 3 : index
    %c0_32 = arith.constant 0 : index
    %c0_33 = arith.constant 0 : index
    %36 = vector.load %arg5[%c3_31, %c0_32, %c0_33] : memref<9x32x32xbf16, #tpu.memory_space<vmem>>, vector<1x32x32xbf16>
    %37 = vector.shape_cast %36 : vector<1x32x32xbf16> to vector<32x32xbf16>
    %cst_34 = arith.constant dense<0.000000e+00> : vector<64x32xf32>
    %38 = tpu.matmul %35, %37, %cst_34 {dimension_numbers = #tpu.dot_dimension_numbers<[1], [0], [0], [1], [0, 0, 1, 1], [], []>} : vector<64x32xbf16>, vector<32x32xbf16>, vector<64x32xf32> -> vector<64x32xf32>
    %39 = arith.addf %31, %38 : vector<64x32xf32>
    %c4 = arith.constant 4 : index
    %c0_35 = arith.constant 0 : index
    %c0_36 = arith.constant 0 : index
    %40 = vector.load %arg4[%c4, %c0_35, %c0_36] : memref<9x64x64xbf16, #tpu.memory_space<vmem>>, vector<1x64x64xbf16>
    %41 = vector.shape_cast %40 : vector<1x64x64xbf16> to vector<64x64xbf16>
    %cst_37 = arith.constant dense<0.000000e+00> : vector<64x32xf32>
    %42 = tpu.matmul %41, %8, %cst_37 {dimension_numbers = #tpu.dot_dimension_numbers<[1], [0], [0], [1], [0, 0, 1, 1], [], []>} : vector<64x64xbf16>, vector<64x32xbf16>, vector<64x32xf32> -> vector<64x32xf32>
    %43 = arith.truncf %42 : vector<64x32xf32> to vector<64x32xbf16>
    %c4_38 = arith.constant 4 : index
    %c0_39 = arith.constant 0 : index
    %c0_40 = arith.constant 0 : index
    %44 = vector.load %arg5[%c4_38, %c0_39, %c0_40] : memref<9x32x32xbf16, #tpu.memory_space<vmem>>, vector<1x32x32xbf16>
    %45 = vector.shape_cast %44 : vector<1x32x32xbf16> to vector<32x32xbf16>
    %cst_41 = arith.constant dense<0.000000e+00> : vector<64x32xf32>
    %46 = tpu.matmul %43, %45, %cst_41 {dimension_numbers = #tpu.dot_dimension_numbers<[1], [0], [0], [1], [0, 0, 1, 1], [], []>} : vector<64x32xbf16>, vector<32x32xbf16>, vector<64x32xf32> -> vector<64x32xf32>
    %47 = arith.addf %39, %46 : vector<64x32xf32>
    %c5 = arith.constant 5 : index
    %c0_42 = arith.constant 0 : index
    %c0_43 = arith.constant 0 : index
    %48 = vector.load %arg4[%c5, %c0_42, %c0_43] : memref<9x64x64xbf16, #tpu.memory_space<vmem>>, vector<1x64x64xbf16>
    %49 = vector.shape_cast %48 : vector<1x64x64xbf16> to vector<64x64xbf16>
    %cst_44 = arith.constant dense<0.000000e+00> : vector<64x32xf32>
    %50 = tpu.matmul %49, %8, %cst_44 {dimension_numbers = #tpu.dot_dimension_numbers<[1], [0], [0], [1], [0, 0, 1, 1], [], []>} : vector<64x64xbf16>, vector<64x32xbf16>, vector<64x32xf32> -> vector<64x32xf32>
    %51 = arith.truncf %50 : vector<64x32xf32> to vector<64x32xbf16>
    %c5_45 = arith.constant 5 : index
    %c0_46 = arith.constant 0 : index
    %c0_47 = arith.constant 0 : index
    %52 = vector.load %arg5[%c5_45, %c0_46, %c0_47] : memref<9x32x32xbf16, #tpu.memory_space<vmem>>, vector<1x32x32xbf16>
    %53 = vector.shape_cast %52 : vector<1x32x32xbf16> to vector<32x32xbf16>
    %cst_48 = arith.constant dense<0.000000e+00> : vector<64x32xf32>
    %54 = tpu.matmul %51, %53, %cst_48 {dimension_numbers = #tpu.dot_dimension_numbers<[1], [0], [0], [1], [0, 0, 1, 1], [], []>} : vector<64x32xbf16>, vector<32x32xbf16>, vector<64x32xf32> -> vector<64x32xf32>
    %55 = arith.addf %47, %54 : vector<64x32xf32>
    %c6 = arith.constant 6 : index
    %c0_49 = arith.constant 0 : index
    %c0_50 = arith.constant 0 : index
    %56 = vector.load %arg4[%c6, %c0_49, %c0_50] : memref<9x64x64xbf16, #tpu.memory_space<vmem>>, vector<1x64x64xbf16>
    %57 = vector.shape_cast %56 : vector<1x64x64xbf16> to vector<64x64xbf16>
    %cst_51 = arith.constant dense<0.000000e+00> : vector<64x32xf32>
    %58 = tpu.matmul %57, %8, %cst_51 {dimension_numbers = #tpu.dot_dimension_numbers<[1], [0], [0], [1], [0, 0, 1, 1], [], []>} : vector<64x64xbf16>, vector<64x32xbf16>, vector<64x32xf32> -> vector<64x32xf32>
    %59 = arith.truncf %58 : vector<64x32xf32> to vector<64x32xbf16>
    %c6_52 = arith.constant 6 : index
    %c0_53 = arith.constant 0 : index
    %c0_54 = arith.constant 0 : index
    %60 = vector.load %arg5[%c6_52, %c0_53, %c0_54] : memref<9x32x32xbf16, #tpu.memory_space<vmem>>, vector<1x32x32xbf16>
    %61 = vector.shape_cast %60 : vector<1x32x32xbf16> to vector<32x32xbf16>
    %cst_55 = arith.constant dense<0.000000e+00> : vector<64x32xf32>
    %62 = tpu.matmul %59, %61, %cst_55 {dimension_numbers = #tpu.dot_dimension_numbers<[1], [0], [0], [1], [0, 0, 1, 1], [], []>} : vector<64x32xbf16>, vector<32x32xbf16>, vector<64x32xf32> -> vector<64x32xf32>
    %63 = arith.addf %55, %62 : vector<64x32xf32>
    %c7 = arith.constant 7 : index
    %c0_56 = arith.constant 0 : index
    %c0_57 = arith.constant 0 : index
    %64 = vector.load %arg4[%c7, %c0_56, %c0_57] : memref<9x64x64xbf16, #tpu.memory_space<vmem>>, vector<1x64x64xbf16>
    %65 = vector.shape_cast %64 : vector<1x64x64xbf16> to vector<64x64xbf16>
    %cst_58 = arith.constant dense<0.000000e+00> : vector<64x32xf32>
    %66 = tpu.matmul %65, %8, %cst_58 {dimension_numbers = #tpu.dot_dimension_numbers<[1], [0], [0], [1], [0, 0, 1, 1], [], []>} : vector<64x64xbf16>, vector<64x32xbf16>, vector<64x32xf32> -> vector<64x32xf32>
    %67 = arith.truncf %66 : vector<64x32xf32> to vector<64x32xbf16>
    %c7_59 = arith.constant 7 : index
    %c0_60 = arith.constant 0 : index
    %c0_61 = arith.constant 0 : index
    %68 = vector.load %arg5[%c7_59, %c0_60, %c0_61] : memref<9x32x32xbf16, #tpu.memory_space<vmem>>, vector<1x32x32xbf16>
    %69 = vector.shape_cast %68 : vector<1x32x32xbf16> to vector<32x32xbf16>
    %cst_62 = arith.constant dense<0.000000e+00> : vector<64x32xf32>
    %70 = tpu.matmul %67, %69, %cst_62 {dimension_numbers = #tpu.dot_dimension_numbers<[1], [0], [0], [1], [0, 0, 1, 1], [], []>} : vector<64x32xbf16>, vector<32x32xbf16>, vector<64x32xf32> -> vector<64x32xf32>
    %71 = arith.addf %63, %70 : vector<64x32xf32>
    %c8 = arith.constant 8 : index
    %c0_63 = arith.constant 0 : index
    %c0_64 = arith.constant 0 : index
    %72 = vector.load %arg4[%c8, %c0_63, %c0_64] : memref<9x64x64xbf16, #tpu.memory_space<vmem>>, vector<1x64x64xbf16>
    %73 = vector.shape_cast %72 : vector<1x64x64xbf16> to vector<64x64xbf16>
    %cst_65 = arith.constant dense<0.000000e+00> : vector<64x32xf32>
    %74 = tpu.matmul %73, %8, %cst_65 {dimension_numbers = #tpu.dot_dimension_numbers<[1], [0], [0], [1], [0, 0, 1, 1], [], []>} : vector<64x64xbf16>, vector<64x32xbf16>, vector<64x32xf32> -> vector<64x32xf32>
    %75 = arith.truncf %74 : vector<64x32xf32> to vector<64x32xbf16>
    %c8_66 = arith.constant 8 : index
    %c0_67 = arith.constant 0 : index
    %c0_68 = arith.constant 0 : index
    %76 = vector.load %arg5[%c8_66, %c0_67, %c0_68] : memref<9x32x32xbf16, #tpu.memory_space<vmem>>, vector<1x32x32xbf16>
    %77 = vector.shape_cast %76 : vector<1x32x32xbf16> to vector<32x32xbf16>
    %cst_69 = arith.constant dense<0.000000e+00> : vector<64x32xf32>
    %78 = tpu.matmul %75, %77, %cst_69 {dimension_numbers = #tpu.dot_dimension_numbers<[1], [0], [0], [1], [0, 0, 1, 1], [], []>} : vector<64x32xbf16>, vector<32x32xbf16>, vector<64x32xf32> -> vector<64x32xf32>
    %79 = arith.addf %71, %78 : vector<64x32xf32>
    %c0_70 = arith.constant 0 : index
    %c0_71 = arith.constant 0 : index
    %80 = vector.load %arg6[%c0_70, %c0_71] : memref<1x32xf32, #tpu.memory_space<vmem>>, vector<1x32xf32>
    %81 = vector.broadcast %80 : vector<1x32xf32> to vector<64x32xf32>
    %82 = arith.addf %79, %81 : vector<64x32xf32>
    %cst_72 = arith.constant 0.000000e+00 : f32
    %83 = vector.broadcast %cst_72 : f32 to vector<64x32xf32>
    %84 = arith.maximumf %82, %83 : vector<64x32xf32>
    %85 = arith.truncf %84 : vector<64x32xf32> to vector<64x32xbf16>
    %c0_73 = arith.constant 0 : index
    %c0_74 = arith.constant 0 : index
    %86 = vector.load %arg7[%c0_73, %c0_74] : memref<32x128xbf16, #tpu.memory_space<vmem>>, vector<32x128xbf16>
    %cst_75 = arith.constant dense<0.000000e+00> : vector<64x128xf32>
    %87 = tpu.matmul %85, %86, %cst_75 {dimension_numbers = #tpu.dot_dimension_numbers<[1], [0], [0], [1], [0, 0, 1, 1], [], []>} : vector<64x32xbf16>, vector<32x128xbf16>, vector<64x128xf32> -> vector<64x128xf32>
    %c0_76 = arith.constant 0 : index
    %c0_77 = arith.constant 0 : index
    %88 = vector.load %arg8[%c0_76, %c0_77] : memref<1x128xf32, #tpu.memory_space<vmem>>, vector<1x128xf32>
    %89 = vector.broadcast %88 : vector<1x128xf32> to vector<64x128xf32>
    %90 = arith.addf %87, %89 : vector<64x128xf32>
    %91 = arith.extf %0 : vector<64x128xbf16> to vector<64x128xf32>
    %92 = arith.addf %90, %91 : vector<64x128xf32>
    %cst_78 = arith.constant 0.000000e+00 : f32
    %93 = vector.broadcast %cst_78 : f32 to vector<64x128xf32>
    %94 = arith.maximumf %92, %93 : vector<64x128xf32>
    %95 = arith.truncf %94 : vector<64x128xf32> to vector<64x128xbf16>
    %c0_79 = arith.constant 0 : index
    %c0_80 = arith.constant 0 : index
    %96 = vector.load %arg9[%c0_79, %c0_80] : memref<64x128xbf16, #tpu.memory_space<vmem>>, vector<64x128xbf16>
    tpu.vector_store %arg9[%c0_79, %c0_80], %95 {strides = array<i32>} : memref<64x128xbf16, #tpu.memory_space<vmem>>, vector<64x128xbf16>,
    return
  }
  func.func @transform_0(%arg0: i32) -> (i32, i32) {
    %c0_i32 = arith.constant 0 : i32
    %c0_i32_0 = arith.constant 0 : i32
    return %arg0, %c0_i32 : i32, i32
  }
  func.func @transform_1(%arg0: i32) -> (i32, i32) {
    %c0_i32 = arith.constant 0 : i32
    %c0_i32_0 = arith.constant 0 : i32
    %c0_i32_1 = arith.constant 0 : i32
    return %c0_i32, %c0_i32_0 : i32, i32
  }
  func.func @transform_2(%arg0: i32) -> (i32, i32) {
    %c0_i32 = arith.constant 0 : i32
    %c0_i32_0 = arith.constant 0 : i32
    %c0_i32_1 = arith.constant 0 : i32
    return %c0_i32, %c0_i32_0 : i32, i32
  }
  func.func @transform_3(%arg0: i32) -> (i32, i32, i32) {
    %c0_i32 = arith.constant 0 : i32
    %c0_i32_0 = arith.constant 0 : i32
    %c0_i32_1 = arith.constant 0 : i32
    %c0_i32_2 = arith.constant 0 : i32
    return %c0_i32, %c0_i32_0, %c0_i32_1 : i32, i32, i32
  }
  func.func @transform_4(%arg0: i32) -> (i32, i32, i32) {
    %c0_i32 = arith.constant 0 : i32
    %c0_i32_0 = arith.constant 0 : i32
    %c0_i32_1 = arith.constant 0 : i32
    %c0_i32_2 = arith.constant 0 : i32
    return %c0_i32, %c0_i32_0, %c0_i32_1 : i32, i32, i32
  }
  func.func @transform_5(%arg0: i32) -> (i32, i32) {
    %c0_i32 = arith.constant 0 : i32
    %c0_i32_0 = arith.constant 0 : i32
    %c0_i32_1 = arith.constant 0 : i32
    return %c0_i32, %c0_i32_0 : i32, i32
  }
  func.func @transform_6(%arg0: i32) -> (i32, i32) {
    %c0_i32 = arith.constant 0 : i32
    %c0_i32_0 = arith.constant 0 : i32
    %c0_i32_1 = arith.constant 0 : i32
    return %c0_i32, %c0_i32_0 : i32, i32
  }
  func.func @transform_7(%arg0: i32) -> (i32, i32) {
    %c0_i32 = arith.constant 0 : i32
    %c0_i32_0 = arith.constant 0 : i32
    %c0_i32_1 = arith.constant 0 : i32
    return %c0_i32, %c0_i32_0 : i32, i32
  }
  func.func @transform_8(%arg0: i32) -> (i32, i32) {
    %c0_i32 = arith.constant 0 : i32
    %c0_i32_0 = arith.constant 0 : i32
    return %arg0, %c0_i32 : i32, i32
  }
}

module attributes {stable_mosaic.version = 11 : i64} {
  func.func @_bottleneck_kernel(%arg0: i32, %arg1: memref<16x256xbf16, #tpu.memory_space<vmem>>, %arg2: memref<256x64xbf16, #tpu.memory_space<vmem>>, %arg3: memref<1x64xf32, #tpu.memory_space<vmem>>, %arg4: memref<9x16x16xbf16, #tpu.memory_space<vmem>>, %arg5: memref<9x64x64xbf16, #tpu.memory_space<vmem>>, %arg6: memref<1x64xf32, #tpu.memory_space<vmem>>, %arg7: memref<64x256xbf16, #tpu.memory_space<vmem>>, %arg8: memref<1x256xf32, #tpu.memory_space<vmem>>, %arg9: memref<16x256xbf16, #tpu.memory_space<vmem>>) attributes {dimension_semantics = [#tpu.dimension_semantics<parallel>], iteration_bounds = array<i64: 2>, scalar_prefetch = 0 : i64, scratch_operands = 0 : i64, tpu.core_type = #tpu.core_type<tc>, window_params = [{transform_indices = @transform_0, window_bounds = array<i64: 16, 256>}, {pipeline_mode = #tpu.pipeline_mode<synchronous>, transform_indices = @transform_1, window_bounds = array<i64: 256, 64>}, {pipeline_mode = #tpu.pipeline_mode<synchronous>, transform_indices = @transform_2, window_bounds = array<i64: 1, 64>}, {pipeline_mode = #tpu.pipeline_mode<synchronous>, transform_indices = @transform_3, window_bounds = array<i64: 9, 16, 16>}, {pipeline_mode = #tpu.pipeline_mode<synchronous>, transform_indices = @transform_4, window_bounds = array<i64: 9, 64, 64>}, {pipeline_mode = #tpu.pipeline_mode<synchronous>, transform_indices = @transform_5, window_bounds = array<i64: 1, 64>}, {pipeline_mode = #tpu.pipeline_mode<synchronous>, transform_indices = @transform_6, window_bounds = array<i64: 64, 256>}, {pipeline_mode = #tpu.pipeline_mode<synchronous>, transform_indices = @transform_7, window_bounds = array<i64: 1, 256>}, {transform_indices = @transform_8, window_bounds = array<i64: 16, 256>}]} {
    %c0 = arith.constant 0 : index
    %c0_0 = arith.constant 0 : index
    %0 = vector.load %arg1[%c0, %c0_0] : memref<16x256xbf16, #tpu.memory_space<vmem>>, vector<16x256xbf16>
    %c0_1 = arith.constant 0 : index
    %c0_2 = arith.constant 0 : index
    %1 = vector.load %arg2[%c0_1, %c0_2] : memref<256x64xbf16, #tpu.memory_space<vmem>>, vector<256x64xbf16>
    %cst = arith.constant dense<0.000000e+00> : vector<16x64xf32>
    %2 = tpu.matmul %0, %1, %cst {dimension_numbers = #tpu.dot_dimension_numbers<[1], [0], [0], [1], [0, 0, 1, 1], [], []>} : vector<16x256xbf16>, vector<256x64xbf16>, vector<16x64xf32> -> vector<16x64xf32>
    %c0_3 = arith.constant 0 : index
    %c0_4 = arith.constant 0 : index
    %3 = vector.load %arg3[%c0_3, %c0_4] : memref<1x64xf32, #tpu.memory_space<vmem>>, vector<1x64xf32>
    %4 = vector.broadcast %3 : vector<1x64xf32> to vector<16x64xf32>
    %5 = arith.addf %2, %4 : vector<16x64xf32>
    %cst_5 = arith.constant 0.000000e+00 : f32
    %6 = vector.broadcast %cst_5 : f32 to vector<16x64xf32>
    %7 = arith.maximumf %5, %6 : vector<16x64xf32>
    %8 = arith.truncf %7 : vector<16x64xf32> to vector<16x64xbf16>
    %c0_6 = arith.constant 0 : index
    %c0_7 = arith.constant 0 : index
    %c0_8 = arith.constant 0 : index
    %9 = vector.load %arg4[%c0_6, %c0_7, %c0_8] : memref<9x16x16xbf16, #tpu.memory_space<vmem>>, vector<1x16x16xbf16>
    %10 = vector.shape_cast %9 : vector<1x16x16xbf16> to vector<16x16xbf16>
    %cst_9 = arith.constant dense<0.000000e+00> : vector<16x64xf32>
    %11 = tpu.matmul %10, %8, %cst_9 {dimension_numbers = #tpu.dot_dimension_numbers<[1], [0], [0], [1], [0, 0, 1, 1], [], []>} : vector<16x16xbf16>, vector<16x64xbf16>, vector<16x64xf32> -> vector<16x64xf32>
    %12 = arith.truncf %11 : vector<16x64xf32> to vector<16x64xbf16>
    %c0_10 = arith.constant 0 : index
    %c0_11 = arith.constant 0 : index
    %c0_12 = arith.constant 0 : index
    %13 = vector.load %arg5[%c0_10, %c0_11, %c0_12] : memref<9x64x64xbf16, #tpu.memory_space<vmem>>, vector<1x64x64xbf16>
    %14 = vector.shape_cast %13 : vector<1x64x64xbf16> to vector<64x64xbf16>
    %cst_13 = arith.constant dense<0.000000e+00> : vector<16x64xf32>
    %15 = tpu.matmul %12, %14, %cst_13 {dimension_numbers = #tpu.dot_dimension_numbers<[1], [0], [0], [1], [0, 0, 1, 1], [], []>} : vector<16x64xbf16>, vector<64x64xbf16>, vector<16x64xf32> -> vector<16x64xf32>
    %c1 = arith.constant 1 : index
    %c0_14 = arith.constant 0 : index
    %c0_15 = arith.constant 0 : index
    %16 = vector.load %arg4[%c1, %c0_14, %c0_15] : memref<9x16x16xbf16, #tpu.memory_space<vmem>>, vector<1x16x16xbf16>
    %17 = vector.shape_cast %16 : vector<1x16x16xbf16> to vector<16x16xbf16>
    %cst_16 = arith.constant dense<0.000000e+00> : vector<16x64xf32>
    %18 = tpu.matmul %17, %8, %cst_16 {dimension_numbers = #tpu.dot_dimension_numbers<[1], [0], [0], [1], [0, 0, 1, 1], [], []>} : vector<16x16xbf16>, vector<16x64xbf16>, vector<16x64xf32> -> vector<16x64xf32>
    %19 = arith.truncf %18 : vector<16x64xf32> to vector<16x64xbf16>
    %c1_17 = arith.constant 1 : index
    %c0_18 = arith.constant 0 : index
    %c0_19 = arith.constant 0 : index
    %20 = vector.load %arg5[%c1_17, %c0_18, %c0_19] : memref<9x64x64xbf16, #tpu.memory_space<vmem>>, vector<1x64x64xbf16>
    %21 = vector.shape_cast %20 : vector<1x64x64xbf16> to vector<64x64xbf16>
    %cst_20 = arith.constant dense<0.000000e+00> : vector<16x64xf32>
    %22 = tpu.matmul %19, %21, %cst_20 {dimension_numbers = #tpu.dot_dimension_numbers<[1], [0], [0], [1], [0, 0, 1, 1], [], []>} : vector<16x64xbf16>, vector<64x64xbf16>, vector<16x64xf32> -> vector<16x64xf32>
    %23 = arith.addf %15, %22 : vector<16x64xf32>
    %c2 = arith.constant 2 : index
    %c0_21 = arith.constant 0 : index
    %c0_22 = arith.constant 0 : index
    %24 = vector.load %arg4[%c2, %c0_21, %c0_22] : memref<9x16x16xbf16, #tpu.memory_space<vmem>>, vector<1x16x16xbf16>
    %25 = vector.shape_cast %24 : vector<1x16x16xbf16> to vector<16x16xbf16>
    %cst_23 = arith.constant dense<0.000000e+00> : vector<16x64xf32>
    %26 = tpu.matmul %25, %8, %cst_23 {dimension_numbers = #tpu.dot_dimension_numbers<[1], [0], [0], [1], [0, 0, 1, 1], [], []>} : vector<16x16xbf16>, vector<16x64xbf16>, vector<16x64xf32> -> vector<16x64xf32>
    %27 = arith.truncf %26 : vector<16x64xf32> to vector<16x64xbf16>
    %c2_24 = arith.constant 2 : index
    %c0_25 = arith.constant 0 : index
    %c0_26 = arith.constant 0 : index
    %28 = vector.load %arg5[%c2_24, %c0_25, %c0_26] : memref<9x64x64xbf16, #tpu.memory_space<vmem>>, vector<1x64x64xbf16>
    %29 = vector.shape_cast %28 : vector<1x64x64xbf16> to vector<64x64xbf16>
    %cst_27 = arith.constant dense<0.000000e+00> : vector<16x64xf32>
    %30 = tpu.matmul %27, %29, %cst_27 {dimension_numbers = #tpu.dot_dimension_numbers<[1], [0], [0], [1], [0, 0, 1, 1], [], []>} : vector<16x64xbf16>, vector<64x64xbf16>, vector<16x64xf32> -> vector<16x64xf32>
    %31 = arith.addf %23, %30 : vector<16x64xf32>
    %c3 = arith.constant 3 : index
    %c0_28 = arith.constant 0 : index
    %c0_29 = arith.constant 0 : index
    %32 = vector.load %arg4[%c3, %c0_28, %c0_29] : memref<9x16x16xbf16, #tpu.memory_space<vmem>>, vector<1x16x16xbf16>
    %33 = vector.shape_cast %32 : vector<1x16x16xbf16> to vector<16x16xbf16>
    %cst_30 = arith.constant dense<0.000000e+00> : vector<16x64xf32>
    %34 = tpu.matmul %33, %8, %cst_30 {dimension_numbers = #tpu.dot_dimension_numbers<[1], [0], [0], [1], [0, 0, 1, 1], [], []>} : vector<16x16xbf16>, vector<16x64xbf16>, vector<16x64xf32> -> vector<16x64xf32>
    %35 = arith.truncf %34 : vector<16x64xf32> to vector<16x64xbf16>
    %c3_31 = arith.constant 3 : index
    %c0_32 = arith.constant 0 : index
    %c0_33 = arith.constant 0 : index
    %36 = vector.load %arg5[%c3_31, %c0_32, %c0_33] : memref<9x64x64xbf16, #tpu.memory_space<vmem>>, vector<1x64x64xbf16>
    %37 = vector.shape_cast %36 : vector<1x64x64xbf16> to vector<64x64xbf16>
    %cst_34 = arith.constant dense<0.000000e+00> : vector<16x64xf32>
    %38 = tpu.matmul %35, %37, %cst_34 {dimension_numbers = #tpu.dot_dimension_numbers<[1], [0], [0], [1], [0, 0, 1, 1], [], []>} : vector<16x64xbf16>, vector<64x64xbf16>, vector<16x64xf32> -> vector<16x64xf32>
    %39 = arith.addf %31, %38 : vector<16x64xf32>
    %c4 = arith.constant 4 : index
    %c0_35 = arith.constant 0 : index
    %c0_36 = arith.constant 0 : index
    %40 = vector.load %arg4[%c4, %c0_35, %c0_36] : memref<9x16x16xbf16, #tpu.memory_space<vmem>>, vector<1x16x16xbf16>
    %41 = vector.shape_cast %40 : vector<1x16x16xbf16> to vector<16x16xbf16>
    %cst_37 = arith.constant dense<0.000000e+00> : vector<16x64xf32>
    %42 = tpu.matmul %41, %8, %cst_37 {dimension_numbers = #tpu.dot_dimension_numbers<[1], [0], [0], [1], [0, 0, 1, 1], [], []>} : vector<16x16xbf16>, vector<16x64xbf16>, vector<16x64xf32> -> vector<16x64xf32>
    %43 = arith.truncf %42 : vector<16x64xf32> to vector<16x64xbf16>
    %c4_38 = arith.constant 4 : index
    %c0_39 = arith.constant 0 : index
    %c0_40 = arith.constant 0 : index
    %44 = vector.load %arg5[%c4_38, %c0_39, %c0_40] : memref<9x64x64xbf16, #tpu.memory_space<vmem>>, vector<1x64x64xbf16>
    %45 = vector.shape_cast %44 : vector<1x64x64xbf16> to vector<64x64xbf16>
    %cst_41 = arith.constant dense<0.000000e+00> : vector<16x64xf32>
    %46 = tpu.matmul %43, %45, %cst_41 {dimension_numbers = #tpu.dot_dimension_numbers<[1], [0], [0], [1], [0, 0, 1, 1], [], []>} : vector<16x64xbf16>, vector<64x64xbf16>, vector<16x64xf32> -> vector<16x64xf32>
    %47 = arith.addf %39, %46 : vector<16x64xf32>
    %c5 = arith.constant 5 : index
    %c0_42 = arith.constant 0 : index
    %c0_43 = arith.constant 0 : index
    %48 = vector.load %arg4[%c5, %c0_42, %c0_43] : memref<9x16x16xbf16, #tpu.memory_space<vmem>>, vector<1x16x16xbf16>
    %49 = vector.shape_cast %48 : vector<1x16x16xbf16> to vector<16x16xbf16>
    %cst_44 = arith.constant dense<0.000000e+00> : vector<16x64xf32>
    %50 = tpu.matmul %49, %8, %cst_44 {dimension_numbers = #tpu.dot_dimension_numbers<[1], [0], [0], [1], [0, 0, 1, 1], [], []>} : vector<16x16xbf16>, vector<16x64xbf16>, vector<16x64xf32> -> vector<16x64xf32>
    %51 = arith.truncf %50 : vector<16x64xf32> to vector<16x64xbf16>
    %c5_45 = arith.constant 5 : index
    %c0_46 = arith.constant 0 : index
    %c0_47 = arith.constant 0 : index
    %52 = vector.load %arg5[%c5_45, %c0_46, %c0_47] : memref<9x64x64xbf16, #tpu.memory_space<vmem>>, vector<1x64x64xbf16>
    %53 = vector.shape_cast %52 : vector<1x64x64xbf16> to vector<64x64xbf16>
    %cst_48 = arith.constant dense<0.000000e+00> : vector<16x64xf32>
    %54 = tpu.matmul %51, %53, %cst_48 {dimension_numbers = #tpu.dot_dimension_numbers<[1], [0], [0], [1], [0, 0, 1, 1], [], []>} : vector<16x64xbf16>, vector<64x64xbf16>, vector<16x64xf32> -> vector<16x64xf32>
    %55 = arith.addf %47, %54 : vector<16x64xf32>
    %c6 = arith.constant 6 : index
    %c0_49 = arith.constant 0 : index
    %c0_50 = arith.constant 0 : index
    %56 = vector.load %arg4[%c6, %c0_49, %c0_50] : memref<9x16x16xbf16, #tpu.memory_space<vmem>>, vector<1x16x16xbf16>
    %57 = vector.shape_cast %56 : vector<1x16x16xbf16> to vector<16x16xbf16>
    %cst_51 = arith.constant dense<0.000000e+00> : vector<16x64xf32>
    %58 = tpu.matmul %57, %8, %cst_51 {dimension_numbers = #tpu.dot_dimension_numbers<[1], [0], [0], [1], [0, 0, 1, 1], [], []>} : vector<16x16xbf16>, vector<16x64xbf16>, vector<16x64xf32> -> vector<16x64xf32>
    %59 = arith.truncf %58 : vector<16x64xf32> to vector<16x64xbf16>
    %c6_52 = arith.constant 6 : index
    %c0_53 = arith.constant 0 : index
    %c0_54 = arith.constant 0 : index
    %60 = vector.load %arg5[%c6_52, %c0_53, %c0_54] : memref<9x64x64xbf16, #tpu.memory_space<vmem>>, vector<1x64x64xbf16>
    %61 = vector.shape_cast %60 : vector<1x64x64xbf16> to vector<64x64xbf16>
    %cst_55 = arith.constant dense<0.000000e+00> : vector<16x64xf32>
    %62 = tpu.matmul %59, %61, %cst_55 {dimension_numbers = #tpu.dot_dimension_numbers<[1], [0], [0], [1], [0, 0, 1, 1], [], []>} : vector<16x64xbf16>, vector<64x64xbf16>, vector<16x64xf32> -> vector<16x64xf32>
    %63 = arith.addf %55, %62 : vector<16x64xf32>
    %c7 = arith.constant 7 : index
    %c0_56 = arith.constant 0 : index
    %c0_57 = arith.constant 0 : index
    %64 = vector.load %arg4[%c7, %c0_56, %c0_57] : memref<9x16x16xbf16, #tpu.memory_space<vmem>>, vector<1x16x16xbf16>
    %65 = vector.shape_cast %64 : vector<1x16x16xbf16> to vector<16x16xbf16>
    %cst_58 = arith.constant dense<0.000000e+00> : vector<16x64xf32>
    %66 = tpu.matmul %65, %8, %cst_58 {dimension_numbers = #tpu.dot_dimension_numbers<[1], [0], [0], [1], [0, 0, 1, 1], [], []>} : vector<16x16xbf16>, vector<16x64xbf16>, vector<16x64xf32> -> vector<16x64xf32>
    %67 = arith.truncf %66 : vector<16x64xf32> to vector<16x64xbf16>
    %c7_59 = arith.constant 7 : index
    %c0_60 = arith.constant 0 : index
    %c0_61 = arith.constant 0 : index
    %68 = vector.load %arg5[%c7_59, %c0_60, %c0_61] : memref<9x64x64xbf16, #tpu.memory_space<vmem>>, vector<1x64x64xbf16>
    %69 = vector.shape_cast %68 : vector<1x64x64xbf16> to vector<64x64xbf16>
    %cst_62 = arith.constant dense<0.000000e+00> : vector<16x64xf32>
    %70 = tpu.matmul %67, %69, %cst_62 {dimension_numbers = #tpu.dot_dimension_numbers<[1], [0], [0], [1], [0, 0, 1, 1], [], []>} : vector<16x64xbf16>, vector<64x64xbf16>, vector<16x64xf32> -> vector<16x64xf32>
    %71 = arith.addf %63, %70 : vector<16x64xf32>
    %c8 = arith.constant 8 : index
    %c0_63 = arith.constant 0 : index
    %c0_64 = arith.constant 0 : index
    %72 = vector.load %arg4[%c8, %c0_63, %c0_64] : memref<9x16x16xbf16, #tpu.memory_space<vmem>>, vector<1x16x16xbf16>
    %73 = vector.shape_cast %72 : vector<1x16x16xbf16> to vector<16x16xbf16>
    %cst_65 = arith.constant dense<0.000000e+00> : vector<16x64xf32>
    %74 = tpu.matmul %73, %8, %cst_65 {dimension_numbers = #tpu.dot_dimension_numbers<[1], [0], [0], [1], [0, 0, 1, 1], [], []>} : vector<16x16xbf16>, vector<16x64xbf16>, vector<16x64xf32> -> vector<16x64xf32>
    %75 = arith.truncf %74 : vector<16x64xf32> to vector<16x64xbf16>
    %c8_66 = arith.constant 8 : index
    %c0_67 = arith.constant 0 : index
    %c0_68 = arith.constant 0 : index
    %76 = vector.load %arg5[%c8_66, %c0_67, %c0_68] : memref<9x64x64xbf16, #tpu.memory_space<vmem>>, vector<1x64x64xbf16>
    %77 = vector.shape_cast %76 : vector<1x64x64xbf16> to vector<64x64xbf16>
    %cst_69 = arith.constant dense<0.000000e+00> : vector<16x64xf32>
    %78 = tpu.matmul %75, %77, %cst_69 {dimension_numbers = #tpu.dot_dimension_numbers<[1], [0], [0], [1], [0, 0, 1, 1], [], []>} : vector<16x64xbf16>, vector<64x64xbf16>, vector<16x64xf32> -> vector<16x64xf32>
    %79 = arith.addf %71, %78 : vector<16x64xf32>
    %c0_70 = arith.constant 0 : index
    %c0_71 = arith.constant 0 : index
    %80 = vector.load %arg6[%c0_70, %c0_71] : memref<1x64xf32, #tpu.memory_space<vmem>>, vector<1x64xf32>
    %81 = vector.broadcast %80 : vector<1x64xf32> to vector<16x64xf32>
    %82 = arith.addf %79, %81 : vector<16x64xf32>
    %cst_72 = arith.constant 0.000000e+00 : f32
    %83 = vector.broadcast %cst_72 : f32 to vector<16x64xf32>
    %84 = arith.maximumf %82, %83 : vector<16x64xf32>
    %85 = arith.truncf %84 : vector<16x64xf32> to vector<16x64xbf16>
    %c0_73 = arith.constant 0 : index
    %c0_74 = arith.constant 0 : index
    %86 = vector.load %arg7[%c0_73, %c0_74] : memref<64x256xbf16, #tpu.memory_space<vmem>>, vector<64x256xbf16>
    %cst_75 = arith.constant dense<0.000000e+00> : vector<16x256xf32>
    %87 = tpu.matmul %85, %86, %cst_75 {dimension_numbers = #tpu.dot_dimension_numbers<[1], [0], [0], [1], [0, 0, 1, 1], [], []>} : vector<16x64xbf16>, vector<64x256xbf16>, vector<16x256xf32> -> vector<16x256xf32>
    %c0_76 = arith.constant 0 : index
    %c0_77 = arith.constant 0 : index
    %88 = vector.load %arg8[%c0_76, %c0_77] : memref<1x256xf32, #tpu.memory_space<vmem>>, vector<1x256xf32>
    %89 = vector.broadcast %88 : vector<1x256xf32> to vector<16x256xf32>
    %90 = arith.addf %87, %89 : vector<16x256xf32>
    %91 = arith.extf %0 : vector<16x256xbf16> to vector<16x256xf32>
    %92 = arith.addf %90, %91 : vector<16x256xf32>
    %cst_78 = arith.constant 0.000000e+00 : f32
    %93 = vector.broadcast %cst_78 : f32 to vector<16x256xf32>
    %94 = arith.maximumf %92, %93 : vector<16x256xf32>
    %95 = arith.truncf %94 : vector<16x256xf32> to vector<16x256xbf16>
    %c0_79 = arith.constant 0 : index
    %c0_80 = arith.constant 0 : index
    %96 = vector.load %arg9[%c0_79, %c0_80] : memref<16x256xbf16, #tpu.memory_space<vmem>>, vector<16x256xbf16>
    tpu.vector_store %arg9[%c0_79, %c0_80], %95 {strides = array<i32>} : memref<16x256xbf16, #tpu.memory_space<vmem>>, vector<16x256xbf16>,
    return
  }
  func.func @transform_0(%arg0: i32) -> (i32, i32) {
    %c0_i32 = arith.constant 0 : i32
    %c0_i32_0 = arith.constant 0 : i32
    return %arg0, %c0_i32 : i32, i32
  }
  func.func @transform_1(%arg0: i32) -> (i32, i32) {
    %c0_i32 = arith.constant 0 : i32
    %c0_i32_0 = arith.constant 0 : i32
    %c0_i32_1 = arith.constant 0 : i32
    return %c0_i32, %c0_i32_0 : i32, i32
  }
  func.func @transform_2(%arg0: i32) -> (i32, i32) {
    %c0_i32 = arith.constant 0 : i32
    %c0_i32_0 = arith.constant 0 : i32
    %c0_i32_1 = arith.constant 0 : i32
    return %c0_i32, %c0_i32_0 : i32, i32
  }
  func.func @transform_3(%arg0: i32) -> (i32, i32, i32) {
    %c0_i32 = arith.constant 0 : i32
    %c0_i32_0 = arith.constant 0 : i32
    %c0_i32_1 = arith.constant 0 : i32
    %c0_i32_2 = arith.constant 0 : i32
    return %c0_i32, %c0_i32_0, %c0_i32_1 : i32, i32, i32
  }
  func.func @transform_4(%arg0: i32) -> (i32, i32, i32) {
    %c0_i32 = arith.constant 0 : i32
    %c0_i32_0 = arith.constant 0 : i32
    %c0_i32_1 = arith.constant 0 : i32
    %c0_i32_2 = arith.constant 0 : i32
    return %c0_i32, %c0_i32_0, %c0_i32_1 : i32, i32, i32
  }
  func.func @transform_5(%arg0: i32) -> (i32, i32) {
    %c0_i32 = arith.constant 0 : i32
    %c0_i32_0 = arith.constant 0 : i32
    %c0_i32_1 = arith.constant 0 : i32
    return %c0_i32, %c0_i32_0 : i32, i32
  }
  func.func @transform_6(%arg0: i32) -> (i32, i32) {
    %c0_i32 = arith.constant 0 : i32
    %c0_i32_0 = arith.constant 0 : i32
    %c0_i32_1 = arith.constant 0 : i32
    return %c0_i32, %c0_i32_0 : i32, i32
  }
  func.func @transform_7(%arg0: i32) -> (i32, i32) {
    %c0_i32 = arith.constant 0 : i32
    %c0_i32_0 = arith.constant 0 : i32
    %c0_i32_1 = arith.constant 0 : i32
    return %c0_i32, %c0_i32_0 : i32, i32
  }
  func.func @transform_8(%arg0: i32) -> (i32, i32) {
    %c0_i32 = arith.constant 0 : i32
    %c0_i32_0 = arith.constant 0 : i32
    return %arg0, %c0_i32 : i32, i32
  }
}

</mosaic_0001>

<llo_original>
// kernel: _lambda_.15
$region0: #{_lambda_.15}
  #allocation0 [shape = 'u32[]', space=smem, size = 0x4, offset = 0x4, fixed_abs, tag = 'smem constant byte address 0x4 - core index']
  #allocation1 [shape = 'u32[144,128]{1,0:T(1,128)}', space=vmem, size = 0x12000, scoped, tag = 'internal scratch']
  %s0 = inlined_call_operand.vmem [shape: bf16[128,128], index: 0, kind: input, shape index: {}]
  %s1 = inlined_call_operand.vmem [shape: bf16[128,64], index: 1, kind: input, shape index: {}]
  %s2 = inlined_call_operand.vmem [shape: f32[1,64], index: 2, kind: input, shape index: {}]
  %s3 = inlined_call_operand.vmem [shape: bf16[9,16,64], index: 3, kind: input, shape index: {}]
  %s4 = inlined_call_operand.vmem [shape: bf16[9,64,64], index: 4, kind: input, shape index: {}]
  %s5 = inlined_call_operand.vmem [shape: f32[1,64], index: 5, kind: input, shape index: {}]
  %s6 = inlined_call_operand.vmem [shape: bf16[64,256], index: 6, kind: input, shape index: {}]
  %s7 = inlined_call_operand.vmem [shape: f32[1,256], index: 7, kind: input, shape index: {}]
  %s8 = inlined_call_operand.vmem [shape: bf16[128,256], index: 8, kind: input, shape index: {}]
  %s9 = inlined_call_operand.vmem [shape: f32[1,256], index: 9, kind: input, shape index: {}]
  %s10 = inlined_call_operand.vmem [shape: bf16[32,256], index: 10, kind: output, shape index: {}]
  %s11 = sld [smem:[#allocation0]]
  $region73: #{_lambda_.15} parent=0
    _
  %s13 = ssub.s32 1, %s11
  %s14 = scalar_select 0, %s13, %s11
  loop: start=0, step=1, limit=4
  $region2: #{_lambda_.15} parent=0 // loop_pre_header
    _
  $region3: #{_lambda_.15} parent=0 // loop_header
    %s16 = sphi 0, %s20
    %p17 = scmp.ge.s32.totalorder %s16, 4
    %s26 = sphi 0, %s28
    %s29 = sphi 0, %s26
    %s30 = sphi 0, %s29
    %s46 = sphi 0, %s30
    %s50 = sphi 0, %s50
    %s52 = sphi 0, %s50
    %s53 = sphi 0, %s52
    %s67 = sphi 0, %s53
    %s71 = sphi 0, %s71
    %s73 = sphi 0, %s71
    %s74 = sphi 0, %s73
    %s88 = sphi 0, %s74
    %s92 = sphi 0, %s92
    %s94 = sphi 0, %s92
    %s95 = sphi 0, %s94
    %s109 = sphi 0, %s95
    %s113 = sphi 0, %s113
    %s115 = sphi 0, %s113
    %s116 = sphi 0, %s115
    %s130 = sphi 0, %s116
    %s134 = sphi 0, %s134
    %s136 = sphi 0, %s134
    %s137 = sphi 0, %s136
    %s151 = sphi 0, %s137
    %s155 = sphi 0, %s155
    %s157 = sphi 0, %s155
    %s158 = sphi 0, %s157
    %s172 = sphi 0, %s158
    %s176 = sphi 0, %s176
    %s178 = sphi 0, %s176
    %s179 = sphi 0, %s178
    %s193 = sphi 0, %s179
    %s197 = sphi 0, %s197
    %s199 = sphi 0, %s197
    %s200 = sphi 0, %s199
    %s214 = sphi 0, %s200
    %s218 = sphi 0, %s218
    %s220 = sphi 0, %s218
    %s221 = sphi 0, %s220
    %s235 = sphi 0, %s221
    %s241 = sphi 0, %s243
    %s244 = sphi 0, %s241
    %s245 = sphi 0, %s244
    %s261 = sphi 0, %s245
  $region4: #{_lambda_.15} parent=0 // loop_header_branch
    %19 = sbr.rel (%p17) target = $region8
  $region5: #{_lambda_.15} parent=0 // loop_body
    %s21 = ssub.s32 %s16, 1
    %s22 = ssub.s32 %s16, 2
    %s23 = sadd.s32 %s16, 1
    %s24 = ssub.s32 %s16, %s23
    %p25 = scmp.eq.s32.totalorder %s24, 0
    %s27 = sadd.s32 %s26, 1
    %s28 = scalar_select %p25, %s26, %s27
    %p31 = pneg %p25
    %p32 = scmp.eq.s32.totalorder %s16, 1
    %p33 = por %p31, %p32
    %p34 = scmp.ne.s32.totalorder %s26, %s29
    %p35 = scmp.eq.s32.totalorder %s16, 0
    %p36 = por %p34, %p35
    %p37 = scmp.ne.s32.totalorder %s26, %s29
    %p38 = scmp.eq.s32.totalorder %s21, 1
    %p39 = por %p37, %p38
    %p40 = scmp.ne.s32.totalorder %s29, %s30
    %p41 = scmp.eq.s32.totalorder %s21, 0
    %p42 = por %p40, %p41
    %p43 = scmp.ne.s32.totalorder %s29, %s30
    %p44 = scmp.eq.s32.totalorder %s22, 1
    %p45 = por %p43, %p44
    %p47 = scmp.ne.s32.totalorder %s30, %s46
    %p48 = scmp.eq.s32.totalorder %s22, 0
    %p49 = por %p47, %p48
    %s51 = sadd.s32 %s50, 1
    %p54 = scmp.eq.s32.totalorder %s16, 1
    %p55 = scmp.ne.s32.totalorder %s50, %s52
    %p56 = scmp.eq.s32.totalorder %s16, 0
    %p57 = por %p55, %p56
    %p58 = scmp.ne.s32.totalorder %s50, %s52
    %p59 = scmp.eq.s32.totalorder %s21, 1
    %p60 = por %p58, %p59
    %p61 = scmp.ne.s32.totalorder %s52, %s53
    %p62 = scmp.eq.s32.totalorder %s21, 0
    %p63 = por %p61, %p62
    %p64 = scmp.ne.s32.totalorder %s52, %s53
    %p65 = scmp.eq.s32.totalorder %s22, 1
    %p66 = por %p64, %p65
    %p68 = scmp.ne.s32.totalorder %s53, %s67
    %p69 = scmp.eq.s32.totalorder %s22, 0
    %p70 = por %p68, %p69
    %s72 = sadd.s32 %s71, 1
    %p75 = scmp.eq.s32.totalorder %s16, 1
    %p76 = scmp.ne.s32.totalorder %s71, %s73
    %p77 = scmp.eq.s32.totalorder %s16, 0
    %p78 = por %p76, %p77
    %p79 = scmp.ne.s32.totalorder %s71, %s73
    %p80 = scmp.eq.s32.totalorder %s21, 1
    %p81 = por %p79, %p80
    %p82 = scmp.ne.s32.totalorder %s73, %s74
    %p83 = scmp.eq.s32.totalorder %s21, 0
    %p84 = por %p82, %p83
    %p85 = scmp.ne.s32.totalorder %s73, %s74
    %p86 = scmp.eq.s32.totalorder %s22, 1
    %p87 = por %p85, %p86
    %p89 = scmp.ne.s32.totalorder %s74, %s88
    %p90 = scmp.eq.s32.totalorder %s22, 0
    %p91 = por %p89, %p90
    %s93 = sadd.s32 %s92, 1
    %p96 = scmp.eq.s32.totalorder %s16, 1
    %p97 = scmp.ne.s32.totalorder %s92, %s94
    %p98 = scmp.eq.s32.totalorder %s16, 0
    %p99 = por %p97, %p98
    %p100 = scmp.ne.s32.totalorder %s92, %s94
    %p101 = scmp.eq.s32.totalorder %s21, 1
    %p102 = por %p100, %p101
    %p103 = scmp.ne.s32.totalorder %s94, %s95
    %p104 = scmp.eq.s32.totalorder %s21, 0
    %p105 = por %p103, %p104
    %p106 = scmp.ne.s32.totalorder %s94, %s95
    %p107 = scmp.eq.s32.totalorder %s22, 1
    %p108 = por %p106, %p107
    %p110 = scmp.ne.s32.totalorder %s95, %s109
    %p111 = scmp.eq.s32.totalorder %s22, 0
    %p112 = por %p110, %p111
    %s114 = sadd.s32 %s113, 1
    %p117 = scmp.eq.s32.totalorder %s16, 1
    %p118 = scmp.ne.s32.totalorder %s113, %s115
    %p119 = scmp.eq.s32.totalorder %s16, 0
    %p120 = por %p118, %p119
    %p121 = scmp.ne.s32.totalorder %s113, %s115
    %p122 = scmp.eq.s32.totalorder %s21, 1
    %p123 = por %p121, %p122
    %p124 = scmp.ne.s32.totalorder %s115, %s116
    %p125 = scmp.eq.s32.totalorder %s21, 0
    %p126 = por %p124, %p125
    %p127 = scmp.ne.s32.totalorder %s115, %s116
    %p128 = scmp.eq.s32.totalorder %s22, 1
    %p129 = por %p127, %p128
    %p131 = scmp.ne.s32.totalorder %s116, %s130
    %p132 = scmp.eq.s32.totalorder %s22, 0
    %p133 = por %p131, %p132
    %s135 = sadd.s32 %s134, 1
    %p138 = scmp.eq.s32.totalorder %s16, 1
    %p139 = scmp.ne.s32.totalorder %s134, %s136
    %p140 = scmp.eq.s32.totalorder %s16, 0
    %p141 = por %p139, %p140
    %p142 = scmp.ne.s32.totalorder %s134, %s136
    %p143 = scmp.eq.s32.totalorder %s21, 1
    %p144 = por %p142, %p143
    %p145 = scmp.ne.s32.totalorder %s136, %s137
    %p146 = scmp.eq.s32.totalorder %s21, 0
    %p147 = por %p145, %p146
    %p148 = scmp.ne.s32.totalorder %s136, %s137
    %p149 = scmp.eq.s32.totalorder %s22, 1
    %p150 = por %p148, %p149
    %p152 = scmp.ne.s32.totalorder %s137, %s151
    %p153 = scmp.eq.s32.totalorder %s22, 0
    %p154 = por %p152, %p153
    %s156 = sadd.s32 %s155, 1
    %p159 = scmp.eq.s32.totalorder %s16, 1
    %p160 = scmp.ne.s32.totalorder %s155, %s157
    %p161 = scmp.eq.s32.totalorder %s16, 0
    %p162 = por %p160, %p161
    %p163 = scmp.ne.s32.totalorder %s155, %s157
    %p164 = scmp.eq.s32.totalorder %s21, 1
    %p165 = por %p163, %p164
    %p166 = scmp.ne.s32.totalorder %s157, %s158
    %p167 = scmp.eq.s32.totalorder %s21, 0
    %p168 = por %p166, %p167
    %p169 = scmp.ne.s32.totalorder %s157, %s158
    %p170 = scmp.eq.s32.totalorder %s22, 1
    %p171 = por %p169, %p170
    %p173 = scmp.ne.s32.totalorder %s158, %s172
    %p174 = scmp.eq.s32.totalorder %s22, 0
    %p175 = por %p173, %p174
    %s177 = sadd.s32 %s176, 1
    %p180 = scmp.eq.s32.totalorder %s16, 1
    %p181 = scmp.ne.s32.totalorder %s176, %s178
    %p182 = scmp.eq.s32.totalorder %s16, 0
    %p183 = por %p181, %p182
    %p184 = scmp.ne.s32.totalorder %s176, %s178
    %p185 = scmp.eq.s32.totalorder %s21, 1
    %p186 = por %p184, %p185
    %p187 = scmp.ne.s32.totalorder %s178, %s179
    %p188 = scmp.eq.s32.totalorder %s21, 0
    %p189 = por %p187, %p188
    %p190 = scmp.ne.s32.totalorder %s178, %s179
    %p191 = scmp.eq.s32.totalorder %s22, 1
    %p192 = por %p190, %p191
    %p194 = scmp.ne.s32.totalorder %s179, %s193
    %p195 = scmp.eq.s32.totalorder %s22, 0
    %p196 = por %p194, %p195
    %s198 = sadd.s32 %s197, 1
    %p201 = scmp.eq.s32.totalorder %s16, 1
    %p202 = scmp.ne.s32.totalorder %s197, %s199
    %p203 = scmp.eq.s32.totalorder %s16, 0
    %p204 = por %p202, %p203
    %p205 = scmp.ne.s32.totalorder %s197, %s199
    %p206 = scmp.eq.s32.totalorder %s21, 1
    %p207 = por %p205, %p206
    %p208 = scmp.ne.s32.totalorder %s199, %s200
    %p209 = scmp.eq.s32.totalorder %s21, 0
    %p210 = por %p208, %p209
    %p211 = scmp.ne.s32.totalorder %s199, %s200
    %p212 = scmp.eq.s32.totalorder %s22, 1
    %p213 = por %p211, %p212
    %p215 = scmp.ne.s32.totalorder %s200, %s214
    %p216 = scmp.eq.s32.totalorder %s22, 0
    %p217 = por %p215, %p216
    %s219 = sadd.s32 %s218, 1
    %p222 = scmp.eq.s32.totalorder %s16, 1
    %p223 = scmp.ne.s32.totalorder %s218, %s220
    %p224 = scmp.eq.s32.totalorder %s16, 0
    %p225 = por %p223, %p224
    %p226 = scmp.ne.s32.totalorder %s218, %s220
    %p227 = scmp.eq.s32.totalorder %s21, 1
    %p228 = por %p226, %p227
    %p229 = scmp.ne.s32.totalorder %s220, %s221
    %p230 = scmp.eq.s32.totalorder %s21, 0
    %p231 = por %p229, %p230
    %p232 = scmp.ne.s32.totalorder %s220, %s221
    %p233 = scmp.eq.s32.totalorder %s22, 1
    %p234 = por %p232, %p233
    %p236 = scmp.ne.s32.totalorder %s221, %s235
    %p237 = scmp.eq.s32.totalorder %s22, 0
    %p238 = por %p236, %p237
    %s239 = ssub.s32 %s16, %s23
    %p240 = scmp.eq.s32.totalorder %s239, 0
    %s242 = sadd.s32 %s241, 1
    %s243 = scalar_select %p240, %s241, %s242
    %p246 = pneg %p240
    %p247 = scmp.eq.s32.totalorder %s16, 1
    %p248 = por %p246, %p247
    %p249 = scmp.ne.s32.totalorder %s241, %s244
    %p250 = scmp.eq.s32.totalorder %s16, 0
    %p251 = por %p249, %p250
    %p252 = scmp.ne.s32.totalorder %s241, %s244
    %p253 = scmp.eq.s32.totalorder %s21, 1
    %p254 = por %p252, %p253
    %p255 = scmp.ne.s32.totalorder %s244, %s245
    %p256 = scmp.eq.s32.totalorder %s21, 0
    %p257 = por %p255, %p256
    %p258 = scmp.ne.s32.totalorder %s244, %s245
    %p259 = scmp.eq.s32.totalorder %s22, 1
    %p260 = por %p258, %p259
    %p262 = scmp.ne.s32.totalorder %s245, %s261
    %p263 = scmp.eq.s32.totalorder %s22, 0
    %p264 = por %p262, %p263
    %p265 = scmp.le.s32.totalorder 1, %s16
    %p266 = scmp.lt.s32.totalorder %s16, 3
    %p267 = pnand %p265, %p266
    %p268 = pneg %p267
    // Predicated region
    $region9: #{_lambda_.15} parent=5 // pred_check
      _
    $region10: #{_lambda_.15} parent=5 // pred_check_branch
      %270 = sbr.rel (%p267) target = $region12
    $region11: #{_lambda_.15} parent=5 // pred_region
      %s271 = ssub.s32 %s16, 1
      // Predicated region
      $region13: #{_lambda_.15} parent=11 // pred_check
        %p272 = pneg %p63
      $region14: #{_lambda_.15} parent=11 // pred_check_branch
        %274 = sbr.rel (%p272) target = $region16
      $region15: #{_lambda_.15} parent=11 // pred_region
        _
      $region16: #{_lambda_.15} parent=11 // pred_fallthru
        _
      // Predicated region
      $region17: #{_lambda_.15} parent=11 // pred_check
        %p275 = pneg %p84
      $region18: #{_lambda_.15} parent=11 // pred_check_branch
        %277 = sbr.rel (%p275) target = $region20
      $region19: #{_lambda_.15} parent=11 // pred_region
        _
      $region20: #{_lambda_.15} parent=11 // pred_fallthru
        _
      // Predicated region
      $region21: #{_lambda_.15} parent=11 // pred_check
        %p278 = pneg %p105
      $region22: #{_lambda_.15} parent=11 // pred_check_branch
        %280 = sbr.rel (%p278) target = $region24
      $region23: #{_lambda_.15} parent=11 // pred_region
        _
      $region24: #{_lambda_.15} parent=11 // pred_fallthru
        _
      // Predicated region
      $region25: #{_lambda_.15} parent=11 // pred_check
        %p281 = pneg %p126
      $region26: #{_lambda_.15} parent=11 // pred_check_branch
        %283 = sbr.rel (%p281) target = $region28
      $region27: #{_lambda_.15} parent=11 // pred_region
        _
      $region28: #{_lambda_.15} parent=11 // pred_fallthru
        _
      // Predicated region
      $region29: #{_lambda_.15} parent=11 // pred_check
        %p284 = pneg %p147
      $region30: #{_lambda_.15} parent=11 // pred_check_branch
        %286 = sbr.rel (%p284) target = $region32
      $region31: #{_lambda_.15} parent=11 // pred_region
        _
      $region32: #{_lambda_.15} parent=11 // pred_fallthru
        _
      // Predicated region
      $region33: #{_lambda_.15} parent=11 // pred_check
        %p287 = pneg %p168
      $region34: #{_lambda_.15} parent=11 // pred_check_branch
        %289 = sbr.rel (%p287) target = $region36
      $region35: #{_lambda_.15} parent=11 // pred_region
        _
      $region36: #{_lambda_.15} parent=11 // pred_fallthru
        _
      // Predicated region
      $region37: #{_lambda_.15} parent=11 // pred_check
        %p290 = pneg %p189
      $region38: #{_lambda_.15} parent=11 // pred_check_branch
        %292 = sbr.rel (%p290) target = $region40
      $region39: #{_lambda_.15} parent=11 // pred_region
        _
      $region40: #{_lambda_.15} parent=11 // pred_fallthru
        _
      // Predicated region
      $region41: #{_lambda_.15} parent=11 // pred_check
        %p293 = pneg %p210
      $region42: #{_lambda_.15} parent=11 // pred_check_branch
        %295 = sbr.rel (%p293) target = $region44
      $region43: #{_lambda_.15} parent=11 // pred_region
        _
      $region44: #{_lambda_.15} parent=11 // pred_fallthru
        _
      // Predicated region
      $region45: #{_lambda_.15} parent=11 // pred_check
        %p296 = pneg %p231
      $region46: #{_lambda_.15} parent=11 // pred_check_branch
        %298 = sbr.rel (%p296) target = $region48
      $region47: #{_lambda_.15} parent=11 // pred_region
        _
      $region48: #{_lambda_.15} parent=11 // pred_fallthru
        _
    $region12: #{_lambda_.15} parent=5 // pred_fallthru
      _
    %p299 = scmp.lt.s32.totalorder %s16, 2
    // Predicated region
    $region49: #{_lambda_.15} parent=5 // pred_check
      %p300 = pneg %p299
    $region50: #{_lambda_.15} parent=5 // pred_check_branch
      %302 = sbr.rel (%p300) target = $region52
    $region51: #{_lambda_.15} parent=5 // pred_region
      // Predicated region
      $region53: #{_lambda_.15} parent=51 // pred_check
        %p303 = pneg %p36
      $region54: #{_lambda_.15} parent=51 // pred_check_branch
        %305 = sbr.rel (%p303) target = $region56
      $region55: #{_lambda_.15} parent=51 // pred_region
        %s306 = smul.u32 8, %s16
        %p307 = scmp.lt.s32.totalorder %s306, 15
        %s308 = scalar_select %p307, %s306, 15
        %s309 = smul.addr %s308, 4
        %s310 = scalar_lea.vmem %s0, %s309
        %s311 = smul.u32 8, %s16
      $region56: #{_lambda_.15} parent=51 // pred_fallthru
        _
    $region52: #{_lambda_.15} parent=5 // pred_fallthru
      _
    %p312 = scmp.le.s32.totalorder 1, %s16
    %p313 = scmp.lt.s32.totalorder %s16, 3
    %p314 = pnand %p312, %p313
    %p315 = pneg %p314
    // Predicated region
    $region57: #{_lambda_.15} parent=5 // pred_check
      _
    $region58: #{_lambda_.15} parent=5 // pred_check_branch
      %317 = sbr.rel (%p314) target = $region60
    $region59: #{_lambda_.15} parent=5 // pred_region
      %s318 = ssub.s32 %s16, 1
      %s319 = smul.u32 8, %s21
      %p320 = scmp.lt.s32.totalorder %s319, 15
      %s321 = scalar_select %p320, %s319, 15
      %s322 = smul.addr %s321, 4
      %s323 = scalar_lea.vmem %s0, %s322
      %p324 = pneg %p42
      %p325 = pneg %p39
      %p326 = pneg %p63
      %p327 = pneg %p60
      %p328 = pneg %p84
      %p329 = pneg %p81
      %p330 = pneg %p105
      %p331 = pneg %p102
      %p332 = pneg %p126
      %p333 = pneg %p123
      %p334 = pneg %p147
      %p335 = pneg %p144
      %p336 = pneg %p168
      %p337 = pneg %p165
      %p338 = pneg %p189
      %p339 = pneg %p186
      %p340 = pneg %p210
      %p341 = pneg %p207
      %p342 = pneg %p231
      %p343 = pneg %p228
      %p344 = pneg %p257
      %p345 = pneg %p254
      %s346 = smul.u32 2, %s21
      %p347 = scmp.lt.s32.totalorder %s346, 3
      %s348 = scalar_select %p347, %s346, 3
      %s349 = smul.addr %s348, 2
      %s350 = smul.addr %s349, 4
      %s351 = scalar_lea.vmem %s10, %s350
      %s352 = smul.u32 8, %s21
      %p353 = scmp.lt.s32.totalorder %s352, 15
      %s354 = scalar_select %p353, %s352, 15
      %s355 = smul.addr %s354, 4
      %s356 = scalar_lea.vmem %s0, %s355
      %s357 = smul.u32 8, %s21
      %s358 = smul.u32 2, %s21
      %p359 = scmp.lt.s32.totalorder %s358, 3
      %s360 = scalar_select %p359, %s358, 3
      %s361 = smul.addr %s360, 2
      %s362 = smul.addr %s361, 4
      %s363 = scalar_lea.vmem %s10, %s362
      %s364 = smul.u32 2, %s21
      %v366 = vld [vmem:[%s356] sm:$0xf]
      %v367 = vld [vmem:[%s356 + $0x4] sm:$0xf]
      %v368 = vld [vmem:[%s356 + $0x8] sm:$0xf]
      %v369 = vld [vmem:[%s356 + $0xc] sm:$0xf]
      %v370 = vld [vmem:[%s356 + $0x10] sm:$0xf]
      %v371 = vld [vmem:[%s356 + $0x14] sm:$0xf]
      %v372 = vld [vmem:[%s356 + $0x18] sm:$0xf]
      %v373 = vld [vmem:[%s356 + $0x1c] sm:$0xf]
      %v374 = vld [vmem:[%s1] sm:$0xf]
      %v375 = vld [vmem:[%s1 + $0x4] sm:$0xf]
      %v376 = vld [vmem:[%s1 + $0x8] sm:$0xf]
      %v377 = vld [vmem:[%s1 + $0xc] sm:$0xf]
      %v378 = vld [vmem:[%s1 + $0x10] sm:$0xf]
      %v379 = vld [vmem:[%s1 + $0x14] sm:$0xf]
      %v380 = vld [vmem:[%s1 + $0x18] sm:$0xf]
      %v381 = vld [vmem:[%s1 + $0x1c] sm:$0xf]
      %v382 = vld [vmem:[%s1 + $0x20] sm:$0xf]
      %v383 = vld [vmem:[%s1 + $0x24] sm:$0xf]
      %v384 = vld [vmem:[%s1 + $0x28] sm:$0xf]
      %v385 = vld [vmem:[%s1 + $0x2c] sm:$0xf]
      %v386 = vld [vmem:[%s1 + $0x30] sm:$0xf]
      %v387 = vld [vmem:[%s1 + $0x34] sm:$0xf]
      %v388 = vld [vmem:[%s1 + $0x38] sm:$0xf]
      %v389 = vld [vmem:[%s1 + $0x3c] sm:$0xf]
      %v390 = vld [vmem:[%s2] sm:$0x1]
      %v392 = vlaneseq
      %v393 = vshrl.u32 %v392, 7
      %v394 = vsub.s32 0, %v393
      %v395 = vrot.slane %v390, %v394
      %v405 = vunpack.c.l.b16 %v366
      %v406 = vunpack.c.l.b16 %v367
      %v407 = vunpack.c.l.b16 %v368
      %v408 = vunpack.c.l.b16 %v369
      %v409 = vunpack.c.l.b16 %v370
      %v410 = vunpack.c.l.b16 %v371
      %v411 = vunpack.c.l.b16 %v372
      %v412 = vunpack.c.l.b16 %v373
      %v413 = vpack.c.b16 %v406, %v405
      %v414 = vpack.c.b16 %v408, %v407
      %v415 = vpack.c.b16 %v410, %v409
      %v416 = vpack.c.b16 %v412, %v411
      %v437 = vunpack.c.l.b16 %v374
      %v438 = vunpack.c.l.b16 %v375
      %v439 = vunpack.c.l.b16 %v376
      %v440 = vunpack.c.l.b16 %v377
      %v441 = vunpack.c.l.b16 %v378
      %v442 = vunpack.c.l.b16 %v379
      %v443 = vunpack.c.l.b16 %v380
      %v444 = vunpack.c.l.b16 %v381
      %v445 = vunpack.c.l.b16 %v382
      %v446 = vunpack.c.l.b16 %v383
      %v447 = vunpack.c.l.b16 %v384
      %v448 = vunpack.c.l.b16 %v385
      %v449 = vunpack.c.l.b16 %v386
      %v450 = vunpack.c.l.b16 %v387
      %v451 = vunpack.c.l.b16 %v388
      %v452 = vunpack.c.l.b16 %v389
      %v453 = vpack.c.b16 %v438, %v437
      %v454 = vpack.c.b16 %v440, %v439
      %v455 = vpack.c.b16 %v442, %v441
      %v456 = vpack.c.b16 %v444, %v443
      %v457 = vpack.c.b16 %v446, %v445
      %v458 = vpack.c.b16 %v448, %v447
      %v459 = vpack.c.b16 %v450, %v449
      %v460 = vpack.c.b16 %v452, %v451
      %469 = vmatprep.subr.bf16.mxu0 0
      %470 = vmatpush1.bf16.msra.mxu0 %v460
      %471 = vmatprep.subr.bf16.mxu0 0
      %472 = vmatpush1.bf16.msra.mxu0 %v459
      %473 = vmatprep.subr.bf16.mxu0 0
      %474 = vmatpush1.bf16.msra.mxu0 %v458
      %475 = vmatprep.subr.bf16.mxu0 0
      %476 = vmatpush1.bf16.msra.mxu0 %v457
      %477 = vmatprep.subr.bf16.mxu0 0
      %478 = vmatpush1.bf16.msra.mxu0 %v456
      %479 = vmatprep.subr.bf16.mxu0 0
      %480 = vmatpush1.bf16.msra.mxu0 %v455
      %481 = vmatprep.subr.bf16.mxu0 0
      %482 = vmatpush1.bf16.msra.mxu0 %v454
      %483 = vmatprep.subr.bf16.mxu0 0
      %484 = vmatpush1.bf16.msra.mxu0 %v453
      %485 = vmatprep.subr.bf16.mxu0 0
      %486 = vmatpush2.bf16.msra.mxu0 0
      %487 = vmatprep.subr.bf16.mxu0 0
      %488 = vmatpush2.bf16.msra.mxu0 0
      %489 = vmatprep.subr.bf16.mxu0 0
      %490 = vmatpush2.bf16.msra.mxu0 0
      %491 = vmatprep.subr.bf16.mxu0 0
      %492 = vmatpush2.bf16.msra.mxu0 0
      %493 = vmatprep.subr.bf16.mxu0 0
      %494 = vmatpush2.bf16.msra.mxu0 0
      %495 = vmatprep.subr.bf16.mxu0 0
      %496 = vmatpush2.bf16.msra.mxu0 0
      %497 = vmatprep.subr.bf16.mxu0 0
      %498 = vmatpush2.bf16.msra.mxu0 0
      %499 = vmatprep.subr.bf16.mxu0 0
      %500 = vmatpush2.bf16.msra.mxu0 0
      %501 = vmatprep.mubr.bf16.mxu0 0
      %502 = vmatmul.mubr.bf16.gmra.mxu0 %v413
      %v503 = vpop.f32.mrf.mxu0
      %v504 = vadd.f32 %v395, %v503
      %v505 = vpop.f32.mrf.mxu0
      %v506 = vpop.f32.mrf.mxu0
      %v507 = vadd.f32 %v395, %v506
      %v508 = vpop.f32.mrf.mxu0
      %509 = vmatprep.mubr.bf16.mxu0 0
      %510 = vmatmul.mubr.bf16.gmra.mxu0 %v414
      %v511 = vpop.f32.mrf.mxu0
      %v512 = vadd.f32 %v395, %v511
      %v513 = vpop.f32.mrf.mxu0
      %v514 = vpop.f32.mrf.mxu0
      %v515 = vadd.f32 %v395, %v514
      %v516 = vpop.f32.mrf.mxu0
      %517 = vmatprep.mubr.bf16.mxu0 0
      %518 = vmatmul.mubr.bf16.gmra.mxu0 %v415
      %v519 = vpop.f32.mrf.mxu0
      %v520 = vadd.f32 %v395, %v519
      %v521 = vpop.f32.mrf.mxu0
      %v522 = vpop.f32.mrf.mxu0
      %v523 = vadd.f32 %v395, %v522
      %v524 = vpop.f32.mrf.mxu0
      %525 = vmatprep.mubr.bf16.mxu0 0
      %526 = vmatmul.mubr.bf16.gmra.mxu0 %v416
      %v527 = vpop.f32.mrf.mxu0
      %v528 = vadd.f32 %v395, %v527
      %v529 = vpop.f32.mrf.mxu0
      %v530 = vpop.f32.mrf.mxu0
      %v531 = vadd.f32 %v395, %v530
      %v532 = vpop.f32.mrf.mxu0
      %533 = vdwg.mxu0
      %v534 = vmax.f32 %v504, 0.0
      %v535 = vmax.f32 %v507, 0.0
      %v536 = vmax.f32 %v512, 0.0
      %v537 = vmax.f32 %v515, 0.0
      %v538 = vmax.f32 %v520, 0.0
      %v539 = vmax.f32 %v523, 0.0
      %v540 = vmax.f32 %v528, 0.0
      %v541 = vmax.f32 %v531, 0.0
      %v542 = vpack.c.bf16 %v535, %v534
      %v543 = vpack.c.bf16 %v537, %v536
      %v544 = vpack.c.bf16 %v539, %v538
      %v545 = vpack.c.bf16 %v541, %v540
      %v546 = vld [vmem:[%s3] sm:$0xf]
      %v547 = vld [vmem:[%s3 + $0x4] sm:$0xf]
      %v550 = vunpack.c.l.b16 %v546
      %v551 = vunpack.c.l.b16 %v547
      %v552 = vpack.c.b16 %v551, %v550
      %vm553 = vcmask 523264
      %v555 = vsel %vm553, %v552, 0
      %557 = vmatprep.subr.bf16.mxu0 0
      %558 = vmatpush1.bf16.msra.mxu0 0
      %559 = vmatprep.subr.bf16.mxu0 0
      %560 = vmatpush1.bf16.msra.mxu0 0
      %561 = vmatprep.subr.bf16.mxu0 0
      %562 = vmatpush1.bf16.msra.mxu0 0
      %563 = vmatprep.subr.bf16.mxu0 0
      %564 = vmatpush1.bf16.msra.mxu0 0
      %565 = vmatprep.subr.bf16.mxu0 0
      %566 = vmatpush1.bf16.msra.mxu0 %v545
      %567 = vmatprep.subr.bf16.mxu0 0
      %568 = vmatpush1.bf16.msra.mxu0 %v544
      %569 = vmatprep.subr.bf16.mxu0 0
      %570 = vmatpush1.bf16.msra.mxu0 %v543
      %571 = vmatprep.subr.bf16.mxu0 0
      %572 = vmatpush1.bf16.msra.mxu0 %v542
      %573 = vmatprep.subr.bf16.mxu0 0
      %574 = vmatpush2.bf16.msra.mxu0 0
      %575 = vmatprep.subr.bf16.mxu0 0
      %576 = vmatpush2.bf16.msra.mxu0 0
      %577 = vmatprep.subr.bf16.mxu0 0
      %578 = vmatpush2.bf16.msra.mxu0 0
      %579 = vmatprep.subr.bf16.mxu0 0
      %580 = vmatpush2.bf16.msra.mxu0 0
      %581 = vmatprep.subr.bf16.mxu0 0
      %582 = vmatpush2.bf16.msra.mxu0 0
      %583 = vmatprep.subr.bf16.mxu0 0
      %584 = vmatpush2.bf16.msra.mxu0 0
      %585 = vmatprep.subr.bf16.mxu0 0
      %586 = vmatpush2.bf16.msra.mxu0 0
      %587 = vmatprep.subr.bf16.mxu0 0
      %588 = vmatpush2.bf16.msra.mxu0 0
      %589 = vmatprep.mubr.bf16.mxu0 0
      %590 = vmatmul.mubr.bf16.gmra.mxu0 %v555
      %v591 = vpop.f32.mrf.mxu0
      %v592 = vadd.f32 0.0, %v591
      %v593 = vpop.f32.mrf.mxu0
      %v594 = vpop.f32.mrf.mxu0
      %v595 = vadd.f32 0.0, %v594
      %v596 = vpop.f32.mrf.mxu0
      %597 = vdwg.mxu0
      %v598 = vpack.c.bf16 %v595, %v592
      %v599 = vld [vmem:[%s4] sm:$0xf]
      %v600 = vld [vmem:[%s4 + $0x4] sm:$0xf]
      %v601 = vld [vmem:[%s4 + $0x8] sm:$0xf]
      %v602 = vld [vmem:[%s4 + $0xc] sm:$0xf]
      %v603 = vld [vmem:[%s4 + $0x10] sm:$0xf]
      %v604 = vld [vmem:[%s4 + $0x14] sm:$0xf]
      %v605 = vld [vmem:[%s4 + $0x18] sm:$0xf]
      %v606 = vld [vmem:[%s4 + $0x1c] sm:$0xf]
      %s607 = scalar_lea.vmem %s3, 8
      %v608 = vld [vmem:[%s607] sm:$0xf]
      %v609 = vld [vmem:[%s607 + $0x4] sm:$0xf]
      %v612 = vunpack.c.l.b16 %v608
      %v613 = vunpack.c.l.b16 %v609
      %v614 = vpack.c.b16 %v613, %v612
      %v616 = vsel %vm553, %v614, 0
      %618 = vmatprep.subr.bf16.mxu0 0
      %619 = vmatpush1.bf16.msra.mxu0 0
      %620 = vmatprep.subr.bf16.mxu0 0
      %621 = vmatpush1.bf16.msra.mxu0 0
      %622 = vmatprep.subr.bf16.mxu0 0
      %623 = vmatpush1.bf16.msra.mxu0 0
      %624 = vmatprep.subr.bf16.mxu0 0
      %625 = vmatpush1.bf16.msra.mxu0 0
      %626 = vmatprep.subr.bf16.mxu0 0
      %627 = vmatpush1.bf16.msra.mxu0 %v545
      %628 = vmatprep.subr.bf16.mxu0 0
      %629 = vmatpush1.bf16.msra.mxu0 %v544
      %630 = vmatprep.subr.bf16.mxu0 0
      %631 = vmatpush1.bf16.msra.mxu0 %v543
      %632 = vmatprep.subr.bf16.mxu0 0
      %633 = vmatpush1.bf16.msra.mxu0 %v542
      %634 = vmatprep.subr.bf16.mxu0 0
      %635 = vmatpush2.bf16.msra.mxu0 0
      %636 = vmatprep.subr.bf16.mxu0 0
      %637 = vmatpush2.bf16.msra.mxu0 0
      %638 = vmatprep.subr.bf16.mxu0 0
      %639 = vmatpush2.bf16.msra.mxu0 0
      %640 = vmatprep.subr.bf16.mxu0 0
      %641 = vmatpush2.bf16.msra.mxu0 0
      %642 = vmatprep.subr.bf16.mxu0 0
      %643 = vmatpush2.bf16.msra.mxu0 0
      %644 = vmatprep.subr.bf16.mxu0 0
      %645 = vmatpush2.bf16.msra.mxu0 0
      %646 = vmatprep.subr.bf16.mxu0 0
      %647 = vmatpush2.bf16.msra.mxu0 0
      %648 = vmatprep.subr.bf16.mxu0 0
      %649 = vmatpush2.bf16.msra.mxu0 0
      %650 = vmatprep.mubr.bf16.mxu0 0
      %651 = vmatmul.mubr.bf16.gmra.mxu0 %v616
      %v652 = vpop.f32.mrf.mxu0
      %v653 = vadd.f32 0.0, %v652
      %v654 = vpop.f32.mrf.mxu0
      %v655 = vpop.f32.mrf.mxu0
      %v656 = vadd.f32 0.0, %v655
      %v657 = vpop.f32.mrf.mxu0
      %658 = vdwg.mxu0
      %v659 = vpack.c.bf16 %v656, %v653
      %s660 = scalar_lea.vmem %s4, 32
      %v661 = vld [vmem:[%s660] sm:$0xf]
      %v662 = vld [vmem:[%s660 + $0x4] sm:$0xf]
      %v663 = vld [vmem:[%s660 + $0x8] sm:$0xf]
      %v664 = vld [vmem:[%s660 + $0xc] sm:$0xf]
      %v665 = vld [vmem:[%s660 + $0x10] sm:$0xf]
      %v666 = vld [vmem:[%s660 + $0x14] sm:$0xf]
      %v667 = vld [vmem:[%s660 + $0x18] sm:$0xf]
      %v668 = vld [vmem:[%s660 + $0x1c] sm:$0xf]
      %v677 = vunpack.c.l.b16 %v661
      %v678 = vunpack.c.l.b16 %v662
      %v679 = vunpack.c.l.b16 %v663
      %v680 = vunpack.c.l.b16 %v664
      %v681 = vunpack.c.l.b16 %v665
      %v682 = vunpack.c.l.b16 %v666
      %v683 = vunpack.c.l.b16 %v667
      %v684 = vunpack.c.l.b16 %v668
      %v685 = vpack.c.b16 %v678, %v677
      %v686 = vpack.c.b16 %v680, %v679
      %v687 = vpack.c.b16 %v682, %v681
      %v688 = vpack.c.b16 %v684, %v683
      %v694 = vsel %vm553, %v659, 0
      %696 = vmatprep.subr.bf16.mxu0 0
      %697 = vmatpush1.bf16.msra.mxu0 0
      %698 = vmatprep.subr.bf16.mxu0 0
      %699 = vmatpush1.bf16.msra.mxu0 0
      %700 = vmatprep.subr.bf16.mxu0 0
      %701 = vmatpush1.bf16.msra.mxu0 0
      %702 = vmatprep.subr.bf16.mxu0 0
      %703 = vmatpush1.bf16.msra.mxu0 0
      %704 = vmatprep.subr.bf16.mxu0 0
      %705 = vmatpush1.bf16.msra.mxu0 %v688
      %706 = vmatprep.subr.bf16.mxu0 0
      %707 = vmatpush1.bf16.msra.mxu0 %v687
      %708 = vmatprep.subr.bf16.mxu0 0
      %709 = vmatpush1.bf16.msra.mxu0 %v686
      %710 = vmatprep.subr.bf16.mxu0 0
      %711 = vmatpush1.bf16.msra.mxu0 %v685
      %712 = vmatprep.subr.bf16.mxu0 0
      %713 = vmatpush2.bf16.msra.mxu0 0
      %714 = vmatprep.subr.bf16.mxu0 0
      %715 = vmatpush2.bf16.msra.mxu0 0
      %716 = vmatprep.subr.bf16.mxu0 0
      %717 = vmatpush2.bf16.msra.mxu0 0
      %718 = vmatprep.subr.bf16.mxu0 0
      %719 = vmatpush2.bf16.msra.mxu0 0
      %720 = vmatprep.subr.bf16.mxu0 0
      %721 = vmatpush2.bf16.msra.mxu0 0
      %722 = vmatprep.subr.bf16.mxu0 0
      %723 = vmatpush2.bf16.msra.mxu0 0
      %724 = vmatprep.subr.bf16.mxu0 0
      %725 = vmatpush2.bf16.msra.mxu0 0
      %726 = vmatprep.subr.bf16.mxu0 0
      %727 = vmatpush2.bf16.msra.mxu0 0
      %728 = vmatprep.mubr.bf16.mxu0 0
      %729 = vmatmul.mubr.bf16.gmra.mxu0 %v694
      %v730 = vpop.f32.mrf.mxu0
      %v731 = vadd.f32 0.0, %v730
      %v732 = vpop.f32.mrf.mxu0
      %v733 = vpop.f32.mrf.mxu0
      %v734 = vadd.f32 0.0, %v733
      %v735 = vpop.f32.mrf.mxu0
      %736 = vdwg.mxu0
      %v745 = vunpack.c.l.b16 %v599
      %v746 = vunpack.c.l.b16 %v600
      %v747 = vunpack.c.l.b16 %v601
      %v748 = vunpack.c.l.b16 %v602
      %v749 = vunpack.c.l.b16 %v603
      %v750 = vunpack.c.l.b16 %v604
      %v751 = vunpack.c.l.b16 %v605
      %v752 = vunpack.c.l.b16 %v606
      %v753 = vpack.c.b16 %v746, %v745
      %v754 = vpack.c.b16 %v748, %v747
      %v755 = vpack.c.b16 %v750, %v749
      %v756 = vpack.c.b16 %v752, %v751
      %v762 = vsel %vm553, %v598, 0
      %764 = vmatprep.subr.bf16.mxu0 0
      %765 = vmatpush1.bf16.msra.mxu0 0
      %766 = vmatprep.subr.bf16.mxu0 0
      %767 = vmatpush1.bf16.msra.mxu0 0
      %768 = vmatprep.subr.bf16.mxu0 0
      %769 = vmatpush1.bf16.msra.mxu0 0
      %770 = vmatprep.subr.bf16.mxu0 0
      %771 = vmatpush1.bf16.msra.mxu0 0
      %772 = vmatprep.subr.bf16.mxu0 0
      %773 = vmatpush1.bf16.msra.mxu0 %v756
      %774 = vmatprep.subr.bf16.mxu0 0
      %775 = vmatpush1.bf16.msra.mxu0 %v755
      %776 = vmatprep.subr.bf16.mxu0 0
      %777 = vmatpush1.bf16.msra.mxu0 %v754
      %778 = vmatprep.subr.bf16.mxu0 0
      %779 = vmatpush1.bf16.msra.mxu0 %v753
      %780 = vmatprep.subr.bf16.mxu0 0
      %781 = vmatpush2.bf16.msra.mxu0 0
      %782 = vmatprep.subr.bf16.mxu0 0
      %783 = vmatpush2.bf16.msra.mxu0 0
      %784 = vmatprep.subr.bf16.mxu0 0
      %785 = vmatpush2.bf16.msra.mxu0 0
      %786 = vmatprep.subr.bf16.mxu0 0
      %787 = vmatpush2.bf16.msra.mxu0 0
      %788 = vmatprep.subr.bf16.mxu0 0
      %789 = vmatpush2.bf16.msra.mxu0 0
      %790 = vmatprep.subr.bf16.mxu0 0
      %791 = vmatpush2.bf16.msra.mxu0 0
      %792 = vmatprep.subr.bf16.mxu0 0
      %793 = vmatpush2.bf16.msra.mxu0 0
      %794 = vmatprep.subr.bf16.mxu0 0
      %795 = vmatpush2.bf16.msra.mxu0 0
      %796 = vmatprep.mubr.bf16.mxu0 0
      %797 = vmatmul.mubr.bf16.gmra.mxu0 %v762
      %v798 = vpop.f32.mrf.mxu0
      %v799 = vadd.f32 %v731, %v798
      %v800 = vpop.f32.mrf.mxu0
      %v801 = vpop.f32.mrf.mxu0
      %v802 = vadd.f32 %v734, %v801
      %v803 = vpop.f32.mrf.mxu0
      %804 = vdwg.mxu0
      %s805 = scalar_lea.vmem %s3, 16
      %v806 = vld [vmem:[%s805] sm:$0xf]
      %v807 = vld [vmem:[%s805 + $0x4] sm:$0xf]
      %v810 = vunpack.c.l.b16 %v806
      %v811 = vunpack.c.l.b16 %v807
      %v812 = vpack.c.b16 %v811, %v810
      %v814 = vsel %vm553, %v812, 0
      %816 = vmatprep.subr.bf16.mxu0 0
      %817 = vmatpush1.bf16.msra.mxu0 0
      %818 = vmatprep.subr.bf16.mxu0 0
      %819 = vmatpush1.bf16.msra.mxu0 0
      %820 = vmatprep.subr.bf16.mxu0 0
      %821 = vmatpush1.bf16.msra.mxu0 0
      %822 = vmatprep.subr.bf16.mxu0 0
      %823 = vmatpush1.bf16.msra.mxu0 0
      %824 = vmatprep.subr.bf16.mxu0 0
      %825 = vmatpush1.bf16.msra.mxu0 %v545
      %826 = vmatprep.subr.bf16.mxu0 0
      %827 = vmatpush1.bf16.msra.mxu0 %v544
      %828 = vmatprep.subr.bf16.mxu0 0
      %829 = vmatpush1.bf16.msra.mxu0 %v543
      %830 = vmatprep.subr.bf16.mxu0 0
      %831 = vmatpush1.bf16.msra.mxu0 %v542
      %832 = vmatprep.subr.bf16.mxu0 0
      %833 = vmatpush2.bf16.msra.mxu0 0
      %834 = vmatprep.subr.bf16.mxu0 0
      %835 = vmatpush2.bf16.msra.mxu0 0
      %836 = vmatprep.subr.bf16.mxu0 0
      %837 = vmatpush2.bf16.msra.mxu0 0
      %838 = vmatprep.subr.bf16.mxu0 0
      %839 = vmatpush2.bf16.msra.mxu0 0
      %840 = vmatprep.subr.bf16.mxu0 0
      %841 = vmatpush2.bf16.msra.mxu0 0
      %842 = vmatprep.subr.bf16.mxu0 0
      %843 = vmatpush2.bf16.msra.mxu0 0
      %844 = vmatprep.subr.bf16.mxu0 0
      %845 = vmatpush2.bf16.msra.mxu0 0
      %846 = vmatprep.subr.bf16.mxu0 0
      %847 = vmatpush2.bf16.msra.mxu0 0
      %848 = vmatprep.mubr.bf16.mxu0 0
      %849 = vmatmul.mubr.bf16.gmra.mxu0 %v814
      %v850 = vpop.f32.mrf.mxu0
      %v851 = vadd.f32 0.0, %v850
      %v852 = vpop.f32.mrf.mxu0
      %v853 = vpop.f32.mrf.mxu0
      %v854 = vadd.f32 0.0, %v853
      %v855 = vpop.f32.mrf.mxu0
      %856 = vdwg.mxu0
      %v857 = vpack.c.bf16 %v854, %v851
      %s858 = scalar_lea.vmem %s4, 64
      %v859 = vld [vmem:[%s858] sm:$0xf]
      %v860 = vld [vmem:[%s858 + $0x4] sm:$0xf]
      %v861 = vld [vmem:[%s858 + $0x8] sm:$0xf]
      %v862 = vld [vmem:[%s858 + $0xc] sm:$0xf]
      %v863 = vld [vmem:[%s858 + $0x10] sm:$0xf]
      %v864 = vld [vmem:[%s858 + $0x14] sm:$0xf]
      %v865 = vld [vmem:[%s858 + $0x18] sm:$0xf]
      %v866 = vld [vmem:[%s858 + $0x1c] sm:$0xf]
      %v875 = vunpack.c.l.b16 %v859
      %v876 = vunpack.c.l.b16 %v860
      %v877 = vunpack.c.l.b16 %v861
      %v878 = vunpack.c.l.b16 %v862
      %v879 = vunpack.c.l.b16 %v863
      %v880 = vunpack.c.l.b16 %v864
      %v881 = vunpack.c.l.b16 %v865
      %v882 = vunpack.c.l.b16 %v866
      %v883 = vpack.c.b16 %v876, %v875
      %v884 = vpack.c.b16 %v878, %v877
      %v885 = vpack.c.b16 %v880, %v879
      %v886 = vpack.c.b16 %v882, %v881
      %v892 = vsel %vm553, %v857, 0
      %894 = vmatprep.subr.bf16.mxu0 0
      %895 = vmatpush1.bf16.msra.mxu0 0
      %896 = vmatprep.subr.bf16.mxu0 0
      %897 = vmatpush1.bf16.msra.mxu0 0
      %898 = vmatprep.subr.bf16.mxu0 0
      %899 = vmatpush1.bf16.msra.mxu0 0
      %900 = vmatprep.subr.bf16.mxu0 0
      %901 = vmatpush1.bf16.msra.mxu0 0
      %902 = vmatprep.subr.bf16.mxu0 0
      %903 = vmatpush1.bf16.msra.mxu0 %v886
      %904 = vmatprep.subr.bf16.mxu0 0
      %905 = vmatpush1.bf16.msra.mxu0 %v885
      %906 = vmatprep.subr.bf16.mxu0 0
      %907 = vmatpush1.bf16.msra.mxu0 %v884
      %908 = vmatprep.subr.bf16.mxu0 0
      %909 = vmatpush1.bf16.msra.mxu0 %v883
      %910 = vmatprep.subr.bf16.mxu0 0
      %911 = vmatpush2.bf16.msra.mxu0 0
      %912 = vmatprep.subr.bf16.mxu0 0
      %913 = vmatpush2.bf16.msra.mxu0 0
      %914 = vmatprep.subr.bf16.mxu0 0
      %915 = vmatpush2.bf16.msra.mxu0 0
      %916 = vmatprep.subr.bf16.mxu0 0
      %917 = vmatpush2.bf16.msra.mxu0 0
      %918 = vmatprep.subr.bf16.mxu0 0
      %919 = vmatpush2.bf16.msra.mxu0 0
      %920 = vmatprep.subr.bf16.mxu0 0
      %921 = vmatpush2.bf16.msra.mxu0 0
      %922 = vmatprep.subr.bf16.mxu0 0
      %923 = vmatpush2.bf16.msra.mxu0 0
      %924 = vmatprep.subr.bf16.mxu0 0
      %925 = vmatpush2.bf16.msra.mxu0 0
      %926 = vmatprep.mubr.bf16.mxu0 0
      %927 = vmatmul.mubr.bf16.gmra.mxu0 %v892
      %v928 = vpop.f32.mrf.mxu0
      %v929 = vadd.f32 0.0, %v928
      %v930 = vpop.f32.mrf.mxu0
      %v931 = vpop.f32.mrf.mxu0
      %v932 = vadd.f32 0.0, %v931
      %v933 = vpop.f32.mrf.mxu0
      %934 = vdwg.mxu0
      %v935 = vadd.f32 %v799, %v929
      %v936 = vadd.f32 %v802, %v932
      %s937 = scalar_lea.vmem %s3, 24
      %v938 = vld [vmem:[%s937] sm:$0xf]
      %v939 = vld [vmem:[%s937 + $0x4] sm:$0xf]
      %v942 = vunpack.c.l.b16 %v938
      %v943 = vunpack.c.l.b16 %v939
      %v944 = vpack.c.b16 %v943, %v942
      %v946 = vsel %vm553, %v944, 0
      %948 = vmatprep.subr.bf16.mxu0 0
      %949 = vmatpush1.bf16.msra.mxu0 0
      %950 = vmatprep.subr.bf16.mxu0 0
      %951 = vmatpush1.bf16.msra.mxu0 0
      %952 = vmatprep.subr.bf16.mxu0 0
      %953 = vmatpush1.bf16.msra.mxu0 0
      %954 = vmatprep.subr.bf16.mxu0 0
      %955 = vmatpush1.bf16.msra.mxu0 0
      %956 = vmatprep.subr.bf16.mxu0 0
      %957 = vmatpush1.bf16.msra.mxu0 %v545
      %958 = vmatprep.subr.bf16.mxu0 0
      %959 = vmatpush1.bf16.msra.mxu0 %v544
      %960 = vmatprep.subr.bf16.mxu0 0
      %961 = vmatpush1.bf16.msra.mxu0 %v543
      %962 = vmatprep.subr.bf16.mxu0 0
      %963 = vmatpush1.bf16.msra.mxu0 %v542
      %964 = vmatprep.subr.bf16.mxu0 0
      %965 = vmatpush2.bf16.msra.mxu0 0
      %966 = vmatprep.subr.bf16.mxu0 0
      %967 = vmatpush2.bf16.msra.mxu0 0
      %968 = vmatprep.subr.bf16.mxu0 0
      %969 = vmatpush2.bf16.msra.mxu0 0
      %970 = vmatprep.subr.bf16.mxu0 0
      %971 = vmatpush2.bf16.msra.mxu0 0
      %972 = vmatprep.subr.bf16.mxu0 0
      %973 = vmatpush2.bf16.msra.mxu0 0
      %974 = vmatprep.subr.bf16.mxu0 0
      %975 = vmatpush2.bf16.msra.mxu0 0
      %976 = vmatprep.subr.bf16.mxu0 0
      %977 = vmatpush2.bf16.msra.mxu0 0
      %978 = vmatprep.subr.bf16.mxu0 0
      %979 = vmatpush2.bf16.msra.mxu0 0
      %980 = vmatprep.mubr.bf16.mxu0 0
      %981 = vmatmul.mubr.bf16.gmra.mxu0 %v946
      %v982 = vpop.f32.mrf.mxu0
      %v983 = vadd.f32 0.0, %v982
      %v984 = vpop.f32.mrf.mxu0
      %v985 = vpop.f32.mrf.mxu0
      %v986 = vadd.f32 0.0, %v985
      %v987 = vpop.f32.mrf.mxu0
      %988 = vdwg.mxu0
      %v989 = vpack.c.bf16 %v986, %v983
      %s990 = scalar_lea.vmem %s4, 96
      %v991 = vld [vmem:[%s990] sm:$0xf]
      %v992 = vld [vmem:[%s990 + $0x4] sm:$0xf]
      %v993 = vld [vmem:[%s990 + $0x8] sm:$0xf]
      %v994 = vld [vmem:[%s990 + $0xc] sm:$0xf]
      %v995 = vld [vmem:[%s990 + $0x10] sm:$0xf]
      %v996 = vld [vmem:[%s990 + $0x14] sm:$0xf]
      %v997 = vld [vmem:[%s990 + $0x18] sm:$0xf]
      %v998 = vld [vmem:[%s990 + $0x1c] sm:$0xf]
      %v1007 = vunpack.c.l.b16 %v991
      %v1008 = vunpack.c.l.b16 %v992
      %v1009 = vunpack.c.l.b16 %v993
      %v1010 = vunpack.c.l.b16 %v994
      %v1011 = vunpack.c.l.b16 %v995
      %v1012 = vunpack.c.l.b16 %v996
      %v1013 = vunpack.c.l.b16 %v997
      %v1014 = vunpack.c.l.b16 %v998
      %v1015 = vpack.c.b16 %v1008, %v1007
      %v1016 = vpack.c.b16 %v1010, %v1009
      %v1017 = vpack.c.b16 %v1012, %v1011
      %v1018 = vpack.c.b16 %v1014, %v1013
      %v1024 = vsel %vm553, %v989, 0
      %1026 = vmatprep.subr.bf16.mxu0 0
      %1027 = vmatpush1.bf16.msra.mxu0 0
      %1028 = vmatprep.subr.bf16.mxu0 0
      %1029 = vmatpush1.bf16.msra.mxu0 0
      %1030 = vmatprep.subr.bf16.mxu0 0
      %1031 = vmatpush1.bf16.msra.mxu0 0
      %1032 = vmatprep.subr.bf16.mxu0 0
      %1033 = vmatpush1.bf16.msra.mxu0 0
      %1034 = vmatprep.subr.bf16.mxu0 0
      %1035 = vmatpush1.bf16.msra.mxu0 %v1018
      %1036 = vmatprep.subr.bf16.mxu0 0
      %1037 = vmatpush1.bf16.msra.mxu0 %v1017
      %1038 = vmatprep.subr.bf16.mxu0 0
      %1039 = vmatpush1.bf16.msra.mxu0 %v1016
      %1040 = vmatprep.subr.bf16.mxu0 0
      %1041 = vmatpush1.bf16.msra.mxu0 %v1015
      %1042 = vmatprep.subr.bf16.mxu0 0
      %1043 = vmatpush2.bf16.msra.mxu0 0
      %1044 = vmatprep.subr.bf16.mxu0 0
      %1045 = vmatpush2.bf16.msra.mxu0 0
      %1046 = vmatprep.subr.bf16.mxu0 0
      %1047 = vmatpush2.bf16.msra.mxu0 0
      %1048 = vmatprep.subr.bf16.mxu0 0
      %1049 = vmatpush2.bf16.msra.mxu0 0
      %1050 = vmatprep.subr.bf16.mxu0 0
      %1051 = vmatpush2.bf16.msra.mxu0 0
      %1052 = vmatprep.subr.bf16.mxu0 0
      %1053 = vmatpush2.bf16.msra.mxu0 0
      %1054 = vmatprep.subr.bf16.mxu0 0
      %1055 = vmatpush2.bf16.msra.mxu0 0
      %1056 = vmatprep.subr.bf16.mxu0 0
      %1057 = vmatpush2.bf16.msra.mxu0 0
      %1058 = vmatprep.mubr.bf16.mxu0 0
      %1059 = vmatmul.mubr.bf16.gmra.mxu0 %v1024
      %v1060 = vpop.f32.mrf.mxu0
      %v1061 = vadd.f32 0.0, %v1060
      %v1062 = vpop.f32.mrf.mxu0
      %v1063 = vpop.f32.mrf.mxu0
      %v1064 = vadd.f32 0.0, %v1063
      %v1065 = vpop.f32.mrf.mxu0
      %1066 = vdwg.mxu0
      %v1067 = vadd.f32 %v935, %v1061
      %v1068 = vadd.f32 %v936, %v1064
      %s1069 = scalar_lea.vmem %s3, 32
      %v1070 = vld [vmem:[%s1069] sm:$0xf]
      %v1071 = vld [vmem:[%s1069 + $0x4] sm:$0xf]
      %v1074 = vunpack.c.l.b16 %v1070
      %v1075 = vunpack.c.l.b16 %v1071
      %v1076 = vpack.c.b16 %v1075, %v1074
      %v1078 = vsel %vm553, %v1076, 0
      %1080 = vmatprep.subr.bf16.mxu0 0
      %1081 = vmatpush1.bf16.msra.mxu0 0
      %1082 = vmatprep.subr.bf16.mxu0 0
      %1083 = vmatpush1.bf16.msra.mxu0 0
      %1084 = vmatprep.subr.bf16.mxu0 0
      %1085 = vmatpush1.bf16.msra.mxu0 0
      %1086 = vmatprep.subr.bf16.mxu0 0
      %1087 = vmatpush1.bf16.msra.mxu0 0
      %1088 = vmatprep.subr.bf16.mxu0 0
      %1089 = vmatpush1.bf16.msra.mxu0 %v545
      %1090 = vmatprep.subr.bf16.mxu0 0
      %1091 = vmatpush1.bf16.msra.mxu0 %v544
      %1092 = vmatprep.subr.bf16.mxu0 0
      %1093 = vmatpush1.bf16.msra.mxu0 %v543
      %1094 = vmatprep.subr.bf16.mxu0 0
      %1095 = vmatpush1.bf16.msra.mxu0 %v542
      %1096 = vmatprep.subr.bf16.mxu0 0
      %1097 = vmatpush2.bf16.msra.mxu0 0
      %1098 = vmatprep.subr.bf16.mxu0 0
      %1099 = vmatpush2.bf16.msra.mxu0 0
      %1100 = vmatprep.subr.bf16.mxu0 0
      %1101 = vmatpush2.bf16.msra.mxu0 0
      %1102 = vmatprep.subr.bf16.mxu0 0
      %1103 = vmatpush2.bf16.msra.mxu0 0
      %1104 = vmatprep.subr.bf16.mxu0 0
      %1105 = vmatpush2.bf16.msra.mxu0 0
      %1106 = vmatprep.subr.bf16.mxu0 0
      %1107 = vmatpush2.bf16.msra.mxu0 0
      %1108 = vmatprep.subr.bf16.mxu0 0
      %1109 = vmatpush2.bf16.msra.mxu0 0
      %1110 = vmatprep.subr.bf16.mxu0 0
      %1111 = vmatpush2.bf16.msra.mxu0 0
      %1112 = vmatprep.mubr.bf16.mxu0 0
      %1113 = vmatmul.mubr.bf16.gmra.mxu0 %v1078
      %v1114 = vpop.f32.mrf.mxu0
      %v1115 = vadd.f32 0.0, %v1114
      %v1116 = vpop.f32.mrf.mxu0
      %v1117 = vpop.f32.mrf.mxu0
      %v1118 = vadd.f32 0.0, %v1117
      %v1119 = vpop.f32.mrf.mxu0
      %1120 = vdwg.mxu0
      %v1121 = vpack.c.bf16 %v1118, %v1115
      %s1122 = scalar_lea.vmem %s4, 128
      %v1123 = vld [vmem:[%s1122] sm:$0xf]
      %v1124 = vld [vmem:[%s1122 + $0x4] sm:$0xf]
      %v1125 = vld [vmem:[%s1122 + $0x8] sm:$0xf]
      %v1126 = vld [vmem:[%s1122 + $0xc] sm:$0xf]
      %v1127 = vld [vmem:[%s1122 + $0x10] sm:$0xf]
      %v1128 = vld [vmem:[%s1122 + $0x14] sm:$0xf]
      %v1129 = vld [vmem:[%s1122 + $0x18] sm:$0xf]
      %v1130 = vld [vmem:[%s1122 + $0x1c] sm:$0xf]
      %v1139 = vunpack.c.l.b16 %v1123
      %v1140 = vunpack.c.l.b16 %v1124
      %v1141 = vunpack.c.l.b16 %v1125
      %v1142 = vunpack.c.l.b16 %v1126
      %v1143 = vunpack.c.l.b16 %v1127
      %v1144 = vunpack.c.l.b16 %v1128
      %v1145 = vunpack.c.l.b16 %v1129
      %v1146 = vunpack.c.l.b16 %v1130
      %v1147 = vpack.c.b16 %v1140, %v1139
      %v1148 = vpack.c.b16 %v1142, %v1141
      %v1149 = vpack.c.b16 %v1144, %v1143
      %v1150 = vpack.c.b16 %v1146, %v1145
      %v1156 = vsel %vm553, %v1121, 0
      %1158 = vmatprep.subr.bf16.mxu0 0
      %1159 = vmatpush1.bf16.msra.mxu0 0
      %1160 = vmatprep.subr.bf16.mxu0 0
      %1161 = vmatpush1.bf16.msra.mxu0 0
      %1162 = vmatprep.subr.bf16.mxu0 0
      %1163 = vmatpush1.bf16.msra.mxu0 0
      %1164 = vmatprep.subr.bf16.mxu0 0
      %1165 = vmatpush1.bf16.msra.mxu0 0
      %1166 = vmatprep.subr.bf16.mxu0 0
      %1167 = vmatpush1.bf16.msra.mxu0 %v1150
      %1168 = vmatprep.subr.bf16.mxu0 0
      %1169 = vmatpush1.bf16.msra.mxu0 %v1149
      %1170 = vmatprep.subr.bf16.mxu0 0
      %1171 = vmatpush1.bf16.msra.mxu0 %v1148
      %1172 = vmatprep.subr.bf16.mxu0 0
      %1173 = vmatpush1.bf16.msra.mxu0 %v1147
      %1174 = vmatprep.subr.bf16.mxu0 0
      %1175 = vmatpush2.bf16.msra.mxu0 0
      %1176 = vmatprep.subr.bf16.mxu0 0
      %1177 = vmatpush2.bf16.msra.mxu0 0
      %1178 = vmatprep.subr.bf16.mxu0 0
      %1179 = vmatpush2.bf16.msra.mxu0 0
      %1180 = vmatprep.subr.bf16.mxu0 0
      %1181 = vmatpush2.bf16.msra.mxu0 0
      %1182 = vmatprep.subr.bf16.mxu0 0
      %1183 = vmatpush2.bf16.msra.mxu0 0
      %1184 = vmatprep.subr.bf16.mxu0 0
      %1185 = vmatpush2.bf16.msra.mxu0 0
      %1186 = vmatprep.subr.bf16.mxu0 0
      %1187 = vmatpush2.bf16.msra.mxu0 0
      %1188 = vmatprep.subr.bf16.mxu0 0
      %1189 = vmatpush2.bf16.msra.mxu0 0
      %1190 = vmatprep.mubr.bf16.mxu0 0
      %1191 = vmatmul.mubr.bf16.gmra.mxu0 %v1156
      %v1192 = vpop.f32.mrf.mxu0
      %v1193 = vadd.f32 0.0, %v1192
      %v1194 = vpop.f32.mrf.mxu0
      %v1195 = vpop.f32.mrf.mxu0
      %v1196 = vadd.f32 0.0, %v1195
      %v1197 = vpop.f32.mrf.mxu0
      %1198 = vdwg.mxu0
      %v1199 = vadd.f32 %v1067, %v1193
      %v1200 = vadd.f32 %v1068, %v1196
      %s1201 = scalar_lea.vmem %s3, 40
      %v1202 = vld [vmem:[%s1201] sm:$0xf]
      %v1203 = vld [vmem:[%s1201 + $0x4] sm:$0xf]
      %v1206 = vunpack.c.l.b16 %v1202
      %v1207 = vunpack.c.l.b16 %v1203
      %v1208 = vpack.c.b16 %v1207, %v1206
      %v1210 = vsel %vm553, %v1208, 0
      %1212 = vmatprep.subr.bf16.mxu0 0
      %1213 = vmatpush1.bf16.msra.mxu0 0
      %1214 = vmatprep.subr.bf16.mxu0 0
      %1215 = vmatpush1.bf16.msra.mxu0 0
      %1216 = vmatprep.subr.bf16.mxu0 0
      %1217 = vmatpush1.bf16.msra.mxu0 0
      %1218 = vmatprep.subr.bf16.mxu0 0
      %1219 = vmatpush1.bf16.msra.mxu0 0
      %1220 = vmatprep.subr.bf16.mxu0 0
      %1221 = vmatpush1.bf16.msra.mxu0 %v545
      %1222 = vmatprep.subr.bf16.mxu0 0
      %1223 = vmatpush1.bf16.msra.mxu0 %v544
      %1224 = vmatprep.subr.bf16.mxu0 0
      %1225 = vmatpush1.bf16.msra.mxu0 %v543
      %1226 = vmatprep.subr.bf16.mxu0 0
      %1227 = vmatpush1.bf16.msra.mxu0 %v542
      %1228 = vmatprep.subr.bf16.mxu0 0
      %1229 = vmatpush2.bf16.msra.mxu0 0
      %1230 = vmatprep.subr.bf16.mxu0 0
      %1231 = vmatpush2.bf16.msra.mxu0 0
      %1232 = vmatprep.subr.bf16.mxu0 0
      %1233 = vmatpush2.bf16.msra.mxu0 0
      %1234 = vmatprep.subr.bf16.mxu0 0
      %1235 = vmatpush2.bf16.msra.mxu0 0
      %1236 = vmatprep.subr.bf16.mxu0 0
      %1237 = vmatpush2.bf16.msra.mxu0 0
      %1238 = vmatprep.subr.bf16.mxu0 0
      %1239 = vmatpush2.bf16.msra.mxu0 0
      %1240 = vmatprep.subr.bf16.mxu0 0
      %1241 = vmatpush2.bf16.msra.mxu0 0
      %1242 = vmatprep.subr.bf16.mxu0 0
      %1243 = vmatpush2.bf16.msra.mxu0 0
      %1244 = vmatprep.mubr.bf16.mxu0 0
      %1245 = vmatmul.mubr.bf16.gmra.mxu0 %v1210
      %v1246 = vpop.f32.mrf.mxu0
      %v1247 = vadd.f32 0.0, %v1246
      %v1248 = vpop.f32.mrf.mxu0
      %v1249 = vpop.f32.mrf.mxu0
      %v1250 = vadd.f32 0.0, %v1249
      %v1251 = vpop.f32.mrf.mxu0
      %1252 = vdwg.mxu0
      %v1253 = vpack.c.bf16 %v1250, %v1247
      %s1254 = scalar_lea.vmem %s4, 160
      %v1255 = vld [vmem:[%s1254] sm:$0xf]
      %v1256 = vld [vmem:[%s1254 + $0x4] sm:$0xf]
      %v1257 = vld [vmem:[%s1254 + $0x8] sm:$0xf]
      %v1258 = vld [vmem:[%s1254 + $0xc] sm:$0xf]
      %v1259 = vld [vmem:[%s1254 + $0x10] sm:$0xf]
      %v1260 = vld [vmem:[%s1254 + $0x14] sm:$0xf]
      %v1261 = vld [vmem:[%s1254 + $0x18] sm:$0xf]
      %v1262 = vld [vmem:[%s1254 + $0x1c] sm:$0xf]
      %v1271 = vunpack.c.l.b16 %v1255
      %v1272 = vunpack.c.l.b16 %v1256
      %v1273 = vunpack.c.l.b16 %v1257
      %v1274 = vunpack.c.l.b16 %v1258
      %v1275 = vunpack.c.l.b16 %v1259
      %v1276 = vunpack.c.l.b16 %v1260
      %v1277 = vunpack.c.l.b16 %v1261
      %v1278 = vunpack.c.l.b16 %v1262
      %v1279 = vpack.c.b16 %v1272, %v1271
      %v1280 = vpack.c.b16 %v1274, %v1273
      %v1281 = vpack.c.b16 %v1276, %v1275
      %v1282 = vpack.c.b16 %v1278, %v1277
      %v1288 = vsel %vm553, %v1253, 0
      %1290 = vmatprep.subr.bf16.mxu0 0
      %1291 = vmatpush1.bf16.msra.mxu0 0
      %1292 = vmatprep.subr.bf16.mxu0 0
      %1293 = vmatpush1.bf16.msra.mxu0 0
      %1294 = vmatprep.subr.bf16.mxu0 0
      %1295 = vmatpush1.bf16.msra.mxu0 0
      %1296 = vmatprep.subr.bf16.mxu0 0
      %1297 = vmatpush1.bf16.msra.mxu0 0
      %1298 = vmatprep.subr.bf16.mxu0 0
      %1299 = vmatpush1.bf16.msra.mxu0 %v1282
      %1300 = vmatprep.subr.bf16.mxu0 0
      %1301 = vmatpush1.bf16.msra.mxu0 %v1281
      %1302 = vmatprep.subr.bf16.mxu0 0
      %1303 = vmatpush1.bf16.msra.mxu0 %v1280
      %1304 = vmatprep.subr.bf16.mxu0 0
      %1305 = vmatpush1.bf16.msra.mxu0 %v1279
      %1306 = vmatprep.subr.bf16.mxu0 0
      %1307 = vmatpush2.bf16.msra.mxu0 0
      %1308 = vmatprep.subr.bf16.mxu0 0
      %1309 = vmatpush2.bf16.msra.mxu0 0
      %1310 = vmatprep.subr.bf16.mxu0 0
      %1311 = vmatpush2.bf16.msra.mxu0 0
      %1312 = vmatprep.subr.bf16.mxu0 0
      %1313 = vmatpush2.bf16.msra.mxu0 0
      %1314 = vmatprep.subr.bf16.mxu0 0
      %1315 = vmatpush2.bf16.msra.mxu0 0
      %1316 = vmatprep.subr.bf16.mxu0 0
      %1317 = vmatpush2.bf16.msra.mxu0 0
      %1318 = vmatprep.subr.bf16.mxu0 0
      %1319 = vmatpush2.bf16.msra.mxu0 0
      %1320 = vmatprep.subr.bf16.mxu0 0
      %1321 = vmatpush2.bf16.msra.mxu0 0
      %1322 = vmatprep.mubr.bf16.mxu0 0
      %1323 = vmatmul.mubr.bf16.gmra.mxu0 %v1288
      %v1324 = vpop.f32.mrf.mxu0
      %v1325 = vadd.f32 0.0, %v1324
      %v1326 = vpop.f32.mrf.mxu0
      %v1327 = vpop.f32.mrf.mxu0
      %v1328 = vadd.f32 0.0, %v1327
      %v1329 = vpop.f32.mrf.mxu0
      %1330 = vdwg.mxu0
      %v1331 = vadd.f32 %v1199, %v1325
      %v1332 = vadd.f32 %v1200, %v1328
      %s1333 = scalar_lea.vmem %s3, 48
      %v1334 = vld [vmem:[%s1333] sm:$0xf]
      %v1335 = vld [vmem:[%s1333 + $0x4] sm:$0xf]
      %v1338 = vunpack.c.l.b16 %v1334
      %v1339 = vunpack.c.l.b16 %v1335
      %v1340 = vpack.c.b16 %v1339, %v1338
      %v1342 = vsel %vm553, %v1340, 0
      %1344 = vmatprep.subr.bf16.mxu0 0
      %1345 = vmatpush1.bf16.msra.mxu0 0
      %1346 = vmatprep.subr.bf16.mxu0 0
      %1347 = vmatpush1.bf16.msra.mxu0 0
      %1348 = vmatprep.subr.bf16.mxu0 0
      %1349 = vmatpush1.bf16.msra.mxu0 0
      %1350 = vmatprep.subr.bf16.mxu0 0
      %1351 = vmatpush1.bf16.msra.mxu0 0
      %1352 = vmatprep.subr.bf16.mxu0 0
      %1353 = vmatpush1.bf16.msra.mxu0 %v545
      %1354 = vmatprep.subr.bf16.mxu0 0
      %1355 = vmatpush1.bf16.msra.mxu0 %v544
      %1356 = vmatprep.subr.bf16.mxu0 0
      %1357 = vmatpush1.bf16.msra.mxu0 %v543
      %1358 = vmatprep.subr.bf16.mxu0 0
      %1359 = vmatpush1.bf16.msra.mxu0 %v542
      %1360 = vmatprep.subr.bf16.mxu0 0
      %1361 = vmatpush2.bf16.msra.mxu0 0
      %1362 = vmatprep.subr.bf16.mxu0 0
      %1363 = vmatpush2.bf16.msra.mxu0 0
      %1364 = vmatprep.subr.bf16.mxu0 0
      %1365 = vmatpush2.bf16.msra.mxu0 0
      %1366 = vmatprep.subr.bf16.mxu0 0
      %1367 = vmatpush2.bf16.msra.mxu0 0
      %1368 = vmatprep.subr.bf16.mxu0 0
      %1369 = vmatpush2.bf16.msra.mxu0 0
      %1370 = vmatprep.subr.bf16.mxu0 0
      %1371 = vmatpush2.bf16.msra.mxu0 0
      %1372 = vmatprep.subr.bf16.mxu0 0
      %1373 = vmatpush2.bf16.msra.mxu0 0
      %1374 = vmatprep.subr.bf16.mxu0 0
      %1375 = vmatpush2.bf16.msra.mxu0 0
      %1376 = vmatprep.mubr.bf16.mxu0 0
      %1377 = vmatmul.mubr.bf16.gmra.mxu0 %v1342
      %v1378 = vpop.f32.mrf.mxu0
      %v1379 = vadd.f32 0.0, %v1378
      %v1380 = vpop.f32.mrf.mxu0
      %v1381 = vpop.f32.mrf.mxu0
      %v1382 = vadd.f32 0.0, %v1381
      %v1383 = vpop.f32.mrf.mxu0
      %1384 = vdwg.mxu0
      %v1385 = vpack.c.bf16 %v1382, %v1379
      %s1386 = scalar_lea.vmem %s4, 192
      %v1387 = vld [vmem:[%s1386] sm:$0xf]
      %v1388 = vld [vmem:[%s1386 + $0x4] sm:$0xf]
      %v1389 = vld [vmem:[%s1386 + $0x8] sm:$0xf]
      %v1390 = vld [vmem:[%s1386 + $0xc] sm:$0xf]
      %v1391 = vld [vmem:[%s1386 + $0x10] sm:$0xf]
      %v1392 = vld [vmem:[%s1386 + $0x14] sm:$0xf]
      %v1393 = vld [vmem:[%s1386 + $0x18] sm:$0xf]
      %v1394 = vld [vmem:[%s1386 + $0x1c] sm:$0xf]
      %v1403 = vunpack.c.l.b16 %v1387
      %v1404 = vunpack.c.l.b16 %v1388
      %v1405 = vunpack.c.l.b16 %v1389
      %v1406 = vunpack.c.l.b16 %v1390
      %v1407 = vunpack.c.l.b16 %v1391
      %v1408 = vunpack.c.l.b16 %v1392
      %v1409 = vunpack.c.l.b16 %v1393
      %v1410 = vunpack.c.l.b16 %v1394
      %v1411 = vpack.c.b16 %v1404, %v1403
      %v1412 = vpack.c.b16 %v1406, %v1405
      %v1413 = vpack.c.b16 %v1408, %v1407
      %v1414 = vpack.c.b16 %v1410, %v1409
      %v1420 = vsel %vm553, %v1385, 0
      %1422 = vmatprep.subr.bf16.mxu0 0
      %1423 = vmatpush1.bf16.msra.mxu0 0
      %1424 = vmatprep.subr.bf16.mxu0 0
      %1425 = vmatpush1.bf16.msra.mxu0 0
      %1426 = vmatprep.subr.bf16.mxu0 0
      %1427 = vmatpush1.bf16.msra.mxu0 0
      %1428 = vmatprep.subr.bf16.mxu0 0
      %1429 = vmatpush1.bf16.msra.mxu0 0
      %1430 = vmatprep.subr.bf16.mxu0 0
      %1431 = vmatpush1.bf16.msra.mxu0 %v1414
      %1432 = vmatprep.subr.bf16.mxu0 0
      %1433 = vmatpush1.bf16.msra.mxu0 %v1413
      %1434 = vmatprep.subr.bf16.mxu0 0
      %1435 = vmatpush1.bf16.msra.mxu0 %v1412
      %1436 = vmatprep.subr.bf16.mxu0 0
      %1437 = vmatpush1.bf16.msra.mxu0 %v1411
      %1438 = vmatprep.subr.bf16.mxu0 0
      %1439 = vmatpush2.bf16.msra.mxu0 0
      %1440 = vmatprep.subr.bf16.mxu0 0
      %1441 = vmatpush2.bf16.msra.mxu0 0
      %1442 = vmatprep.subr.bf16.mxu0 0
      %1443 = vmatpush2.bf16.msra.mxu0 0
      %1444 = vmatprep.subr.bf16.mxu0 0
      %1445 = vmatpush2.bf16.msra.mxu0 0
      %1446 = vmatprep.subr.bf16.mxu0 0
      %1447 = vmatpush2.bf16.msra.mxu0 0
      %1448 = vmatprep.subr.bf16.mxu0 0
      %1449 = vmatpush2.bf16.msra.mxu0 0
      %1450 = vmatprep.subr.bf16.mxu0 0
      %1451 = vmatpush2.bf16.msra.mxu0 0
      %1452 = vmatprep.subr.bf16.mxu0 0
      %1453 = vmatpush2.bf16.msra.mxu0 0
      %1454 = vmatprep.mubr.bf16.mxu0 0
      %1455 = vmatmul.mubr.bf16.gmra.mxu0 %v1420
      %v1456 = vpop.f32.mrf.mxu0
      %v1457 = vadd.f32 0.0, %v1456
      %v1458 = vpop.f32.mrf.mxu0
      %v1459 = vpop.f32.mrf.mxu0
      %v1460 = vadd.f32 0.0, %v1459
      %v1461 = vpop.f32.mrf.mxu0
      %1462 = vdwg.mxu0
      %v1463 = vadd.f32 %v1331, %v1457
      %v1464 = vadd.f32 %v1332, %v1460
      %s1465 = scalar_lea.vmem %s3, 56
      %v1466 = vld [vmem:[%s1465] sm:$0xf]
      %v1467 = vld [vmem:[%s1465 + $0x4] sm:$0xf]
      %v1470 = vunpack.c.l.b16 %v1466
      %v1471 = vunpack.c.l.b16 %v1467
      %v1472 = vpack.c.b16 %v1471, %v1470
      %v1474 = vsel %vm553, %v1472, 0
      %1476 = vmatprep.subr.bf16.mxu0 0
      %1477 = vmatpush1.bf16.msra.mxu0 0
      %1478 = vmatprep.subr.bf16.mxu0 0
      %1479 = vmatpush1.bf16.msra.mxu0 0
      %1480 = vmatprep.subr.bf16.mxu0 0
      %1481 = vmatpush1.bf16.msra.mxu0 0
      %1482 = vmatprep.subr.bf16.mxu0 0
      %1483 = vmatpush1.bf16.msra.mxu0 0
      %1484 = vmatprep.subr.bf16.mxu0 0
      %1485 = vmatpush1.bf16.msra.mxu0 %v545
      %1486 = vmatprep.subr.bf16.mxu0 0
      %1487 = vmatpush1.bf16.msra.mxu0 %v544
      %1488 = vmatprep.subr.bf16.mxu0 0
      %1489 = vmatpush1.bf16.msra.mxu0 %v543
      %1490 = vmatprep.subr.bf16.mxu0 0
      %1491 = vmatpush1.bf16.msra.mxu0 %v542
      %1492 = vmatprep.subr.bf16.mxu0 0
      %1493 = vmatpush2.bf16.msra.mxu0 0
      %1494 = vmatprep.subr.bf16.mxu0 0
      %1495 = vmatpush2.bf16.msra.mxu0 0
      %1496 = vmatprep.subr.bf16.mxu0 0
      %1497 = vmatpush2.bf16.msra.mxu0 0
      %1498 = vmatprep.subr.bf16.mxu0 0
      %1499 = vmatpush2.bf16.msra.mxu0 0
      %1500 = vmatprep.subr.bf16.mxu0 0
      %1501 = vmatpush2.bf16.msra.mxu0 0
      %1502 = vmatprep.subr.bf16.mxu0 0
      %1503 = vmatpush2.bf16.msra.mxu0 0
      %1504 = vmatprep.subr.bf16.mxu0 0
      %1505 = vmatpush2.bf16.msra.mxu0 0
      %1506 = vmatprep.subr.bf16.mxu0 0
      %1507 = vmatpush2.bf16.msra.mxu0 0
      %1508 = vmatprep.mubr.bf16.mxu0 0
      %1509 = vmatmul.mubr.bf16.gmra.mxu0 %v1474
      %v1510 = vpop.f32.mrf.mxu0
      %v1511 = vadd.f32 0.0, %v1510
      %v1512 = vpop.f32.mrf.mxu0
      %v1513 = vpop.f32.mrf.mxu0
      %v1514 = vadd.f32 0.0, %v1513
      %v1515 = vpop.f32.mrf.mxu0
      %1516 = vdwg.mxu0
      %v1517 = vpack.c.bf16 %v1514, %v1511
      %s1518 = scalar_lea.vmem %s4, 224
      %v1519 = vld [vmem:[%s1518] sm:$0xf]
      %v1520 = vld [vmem:[%s1518 + $0x4] sm:$0xf]
      %v1521 = vld [vmem:[%s1518 + $0x8] sm:$0xf]
      %v1522 = vld [vmem:[%s1518 + $0xc] sm:$0xf]
      %v1523 = vld [vmem:[%s1518 + $0x10] sm:$0xf]
      %v1524 = vld [vmem:[%s1518 + $0x14] sm:$0xf]
      %v1525 = vld [vmem:[%s1518 + $0x18] sm:$0xf]
      %v1526 = vld [vmem:[%s1518 + $0x1c] sm:$0xf]
      %v1535 = vunpack.c.l.b16 %v1519
      %v1536 = vunpack.c.l.b16 %v1520
      %v1537 = vunpack.c.l.b16 %v1521
      %v1538 = vunpack.c.l.b16 %v1522
      %v1539 = vunpack.c.l.b16 %v1523
      %v1540 = vunpack.c.l.b16 %v1524
      %v1541 = vunpack.c.l.b16 %v1525
      %v1542 = vunpack.c.l.b16 %v1526
      %v1543 = vpack.c.b16 %v1536, %v1535
      %v1544 = vpack.c.b16 %v1538, %v1537
      %v1545 = vpack.c.b16 %v1540, %v1539
      %v1546 = vpack.c.b16 %v1542, %v1541
      %v1552 = vsel %vm553, %v1517, 0
      %1554 = vmatprep.subr.bf16.mxu0 0
      %1555 = vmatpush1.bf16.msra.mxu0 0
      %1556 = vmatprep.subr.bf16.mxu0 0
      %1557 = vmatpush1.bf16.msra.mxu0 0
      %1558 = vmatprep.subr.bf16.mxu0 0
      %1559 = vmatpush1.bf16.msra.mxu0 0
      %1560 = vmatprep.subr.bf16.mxu0 0
      %1561 = vmatpush1.bf16.msra.mxu0 0
      %1562 = vmatprep.subr.bf16.mxu0 0
      %1563 = vmatpush1.bf16.msra.mxu0 %v1546
      %1564 = vmatprep.subr.bf16.mxu0 0
      %1565 = vmatpush1.bf16.msra.mxu0 %v1545
      %1566 = vmatprep.subr.bf16.mxu0 0
      %1567 = vmatpush1.bf16.msra.mxu0 %v1544
      %1568 = vmatprep.subr.bf16.mxu0 0
      %1569 = vmatpush1.bf16.msra.mxu0 %v1543
      %1570 = vmatprep.subr.bf16.mxu0 0
      %1571 = vmatpush2.bf16.msra.mxu0 0
      %1572 = vmatprep.subr.bf16.mxu0 0
      %1573 = vmatpush2.bf16.msra.mxu0 0
      %1574 = vmatprep.subr.bf16.mxu0 0
      %1575 = vmatpush2.bf16.msra.mxu0 0
      %1576 = vmatprep.subr.bf16.mxu0 0
      %1577 = vmatpush2.bf16.msra.mxu0 0
      %1578 = vmatprep.subr.bf16.mxu0 0
      %1579 = vmatpush2.bf16.msra.mxu0 0
      %1580 = vmatprep.subr.bf16.mxu0 0
      %1581 = vmatpush2.bf16.msra.mxu0 0
      %1582 = vmatprep.subr.bf16.mxu0 0
      %1583 = vmatpush2.bf16.msra.mxu0 0
      %1584 = vmatprep.subr.bf16.mxu0 0
      %1585 = vmatpush2.bf16.msra.mxu0 0
      %1586 = vmatprep.mubr.bf16.mxu0 0
      %1587 = vmatmul.mubr.bf16.gmra.mxu0 %v1552
      %v1588 = vpop.f32.mrf.mxu0
      %v1589 = vadd.f32 0.0, %v1588
      %v1590 = vpop.f32.mrf.mxu0
      %v1591 = vpop.f32.mrf.mxu0
      %v1592 = vadd.f32 0.0, %v1591
      %v1593 = vpop.f32.mrf.mxu0
      %1594 = vdwg.mxu0
      %v1595 = vadd.f32 %v1463, %v1589
      %v1596 = vadd.f32 %v1464, %v1592
      %s1597 = scalar_lea.vmem %s3, 64
      %v1598 = vld [vmem:[%s1597] sm:$0xf]
      %v1599 = vld [vmem:[%s1597 + $0x4] sm:$0xf]
      %v1602 = vunpack.c.l.b16 %v1598
      %v1603 = vunpack.c.l.b16 %v1599
      %v1604 = vpack.c.b16 %v1603, %v1602
      %v1606 = vsel %vm553, %v1604, 0
      %1608 = vmatprep.subr.bf16.mxu0 0
      %1609 = vmatpush1.bf16.msra.mxu0 0
      %1610 = vmatprep.subr.bf16.mxu0 0
      %1611 = vmatpush1.bf16.msra.mxu0 0
      %1612 = vmatprep.subr.bf16.mxu0 0
      %1613 = vmatpush1.bf16.msra.mxu0 0
      %1614 = vmatprep.subr.bf16.mxu0 0
      %1615 = vmatpush1.bf16.msra.mxu0 0
      %1616 = vmatprep.subr.bf16.mxu0 0
      %1617 = vmatpush1.bf16.msra.mxu0 %v545
      %1618 = vmatprep.subr.bf16.mxu0 0
      %1619 = vmatpush1.bf16.msra.mxu0 %v544
      %1620 = vmatprep.subr.bf16.mxu0 0
      %1621 = vmatpush1.bf16.msra.mxu0 %v543
      %1622 = vmatprep.subr.bf16.mxu0 0
      %1623 = vmatpush1.bf16.msra.mxu0 %v542
      %1624 = vmatprep.subr.bf16.mxu0 0
      %1625 = vmatpush2.bf16.msra.mxu0 0
      %1626 = vmatprep.subr.bf16.mxu0 0
      %1627 = vmatpush2.bf16.msra.mxu0 0
      %1628 = vmatprep.subr.bf16.mxu0 0
      %1629 = vmatpush2.bf16.msra.mxu0 0
      %1630 = vmatprep.subr.bf16.mxu0 0
      %1631 = vmatpush2.bf16.msra.mxu0 0
      %1632 = vmatprep.subr.bf16.mxu0 0
      %1633 = vmatpush2.bf16.msra.mxu0 0
      %1634 = vmatprep.subr.bf16.mxu0 0
      %1635 = vmatpush2.bf16.msra.mxu0 0
      %1636 = vmatprep.subr.bf16.mxu0 0
      %1637 = vmatpush2.bf16.msra.mxu0 0
      %1638 = vmatprep.subr.bf16.mxu0 0
      %1639 = vmatpush2.bf16.msra.mxu0 0
      %1640 = vmatprep.mubr.bf16.mxu0 0
      %1641 = vmatmul.mubr.bf16.gmra.mxu0 %v1606
      %v1642 = vpop.f32.mrf.mxu0
      %v1643 = vadd.f32 0.0, %v1642
      %v1644 = vpop.f32.mrf.mxu0
      %v1645 = vpop.f32.mrf.mxu0
      %v1646 = vadd.f32 0.0, %v1645
      %v1647 = vpop.f32.mrf.mxu0
      %1648 = vdwg.mxu0
      %v1649 = vpack.c.bf16 %v1646, %v1643
      %s1650 = scalar_lea.vmem %s4, 256
      %v1651 = vld [vmem:[%s1650] sm:$0xf]
      %v1652 = vld [vmem:[%s1650 + $0x4] sm:$0xf]
      %v1653 = vld [vmem:[%s1650 + $0x8] sm:$0xf]
      %v1654 = vld [vmem:[%s1650 + $0xc] sm:$0xf]
      %v1655 = vld [vmem:[%s1650 + $0x10] sm:$0xf]
      %v1656 = vld [vmem:[%s1650 + $0x14] sm:$0xf]
      %v1657 = vld [vmem:[%s1650 + $0x18] sm:$0xf]
      %v1658 = vld [vmem:[%s1650 + $0x1c] sm:$0xf]
      %v1667 = vunpack.c.l.b16 %v1651
      %v1668 = vunpack.c.l.b16 %v1652
      %v1669 = vunpack.c.l.b16 %v1653
      %v1670 = vunpack.c.l.b16 %v1654
      %v1671 = vunpack.c.l.b16 %v1655
      %v1672 = vunpack.c.l.b16 %v1656
      %v1673 = vunpack.c.l.b16 %v1657
      %v1674 = vunpack.c.l.b16 %v1658
      %v1675 = vpack.c.b16 %v1668, %v1667
      %v1676 = vpack.c.b16 %v1670, %v1669
      %v1677 = vpack.c.b16 %v1672, %v1671
      %v1678 = vpack.c.b16 %v1674, %v1673
      %v1684 = vsel %vm553, %v1649, 0
      %1686 = vmatprep.subr.bf16.mxu0 0
      %1687 = vmatpush1.bf16.msra.mxu0 0
      %1688 = vmatprep.subr.bf16.mxu0 0
      %1689 = vmatpush1.bf16.msra.mxu0 0
      %1690 = vmatprep.subr.bf16.mxu0 0
      %1691 = vmatpush1.bf16.msra.mxu0 0
      %1692 = vmatprep.subr.bf16.mxu0 0
      %1693 = vmatpush1.bf16.msra.mxu0 0
      %1694 = vmatprep.subr.bf16.mxu0 0
      %1695 = vmatpush1.bf16.msra.mxu0 %v1678
      %1696 = vmatprep.subr.bf16.mxu0 0
      %1697 = vmatpush1.bf16.msra.mxu0 %v1677
      %1698 = vmatprep.subr.bf16.mxu0 0
      %1699 = vmatpush1.bf16.msra.mxu0 %v1676
      %1700 = vmatprep.subr.bf16.mxu0 0
      %1701 = vmatpush1.bf16.msra.mxu0 %v1675
      %1702 = vmatprep.subr.bf16.mxu0 0
      %1703 = vmatpush2.bf16.msra.mxu0 0
      %1704 = vmatprep.subr.bf16.mxu0 0
      %1705 = vmatpush2.bf16.msra.mxu0 0
      %1706 = vmatprep.subr.bf16.mxu0 0
      %1707 = vmatpush2.bf16.msra.mxu0 0
      %1708 = vmatprep.subr.bf16.mxu0 0
      %1709 = vmatpush2.bf16.msra.mxu0 0
      %1710 = vmatprep.subr.bf16.mxu0 0
      %1711 = vmatpush2.bf16.msra.mxu0 0
      %1712 = vmatprep.subr.bf16.mxu0 0
      %1713 = vmatpush2.bf16.msra.mxu0 0
      %1714 = vmatprep.subr.bf16.mxu0 0
      %1715 = vmatpush2.bf16.msra.mxu0 0
      %1716 = vmatprep.subr.bf16.mxu0 0
      %1717 = vmatpush2.bf16.msra.mxu0 0
      %1718 = vmatprep.mubr.bf16.mxu0 0
      %1719 = vmatmul.mubr.bf16.gmra.mxu0 %v1684
      %v1720 = vpop.f32.mrf.mxu0
      %v1721 = vadd.f32 0.0, %v1720
      %v1722 = vpop.f32.mrf.mxu0
      %v1723 = vpop.f32.mrf.mxu0
      %v1724 = vadd.f32 0.0, %v1723
      %v1725 = vpop.f32.mrf.mxu0
      %1726 = vdwg.mxu0
      %v1727 = vadd.f32 %v1595, %v1721
      %v1728 = vadd.f32 %v1596, %v1724
      %v1729 = vld [vmem:[%s5] sm:$0x1]
      %v1731 = vlaneseq
      %v1732 = vshrl.u32 %v1731, 7
      %v1733 = vsub.s32 0, %v1732
      %v1734 = vrot.slane %v1729, %v1733
      %v1736 = vadd.f32 %v1727, %v1734
      %v1737 = vadd.f32 %v1728, %v1734
      %v1738 = vmax.f32 %v1736, 0.0
      %v1739 = vmax.f32 %v1737, 0.0
      %v1740 = vpack.c.bf16 %v1739, %v1738
      %v1741 = vld [vmem:[%s6] sm:$0xff]
      %v1742 = vld [vmem:[%s6 + $0x8] sm:$0xff]
      %v1743 = vld [vmem:[%s6 + $0x10] sm:$0xff]
      %v1744 = vld [vmem:[%s6 + $0x18] sm:$0xff]
      %v1745 = vld [vmem:[%s6 + $0x20] sm:$0xff]
      %v1746 = vld [vmem:[%s6 + $0x28] sm:$0xff]
      %v1747 = vld [vmem:[%s6 + $0x30] sm:$0xff]
      %v1748 = vld [vmem:[%s6 + $0x38] sm:$0xff]
      %v1749 = vld [vmem:[%s7] sm:$0x3]
      %v1751 = vlaneseq
      %v1752 = vshrl.u32 %v1751, 7
      %v1753 = vsub.s32 0, %v1752
      %v1754 = vrot.slane %v1749, %v1753
      %v1755 = vlaneseq
      %v1756 = vshrl.u32 %v1755, 7
      %v1757 = vsub.s32 1, %v1756
      %v1758 = vrot.slane %v1749, %v1757
      %v1769 = vunpack.c.l.b16 %v1741
      %v1770 = vunpack.c.h.b16 %v1741
      %v1771 = vunpack.c.l.b16 %v1742
      %v1772 = vunpack.c.h.b16 %v1742
      %v1773 = vunpack.c.l.b16 %v1743
      %v1774 = vunpack.c.h.b16 %v1743
      %v1775 = vunpack.c.l.b16 %v1744
      %v1776 = vunpack.c.h.b16 %v1744
      %v1777 = vunpack.c.l.b16 %v1745
      %v1778 = vunpack.c.h.b16 %v1745
      %v1779 = vunpack.c.l.b16 %v1746
      %v1780 = vunpack.c.h.b16 %v1746
      %v1781 = vunpack.c.l.b16 %v1747
      %v1782 = vunpack.c.h.b16 %v1747
      %v1783 = vunpack.c.l.b16 %v1748
      %v1784 = vunpack.c.h.b16 %v1748
      %v1785 = vpack.c.b16 %v1771, %v1769
      %v1786 = vpack.c.b16 %v1772, %v1770
      %v1787 = vpack.c.b16 %v1775, %v1773
      %v1788 = vpack.c.b16 %v1776, %v1774
      %v1789 = vpack.c.b16 %v1779, %v1777
      %v1790 = vpack.c.b16 %v1780, %v1778
      %v1791 = vpack.c.b16 %v1783, %v1781
      %v1792 = vpack.c.b16 %v1784, %v1782
      %v1802 = vsel %vm553, %v1740, 0
      %1804 = vmatprep.subr.bf16.mxu0 0
      %1805 = vmatpush1.bf16.msra.mxu0 0
      %1806 = vmatprep.subr.bf16.mxu0 0
      %1807 = vmatpush1.bf16.msra.mxu0 0
      %1808 = vmatprep.subr.bf16.mxu0 0
      %1809 = vmatpush1.bf16.msra.mxu0 0
      %1810 = vmatprep.subr.bf16.mxu0 0
      %1811 = vmatpush1.bf16.msra.mxu0 0
      %1812 = vmatprep.subr.bf16.mxu0 %v1792
      %1813 = vmatpush1.bf16.msra.mxu0 %v1791
      %1814 = vmatprep.subr.bf16.mxu0 %v1790
      %1815 = vmatpush1.bf16.msra.mxu0 %v1789
      %1816 = vmatprep.subr.bf16.mxu0 %v1788
      %1817 = vmatpush1.bf16.msra.mxu0 %v1787
      %1818 = vmatprep.subr.bf16.mxu0 %v1786
      %1819 = vmatpush1.bf16.msra.mxu0 %v1785
      %1820 = vmatprep.subr.bf16.mxu0 0
      %1821 = vmatpush2.bf16.msra.mxu0 0
      %1822 = vmatprep.subr.bf16.mxu0 0
      %1823 = vmatpush2.bf16.msra.mxu0 0
      %1824 = vmatprep.subr.bf16.mxu0 0
      %1825 = vmatpush2.bf16.msra.mxu0 0
      %1826 = vmatprep.subr.bf16.mxu0 0
      %1827 = vmatpush2.bf16.msra.mxu0 0
      %1828 = vmatprep.subr.bf16.mxu0 0
      %1829 = vmatpush2.bf16.msra.mxu0 0
      %1830 = vmatprep.subr.bf16.mxu0 0
      %1831 = vmatpush2.bf16.msra.mxu0 0
      %1832 = vmatprep.subr.bf16.mxu0 0
      %1833 = vmatpush2.bf16.msra.mxu0 0
      %1834 = vmatprep.subr.bf16.mxu0 0
      %1835 = vmatpush2.bf16.msra.mxu0 0
      %1836 = vmatprep.mubr.bf16.mxu0 0
      %1837 = vmatmul.mubr.bf16.gmra.mxu0 %v1802
      %v1838 = vpop.f32.mrf.mxu0
      %v1839 = vadd.f32 %v1754, %v1838
      %v1840 = vpop.f32.mrf.mxu0
      %v1841 = vadd.f32 %v1758, %v1840
      %v1842 = vpop.f32.mrf.mxu0
      %v1843 = vadd.f32 %v1754, %v1842
      %v1844 = vpop.f32.mrf.mxu0
      %v1845 = vadd.f32 %v1758, %v1844
      %1846 = vdwg.mxu0
      %1847 = vmatprep.subr.bf16.mxu0 0
      %1848 = vmatpush1.bf16.msra.mxu0 0
      %1849 = vmatprep.subr.bf16.mxu0 0
      %1850 = vmatpush1.bf16.msra.mxu0 0
      %1851 = vmatprep.subr.bf16.mxu0 0
      %1852 = vmatpush1.bf16.msra.mxu0 0
      %1853 = vmatprep.subr.bf16.mxu0 0
      %1854 = vmatpush1.bf16.msra.mxu0 0
      %1855 = vmatprep.subr.bf16.mxu0 0
      %1856 = vmatpush1.bf16.msra.mxu0 %v416
      %1857 = vmatprep.subr.bf16.mxu0 0
      %1858 = vmatpush1.bf16.msra.mxu0 %v415
      %1859 = vmatprep.subr.bf16.mxu0 0
      %1860 = vmatpush1.bf16.msra.mxu0 %v414
      %1861 = vmatprep.subr.bf16.mxu0 0
      %1862 = vmatpush1.bf16.msra.mxu0 %v413
      %1863 = vmatprep.subr.bf16.mxu0 0
      %1864 = vmatpush2.bf16.msra.mxu0 0
      %1865 = vmatprep.subr.bf16.mxu0 0
      %1866 = vmatpush2.bf16.msra.mxu0 0
      %1867 = vmatprep.subr.bf16.mxu0 0
      %1868 = vmatpush2.bf16.msra.mxu0 0
      %1869 = vmatprep.subr.bf16.mxu0 0
      %1870 = vmatpush2.bf16.msra.mxu0 0
      %1871 = vmatprep.subr.bf16.mxu0 0
      %1872 = vmatpush2.bf16.msra.mxu0 0
      %1873 = vmatprep.subr.bf16.mxu0 0
      %1874 = vmatpush2.bf16.msra.mxu0 0
      %1875 = vmatprep.subr.bf16.mxu0 0
      %1876 = vmatpush2.bf16.msra.mxu0 0
      %1877 = vmatprep.subr.bf16.mxu0 0
      %1878 = vmatpush2.bf16.msra.mxu0 0
      %1879 = vmatprep.mubr.bf16.mxu0 0
      %1880 = vmatmul.mubr.bf16.gmra.mxu0 %v1078
      %v1881 = vpop.f32.mrf.mxu0
      %v1882 = vadd.f32 0.0, %v1881
      %v1883 = vpop.f32.mrf.mxu0
      %v1884 = vpop.f32.mrf.mxu0
      %v1885 = vadd.f32 0.0, %v1884
      %v1886 = vpop.f32.mrf.mxu0
      %1887 = vdwg.mxu0
      %v1888 = vpack.c.bf16 %v1885, %v1882
      %v1889 = vld [vmem:[%s8] sm:$0xff]
      %v1890 = vld [vmem:[%s8 + $0x8] sm:$0xff]
      %v1891 = vld [vmem:[%s8 + $0x10] sm:$0xff]
      %v1892 = vld [vmem:[%s8 + $0x18] sm:$0xff]
      %v1893 = vld [vmem:[%s8 + $0x20] sm:$0xff]
      %v1894 = vld [vmem:[%s8 + $0x28] sm:$0xff]
      %v1895 = vld [vmem:[%s8 + $0x30] sm:$0xff]
      %v1896 = vld [vmem:[%s8 + $0x38] sm:$0xff]
      %v1897 = vld [vmem:[%s8 + $0x40] sm:$0xff]
      %v1898 = vld [vmem:[%s8 + $0x48] sm:$0xff]
      %v1899 = vld [vmem:[%s8 + $0x50] sm:$0xff]
      %v1900 = vld [vmem:[%s8 + $0x58] sm:$0xff]
      %v1901 = vld [vmem:[%s8 + $0x60] sm:$0xff]
      %v1902 = vld [vmem:[%s8 + $0x68] sm:$0xff]
      %v1903 = vld [vmem:[%s8 + $0x70] sm:$0xff]
      %v1904 = vld [vmem:[%s8 + $0x78] sm:$0xff]
      %v1905 = vld [vmem:[%s9] sm:$0x3]
      %v1907 = vlaneseq
      %v1908 = vshrl.u32 %v1907, 7
      %v1909 = vsub.s32 0, %v1908
      %v1910 = vrot.slane %v1905, %v1909
      %v1911 = vlaneseq
      %v1912 = vshrl.u32 %v1911, 7
      %v1913 = vsub.s32 1, %v1912
      %v1914 = vrot.slane %v1905, %v1913
      %v1933 = vunpack.c.l.b16 %v1889
      %v1934 = vunpack.c.h.b16 %v1889
      %v1935 = vunpack.c.l.b16 %v1890
      %v1936 = vunpack.c.h.b16 %v1890
      %v1937 = vunpack.c.l.b16 %v1891
      %v1938 = vunpack.c.h.b16 %v1891
      %v1939 = vunpack.c.l.b16 %v1892
      %v1940 = vunpack.c.h.b16 %v1892
      %v1941 = vunpack.c.l.b16 %v1893
      %v1942 = vunpack.c.h.b16 %v1893
      %v1943 = vunpack.c.l.b16 %v1894
      %v1944 = vunpack.c.h.b16 %v1894
      %v1945 = vunpack.c.l.b16 %v1895
      %v1946 = vunpack.c.h.b16 %v1895
      %v1947 = vunpack.c.l.b16 %v1896
      %v1948 = vunpack.c.h.b16 %v1896
      %v1949 = vunpack.c.l.b16 %v1897
      %v1950 = vunpack.c.h.b16 %v1897
      %v1951 = vunpack.c.l.b16 %v1898
      %v1952 = vunpack.c.h.b16 %v1898
      %v1953 = vunpack.c.l.b16 %v1899
      %v1954 = vunpack.c.h.b16 %v1899
      %v1955 = vunpack.c.l.b16 %v1900
      %v1956 = vunpack.c.h.b16 %v1900
      %v1957 = vunpack.c.l.b16 %v1901
      %v1958 = vunpack.c.h.b16 %v1901
      %v1959 = vunpack.c.l.b16 %v1902
      %v1960 = vunpack.c.h.b16 %v1902
      %v1961 = vunpack.c.l.b16 %v1903
      %v1962 = vunpack.c.h.b16 %v1903
      %v1963 = vunpack.c.l.b16 %v1904
      %v1964 = vunpack.c.h.b16 %v1904
      %v1965 = vpack.c.b16 %v1935, %v1933
      %v1966 = vpack.c.b16 %v1936, %v1934
      %v1967 = vpack.c.b16 %v1939, %v1937
      %v1968 = vpack.c.b16 %v1940, %v1938
      %v1969 = vpack.c.b16 %v1943, %v1941
      %v1970 = vpack.c.b16 %v1944, %v1942
      %v1971 = vpack.c.b16 %v1947, %v1945
      %v1972 = vpack.c.b16 %v1948, %v1946
      %v1973 = vpack.c.b16 %v1951, %v1949
      %v1974 = vpack.c.b16 %v1952, %v1950
      %v1975 = vpack.c.b16 %v1955, %v1953
      %v1976 = vpack.c.b16 %v1956, %v1954
      %v1977 = vpack.c.b16 %v1959, %v1957
      %v1978 = vpack.c.b16 %v1960, %v1958
      %v1979 = vpack.c.b16 %v1963, %v1961
      %v1980 = vpack.c.b16 %v1964, %v1962
      %1997 = vmatprep.subr.bf16.mxu0 %v1980
      %1998 = vmatpush1.bf16.msra.mxu0 %v1979
      %1999 = vmatprep.subr.bf16.mxu0 %v1978
      %2000 = vmatpush1.bf16.msra.mxu0 %v1977
      %2001 = vmatprep.subr.bf16.mxu0 %v1976
      %2002 = vmatpush1.bf16.msra.mxu0 %v1975
      %2003 = vmatprep.subr.bf16.mxu0 %v1974
      %2004 = vmatpush1.bf16.msra.mxu0 %v1973
      %2005 = vmatprep.subr.bf16.mxu0 %v1972
      %2006 = vmatpush1.bf16.msra.mxu0 %v1971
      %2007 = vmatprep.subr.bf16.mxu0 %v1970
      %2008 = vmatpush1.bf16.msra.mxu0 %v1969
      %2009 = vmatprep.subr.bf16.mxu0 %v1968
      %2010 = vmatpush1.bf16.msra.mxu0 %v1967
      %2011 = vmatprep.subr.bf16.mxu0 %v1966
      %2012 = vmatpush1.bf16.msra.mxu0 %v1965
      %2013 = vmatprep.subr.bf16.mxu0 0
      %2014 = vmatpush2.bf16.msra.mxu0 0
      %2015 = vmatprep.subr.bf16.mxu0 0
      %2016 = vmatpush2.bf16.msra.mxu0 0
      %2017 = vmatprep.subr.bf16.mxu0 0
      %2018 = vmatpush2.bf16.msra.mxu0 0
      %2019 = vmatprep.subr.bf16.mxu0 0
      %2020 = vmatpush2.bf16.msra.mxu0 0
      %2021 = vmatprep.subr.bf16.mxu0 0
      %2022 = vmatpush2.bf16.msra.mxu0 0
      %2023 = vmatprep.subr.bf16.mxu0 0
      %2024 = vmatpush2.bf16.msra.mxu0 0
      %2025 = vmatprep.subr.bf16.mxu0 0
      %2026 = vmatpush2.bf16.msra.mxu0 0
      %2027 = vmatprep.subr.bf16.mxu0 0
      %2028 = vmatpush2.bf16.msra.mxu0 0
      %2029 = vmatprep.mubr.bf16.mxu0 0
      %2030 = vmatmul.mubr.bf16.gmra.mxu0 %v1888
      %v2031 = vpop.f32.mrf.mxu0
      %v2032 = vadd.f32 %v1910, %v2031
      %v2033 = vpop.f32.mrf.mxu0
      %v2034 = vadd.f32 %v1914, %v2033
      %v2035 = vpop.f32.mrf.mxu0
      %v2036 = vadd.f32 %v1910, %v2035
      %v2037 = vpop.f32.mrf.mxu0
      %v2038 = vadd.f32 %v1914, %v2037
      %2039 = vdwg.mxu0
      %v2040 = vadd.f32 %v1839, %v2032
      %v2041 = vadd.f32 %v1841, %v2034
      %v2042 = vadd.f32 %v1843, %v2036
      %v2043 = vadd.f32 %v1845, %v2038
      %v2044 = vmax.f32 %v2040, 0.0
      %v2045 = vmax.f32 %v2041, 0.0
      %v2046 = vmax.f32 %v2042, 0.0
      %v2047 = vmax.f32 %v2043, 0.0
      %v2048 = vpack.c.bf16 %v2046, %v2044
      %v2049 = vpack.c.bf16 %v2047, %v2045
      %v2052 = vunpack.c.l.b16 %v2048
      %v2053 = vunpack.c.l.b16 %v2049
      %v2054 = vunpack.c.h.b16 %v2048
      %v2055 = vunpack.c.h.b16 %v2049
      %v2056 = vpack.c.b16 %v2053, %v2052
      %v2057 = vpack.c.b16 %v2055, %v2054
      %2060 = vst [vmem:[%s363] sm:$0xff] %v2056
      %2061 = vst [vmem:[%s363 + $0x8] sm:$0xff] %v2057
      %s2062 = smul.u32 2, %s21
      %p2063 = scmp.lt.s32.totalorder %s2062, 3
      %s2064 = scalar_select %p2063, %s2062, 3
      %s2065 = smul.addr %s2064, 2
      %s2066 = smul.addr %s2065, 4
      %s2067 = scalar_lea.vmem %s10, %s2066
      // Predicated region
      $region61: #{_lambda_.15} parent=59 // pred_check
        %p2068 = pneg %p254
      $region62: #{_lambda_.15} parent=59 // pred_check_branch
        %2070 = sbr.rel (%p2068) target = $region64
      $region63: #{_lambda_.15} parent=59 // pred_region
        %s2071 = smul.u32 2, %s21
      $region64: #{_lambda_.15} parent=59 // pred_fallthru
        _
    $region60: #{_lambda_.15} parent=5 // pred_fallthru
      _
    %p2072 = scmp.le.s32.totalorder 2, %s16
    // Predicated region
    $region65: #{_lambda_.15} parent=5 // pred_check
      %p2073 = pneg %p2072
    $region66: #{_lambda_.15} parent=5 // pred_check_branch
      %2075 = sbr.rel (%p2073) target = $region68
    $region67: #{_lambda_.15} parent=5 // pred_region
      %s2076 = ssub.s32 %s16, 2
      // Predicated region
      $region69: #{_lambda_.15} parent=67 // pred_check
        %p2077 = pneg %p260
      $region70: #{_lambda_.15} parent=67 // pred_check_branch
        %2079 = sbr.rel (%p2077) target = $region72
      $region71: #{_lambda_.15} parent=67 // pred_region
        %s2080 = smul.u32 2, %s22
        %p2081 = scmp.lt.s32.totalorder %s2080, 3
        %s2082 = scalar_select %p2081, %s2080, 3
        %s2083 = smul.addr %s2082, 2
        %s2084 = smul.addr %s2083, 4
        %s2085 = scalar_lea.vmem %s10, %s2084
      $region72: #{_lambda_.15} parent=67 // pred_fallthru
        _
    $region68: #{_lambda_.15} parent=5 // pred_fallthru
      _
  $region6: #{_lambda_.15} parent=0 // loop_footer
    %s20 = sadd.s32 1, %s16
  $region7: #{_lambda_.15} parent=0 // loop_footer_branch
    %15 = sbr.rel target = $region3
  $region8: #{_lambda_.15} parent=0 // loop_exit
    _

// kernel: _lambda_.9
$region0: #{_lambda_.9}
  #allocation0 [shape = 'u32[]', space=smem, size = 0x4, offset = 0x4, fixed_abs, tag = 'smem constant byte address 0x4 - core index']
  #allocation1 [shape = 'u32[144,128]{1,0:T(1,128)}', space=vmem, size = 0x12000, scoped, tag = 'internal scratch']
  %s0 = inlined_call_operand.vmem [shape: bf16[512,128], index: 0, kind: input, shape index: {}]
  %s1 = inlined_call_operand.vmem [shape: bf16[128,32], index: 1, kind: input, shape index: {}]
  %s2 = inlined_call_operand.vmem [shape: f32[1,32], index: 2, kind: input, shape index: {}]
  %s3 = inlined_call_operand.vmem [shape: bf16[9,64,256], index: 3, kind: input, shape index: {}]
  %s4 = inlined_call_operand.vmem [shape: bf16[9,32,32], index: 4, kind: input, shape index: {}]
  %s5 = inlined_call_operand.vmem [shape: f32[1,32], index: 5, kind: input, shape index: {}]
  %s6 = inlined_call_operand.vmem [shape: bf16[32,128], index: 6, kind: input, shape index: {}]
  %s7 = inlined_call_operand.vmem [shape: f32[1,128], index: 7, kind: input, shape index: {}]
  %s8 = inlined_call_operand.vmem [shape: bf16[128,128], index: 8, kind: input, shape index: {}]
  %s9 = inlined_call_operand.vmem [shape: f32[1,128], index: 9, kind: input, shape index: {}]
  %s10 = inlined_call_operand.vmem [shape: bf16[128,128], index: 10, kind: output, shape index: {}]
  %s11 = sld [smem:[#allocation0]]
  $region73: #{_lambda_.9} parent=0
    _
  %s13 = ssub.s32 1, %s11
  %s14 = scalar_select 0, %s13, %s11
  loop: start=0, step=1, limit=4
  $region2: #{_lambda_.9} parent=0 // loop_pre_header
    _
  $region3: #{_lambda_.9} parent=0 // loop_header
    %s16 = sphi 0, %s20
    %p17 = scmp.ge.s32.totalorder %s16, 4
    %s26 = sphi 0, %s28
    %s29 = sphi 0, %s26
    %s30 = sphi 0, %s29
    %s46 = sphi 0, %s30
    %s50 = sphi 0, %s50
    %s52 = sphi 0, %s50
    %s53 = sphi 0, %s52
    %s67 = sphi 0, %s53
    %s71 = sphi 0, %s71
    %s73 = sphi 0, %s71
    %s74 = sphi 0, %s73
    %s88 = sphi 0, %s74
    %s92 = sphi 0, %s92
    %s94 = sphi 0, %s92
    %s95 = sphi 0, %s94
    %s109 = sphi 0, %s95
    %s113 = sphi 0, %s113
    %s115 = sphi 0, %s113
    %s116 = sphi 0, %s115
    %s130 = sphi 0, %s116
    %s134 = sphi 0, %s134
    %s136 = sphi 0, %s134
    %s137 = sphi 0, %s136
    %s151 = sphi 0, %s137
    %s155 = sphi 0, %s155
    %s157 = sphi 0, %s155
    %s158 = sphi 0, %s157
    %s172 = sphi 0, %s158
    %s176 = sphi 0, %s176
    %s178 = sphi 0, %s176
    %s179 = sphi 0, %s178
    %s193 = sphi 0, %s179
    %s197 = sphi 0, %s197
    %s199 = sphi 0, %s197
    %s200 = sphi 0, %s199
    %s214 = sphi 0, %s200
    %s218 = sphi 0, %s218
    %s220 = sphi 0, %s218
    %s221 = sphi 0, %s220
    %s235 = sphi 0, %s221
    %s241 = sphi 0, %s243
    %s244 = sphi 0, %s241
    %s245 = sphi 0, %s244
    %s261 = sphi 0, %s245
  $region4: #{_lambda_.9} parent=0 // loop_header_branch
    %19 = sbr.rel (%p17) target = $region8
  $region5: #{_lambda_.9} parent=0 // loop_body
    %s21 = ssub.s32 %s16, 1
    %s22 = ssub.s32 %s16, 2
    %s23 = sadd.s32 %s16, 1
    %s24 = ssub.s32 %s16, %s23
    %p25 = scmp.eq.s32.totalorder %s24, 0
    %s27 = sadd.s32 %s26, 1
    %s28 = scalar_select %p25, %s26, %s27
    %p31 = pneg %p25
    %p32 = scmp.eq.s32.totalorder %s16, 1
    %p33 = por %p31, %p32
    %p34 = scmp.ne.s32.totalorder %s26, %s29
    %p35 = scmp.eq.s32.totalorder %s16, 0
    %p36 = por %p34, %p35
    %p37 = scmp.ne.s32.totalorder %s26, %s29
    %p38 = scmp.eq.s32.totalorder %s21, 1
    %p39 = por %p37, %p38
    %p40 = scmp.ne.s32.totalorder %s29, %s30
    %p41 = scmp.eq.s32.totalorder %s21, 0
    %p42 = por %p40, %p41
    %p43 = scmp.ne.s32.totalorder %s29, %s30
    %p44 = scmp.eq.s32.totalorder %s22, 1
    %p45 = por %p43, %p44
    %p47 = scmp.ne.s32.totalorder %s30, %s46
    %p48 = scmp.eq.s32.totalorder %s22, 0
    %p49 = por %p47, %p48
    %s51 = sadd.s32 %s50, 1
    %p54 = scmp.eq.s32.totalorder %s16, 1
    %p55 = scmp.ne.s32.totalorder %s50, %s52
    %p56 = scmp.eq.s32.totalorder %s16, 0
    %p57 = por %p55, %p56
    %p58 = scmp.ne.s32.totalorder %s50, %s52
    %p59 = scmp.eq.s32.totalorder %s21, 1
    %p60 = por %p58, %p59
    %p61 = scmp.ne.s32.totalorder %s52, %s53
    %p62 = scmp.eq.s32.totalorder %s21, 0
    %p63 = por %p61, %p62
    %p64 = scmp.ne.s32.totalorder %s52, %s53
    %p65 = scmp.eq.s32.totalorder %s22, 1
    %p66 = por %p64, %p65
    %p68 = scmp.ne.s32.totalorder %s53, %s67
    %p69 = scmp.eq.s32.totalorder %s22, 0
    %p70 = por %p68, %p69
    %s72 = sadd.s32 %s71, 1
    %p75 = scmp.eq.s32.totalorder %s16, 1
    %p76 = scmp.ne.s32.totalorder %s71, %s73
    %p77 = scmp.eq.s32.totalorder %s16, 0
    %p78 = por %p76, %p77
    %p79 = scmp.ne.s32.totalorder %s71, %s73
    %p80 = scmp.eq.s32.totalorder %s21, 1
    %p81 = por %p79, %p80
    %p82 = scmp.ne.s32.totalorder %s73, %s74
    %p83 = scmp.eq.s32.totalorder %s21, 0
    %p84 = por %p82, %p83
    %p85 = scmp.ne.s32.totalorder %s73, %s74
    %p86 = scmp.eq.s32.totalorder %s22, 1
    %p87 = por %p85, %p86
    %p89 = scmp.ne.s32.totalorder %s74, %s88
    %p90 = scmp.eq.s32.totalorder %s22, 0
    %p91 = por %p89, %p90
    %s93 = sadd.s32 %s92, 1
    %p96 = scmp.eq.s32.totalorder %s16, 1
    %p97 = scmp.ne.s32.totalorder %s92, %s94
    %p98 = scmp.eq.s32.totalorder %s16, 0
    %p99 = por %p97, %p98
    %p100 = scmp.ne.s32.totalorder %s92, %s94
    %p101 = scmp.eq.s32.totalorder %s21, 1
    %p102 = por %p100, %p101
    %p103 = scmp.ne.s32.totalorder %s94, %s95
    %p104 = scmp.eq.s32.totalorder %s21, 0
    %p105 = por %p103, %p104
    %p106 = scmp.ne.s32.totalorder %s94, %s95
    %p107 = scmp.eq.s32.totalorder %s22, 1
    %p108 = por %p106, %p107
    %p110 = scmp.ne.s32.totalorder %s95, %s109
    %p111 = scmp.eq.s32.totalorder %s22, 0
    %p112 = por %p110, %p111
    %s114 = sadd.s32 %s113, 1
    %p117 = scmp.eq.s32.totalorder %s16, 1
    %p118 = scmp.ne.s32.totalorder %s113, %s115
    %p119 = scmp.eq.s32.totalorder %s16, 0
    %p120 = por %p118, %p119
    %p121 = scmp.ne.s32.totalorder %s113, %s115
    %p122 = scmp.eq.s32.totalorder %s21, 1
    %p123 = por %p121, %p122
    %p124 = scmp.ne.s32.totalorder %s115, %s116
    %p125 = scmp.eq.s32.totalorder %s21, 0
    %p126 = por %p124, %p125
    %p127 = scmp.ne.s32.totalorder %s115, %s116
    %p128 = scmp.eq.s32.totalorder %s22, 1
    %p129 = por %p127, %p128
    %p131 = scmp.ne.s32.totalorder %s116, %s130
    %p132 = scmp.eq.s32.totalorder %s22, 0
    %p133 = por %p131, %p132
    %s135 = sadd.s32 %s134, 1
    %p138 = scmp.eq.s32.totalorder %s16, 1
    %p139 = scmp.ne.s32.totalorder %s134, %s136
    %p140 = scmp.eq.s32.totalorder %s16, 0
    %p141 = por %p139, %p140
    %p142 = scmp.ne.s32.totalorder %s134, %s136
    %p143 = scmp.eq.s32.totalorder %s21, 1
    %p144 = por %p142, %p143
    %p145 = scmp.ne.s32.totalorder %s136, %s137
    %p146 = scmp.eq.s32.totalorder %s21, 0
    %p147 = por %p145, %p146
    %p148 = scmp.ne.s32.totalorder %s136, %s137
    %p149 = scmp.eq.s32.totalorder %s22, 1
    %p150 = por %p148, %p149
    %p152 = scmp.ne.s32.totalorder %s137, %s151
    %p153 = scmp.eq.s32.totalorder %s22, 0
    %p154 = por %p152, %p153
    %s156 = sadd.s32 %s155, 1
    %p159 = scmp.eq.s32.totalorder %s16, 1
    %p160 = scmp.ne.s32.totalorder %s155, %s157
    %p161 = scmp.eq.s32.totalorder %s16, 0
    %p162 = por %p160, %p161
    %p163 = scmp.ne.s32.totalorder %s155, %s157
    %p164 = scmp.eq.s32.totalorder %s21, 1
    %p165 = por %p163, %p164
    %p166 = scmp.ne.s32.totalorder %s157, %s158
    %p167 = scmp.eq.s32.totalorder %s21, 0
    %p168 = por %p166, %p167
    %p169 = scmp.ne.s32.totalorder %s157, %s158
    %p170 = scmp.eq.s32.totalorder %s22, 1
    %p171 = por %p169, %p170
    %p173 = scmp.ne.s32.totalorder %s158, %s172
    %p174 = scmp.eq.s32.totalorder %s22, 0
    %p175 = por %p173, %p174
    %s177 = sadd.s32 %s176, 1
    %p180 = scmp.eq.s32.totalorder %s16, 1
    %p181 = scmp.ne.s32.totalorder %s176, %s178
    %p182 = scmp.eq.s32.totalorder %s16, 0
    %p183 = por %p181, %p182
    %p184 = scmp.ne.s32.totalorder %s176, %s178
    %p185 = scmp.eq.s32.totalorder %s21, 1
    %p186 = por %p184, %p185
    %p187 = scmp.ne.s32.totalorder %s178, %s179
    %p188 = scmp.eq.s32.totalorder %s21, 0
    %p189 = por %p187, %p188
    %p190 = scmp.ne.s32.totalorder %s178, %s179
    %p191 = scmp.eq.s32.totalorder %s22, 1
    %p192 = por %p190, %p191
    %p194 = scmp.ne.s32.totalorder %s179, %s193
    %p195 = scmp.eq.s32.totalorder %s22, 0
    %p196 = por %p194, %p195
    %s198 = sadd.s32 %s197, 1
    %p201 = scmp.eq.s32.totalorder %s16, 1
    %p202 = scmp.ne.s32.totalorder %s197, %s199
    %p203 = scmp.eq.s32.totalorder %s16, 0
    %p204 = por %p202, %p203
    %p205 = scmp.ne.s32.totalorder %s197, %s199
    %p206 = scmp.eq.s32.totalorder %s21, 1
    %p207 = por %p205, %p206
    %p208 = scmp.ne.s32.totalorder %s199, %s200
    %p209 = scmp.eq.s32.totalorder %s21, 0
    %p210 = por %p208, %p209
    %p211 = scmp.ne.s32.totalorder %s199, %s200
    %p212 = scmp.eq.s32.totalorder %s22, 1
    %p213 = por %p211, %p212
    %p215 = scmp.ne.s32.totalorder %s200, %s214
    %p216 = scmp.eq.s32.totalorder %s22, 0
    %p217 = por %p215, %p216
    %s219 = sadd.s32 %s218, 1
    %p222 = scmp.eq.s32.totalorder %s16, 1
    %p223 = scmp.ne.s32.totalorder %s218, %s220
    %p224 = scmp.eq.s32.totalorder %s16, 0
    %p225 = por %p223, %p224
    %p226 = scmp.ne.s32.totalorder %s218, %s220
    %p227 = scmp.eq.s32.totalorder %s21, 1
    %p228 = por %p226, %p227
    %p229 = scmp.ne.s32.totalorder %s220, %s221
    %p230 = scmp.eq.s32.totalorder %s21, 0
    %p231 = por %p229, %p230
    %p232 = scmp.ne.s32.totalorder %s220, %s221
    %p233 = scmp.eq.s32.totalorder %s22, 1
    %p234 = por %p232, %p233
    %p236 = scmp.ne.s32.totalorder %s221, %s235
    %p237 = scmp.eq.s32.totalorder %s22, 0
    %p238 = por %p236, %p237
    %s239 = ssub.s32 %s16, %s23
    %p240 = scmp.eq.s32.totalorder %s239, 0
    %s242 = sadd.s32 %s241, 1
    %s243 = scalar_select %p240, %s241, %s242
    %p246 = pneg %p240
    %p247 = scmp.eq.s32.totalorder %s16, 1
    %p248 = por %p246, %p247
    %p249 = scmp.ne.s32.totalorder %s241, %s244
    %p250 = scmp.eq.s32.totalorder %s16, 0
    %p251 = por %p249, %p250
    %p252 = scmp.ne.s32.totalorder %s241, %s244
    %p253 = scmp.eq.s32.totalorder %s21, 1
    %p254 = por %p252, %p253
    %p255 = scmp.ne.s32.totalorder %s244, %s245
    %p256 = scmp.eq.s32.totalorder %s21, 0
    %p257 = por %p255, %p256
    %p258 = scmp.ne.s32.totalorder %s244, %s245
    %p259 = scmp.eq.s32.totalorder %s22, 1
    %p260 = por %p258, %p259
    %p262 = scmp.ne.s32.totalorder %s245, %s261
    %p263 = scmp.eq.s32.totalorder %s22, 0
    %p264 = por %p262, %p263
    %p265 = scmp.le.s32.totalorder 1, %s16
    %p266 = scmp.lt.s32.totalorder %s16, 3
    %p267 = pnand %p265, %p266
    %p268 = pneg %p267
    // Predicated region
    $region9: #{_lambda_.9} parent=5 // pred_check
      _
    $region10: #{_lambda_.9} parent=5 // pred_check_branch
      %270 = sbr.rel (%p267) target = $region12
    $region11: #{_lambda_.9} parent=5 // pred_region
      %s271 = ssub.s32 %s16, 1
      // Predicated region
      $region13: #{_lambda_.9} parent=11 // pred_check
        %p272 = pneg %p63
      $region14: #{_lambda_.9} parent=11 // pred_check_branch
        %274 = sbr.rel (%p272) target = $region16
      $region15: #{_lambda_.9} parent=11 // pred_region
        _
      $region16: #{_lambda_.9} parent=11 // pred_fallthru
        _
      // Predicated region
      $region17: #{_lambda_.9} parent=11 // pred_check
        %p275 = pneg %p84
      $region18: #{_lambda_.9} parent=11 // pred_check_branch
        %277 = sbr.rel (%p275) target = $region20
      $region19: #{_lambda_.9} parent=11 // pred_region
        _
      $region20: #{_lambda_.9} parent=11 // pred_fallthru
        _
      // Predicated region
      $region21: #{_lambda_.9} parent=11 // pred_check
        %p278 = pneg %p105
      $region22: #{_lambda_.9} parent=11 // pred_check_branch
        %280 = sbr.rel (%p278) target = $region24
      $region23: #{_lambda_.9} parent=11 // pred_region
        _
      $region24: #{_lambda_.9} parent=11 // pred_fallthru
        _
      // Predicated region
      $region25: #{_lambda_.9} parent=11 // pred_check
        %p281 = pneg %p126
      $region26: #{_lambda_.9} parent=11 // pred_check_branch
        %283 = sbr.rel (%p281) target = $region28
      $region27: #{_lambda_.9} parent=11 // pred_region
        _
      $region28: #{_lambda_.9} parent=11 // pred_fallthru
        _
      // Predicated region
      $region29: #{_lambda_.9} parent=11 // pred_check
        %p284 = pneg %p147
      $region30: #{_lambda_.9} parent=11 // pred_check_branch
        %286 = sbr.rel (%p284) target = $region32
      $region31: #{_lambda_.9} parent=11 // pred_region
        _
      $region32: #{_lambda_.9} parent=11 // pred_fallthru
        _
      // Predicated region
      $region33: #{_lambda_.9} parent=11 // pred_check
        %p287 = pneg %p168
      $region34: #{_lambda_.9} parent=11 // pred_check_branch
        %289 = sbr.rel (%p287) target = $region36
      $region35: #{_lambda_.9} parent=11 // pred_region
        _
      $region36: #{_lambda_.9} parent=11 // pred_fallthru
        _
      // Predicated region
      $region37: #{_lambda_.9} parent=11 // pred_check
        %p290 = pneg %p189
      $region38: #{_lambda_.9} parent=11 // pred_check_branch
        %292 = sbr.rel (%p290) target = $region40
      $region39: #{_lambda_.9} parent=11 // pred_region
        _
      $region40: #{_lambda_.9} parent=11 // pred_fallthru
        _
      // Predicated region
      $region41: #{_lambda_.9} parent=11 // pred_check
        %p293 = pneg %p210
      $region42: #{_lambda_.9} parent=11 // pred_check_branch
        %295 = sbr.rel (%p293) target = $region44
      $region43: #{_lambda_.9} parent=11 // pred_region
        _
      $region44: #{_lambda_.9} parent=11 // pred_fallthru
        _
      // Predicated region
      $region45: #{_lambda_.9} parent=11 // pred_check
        %p296 = pneg %p231
      $region46: #{_lambda_.9} parent=11 // pred_check_branch
        %298 = sbr.rel (%p296) target = $region48
      $region47: #{_lambda_.9} parent=11 // pred_region
        _
      $region48: #{_lambda_.9} parent=11 // pred_fallthru
        _
    $region12: #{_lambda_.9} parent=5 // pred_fallthru
      _
    %p299 = scmp.lt.s32.totalorder %s16, 2
    // Predicated region
    $region49: #{_lambda_.9} parent=5 // pred_check
      %p300 = pneg %p299
    $region50: #{_lambda_.9} parent=5 // pred_check_branch
      %302 = sbr.rel (%p300) target = $region52
    $region51: #{_lambda_.9} parent=5 // pred_region
      // Predicated region
      $region53: #{_lambda_.9} parent=51 // pred_check
        %p303 = pneg %p36
      $region54: #{_lambda_.9} parent=51 // pred_check_branch
        %305 = sbr.rel (%p303) target = $region56
      $region55: #{_lambda_.9} parent=51 // pred_region
        %s306 = smul.u32 32, %s16
        %p307 = scmp.lt.s32.totalorder %s306, 63
        %s308 = scalar_select %p307, %s306, 63
        %s309 = smul.addr %s308, 4
        %s310 = scalar_lea.vmem %s0, %s309
        %s311 = smul.u32 32, %s16
      $region56: #{_lambda_.9} parent=51 // pred_fallthru
        _
    $region52: #{_lambda_.9} parent=5 // pred_fallthru
      _
    %p312 = scmp.le.s32.totalorder 1, %s16
    %p313 = scmp.lt.s32.totalorder %s16, 3
    %p314 = pnand %p312, %p313
    %p315 = pneg %p314
    // Predicated region
    $region57: #{_lambda_.9} parent=5 // pred_check
      _
    $region58: #{_lambda_.9} parent=5 // pred_check_branch
      %317 = sbr.rel (%p314) target = $region60
    $region59: #{_lambda_.9} parent=5 // pred_region
      %s318 = ssub.s32 %s16, 1
      %s319 = smul.u32 32, %s21
      %p320 = scmp.lt.s32.totalorder %s319, 63
      %s321 = scalar_select %p320, %s319, 63
      %s322 = smul.addr %s321, 4
      %s323 = scalar_lea.vmem %s0, %s322
      %p324 = pneg %p42
      %p325 = pneg %p39
      %p326 = pneg %p63
      %p327 = pneg %p60
      %p328 = pneg %p84
      %p329 = pneg %p81
      %p330 = pneg %p105
      %p331 = pneg %p102
      %p332 = pneg %p126
      %p333 = pneg %p123
      %p334 = pneg %p147
      %p335 = pneg %p144
      %p336 = pneg %p168
      %p337 = pneg %p165
      %p338 = pneg %p189
      %p339 = pneg %p186
      %p340 = pneg %p210
      %p341 = pneg %p207
      %p342 = pneg %p231
      %p343 = pneg %p228
      %p344 = pneg %p257
      %p345 = pneg %p254
      %s346 = smul.u32 8, %s21
      %p347 = scmp.lt.s32.totalorder %s346, 15
      %s348 = scalar_select %p347, %s346, 15
      %s349 = smul.addr %s348, 4
      %s350 = scalar_lea.vmem %s10, %s349
      %s351 = smul.u32 32, %s21
      %p352 = scmp.lt.s32.totalorder %s351, 63
      %s353 = scalar_select %p352, %s351, 63
      %s354 = smul.addr %s353, 4
      %s355 = scalar_lea.vmem %s0, %s354
      %s356 = smul.u32 32, %s21
      %s357 = smul.u32 8, %s21
      %p358 = scmp.lt.s32.totalorder %s357, 15
      %s359 = scalar_select %p358, %s357, 15
      %s360 = smul.addr %s359, 4
      %s361 = scalar_lea.vmem %s10, %s360
      %s362 = smul.u32 8, %s21
      %v364 = vld [vmem:[%s355] sm:$0xf]
      %v365 = vld [vmem:[%s355 + $0x4] sm:$0xf]
      %v366 = vld [vmem:[%s355 + $0x8] sm:$0xf]
      %v367 = vld [vmem:[%s355 + $0xc] sm:$0xf]
      %v368 = vld [vmem:[%s355 + $0x10] sm:$0xf]
      %v369 = vld [vmem:[%s355 + $0x14] sm:$0xf]
      %v370 = vld [vmem:[%s355 + $0x18] sm:$0xf]
      %v371 = vld [vmem:[%s355 + $0x1c] sm:$0xf]
      %v372 = vld [vmem:[%s355 + $0x20] sm:$0xf]
      %v373 = vld [vmem:[%s355 + $0x24] sm:$0xf]
      %v374 = vld [vmem:[%s355 + $0x28] sm:$0xf]
      %v375 = vld [vmem:[%s355 + $0x2c] sm:$0xf]
      %v376 = vld [vmem:[%s355 + $0x30] sm:$0xf]
      %v377 = vld [vmem:[%s355 + $0x34] sm:$0xf]
      %v378 = vld [vmem:[%s355 + $0x38] sm:$0xf]
      %v379 = vld [vmem:[%s355 + $0x3c] sm:$0xf]
      %v380 = vld [vmem:[%s355 + $0x40] sm:$0xf]
      %v381 = vld [vmem:[%s355 + $0x44] sm:$0xf]
      %v382 = vld [vmem:[%s355 + $0x48] sm:$0xf]
      %v383 = vld [vmem:[%s355 + $0x4c] sm:$0xf]
      %v384 = vld [vmem:[%s355 + $0x50] sm:$0xf]
      %v385 = vld [vmem:[%s355 + $0x54] sm:$0xf]
      %v386 = vld [vmem:[%s355 + $0x58] sm:$0xf]
      %v387 = vld [vmem:[%s355 + $0x5c] sm:$0xf]
      %v388 = vld [vmem:[%s355 + $0x60] sm:$0xf]
      %v389 = vld [vmem:[%s355 + $0x64] sm:$0xf]
      %v390 = vld [vmem:[%s355 + $0x68] sm:$0xf]
      %v391 = vld [vmem:[%s355 + $0x6c] sm:$0xf]
      %v392 = vld [vmem:[%s355 + $0x70] sm:$0xf]
      %v393 = vld [vmem:[%s355 + $0x74] sm:$0xf]
      %v394 = vld [vmem:[%s355 + $0x78] sm:$0xf]
      %v395 = vld [vmem:[%s355 + $0x7c] sm:$0xf]
      %v396 = vld [vmem:[%s1] sm:$0xf]
      %v397 = vld [vmem:[%s1 + $0x4] sm:$0xf]
      %v398 = vld [vmem:[%s1 + $0x8] sm:$0xf]
      %v399 = vld [vmem:[%s1 + $0xc] sm:$0xf]
      %v400 = vld [vmem:[%s1 + $0x10] sm:$0xf]
      %v401 = vld [vmem:[%s1 + $0x14] sm:$0xf]
      %v402 = vld [vmem:[%s1 + $0x18] sm:$0xf]
      %v403 = vld [vmem:[%s1 + $0x1c] sm:$0xf]
      %v404 = vld [vmem:[%s1 + $0x20] sm:$0xf]
      %v405 = vld [vmem:[%s1 + $0x24] sm:$0xf]
      %v406 = vld [vmem:[%s1 + $0x28] sm:$0xf]
      %v407 = vld [vmem:[%s1 + $0x2c] sm:$0xf]
      %v408 = vld [vmem:[%s1 + $0x30] sm:$0xf]
      %v409 = vld [vmem:[%s1 + $0x34] sm:$0xf]
      %v410 = vld [vmem:[%s1 + $0x38] sm:$0xf]
      %v411 = vld [vmem:[%s1 + $0x3c] sm:$0xf]
      %v412 = vld [vmem:[%s2] sm:$0x1]
      %v414 = vlaneseq
      %v415 = vshrl.u32 %v414, 7
      %v416 = vsub.s32 0, %v415
      %v417 = vrot.slane %v412, %v416
      %v451 = vunpack.c.l.b16 %v364
      %v452 = vunpack.c.l.b16 %v365
      %v453 = vunpack.c.l.b16 %v366
      %v454 = vunpack.c.l.b16 %v367
      %v455 = vunpack.c.l.b16 %v368
      %v456 = vunpack.c.l.b16 %v369
      %v457 = vunpack.c.l.b16 %v370
      %v458 = vunpack.c.l.b16 %v371
      %v459 = vunpack.c.l.b16 %v372
      %v460 = vunpack.c.l.b16 %v373
      %v461 = vunpack.c.l.b16 %v374
      %v462 = vunpack.c.l.b16 %v375
      %v463 = vunpack.c.l.b16 %v376
      %v464 = vunpack.c.l.b16 %v377
      %v465 = vunpack.c.l.b16 %v378
      %v466 = vunpack.c.l.b16 %v379
      %v467 = vunpack.c.l.b16 %v380
      %v468 = vunpack.c.l.b16 %v381
      %v469 = vunpack.c.l.b16 %v382
      %v470 = vunpack.c.l.b16 %v383
      %v471 = vunpack.c.l.b16 %v384
      %v472 = vunpack.c.l.b16 %v385
      %v473 = vunpack.c.l.b16 %v386
      %v474 = vunpack.c.l.b16 %v387
      %v475 = vunpack.c.l.b16 %v388
      %v476 = vunpack.c.l.b16 %v389
      %v477 = vunpack.c.l.b16 %v390
      %v478 = vunpack.c.l.b16 %v391
      %v479 = vunpack.c.l.b16 %v392
      %v480 = vunpack.c.l.b16 %v393
      %v481 = vunpack.c.l.b16 %v394
      %v482 = vunpack.c.l.b16 %v395
      %v483 = vpack.c.b16 %v452, %v451
      %v484 = vpack.c.b16 %v454, %v453
      %v485 = vpack.c.b16 %v456, %v455
      %v486 = vpack.c.b16 %v458, %v457
      %v487 = vpack.c.b16 %v460, %v459
      %v488 = vpack.c.b16 %v462, %v461
      %v489 = vpack.c.b16 %v464, %v463
      %v490 = vpack.c.b16 %v466, %v465
      %v491 = vpack.c.b16 %v468, %v467
      %v492 = vpack.c.b16 %v470, %v469
      %v493 = vpack.c.b16 %v472, %v471
      %v494 = vpack.c.b16 %v474, %v473
      %v495 = vpack.c.b16 %v476, %v475
      %v496 = vpack.c.b16 %v478, %v477
      %v497 = vpack.c.b16 %v480, %v479
      %v498 = vpack.c.b16 %v482, %v481
      %v531 = vunpack.c.l.b16 %v396
      %v532 = vunpack.c.l.b16 %v397
      %v533 = vunpack.c.l.b16 %v398
      %v534 = vunpack.c.l.b16 %v399
      %v535 = vunpack.c.l.b16 %v400
      %v536 = vunpack.c.l.b16 %v401
      %v537 = vunpack.c.l.b16 %v402
      %v538 = vunpack.c.l.b16 %v403
      %v539 = vunpack.c.l.b16 %v404
      %v540 = vunpack.c.l.b16 %v405
      %v541 = vunpack.c.l.b16 %v406
      %v542 = vunpack.c.l.b16 %v407
      %v543 = vunpack.c.l.b16 %v408
      %v544 = vunpack.c.l.b16 %v409
      %v545 = vunpack.c.l.b16 %v410
      %v546 = vunpack.c.l.b16 %v411
      %v547 = vpack.c.b16 %v532, %v531
      %v548 = vpack.c.b16 %v534, %v533
      %v549 = vpack.c.b16 %v536, %v535
      %v550 = vpack.c.b16 %v538, %v537
      %v551 = vpack.c.b16 %v540, %v539
      %v552 = vpack.c.b16 %v542, %v541
      %v553 = vpack.c.b16 %v544, %v543
      %v554 = vpack.c.b16 %v546, %v545
      %563 = vmatprep.subr.bf16.mxu0 0
      %564 = vmatpush1.bf16.msra.mxu0 %v554
      %565 = vmatprep.subr.bf16.mxu0 0
      %566 = vmatpush1.bf16.msra.mxu0 %v553
      %567 = vmatprep.subr.bf16.mxu0 0
      %568 = vmatpush1.bf16.msra.mxu0 %v552
      %569 = vmatprep.subr.bf16.mxu0 0
      %570 = vmatpush1.bf16.msra.mxu0 %v551
      %571 = vmatprep.subr.bf16.mxu0 0
      %572 = vmatpush1.bf16.msra.mxu0 %v550
      %573 = vmatprep.subr.bf16.mxu0 0
      %574 = vmatpush1.bf16.msra.mxu0 %v549
      %575 = vmatprep.subr.bf16.mxu0 0
      %576 = vmatpush1.bf16.msra.mxu0 %v548
      %577 = vmatprep.subr.bf16.mxu0 0
      %578 = vmatpush1.bf16.msra.mxu0 %v547
      %579 = vmatprep.subr.bf16.mxu0 0
      %580 = vmatpush2.bf16.msra.mxu0 0
      %581 = vmatprep.subr.bf16.mxu0 0
      %582 = vmatpush2.bf16.msra.mxu0 0
      %583 = vmatprep.subr.bf16.mxu0 0
      %584 = vmatpush2.bf16.msra.mxu0 0
      %585 = vmatprep.subr.bf16.mxu0 0
      %586 = vmatpush2.bf16.msra.mxu0 0
      %587 = vmatprep.subr.bf16.mxu0 0
      %588 = vmatpush2.bf16.msra.mxu0 0
      %589 = vmatprep.subr.bf16.mxu0 0
      %590 = vmatpush2.bf16.msra.mxu0 0
      %591 = vmatprep.subr.bf16.mxu0 0
      %592 = vmatpush2.bf16.msra.mxu0 0
      %593 = vmatprep.subr.bf16.mxu0 0
      %594 = vmatpush2.bf16.msra.mxu0 0
      %595 = vmatprep.mubr.bf16.mxu0 0
      %596 = vmatmul.mubr.bf16.gmra.mxu0 %v483
      %v597 = vpop.f32.mrf.mxu0
      %v598 = vadd.f32 %v417, %v597
      %v599 = vpop.f32.mrf.mxu0
      %v600 = vpop.f32.mrf.mxu0
      %v601 = vadd.f32 %v417, %v600
      %v602 = vpop.f32.mrf.mxu0
      %603 = vmatprep.mubr.bf16.mxu0 0
      %604 = vmatmul.mubr.bf16.gmra.mxu0 %v484
      %v605 = vpop.f32.mrf.mxu0
      %v606 = vadd.f32 %v417, %v605
      %v607 = vpop.f32.mrf.mxu0
      %v608 = vpop.f32.mrf.mxu0
      %v609 = vadd.f32 %v417, %v608
      %v610 = vpop.f32.mrf.mxu0
      %611 = vmatprep.mubr.bf16.mxu0 0
      %612 = vmatmul.mubr.bf16.gmra.mxu0 %v485
      %v613 = vpop.f32.mrf.mxu0
      %v614 = vadd.f32 %v417, %v613
      %v615 = vpop.f32.mrf.mxu0
      %v616 = vpop.f32.mrf.mxu0
      %v617 = vadd.f32 %v417, %v616
      %v618 = vpop.f32.mrf.mxu0
      %619 = vmatprep.mubr.bf16.mxu0 0
      %620 = vmatmul.mubr.bf16.gmra.mxu0 %v486
      %v621 = vpop.f32.mrf.mxu0
      %v622 = vadd.f32 %v417, %v621
      %v623 = vpop.f32.mrf.mxu0
      %v624 = vpop.f32.mrf.mxu0
      %v625 = vadd.f32 %v417, %v624
      %v626 = vpop.f32.mrf.mxu0
      %627 = vmatprep.mubr.bf16.mxu0 0
      %628 = vmatmul.mubr.bf16.gmra.mxu0 %v487
      %v629 = vpop.f32.mrf.mxu0
      %v630 = vadd.f32 %v417, %v629
      %v631 = vpop.f32.mrf.mxu0
      %v632 = vpop.f32.mrf.mxu0
      %v633 = vadd.f32 %v417, %v632
      %v634 = vpop.f32.mrf.mxu0
      %635 = vmatprep.mubr.bf16.mxu0 0
      %636 = vmatmul.mubr.bf16.gmra.mxu0 %v488
      %v637 = vpop.f32.mrf.mxu0
      %v638 = vadd.f32 %v417, %v637
      %v639 = vpop.f32.mrf.mxu0
      %v640 = vpop.f32.mrf.mxu0
      %v641 = vadd.f32 %v417, %v640
      %v642 = vpop.f32.mrf.mxu0
      %643 = vmatprep.mubr.bf16.mxu0 0
      %644 = vmatmul.mubr.bf16.gmra.mxu0 %v489
      %v645 = vpop.f32.mrf.mxu0
      %v646 = vadd.f32 %v417, %v645
      %v647 = vpop.f32.mrf.mxu0
      %v648 = vpop.f32.mrf.mxu0
      %v649 = vadd.f32 %v417, %v648
      %v650 = vpop.f32.mrf.mxu0
      %651 = vmatprep.mubr.bf16.mxu0 0
      %652 = vmatmul.mubr.bf16.gmra.mxu0 %v490
      %v653 = vpop.f32.mrf.mxu0
      %v654 = vadd.f32 %v417, %v653
      %v655 = vpop.f32.mrf.mxu0
      %v656 = vpop.f32.mrf.mxu0
      %v657 = vadd.f32 %v417, %v656
      %v658 = vpop.f32.mrf.mxu0
      %659 = vmatprep.mubr.bf16.mxu0 0
      %660 = vmatmul.mubr.bf16.gmra.mxu0 %v491
      %v661 = vpop.f32.mrf.mxu0
      %v662 = vadd.f32 %v417, %v661
      %v663 = vpop.f32.mrf.mxu0
      %v664 = vpop.f32.mrf.mxu0
      %v665 = vadd.f32 %v417, %v664
      %v666 = vpop.f32.mrf.mxu0
      %667 = vmatprep.mubr.bf16.mxu0 0
      %668 = vmatmul.mubr.bf16.gmra.mxu0 %v492
      %v669 = vpop.f32.mrf.mxu0
      %v670 = vadd.f32 %v417, %v669
      %v671 = vpop.f32.mrf.mxu0
      %v672 = vpop.f32.mrf.mxu0
      %v673 = vadd.f32 %v417, %v672
      %v674 = vpop.f32.mrf.mxu0
      %675 = vmatprep.mubr.bf16.mxu0 0
      %676 = vmatmul.mubr.bf16.gmra.mxu0 %v493
      %v677 = vpop.f32.mrf.mxu0
      %v678 = vadd.f32 %v417, %v677
      %v679 = vpop.f32.mrf.mxu0
      %v680 = vpop.f32.mrf.mxu0
      %v681 = vadd.f32 %v417, %v680
      %v682 = vpop.f32.mrf.mxu0
      %683 = vmatprep.mubr.bf16.mxu0 0
      %684 = vmatmul.mubr.bf16.gmra.mxu0 %v494
      %v685 = vpop.f32.mrf.mxu0
      %v686 = vadd.f32 %v417, %v685
      %v687 = vpop.f32.mrf.mxu0
      %v688 = vpop.f32.mrf.mxu0
      %v689 = vadd.f32 %v417, %v688
      %v690 = vpop.f32.mrf.mxu0
      %691 = vmatprep.mubr.bf16.mxu0 0
      %692 = vmatmul.mubr.bf16.gmra.mxu0 %v495
      %v693 = vpop.f32.mrf.mxu0
      %v694 = vadd.f32 %v417, %v693
      %v695 = vpop.f32.mrf.mxu0
      %v696 = vpop.f32.mrf.mxu0
      %v697 = vadd.f32 %v417, %v696
      %v698 = vpop.f32.mrf.mxu0
      %699 = vmatprep.mubr.bf16.mxu0 0
      %700 = vmatmul.mubr.bf16.gmra.mxu0 %v496
      %v701 = vpop.f32.mrf.mxu0
      %v702 = vadd.f32 %v417, %v701
      %v703 = vpop.f32.mrf.mxu0
      %v704 = vpop.f32.mrf.mxu0
      %v705 = vadd.f32 %v417, %v704
      %v706 = vpop.f32.mrf.mxu0
      %707 = vmatprep.mubr.bf16.mxu0 0
      %708 = vmatmul.mubr.bf16.gmra.mxu0 %v497
      %v709 = vpop.f32.mrf.mxu0
      %v710 = vadd.f32 %v417, %v709
      %v711 = vpop.f32.mrf.mxu0
      %v712 = vpop.f32.mrf.mxu0
      %v713 = vadd.f32 %v417, %v712
      %v714 = vpop.f32.mrf.mxu0
      %715 = vmatprep.mubr.bf16.mxu0 0
      %716 = vmatmul.mubr.bf16.gmra.mxu0 %v498
      %v717 = vpop.f32.mrf.mxu0
      %v718 = vadd.f32 %v417, %v717
      %v719 = vpop.f32.mrf.mxu0
      %v720 = vpop.f32.mrf.mxu0
      %v721 = vadd.f32 %v417, %v720
      %v722 = vpop.f32.mrf.mxu0
      %723 = vdwg.mxu0
      %v724 = vmax.f32 %v598, 0.0
      %v725 = vmax.f32 %v601, 0.0
      %v726 = vmax.f32 %v606, 0.0
      %v727 = vmax.f32 %v609, 0.0
      %v728 = vmax.f32 %v614, 0.0
      %v729 = vmax.f32 %v617, 0.0
      %v730 = vmax.f32 %v622, 0.0
      %v731 = vmax.f32 %v625, 0.0
      %v732 = vmax.f32 %v630, 0.0
      %v733 = vmax.f32 %v633, 0.0
      %v734 = vmax.f32 %v638, 0.0
      %v735 = vmax.f32 %v641, 0.0
      %v736 = vmax.f32 %v646, 0.0
      %v737 = vmax.f32 %v649, 0.0
      %v738 = vmax.f32 %v654, 0.0
      %v739 = vmax.f32 %v657, 0.0
      %v740 = vmax.f32 %v662, 0.0
      %v741 = vmax.f32 %v665, 0.0
      %v742 = vmax.f32 %v670, 0.0
      %v743 = vmax.f32 %v673, 0.0
      %v744 = vmax.f32 %v678, 0.0
      %v745 = vmax.f32 %v681, 0.0
      %v746 = vmax.f32 %v686, 0.0
      %v747 = vmax.f32 %v689, 0.0
      %v748 = vmax.f32 %v694, 0.0
      %v749 = vmax.f32 %v697, 0.0
      %v750 = vmax.f32 %v702, 0.0
      %v751 = vmax.f32 %v705, 0.0
      %v752 = vmax.f32 %v710, 0.0
      %v753 = vmax.f32 %v713, 0.0
      %v754 = vmax.f32 %v718, 0.0
      %v755 = vmax.f32 %v721, 0.0
      %v756 = vpack.c.bf16 %v725, %v724
      %v757 = vpack.c.bf16 %v727, %v726
      %v758 = vpack.c.bf16 %v729, %v728
      %v759 = vpack.c.bf16 %v731, %v730
      %v760 = vpack.c.bf16 %v733, %v732
      %v761 = vpack.c.bf16 %v735, %v734
      %v762 = vpack.c.bf16 %v737, %v736
      %v763 = vpack.c.bf16 %v739, %v738
      %v764 = vpack.c.bf16 %v741, %v740
      %v765 = vpack.c.bf16 %v743, %v742
      %v766 = vpack.c.bf16 %v745, %v744
      %v767 = vpack.c.bf16 %v747, %v746
      %v768 = vpack.c.bf16 %v749, %v748
      %v769 = vpack.c.bf16 %v751, %v750
      %v770 = vpack.c.bf16 %v753, %v752
      %v771 = vpack.c.bf16 %v755, %v754
      %v772 = vld [vmem:[%s3] sm:$0xff]
      %v773 = vld [vmem:[%s3 + $0x8] sm:$0xff]
      %v774 = vld [vmem:[%s3 + $0x10] sm:$0xff]
      %v775 = vld [vmem:[%s3 + $0x18] sm:$0xff]
      %v776 = vld [vmem:[%s3 + $0x20] sm:$0xff]
      %v777 = vld [vmem:[%s3 + $0x28] sm:$0xff]
      %v778 = vld [vmem:[%s3 + $0x30] sm:$0xff]
      %v779 = vld [vmem:[%s3 + $0x38] sm:$0xff]
      %v788 = vunpack.c.l.b16 %v772
      %v789 = vunpack.c.h.b16 %v772
      %v790 = vunpack.c.l.b16 %v773
      %v791 = vunpack.c.h.b16 %v773
      %v792 = vunpack.c.l.b16 %v774
      %v793 = vunpack.c.h.b16 %v774
      %v794 = vunpack.c.l.b16 %v775
      %v795 = vunpack.c.h.b16 %v775
      %v796 = vunpack.c.l.b16 %v776
      %v797 = vunpack.c.h.b16 %v776
      %v798 = vunpack.c.l.b16 %v777
      %v799 = vunpack.c.h.b16 %v777
      %v800 = vunpack.c.l.b16 %v778
      %v801 = vunpack.c.h.b16 %v778
      %v802 = vunpack.c.l.b16 %v779
      %v803 = vunpack.c.h.b16 %v779
      %v804 = vpack.c.b16 %v790, %v788
      %v805 = vpack.c.b16 %v791, %v789
      %v806 = vpack.c.b16 %v794, %v792
      %v807 = vpack.c.b16 %v795, %v793
      %v808 = vpack.c.b16 %v798, %v796
      %v809 = vpack.c.b16 %v799, %v797
      %v810 = vpack.c.b16 %v802, %v800
      %v811 = vpack.c.b16 %v803, %v801
      %820 = vmatprep.subr.bf16.mxu0 0
      %821 = vmatpush1.bf16.msra.mxu0 %v763
      %822 = vmatprep.subr.bf16.mxu0 0
      %823 = vmatpush1.bf16.msra.mxu0 %v762
      %824 = vmatprep.subr.bf16.mxu0 0
      %825 = vmatpush1.bf16.msra.mxu0 %v761
      %826 = vmatprep.subr.bf16.mxu0 0
      %827 = vmatpush1.bf16.msra.mxu0 %v760
      %828 = vmatprep.subr.bf16.mxu0 0
      %829 = vmatpush1.bf16.msra.mxu0 %v759
      %830 = vmatprep.subr.bf16.mxu0 0
      %831 = vmatpush1.bf16.msra.mxu0 %v758
      %832 = vmatprep.subr.bf16.mxu0 0
      %833 = vmatpush1.bf16.msra.mxu0 %v757
      %834 = vmatprep.subr.bf16.mxu0 0
      %835 = vmatpush1.bf16.msra.mxu0 %v756
      %836 = vmatprep.subr.bf16.mxu0 0
      %837 = vmatpush2.bf16.msra.mxu0 %v771
      %838 = vmatprep.subr.bf16.mxu0 0
      %839 = vmatpush2.bf16.msra.mxu0 %v770
      %840 = vmatprep.subr.bf16.mxu0 0
      %841 = vmatpush2.bf16.msra.mxu0 %v769
      %842 = vmatprep.subr.bf16.mxu0 0
      %843 = vmatpush2.bf16.msra.mxu0 %v768
      %844 = vmatprep.subr.bf16.mxu0 0
      %845 = vmatpush2.bf16.msra.mxu0 %v767
      %846 = vmatprep.subr.bf16.mxu0 0
      %847 = vmatpush2.bf16.msra.mxu0 %v766
      %848 = vmatprep.subr.bf16.mxu0 0
      %849 = vmatpush2.bf16.msra.mxu0 %v765
      %850 = vmatprep.subr.bf16.mxu0 0
      %851 = vmatpush2.bf16.msra.mxu0 %v764
      %852 = vmatprep.mubr.bf16.mxu0 %v805
      %853 = vmatmul.mubr.bf16.gmra.mxu0 %v804
      %v854 = vpop.f32.mrf.mxu0
      %v855 = vadd.f32 0.0, %v854
      %v856 = vpop.f32.mrf.mxu0
      %v857 = vpop.f32.mrf.mxu0
      %v858 = vadd.f32 0.0, %v857
      %v859 = vpop.f32.mrf.mxu0
      %860 = vmatprep.mubr.bf16.mxu0 %v807
      %861 = vmatmul.mubr.bf16.gmra.mxu0 %v806
      %v862 = vpop.f32.mrf.mxu0
      %v863 = vadd.f32 0.0, %v862
      %v864 = vpop.f32.mrf.mxu0
      %v865 = vpop.f32.mrf.mxu0
      %v866 = vadd.f32 0.0, %v865
      %v867 = vpop.f32.mrf.mxu0
      %868 = vmatprep.mubr.bf16.mxu0 %v809
      %869 = vmatmul.mubr.bf16.gmra.mxu0 %v808
      %v870 = vpop.f32.mrf.mxu0
      %v871 = vadd.f32 0.0, %v870
      %v872 = vpop.f32.mrf.mxu0
      %v873 = vpop.f32.mrf.mxu0
      %v874 = vadd.f32 0.0, %v873
      %v875 = vpop.f32.mrf.mxu0
      %876 = vmatprep.mubr.bf16.mxu0 %v811
      %877 = vmatmul.mubr.bf16.gmra.mxu0 %v810
      %v878 = vpop.f32.mrf.mxu0
      %v879 = vadd.f32 0.0, %v878
      %v880 = vpop.f32.mrf.mxu0
      %v881 = vpop.f32.mrf.mxu0
      %v882 = vadd.f32 0.0, %v881
      %v883 = vpop.f32.mrf.mxu0
      %884 = vdwg.mxu0
      %v885 = vpack.c.bf16 %v858, %v855
      %v886 = vpack.c.bf16 %v866, %v863
      %v887 = vpack.c.bf16 %v874, %v871
      %v888 = vpack.c.bf16 %v882, %v879
      %v889 = vld [vmem:[%s4] sm:$0xf]
      %v890 = vld [vmem:[%s4 + $0x4] sm:$0xf]
      %v891 = vld [vmem:[%s4 + $0x8] sm:$0xf]
      %v892 = vld [vmem:[%s4 + $0xc] sm:$0xf]
      %s893 = scalar_lea.vmem %s3, 64
      %v894 = vld [vmem:[%s893] sm:$0xff]
      %v895 = vld [vmem:[%s893 + $0x8] sm:$0xff]
      %v896 = vld [vmem:[%s893 + $0x10] sm:$0xff]
      %v897 = vld [vmem:[%s893 + $0x18] sm:$0xff]
      %v898 = vld [vmem:[%s893 + $0x20] sm:$0xff]
      %v899 = vld [vmem:[%s893 + $0x28] sm:$0xff]
      %v900 = vld [vmem:[%s893 + $0x30] sm:$0xff]
      %v901 = vld [vmem:[%s893 + $0x38] sm:$0xff]
      %v910 = vunpack.c.l.b16 %v894
      %v911 = vunpack.c.h.b16 %v894
      %v912 = vunpack.c.l.b16 %v895
      %v913 = vunpack.c.h.b16 %v895
      %v914 = vunpack.c.l.b16 %v896
      %v915 = vunpack.c.h.b16 %v896
      %v916 = vunpack.c.l.b16 %v897
      %v917 = vunpack.c.h.b16 %v897
      %v918 = vunpack.c.l.b16 %v898
      %v919 = vunpack.c.h.b16 %v898
      %v920 = vunpack.c.l.b16 %v899
      %v921 = vunpack.c.h.b16 %v899
      %v922 = vunpack.c.l.b16 %v900
      %v923 = vunpack.c.h.b16 %v900
      %v924 = vunpack.c.l.b16 %v901
      %v925 = vunpack.c.h.b16 %v901
      %v926 = vpack.c.b16 %v912, %v910
      %v927 = vpack.c.b16 %v913, %v911
      %v928 = vpack.c.b16 %v916, %v914
      %v929 = vpack.c.b16 %v917, %v915
      %v930 = vpack.c.b16 %v920, %v918
      %v931 = vpack.c.b16 %v921, %v919
      %v932 = vpack.c.b16 %v924, %v922
      %v933 = vpack.c.b16 %v925, %v923
      %942 = vmatprep.subr.bf16.mxu0 0
      %943 = vmatpush1.bf16.msra.mxu0 %v763
      %944 = vmatprep.subr.bf16.mxu0 0
      %945 = vmatpush1.bf16.msra.mxu0 %v762
      %946 = vmatprep.subr.bf16.mxu0 0
      %947 = vmatpush1.bf16.msra.mxu0 %v761
      %948 = vmatprep.subr.bf16.mxu0 0
      %949 = vmatpush1.bf16.msra.mxu0 %v760
      %950 = vmatprep.subr.bf16.mxu0 0
      %951 = vmatpush1.bf16.msra.mxu0 %v759
      %952 = vmatprep.subr.bf16.mxu0 0
      %953 = vmatpush1.bf16.msra.mxu0 %v758
      %954 = vmatprep.subr.bf16.mxu0 0
      %955 = vmatpush1.bf16.msra.mxu0 %v757
      %956 = vmatprep.subr.bf16.mxu0 0
      %957 = vmatpush1.bf16.msra.mxu0 %v756
      %958 = vmatprep.subr.bf16.mxu0 0
      %959 = vmatpush2.bf16.msra.mxu0 %v771
      %960 = vmatprep.subr.bf16.mxu0 0
      %961 = vmatpush2.bf16.msra.mxu0 %v770
      %962 = vmatprep.subr.bf16.mxu0 0
      %963 = vmatpush2.bf16.msra.mxu0 %v769
      %964 = vmatprep.subr.bf16.mxu0 0
      %965 = vmatpush2.bf16.msra.mxu0 %v768
      %966 = vmatprep.subr.bf16.mxu0 0
      %967 = vmatpush2.bf16.msra.mxu0 %v767
      %968 = vmatprep.subr.bf16.mxu0 0
      %969 = vmatpush2.bf16.msra.mxu0 %v766
      %970 = vmatprep.subr.bf16.mxu0 0
      %971 = vmatpush2.bf16.msra.mxu0 %v765
      %972 = vmatprep.subr.bf16.mxu0 0
      %973 = vmatpush2.bf16.msra.mxu0 %v764
      %974 = vmatprep.mubr.bf16.mxu0 %v927
      %975 = vmatmul.mubr.bf16.gmra.mxu0 %v926
      %v976 = vpop.f32.mrf.mxu0
      %v977 = vadd.f32 0.0, %v976
      %v978 = vpop.f32.mrf.mxu0
      %v979 = vpop.f32.mrf.mxu0
      %v980 = vadd.f32 0.0, %v979
      %v981 = vpop.f32.mrf.mxu0
      %982 = vmatprep.mubr.bf16.mxu0 %v929
      %983 = vmatmul.mubr.bf16.gmra.mxu0 %v928
      %v984 = vpop.f32.mrf.mxu0
      %v985 = vadd.f32 0.0, %v984
      %v986 = vpop.f32.mrf.mxu0
      %v987 = vpop.f32.mrf.mxu0
      %v988 = vadd.f32 0.0, %v987
      %v989 = vpop.f32.mrf.mxu0
      %990 = vmatprep.mubr.bf16.mxu0 %v931
      %991 = vmatmul.mubr.bf16.gmra.mxu0 %v930
      %v992 = vpop.f32.mrf.mxu0
      %v993 = vadd.f32 0.0, %v992
      %v994 = vpop.f32.mrf.mxu0
      %v995 = vpop.f32.mrf.mxu0
      %v996 = vadd.f32 0.0, %v995
      %v997 = vpop.f32.mrf.mxu0
      %998 = vmatprep.mubr.bf16.mxu0 %v933
      %999 = vmatmul.mubr.bf16.gmra.mxu0 %v932
      %v1000 = vpop.f32.mrf.mxu0
      %v1001 = vadd.f32 0.0, %v1000
      %v1002 = vpop.f32.mrf.mxu0
      %v1003 = vpop.f32.mrf.mxu0
      %v1004 = vadd.f32 0.0, %v1003
      %v1005 = vpop.f32.mrf.mxu0
      %1006 = vdwg.mxu0
      %v1007 = vpack.c.bf16 %v980, %v977
      %v1008 = vpack.c.bf16 %v988, %v985
      %v1009 = vpack.c.bf16 %v996, %v993
      %v1010 = vpack.c.bf16 %v1004, %v1001
      %s1011 = scalar_lea.vmem %s4, 16
      %v1012 = vld [vmem:[%s1011] sm:$0xf]
      %v1013 = vld [vmem:[%s1011 + $0x4] sm:$0xf]
      %v1014 = vld [vmem:[%s1011 + $0x8] sm:$0xf]
      %v1015 = vld [vmem:[%s1011 + $0xc] sm:$0xf]
      %v1020 = vunpack.c.l.b16 %v1012
      %v1021 = vunpack.c.l.b16 %v1013
      %v1022 = vunpack.c.l.b16 %v1014
      %v1023 = vunpack.c.l.b16 %v1015
      %v1024 = vpack.c.b16 %v1021, %v1020
      %v1025 = vpack.c.b16 %v1023, %v1022
      %vm1028 = vcmask 261120
      %v1030 = vsel %vm1028, %v1007, 0
      %v1033 = vsel %vm1028, %v1008, 0
      %v1036 = vsel %vm1028, %v1009, 0
      %v1039 = vsel %vm1028, %v1010, 0
      %1041 = vmatprep.subr.bf16.mxu0 0
      %1042 = vmatpush1.bf16.msra.mxu0 0
      %1043 = vmatprep.subr.bf16.mxu0 0
      %1044 = vmatpush1.bf16.msra.mxu0 0
      %1045 = vmatprep.subr.bf16.mxu0 0
      %1046 = vmatpush1.bf16.msra.mxu0 0
      %1047 = vmatprep.subr.bf16.mxu0 0
      %1048 = vmatpush1.bf16.msra.mxu0 0
      %1049 = vmatprep.subr.bf16.mxu0 0
      %1050 = vmatpush1.bf16.msra.mxu0 0
      %1051 = vmatprep.subr.bf16.mxu0 0
      %1052 = vmatpush1.bf16.msra.mxu0 0
      %1053 = vmatprep.subr.bf16.mxu0 0
      %1054 = vmatpush1.bf16.msra.mxu0 %v1025
      %1055 = vmatprep.subr.bf16.mxu0 0
      %1056 = vmatpush1.bf16.msra.mxu0 %v1024
      %1057 = vmatprep.subr.bf16.mxu0 0
      %1058 = vmatpush2.bf16.msra.mxu0 0
      %1059 = vmatprep.subr.bf16.mxu0 0
      %1060 = vmatpush2.bf16.msra.mxu0 0
      %1061 = vmatprep.subr.bf16.mxu0 0
      %1062 = vmatpush2.bf16.msra.mxu0 0
      %1063 = vmatprep.subr.bf16.mxu0 0
      %1064 = vmatpush2.bf16.msra.mxu0 0
      %1065 = vmatprep.subr.bf16.mxu0 0
      %1066 = vmatpush2.bf16.msra.mxu0 0
      %1067 = vmatprep.subr.bf16.mxu0 0
      %1068 = vmatpush2.bf16.msra.mxu0 0
      %1069 = vmatprep.subr.bf16.mxu0 0
      %1070 = vmatpush2.bf16.msra.mxu0 0
      %1071 = vmatprep.subr.bf16.mxu0 0
      %1072 = vmatpush2.bf16.msra.mxu0 0
      %1073 = vmatprep.mubr.bf16.mxu0 0
      %1074 = vmatmul.mubr.bf16.gmra.mxu0 %v1030
      %v1075 = vpop.f32.mrf.mxu0
      %v1076 = vadd.f32 0.0, %v1075
      %v1077 = vpop.f32.mrf.mxu0
      %v1078 = vpop.f32.mrf.mxu0
      %v1079 = vadd.f32 0.0, %v1078
      %v1080 = vpop.f32.mrf.mxu0
      %1081 = vmatprep.mubr.bf16.mxu0 0
      %1082 = vmatmul.mubr.bf16.gmra.mxu0 %v1033
      %v1083 = vpop.f32.mrf.mxu0
      %v1084 = vadd.f32 0.0, %v1083
      %v1085 = vpop.f32.mrf.mxu0
      %v1086 = vpop.f32.mrf.mxu0
      %v1087 = vadd.f32 0.0, %v1086
      %v1088 = vpop.f32.mrf.mxu0
      %1089 = vmatprep.mubr.bf16.mxu0 0
      %1090 = vmatmul.mubr.bf16.gmra.mxu0 %v1036
      %v1091 = vpop.f32.mrf.mxu0
      %v1092 = vadd.f32 0.0, %v1091
      %v1093 = vpop.f32.mrf.mxu0
      %v1094 = vpop.f32.mrf.mxu0
      %v1095 = vadd.f32 0.0, %v1094
      %v1096 = vpop.f32.mrf.mxu0
      %1097 = vmatprep.mubr.bf16.mxu0 0
      %1098 = vmatmul.mubr.bf16.gmra.mxu0 %v1039
      %v1099 = vpop.f32.mrf.mxu0
      %v1100 = vadd.f32 0.0, %v1099
      %v1101 = vpop.f32.mrf.mxu0
      %v1102 = vpop.f32.mrf.mxu0
      %v1103 = vadd.f32 0.0, %v1102
      %v1104 = vpop.f32.mrf.mxu0
      %1105 = vdwg.mxu0
      %v1110 = vunpack.c.l.b16 %v889
      %v1111 = vunpack.c.l.b16 %v890
      %v1112 = vunpack.c.l.b16 %v891
      %v1113 = vunpack.c.l.b16 %v892
      %v1114 = vpack.c.b16 %v1111, %v1110
      %v1115 = vpack.c.b16 %v1113, %v1112
      %v1119 = vsel %vm1028, %v885, 0
      %v1122 = vsel %vm1028, %v886, 0
      %v1125 = vsel %vm1028, %v887, 0
      %v1128 = vsel %vm1028, %v888, 0
      %1130 = vmatprep.subr.bf16.mxu0 0
      %1131 = vmatpush1.bf16.msra.mxu0 0
      %1132 = vmatprep.subr.bf16.mxu0 0
      %1133 = vmatpush1.bf16.msra.mxu0 0
      %1134 = vmatprep.subr.bf16.mxu0 0
      %1135 = vmatpush1.bf16.msra.mxu0 0
      %1136 = vmatprep.subr.bf16.mxu0 0
      %1137 = vmatpush1.bf16.msra.mxu0 0
      %1138 = vmatprep.subr.bf16.mxu0 0
      %1139 = vmatpush1.bf16.msra.mxu0 0
      %1140 = vmatprep.subr.bf16.mxu0 0
      %1141 = vmatpush1.bf16.msra.mxu0 0
      %1142 = vmatprep.subr.bf16.mxu0 0
      %1143 = vmatpush1.bf16.msra.mxu0 %v1115
      %1144 = vmatprep.subr.bf16.mxu0 0
      %1145 = vmatpush1.bf16.msra.mxu0 %v1114
      %1146 = vmatprep.subr.bf16.mxu0 0
      %1147 = vmatpush2.bf16.msra.mxu0 0
      %1148 = vmatprep.subr.bf16.mxu0 0
      %1149 = vmatpush2.bf16.msra.mxu0 0
      %1150 = vmatprep.subr.bf16.mxu0 0
      %1151 = vmatpush2.bf16.msra.mxu0 0
      %1152 = vmatprep.subr.bf16.mxu0 0
      %1153 = vmatpush2.bf16.msra.mxu0 0
      %1154 = vmatprep.subr.bf16.mxu0 0
      %1155 = vmatpush2.bf16.msra.mxu0 0
      %1156 = vmatprep.subr.bf16.mxu0 0
      %1157 = vmatpush2.bf16.msra.mxu0 0
      %1158 = vmatprep.subr.bf16.mxu0 0
      %1159 = vmatpush2.bf16.msra.mxu0 0
      %1160 = vmatprep.subr.bf16.mxu0 0
      %1161 = vmatpush2.bf16.msra.mxu0 0
      %1162 = vmatprep.mubr.bf16.mxu0 0
      %1163 = vmatmul.mubr.bf16.gmra.mxu0 %v1119
      %v1164 = vpop.f32.mrf.mxu0
      %v1165 = vadd.f32 %v1076, %v1164
      %v1166 = vpop.f32.mrf.mxu0
      %v1167 = vpop.f32.mrf.mxu0
      %v1168 = vadd.f32 %v1079, %v1167
      %v1169 = vpop.f32.mrf.mxu0
      %1170 = vmatprep.mubr.bf16.mxu0 0
      %1171 = vmatmul.mubr.bf16.gmra.mxu0 %v1122
      %v1172 = vpop.f32.mrf.mxu0
      %v1173 = vadd.f32 %v1084, %v1172
      %v1174 = vpop.f32.mrf.mxu0
      %v1175 = vpop.f32.mrf.mxu0
      %v1176 = vadd.f32 %v1087, %v1175
      %v1177 = vpop.f32.mrf.mxu0
      %1178 = vmatprep.mubr.bf16.mxu0 0
      %1179 = vmatmul.mubr.bf16.gmra.mxu0 %v1125
      %v1180 = vpop.f32.mrf.mxu0
      %v1181 = vadd.f32 %v1092, %v1180
      %v1182 = vpop.f32.mrf.mxu0
      %v1183 = vpop.f32.mrf.mxu0
      %v1184 = vadd.f32 %v1095, %v1183
      %v1185 = vpop.f32.mrf.mxu0
      %1186 = vmatprep.mubr.bf16.mxu0 0
      %1187 = vmatmul.mubr.bf16.gmra.mxu0 %v1128
      %v1188 = vpop.f32.mrf.mxu0
      %v1189 = vadd.f32 %v1100, %v1188
      %v1190 = vpop.f32.mrf.mxu0
      %v1191 = vpop.f32.mrf.mxu0
      %v1192 = vadd.f32 %v1103, %v1191
      %v1193 = vpop.f32.mrf.mxu0
      %1194 = vdwg.mxu0
      %s1195 = scalar_lea.vmem %s3, 128
      %v1196 = vld [vmem:[%s1195] sm:$0xff]
      %v1197 = vld [vmem:[%s1195 + $0x8] sm:$0xff]
      %v1198 = vld [vmem:[%s1195 + $0x10] sm:$0xff]
      %v1199 = vld [vmem:[%s1195 + $0x18] sm:$0xff]
      %v1200 = vld [vmem:[%s1195 + $0x20] sm:$0xff]
      %v1201 = vld [vmem:[%s1195 + $0x28] sm:$0xff]
      %v1202 = vld [vmem:[%s1195 + $0x30] sm:$0xff]
      %v1203 = vld [vmem:[%s1195 + $0x38] sm:$0xff]
      %v1212 = vunpack.c.l.b16 %v1196
      %v1213 = vunpack.c.h.b16 %v1196
      %v1214 = vunpack.c.l.b16 %v1197
      %v1215 = vunpack.c.h.b16 %v1197
      %v1216 = vunpack.c.l.b16 %v1198
      %v1217 = vunpack.c.h.b16 %v1198
      %v1218 = vunpack.c.l.b16 %v1199
      %v1219 = vunpack.c.h.b16 %v1199
      %v1220 = vunpack.c.l.b16 %v1200
      %v1221 = vunpack.c.h.b16 %v1200
      %v1222 = vunpack.c.l.b16 %v1201
      %v1223 = vunpack.c.h.b16 %v1201
      %v1224 = vunpack.c.l.b16 %v1202
      %v1225 = vunpack.c.h.b16 %v1202
      %v1226 = vunpack.c.l.b16 %v1203
      %v1227 = vunpack.c.h.b16 %v1203
      %v1228 = vpack.c.b16 %v1214, %v1212
      %v1229 = vpack.c.b16 %v1215, %v1213
      %v1230 = vpack.c.b16 %v1218, %v1216
      %v1231 = vpack.c.b16 %v1219, %v1217
      %v1232 = vpack.c.b16 %v1222, %v1220
      %v1233 = vpack.c.b16 %v1223, %v1221
      %v1234 = vpack.c.b16 %v1226, %v1224
      %v1235 = vpack.c.b16 %v1227, %v1225
      %1244 = vmatprep.subr.bf16.mxu0 0
      %1245 = vmatpush1.bf16.msra.mxu0 %v763
      %1246 = vmatprep.subr.bf16.mxu0 0
      %1247 = vmatpush1.bf16.msra.mxu0 %v762
      %1248 = vmatprep.subr.bf16.mxu0 0
      %1249 = vmatpush1.bf16.msra.mxu0 %v761
      %1250 = vmatprep.subr.bf16.mxu0 0
      %1251 = vmatpush1.bf16.msra.mxu0 %v760
      %1252 = vmatprep.subr.bf16.mxu0 0
      %1253 = vmatpush1.bf16.msra.mxu0 %v759
      %1254 = vmatprep.subr.bf16.mxu0 0
      %1255 = vmatpush1.bf16.msra.mxu0 %v758
      %1256 = vmatprep.subr.bf16.mxu0 0
      %1257 = vmatpush1.bf16.msra.mxu0 %v757
      %1258 = vmatprep.subr.bf16.mxu0 0
      %1259 = vmatpush1.bf16.msra.mxu0 %v756
      %1260 = vmatprep.subr.bf16.mxu0 0
      %1261 = vmatpush2.bf16.msra.mxu0 %v771
      %1262 = vmatprep.subr.bf16.mxu0 0
      %1263 = vmatpush2.bf16.msra.mxu0 %v770
      %1264 = vmatprep.subr.bf16.mxu0 0
      %1265 = vmatpush2.bf16.msra.mxu0 %v769
      %1266 = vmatprep.subr.bf16.mxu0 0
      %1267 = vmatpush2.bf16.msra.mxu0 %v768
      %1268 = vmatprep.subr.bf16.mxu0 0
      %1269 = vmatpush2.bf16.msra.mxu0 %v767
      %1270 = vmatprep.subr.bf16.mxu0 0
      %1271 = vmatpush2.bf16.msra.mxu0 %v766
      %1272 = vmatprep.subr.bf16.mxu0 0
      %1273 = vmatpush2.bf16.msra.mxu0 %v765
      %1274 = vmatprep.subr.bf16.mxu0 0
      %1275 = vmatpush2.bf16.msra.mxu0 %v764
      %1276 = vmatprep.mubr.bf16.mxu0 %v1229
      %1277 = vmatmul.mubr.bf16.gmra.mxu0 %v1228
      %v1278 = vpop.f32.mrf.mxu0
      %v1279 = vadd.f32 0.0, %v1278
      %v1280 = vpop.f32.mrf.mxu0
      %v1281 = vpop.f32.mrf.mxu0
      %v1282 = vadd.f32 0.0, %v1281
      %v1283 = vpop.f32.mrf.mxu0
      %1284 = vmatprep.mubr.bf16.mxu0 %v1231
      %1285 = vmatmul.mubr.bf16.gmra.mxu0 %v1230
      %v1286 = vpop.f32.mrf.mxu0
      %v1287 = vadd.f32 0.0, %v1286
      %v1288 = vpop.f32.mrf.mxu0
      %v1289 = vpop.f32.mrf.mxu0
      %v1290 = vadd.f32 0.0, %v1289
      %v1291 = vpop.f32.mrf.mxu0
      %1292 = vmatprep.mubr.bf16.mxu0 %v1233
      %1293 = vmatmul.mubr.bf16.gmra.mxu0 %v1232
      %v1294 = vpop.f32.mrf.mxu0
      %v1295 = vadd.f32 0.0, %v1294
      %v1296 = vpop.f32.mrf.mxu0
      %v1297 = vpop.f32.mrf.mxu0
      %v1298 = vadd.f32 0.0, %v1297
      %v1299 = vpop.f32.mrf.mxu0
      %1300 = vmatprep.mubr.bf16.mxu0 %v1235
      %1301 = vmatmul.mubr.bf16.gmra.mxu0 %v1234
      %v1302 = vpop.f32.mrf.mxu0
      %v1303 = vadd.f32 0.0, %v1302
      %v1304 = vpop.f32.mrf.mxu0
      %v1305 = vpop.f32.mrf.mxu0
      %v1306 = vadd.f32 0.0, %v1305
      %v1307 = vpop.f32.mrf.mxu0
      %1308 = vdwg.mxu0
      %v1309 = vpack.c.bf16 %v1282, %v1279
      %v1310 = vpack.c.bf16 %v1290, %v1287
      %v1311 = vpack.c.bf16 %v1298, %v1295
      %v1312 = vpack.c.bf16 %v1306, %v1303
      %s1313 = scalar_lea.vmem %s4, 32
      %v1314 = vld [vmem:[%s1313] sm:$0xf]
      %v1315 = vld [vmem:[%s1313 + $0x4] sm:$0xf]
      %v1316 = vld [vmem:[%s1313 + $0x8] sm:$0xf]
      %v1317 = vld [vmem:[%s1313 + $0xc] sm:$0xf]
      %v1322 = vunpack.c.l.b16 %v1314
      %v1323 = vunpack.c.l.b16 %v1315
      %v1324 = vunpack.c.l.b16 %v1316
      %v1325 = vunpack.c.l.b16 %v1317
      %v1326 = vpack.c.b16 %v1323, %v1322
      %v1327 = vpack.c.b16 %v1325, %v1324
      %v1331 = vsel %vm1028, %v1309, 0
      %v1334 = vsel %vm1028, %v1310, 0
      %v1337 = vsel %vm1028, %v1311, 0
      %v1340 = vsel %vm1028, %v1312, 0
      %1342 = vmatprep.subr.bf16.mxu0 0
      %1343 = vmatpush1.bf16.msra.mxu0 0
      %1344 = vmatprep.subr.bf16.mxu0 0
      %1345 = vmatpush1.bf16.msra.mxu0 0
      %1346 = vmatprep.subr.bf16.mxu0 0
      %1347 = vmatpush1.bf16.msra.mxu0 0
      %1348 = vmatprep.subr.bf16.mxu0 0
      %1349 = vmatpush1.bf16.msra.mxu0 0
      %1350 = vmatprep.subr.bf16.mxu0 0
      %1351 = vmatpush1.bf16.msra.mxu0 0
      %1352 = vmatprep.subr.bf16.mxu0 0
      %1353 = vmatpush1.bf16.msra.mxu0 0
      %1354 = vmatprep.subr.bf16.mxu0 0
      %1355 = vmatpush1.bf16.msra.mxu0 %v1327
      %1356 = vmatprep.subr.bf16.mxu0 0
      %1357 = vmatpush1.bf16.msra.mxu0 %v1326
      %1358 = vmatprep.subr.bf16.mxu0 0
      %1359 = vmatpush2.bf16.msra.mxu0 0
      %1360 = vmatprep.subr.bf16.mxu0 0
      %1361 = vmatpush2.bf16.msra.mxu0 0
      %1362 = vmatprep.subr.bf16.mxu0 0
      %1363 = vmatpush2.bf16.msra.mxu0 0
      %1364 = vmatprep.subr.bf16.mxu0 0
      %1365 = vmatpush2.bf16.msra.mxu0 0
      %1366 = vmatprep.subr.bf16.mxu0 0
      %1367 = vmatpush2.bf16.msra.mxu0 0
      %1368 = vmatprep.subr.bf16.mxu0 0
      %1369 = vmatpush2.bf16.msra.mxu0 0
      %1370 = vmatprep.subr.bf16.mxu0 0
      %1371 = vmatpush2.bf16.msra.mxu0 0
      %1372 = vmatprep.subr.bf16.mxu0 0
      %1373 = vmatpush2.bf16.msra.mxu0 0
      %1374 = vmatprep.mubr.bf16.mxu0 0
      %1375 = vmatmul.mubr.bf16.gmra.mxu0 %v1331
      %v1376 = vpop.f32.mrf.mxu0
      %v1377 = vadd.f32 0.0, %v1376
      %v1378 = vpop.f32.mrf.mxu0
      %v1379 = vpop.f32.mrf.mxu0
      %v1380 = vadd.f32 0.0, %v1379
      %v1381 = vpop.f32.mrf.mxu0
      %1382 = vmatprep.mubr.bf16.mxu0 0
      %1383 = vmatmul.mubr.bf16.gmra.mxu0 %v1334
      %v1384 = vpop.f32.mrf.mxu0
      %v1385 = vadd.f32 0.0, %v1384
      %v1386 = vpop.f32.mrf.mxu0
      %v1387 = vpop.f32.mrf.mxu0
      %v1388 = vadd.f32 0.0, %v1387
      %v1389 = vpop.f32.mrf.mxu0
      %1390 = vmatprep.mubr.bf16.mxu0 0
      %1391 = vmatmul.mubr.bf16.gmra.mxu0 %v1337
      %v1392 = vpop.f32.mrf.mxu0
      %v1393 = vadd.f32 0.0, %v1392
      %v1394 = vpop.f32.mrf.mxu0
      %v1395 = vpop.f32.mrf.mxu0
      %v1396 = vadd.f32 0.0, %v1395
      %v1397 = vpop.f32.mrf.mxu0
      %1398 = vmatprep.mubr.bf16.mxu0 0
      %1399 = vmatmul.mubr.bf16.gmra.mxu0 %v1340
      %v1400 = vpop.f32.mrf.mxu0
      %v1401 = vadd.f32 0.0, %v1400
      %v1402 = vpop.f32.mrf.mxu0
      %v1403 = vpop.f32.mrf.mxu0
      %v1404 = vadd.f32 0.0, %v1403
      %v1405 = vpop.f32.mrf.mxu0
      %1406 = vdwg.mxu0
      %v1407 = vadd.f32 %v1165, %v1377
      %v1408 = vadd.f32 %v1168, %v1380
      %v1409 = vadd.f32 %v1173, %v1385
      %v1410 = vadd.f32 %v1176, %v1388
      %v1411 = vadd.f32 %v1181, %v1393
      %v1412 = vadd.f32 %v1184, %v1396
      %v1413 = vadd.f32 %v1189, %v1401
      %v1414 = vadd.f32 %v1192, %v1404
      %s1415 = scalar_lea.vmem %s3, 192
      %v1416 = vld [vmem:[%s1415] sm:$0xff]
      %v1417 = vld [vmem:[%s1415 + $0x8] sm:$0xff]
      %v1418 = vld [vmem:[%s1415 + $0x10] sm:$0xff]
      %v1419 = vld [vmem:[%s1415 + $0x18] sm:$0xff]
      %v1420 = vld [vmem:[%s1415 + $0x20] sm:$0xff]
      %v1421 = vld [vmem:[%s1415 + $0x28] sm:$0xff]
      %v1422 = vld [vmem:[%s1415 + $0x30] sm:$0xff]
      %v1423 = vld [vmem:[%s1415 + $0x38] sm:$0xff]
      %v1432 = vunpack.c.l.b16 %v1416
      %v1433 = vunpack.c.h.b16 %v1416
      %v1434 = vunpack.c.l.b16 %v1417
      %v1435 = vunpack.c.h.b16 %v1417
      %v1436 = vunpack.c.l.b16 %v1418
      %v1437 = vunpack.c.h.b16 %v1418
      %v1438 = vunpack.c.l.b16 %v1419
      %v1439 = vunpack.c.h.b16 %v1419
      %v1440 = vunpack.c.l.b16 %v1420
      %v1441 = vunpack.c.h.b16 %v1420
      %v1442 = vunpack.c.l.b16 %v1421
      %v1443 = vunpack.c.h.b16 %v1421
      %v1444 = vunpack.c.l.b16 %v1422
      %v1445 = vunpack.c.h.b16 %v1422
      %v1446 = vunpack.c.l.b16 %v1423
      %v1447 = vunpack.c.h.b16 %v1423
      %v1448 = vpack.c.b16 %v1434, %v1432
      %v1449 = vpack.c.b16 %v1435, %v1433
      %v1450 = vpack.c.b16 %v1438, %v1436
      %v1451 = vpack.c.b16 %v1439, %v1437
      %v1452 = vpack.c.b16 %v1442, %v1440
      %v1453 = vpack.c.b16 %v1443, %v1441
      %v1454 = vpack.c.b16 %v1446, %v1444
      %v1455 = vpack.c.b16 %v1447, %v1445
      %1464 = vmatprep.subr.bf16.mxu0 0
      %1465 = vmatpush1.bf16.msra.mxu0 %v763
      %1466 = vmatprep.subr.bf16.mxu0 0
      %1467 = vmatpush1.bf16.msra.mxu0 %v762
      %1468 = vmatprep.subr.bf16.mxu0 0
      %1469 = vmatpush1.bf16.msra.mxu0 %v761
      %1470 = vmatprep.subr.bf16.mxu0 0
      %1471 = vmatpush1.bf16.msra.mxu0 %v760
      %1472 = vmatprep.subr.bf16.mxu0 0
      %1473 = vmatpush1.bf16.msra.mxu0 %v759
      %1474 = vmatprep.subr.bf16.mxu0 0
      %1475 = vmatpush1.bf16.msra.mxu0 %v758
      %1476 = vmatprep.subr.bf16.mxu0 0
      %1477 = vmatpush1.bf16.msra.mxu0 %v757
      %1478 = vmatprep.subr.bf16.mxu0 0
      %1479 = vmatpush1.bf16.msra.mxu0 %v756
      %1480 = vmatprep.subr.bf16.mxu0 0
      %1481 = vmatpush2.bf16.msra.mxu0 %v771
      %1482 = vmatprep.subr.bf16.mxu0 0
      %1483 = vmatpush2.bf16.msra.mxu0 %v770
      %1484 = vmatprep.subr.bf16.mxu0 0
      %1485 = vmatpush2.bf16.msra.mxu0 %v769
      %1486 = vmatprep.subr.bf16.mxu0 0
      %1487 = vmatpush2.bf16.msra.mxu0 %v768
      %1488 = vmatprep.subr.bf16.mxu0 0
      %1489 = vmatpush2.bf16.msra.mxu0 %v767
      %1490 = vmatprep.subr.bf16.mxu0 0
      %1491 = vmatpush2.bf16.msra.mxu0 %v766
      %1492 = vmatprep.subr.bf16.mxu0 0
      %1493 = vmatpush2.bf16.msra.mxu0 %v765
      %1494 = vmatprep.subr.bf16.mxu0 0
      %1495 = vmatpush2.bf16.msra.mxu0 %v764
      %1496 = vmatprep.mubr.bf16.mxu0 %v1449
      %1497 = vmatmul.mubr.bf16.gmra.mxu0 %v1448
      %v1498 = vpop.f32.mrf.mxu0
      %v1499 = vadd.f32 0.0, %v1498
      %v1500 = vpop.f32.mrf.mxu0
      %v1501 = vpop.f32.mrf.mxu0
      %v1502 = vadd.f32 0.0, %v1501
      %v1503 = vpop.f32.mrf.mxu0
      %1504 = vmatprep.mubr.bf16.mxu0 %v1451
      %1505 = vmatmul.mubr.bf16.gmra.mxu0 %v1450
      %v1506 = vpop.f32.mrf.mxu0
      %v1507 = vadd.f32 0.0, %v1506
      %v1508 = vpop.f32.mrf.mxu0
      %v1509 = vpop.f32.mrf.mxu0
      %v1510 = vadd.f32 0.0, %v1509
      %v1511 = vpop.f32.mrf.mxu0
      %1512 = vmatprep.mubr.bf16.mxu0 %v1453
      %1513 = vmatmul.mubr.bf16.gmra.mxu0 %v1452
      %v1514 = vpop.f32.mrf.mxu0
      %v1515 = vadd.f32 0.0, %v1514
      %v1516 = vpop.f32.mrf.mxu0
      %v1517 = vpop.f32.mrf.mxu0
      %v1518 = vadd.f32 0.0, %v1517
      %v1519 = vpop.f32.mrf.mxu0
      %1520 = vmatprep.mubr.bf16.mxu0 %v1455
      %1521 = vmatmul.mubr.bf16.gmra.mxu0 %v1454
      %v1522 = vpop.f32.mrf.mxu0
      %v1523 = vadd.f32 0.0, %v1522
      %v1524 = vpop.f32.mrf.mxu0
      %v1525 = vpop.f32.mrf.mxu0
      %v1526 = vadd.f32 0.0, %v1525
      %v1527 = vpop.f32.mrf.mxu0
      %1528 = vdwg.mxu0
      %v1529 = vpack.c.bf16 %v1502, %v1499
      %v1530 = vpack.c.bf16 %v1510, %v1507
      %v1531 = vpack.c.bf16 %v1518, %v1515
      %v1532 = vpack.c.bf16 %v1526, %v1523
      %s1533 = scalar_lea.vmem %s4, 48
      %v1534 = vld [vmem:[%s1533] sm:$0xf]
      %v1535 = vld [vmem:[%s1533 + $0x4] sm:$0xf]
      %v1536 = vld [vmem:[%s1533 + $0x8] sm:$0xf]
      %v1537 = vld [vmem:[%s1533 + $0xc] sm:$0xf]
      %v1542 = vunpack.c.l.b16 %v1534
      %v1543 = vunpack.c.l.b16 %v1535
      %v1544 = vunpack.c.l.b16 %v1536
      %v1545 = vunpack.c.l.b16 %v1537
      %v1546 = vpack.c.b16 %v1543, %v1542
      %v1547 = vpack.c.b16 %v1545, %v1544
      %v1551 = vsel %vm1028, %v1529, 0
      %v1554 = vsel %vm1028, %v1530, 0
      %v1557 = vsel %vm1028, %v1531, 0
      %v1560 = vsel %vm1028, %v1532, 0
      %1562 = vmatprep.subr.bf16.mxu0 0
      %1563 = vmatpush1.bf16.msra.mxu0 0
      %1564 = vmatprep.subr.bf16.mxu0 0
      %1565 = vmatpush1.bf16.msra.mxu0 0
      %1566 = vmatprep.subr.bf16.mxu0 0
      %1567 = vmatpush1.bf16.msra.mxu0 0
      %1568 = vmatprep.subr.bf16.mxu0 0
      %1569 = vmatpush1.bf16.msra.mxu0 0
      %1570 = vmatprep.subr.bf16.mxu0 0
      %1571 = vmatpush1.bf16.msra.mxu0 0
      %1572 = vmatprep.subr.bf16.mxu0 0
      %1573 = vmatpush1.bf16.msra.mxu0 0
      %1574 = vmatprep.subr.bf16.mxu0 0
      %1575 = vmatpush1.bf16.msra.mxu0 %v1547
      %1576 = vmatprep.subr.bf16.mxu0 0
      %1577 = vmatpush1.bf16.msra.mxu0 %v1546
      %1578 = vmatprep.subr.bf16.mxu0 0
      %1579 = vmatpush2.bf16.msra.mxu0 0
      %1580 = vmatprep.subr.bf16.mxu0 0
      %1581 = vmatpush2.bf16.msra.mxu0 0
      %1582 = vmatprep.subr.bf16.mxu0 0
      %1583 = vmatpush2.bf16.msra.mxu0 0
      %1584 = vmatprep.subr.bf16.mxu0 0
      %1585 = vmatpush2.bf16.msra.mxu0 0
      %1586 = vmatprep.subr.bf16.mxu0 0
      %1587 = vmatpush2.bf16.msra.mxu0 0
      %1588 = vmatprep.subr.bf16.mxu0 0
      %1589 = vmatpush2.bf16.msra.mxu0 0
      %1590 = vmatprep.subr.bf16.mxu0 0
      %1591 = vmatpush2.bf16.msra.mxu0 0
      %1592 = vmatprep.subr.bf16.mxu0 0
      %1593 = vmatpush2.bf16.msra.mxu0 0
      %1594 = vmatprep.mubr.bf16.mxu0 0
      %1595 = vmatmul.mubr.bf16.gmra.mxu0 %v1551
      %v1596 = vpop.f32.mrf.mxu0
      %v1597 = vadd.f32 0.0, %v1596
      %v1598 = vpop.f32.mrf.mxu0
      %v1599 = vpop.f32.mrf.mxu0
      %v1600 = vadd.f32 0.0, %v1599
      %v1601 = vpop.f32.mrf.mxu0
      %1602 = vmatprep.mubr.bf16.mxu0 0
      %1603 = vmatmul.mubr.bf16.gmra.mxu0 %v1554
      %v1604 = vpop.f32.mrf.mxu0
      %v1605 = vadd.f32 0.0, %v1604
      %v1606 = vpop.f32.mrf.mxu0
      %v1607 = vpop.f32.mrf.mxu0
      %v1608 = vadd.f32 0.0, %v1607
      %v1609 = vpop.f32.mrf.mxu0
      %1610 = vmatprep.mubr.bf16.mxu0 0
      %1611 = vmatmul.mubr.bf16.gmra.mxu0 %v1557
      %v1612 = vpop.f32.mrf.mxu0
      %v1613 = vadd.f32 0.0, %v1612
      %v1614 = vpop.f32.mrf.mxu0
      %v1615 = vpop.f32.mrf.mxu0
      %v1616 = vadd.f32 0.0, %v1615
      %v1617 = vpop.f32.mrf.mxu0
      %1618 = vmatprep.mubr.bf16.mxu0 0
      %1619 = vmatmul.mubr.bf16.gmra.mxu0 %v1560
      %v1620 = vpop.f32.mrf.mxu0
      %v1621 = vadd.f32 0.0, %v1620
      %v1622 = vpop.f32.mrf.mxu0
      %v1623 = vpop.f32.mrf.mxu0
      %v1624 = vadd.f32 0.0, %v1623
      %v1625 = vpop.f32.mrf.mxu0
      %1626 = vdwg.mxu0
      %v1627 = vadd.f32 %v1407, %v1597
      %v1628 = vadd.f32 %v1408, %v1600
      %v1629 = vadd.f32 %v1409, %v1605
      %v1630 = vadd.f32 %v1410, %v1608
      %v1631 = vadd.f32 %v1411, %v1613
      %v1632 = vadd.f32 %v1412, %v1616
      %v1633 = vadd.f32 %v1413, %v1621
      %v1634 = vadd.f32 %v1414, %v1624
      %s1635 = scalar_lea.vmem %s3, 256
      %v1636 = vld [vmem:[%s1635] sm:$0xff]
      %v1637 = vld [vmem:[%s1635 + $0x8] sm:$0xff]
      %v1638 = vld [vmem:[%s1635 + $0x10] sm:$0xff]
      %v1639 = vld [vmem:[%s1635 + $0x18] sm:$0xff]
      %v1640 = vld [vmem:[%s1635 + $0x20] sm:$0xff]
      %v1641 = vld [vmem:[%s1635 + $0x28] sm:$0xff]
      %v1642 = vld [vmem:[%s1635 + $0x30] sm:$0xff]
      %v1643 = vld [vmem:[%s1635 + $0x38] sm:$0xff]
      %v1652 = vunpack.c.l.b16 %v1636
      %v1653 = vunpack.c.h.b16 %v1636
      %v1654 = vunpack.c.l.b16 %v1637
      %v1655 = vunpack.c.h.b16 %v1637
      %v1656 = vunpack.c.l.b16 %v1638
      %v1657 = vunpack.c.h.b16 %v1638
      %v1658 = vunpack.c.l.b16 %v1639
      %v1659 = vunpack.c.h.b16 %v1639
      %v1660 = vunpack.c.l.b16 %v1640
      %v1661 = vunpack.c.h.b16 %v1640
      %v1662 = vunpack.c.l.b16 %v1641
      %v1663 = vunpack.c.h.b16 %v1641
      %v1664 = vunpack.c.l.b16 %v1642
      %v1665 = vunpack.c.h.b16 %v1642
      %v1666 = vunpack.c.l.b16 %v1643
      %v1667 = vunpack.c.h.b16 %v1643
      %v1668 = vpack.c.b16 %v1654, %v1652
      %v1669 = vpack.c.b16 %v1655, %v1653
      %v1670 = vpack.c.b16 %v1658, %v1656
      %v1671 = vpack.c.b16 %v1659, %v1657
      %v1672 = vpack.c.b16 %v1662, %v1660
      %v1673 = vpack.c.b16 %v1663, %v1661
      %v1674 = vpack.c.b16 %v1666, %v1664
      %v1675 = vpack.c.b16 %v1667, %v1665
      %1684 = vmatprep.subr.bf16.mxu0 0
      %1685 = vmatpush1.bf16.msra.mxu0 %v763
      %1686 = vmatprep.subr.bf16.mxu0 0
      %1687 = vmatpush1.bf16.msra.mxu0 %v762
      %1688 = vmatprep.subr.bf16.mxu0 0
      %1689 = vmatpush1.bf16.msra.mxu0 %v761
      %1690 = vmatprep.subr.bf16.mxu0 0
      %1691 = vmatpush1.bf16.msra.mxu0 %v760
      %1692 = vmatprep.subr.bf16.mxu0 0
      %1693 = vmatpush1.bf16.msra.mxu0 %v759
      %1694 = vmatprep.subr.bf16.mxu0 0
      %1695 = vmatpush1.bf16.msra.mxu0 %v758
      %1696 = vmatprep.subr.bf16.mxu0 0
      %1697 = vmatpush1.bf16.msra.mxu0 %v757
      %1698 = vmatprep.subr.bf16.mxu0 0
      %1699 = vmatpush1.bf16.msra.mxu0 %v756
      %1700 = vmatprep.subr.bf16.mxu0 0
      %1701 = vmatpush2.bf16.msra.mxu0 %v771
      %1702 = vmatprep.subr.bf16.mxu0 0
      %1703 = vmatpush2.bf16.msra.mxu0 %v770
      %1704 = vmatprep.subr.bf16.mxu0 0
      %1705 = vmatpush2.bf16.msra.mxu0 %v769
      %1706 = vmatprep.subr.bf16.mxu0 0
      %1707 = vmatpush2.bf16.msra.mxu0 %v768
      %1708 = vmatprep.subr.bf16.mxu0 0
      %1709 = vmatpush2.bf16.msra.mxu0 %v767
      %1710 = vmatprep.subr.bf16.mxu0 0
      %1711 = vmatpush2.bf16.msra.mxu0 %v766
      %1712 = vmatprep.subr.bf16.mxu0 0
      %1713 = vmatpush2.bf16.msra.mxu0 %v765
      %1714 = vmatprep.subr.bf16.mxu0 0
      %1715 = vmatpush2.bf16.msra.mxu0 %v764
      %1716 = vmatprep.mubr.bf16.mxu0 %v1669
      %1717 = vmatmul.mubr.bf16.gmra.mxu0 %v1668
      %v1718 = vpop.f32.mrf.mxu0
      %v1719 = vadd.f32 0.0, %v1718
      %v1720 = vpop.f32.mrf.mxu0
      %v1721 = vpop.f32.mrf.mxu0
      %v1722 = vadd.f32 0.0, %v1721
      %v1723 = vpop.f32.mrf.mxu0
      %1724 = vmatprep.mubr.bf16.mxu0 %v1671
      %1725 = vmatmul.mubr.bf16.gmra.mxu0 %v1670
      %v1726 = vpop.f32.mrf.mxu0
      %v1727 = vadd.f32 0.0, %v1726
      %v1728 = vpop.f32.mrf.mxu0
      %v1729 = vpop.f32.mrf.mxu0
      %v1730 = vadd.f32 0.0, %v1729
      %v1731 = vpop.f32.mrf.mxu0
      %1732 = vmatprep.mubr.bf16.mxu0 %v1673
      %1733 = vmatmul.mubr.bf16.gmra.mxu0 %v1672
      %v1734 = vpop.f32.mrf.mxu0
      %v1735 = vadd.f32 0.0, %v1734
      %v1736 = vpop.f32.mrf.mxu0
      %v1737 = vpop.f32.mrf.mxu0
      %v1738 = vadd.f32 0.0, %v1737
      %v1739 = vpop.f32.mrf.mxu0
      %1740 = vmatprep.mubr.bf16.mxu0 %v1675
      %1741 = vmatmul.mubr.bf16.gmra.mxu0 %v1674
      %v1742 = vpop.f32.mrf.mxu0
      %v1743 = vadd.f32 0.0, %v1742
      %v1744 = vpop.f32.mrf.mxu0
      %v1745 = vpop.f32.mrf.mxu0
      %v1746 = vadd.f32 0.0, %v1745
      %v1747 = vpop.f32.mrf.mxu0
      %1748 = vdwg.mxu0
      %v1749 = vpack.c.bf16 %v1722, %v1719
      %v1750 = vpack.c.bf16 %v1730, %v1727
      %v1751 = vpack.c.bf16 %v1738, %v1735
      %v1752 = vpack.c.bf16 %v1746, %v1743
      %s1753 = scalar_lea.vmem %s4, 64
      %v1754 = vld [vmem:[%s1753] sm:$0xf]
      %v1755 = vld [vmem:[%s1753 + $0x4] sm:$0xf]
      %v1756 = vld [vmem:[%s1753 + $0x8] sm:$0xf]
      %v1757 = vld [vmem:[%s1753 + $0xc] sm:$0xf]
      %v1762 = vunpack.c.l.b16 %v1754
      %v1763 = vunpack.c.l.b16 %v1755
      %v1764 = vunpack.c.l.b16 %v1756
      %v1765 = vunpack.c.l.b16 %v1757
      %v1766 = vpack.c.b16 %v1763, %v1762
      %v1767 = vpack.c.b16 %v1765, %v1764
      %v1771 = vsel %vm1028, %v1749, 0
      %v1774 = vsel %vm1028, %v1750, 0
      %v1777 = vsel %vm1028, %v1751, 0
      %v1780 = vsel %vm1028, %v1752, 0
      %1782 = vmatprep.subr.bf16.mxu0 0
      %1783 = vmatpush1.bf16.msra.mxu0 0
      %1784 = vmatprep.subr.bf16.mxu0 0
      %1785 = vmatpush1.bf16.msra.mxu0 0
      %1786 = vmatprep.subr.bf16.mxu0 0
      %1787 = vmatpush1.bf16.msra.mxu0 0
      %1788 = vmatprep.subr.bf16.mxu0 0
      %1789 = vmatpush1.bf16.msra.mxu0 0
      %1790 = vmatprep.subr.bf16.mxu0 0
      %1791 = vmatpush1.bf16.msra.mxu0 0
      %1792 = vmatprep.subr.bf16.mxu0 0
      %1793 = vmatpush1.bf16.msra.mxu0 0
      %1794 = vmatprep.subr.bf16.mxu0 0
      %1795 = vmatpush1.bf16.msra.mxu0 %v1767
      %1796 = vmatprep.subr.bf16.mxu0 0
      %1797 = vmatpush1.bf16.msra.mxu0 %v1766
      %1798 = vmatprep.subr.bf16.mxu0 0
      %1799 = vmatpush2.bf16.msra.mxu0 0
      %1800 = vmatprep.subr.bf16.mxu0 0
      %1801 = vmatpush2.bf16.msra.mxu0 0
      %1802 = vmatprep.subr.bf16.mxu0 0
      %1803 = vmatpush2.bf16.msra.mxu0 0
      %1804 = vmatprep.subr.bf16.mxu0 0
      %1805 = vmatpush2.bf16.msra.mxu0 0
      %1806 = vmatprep.subr.bf16.mxu0 0
      %1807 = vmatpush2.bf16.msra.mxu0 0
      %1808 = vmatprep.subr.bf16.mxu0 0
      %1809 = vmatpush2.bf16.msra.mxu0 0
      %1810 = vmatprep.subr.bf16.mxu0 0
      %1811 = vmatpush2.bf16.msra.mxu0 0
      %1812 = vmatprep.subr.bf16.mxu0 0
      %1813 = vmatpush2.bf16.msra.mxu0 0
      %1814 = vmatprep.mubr.bf16.mxu0 0
      %1815 = vmatmul.mubr.bf16.gmra.mxu0 %v1771
      %v1816 = vpop.f32.mrf.mxu0
      %v1817 = vadd.f32 0.0, %v1816
      %v1818 = vpop.f32.mrf.mxu0
      %v1819 = vpop.f32.mrf.mxu0
      %v1820 = vadd.f32 0.0, %v1819
      %v1821 = vpop.f32.mrf.mxu0
      %1822 = vmatprep.mubr.bf16.mxu0 0
      %1823 = vmatmul.mubr.bf16.gmra.mxu0 %v1774
      %v1824 = vpop.f32.mrf.mxu0
      %v1825 = vadd.f32 0.0, %v1824
      %v1826 = vpop.f32.mrf.mxu0
      %v1827 = vpop.f32.mrf.mxu0
      %v1828 = vadd.f32 0.0, %v1827
      %v1829 = vpop.f32.mrf.mxu0
      %1830 = vmatprep.mubr.bf16.mxu0 0
      %1831 = vmatmul.mubr.bf16.gmra.mxu0 %v1777
      %v1832 = vpop.f32.mrf.mxu0
      %v1833 = vadd.f32 0.0, %v1832
      %v1834 = vpop.f32.mrf.mxu0
      %v1835 = vpop.f32.mrf.mxu0
      %v1836 = vadd.f32 0.0, %v1835
      %v1837 = vpop.f32.mrf.mxu0
      %1838 = vmatprep.mubr.bf16.mxu0 0
      %1839 = vmatmul.mubr.bf16.gmra.mxu0 %v1780
      %v1840 = vpop.f32.mrf.mxu0
      %v1841 = vadd.f32 0.0, %v1840
      %v1842 = vpop.f32.mrf.mxu0
      %v1843 = vpop.f32.mrf.mxu0
      %v1844 = vadd.f32 0.0, %v1843
      %v1845 = vpop.f32.mrf.mxu0
      %1846 = vdwg.mxu0
      %v1847 = vadd.f32 %v1627, %v1817
      %v1848 = vadd.f32 %v1628, %v1820
      %v1849 = vadd.f32 %v1629, %v1825
      %v1850 = vadd.f32 %v1630, %v1828
      %v1851 = vadd.f32 %v1631, %v1833
      %v1852 = vadd.f32 %v1632, %v1836
      %v1853 = vadd.f32 %v1633, %v1841
      %v1854 = vadd.f32 %v1634, %v1844
      %s1855 = scalar_lea.vmem %s3, 320
      %v1856 = vld [vmem:[%s1855] sm:$0xff]
      %v1857 = vld [vmem:[%s1855 + $0x8] sm:$0xff]
      %v1858 = vld [vmem:[%s1855 + $0x10] sm:$0xff]
      %v1859 = vld [vmem:[%s1855 + $0x18] sm:$0xff]
      %v1860 = vld [vmem:[%s1855 + $0x20] sm:$0xff]
      %v1861 = vld [vmem:[%s1855 + $0x28] sm:$0xff]
      %v1862 = vld [vmem:[%s1855 + $0x30] sm:$0xff]
      %v1863 = vld [vmem:[%s1855 + $0x38] sm:$0xff]
      %v1872 = vunpack.c.l.b16 %v1856
      %v1873 = vunpack.c.h.b16 %v1856
      %v1874 = vunpack.c.l.b16 %v1857
      %v1875 = vunpack.c.h.b16 %v1857
      %v1876 = vunpack.c.l.b16 %v1858
      %v1877 = vunpack.c.h.b16 %v1858
      %v1878 = vunpack.c.l.b16 %v1859
      %v1879 = vunpack.c.h.b16 %v1859
      %v1880 = vunpack.c.l.b16 %v1860
      %v1881 = vunpack.c.h.b16 %v1860
      %v1882 = vunpack.c.l.b16 %v1861
      %v1883 = vunpack.c.h.b16 %v1861
      %v1884 = vunpack.c.l.b16 %v1862
      %v1885 = vunpack.c.h.b16 %v1862
      %v1886 = vunpack.c.l.b16 %v1863
      %v1887 = vunpack.c.h.b16 %v1863
      %v1888 = vpack.c.b16 %v1874, %v1872
      %v1889 = vpack.c.b16 %v1875, %v1873
      %v1890 = vpack.c.b16 %v1878, %v1876
      %v1891 = vpack.c.b16 %v1879, %v1877
      %v1892 = vpack.c.b16 %v1882, %v1880
      %v1893 = vpack.c.b16 %v1883, %v1881
      %v1894 = vpack.c.b16 %v1886, %v1884
      %v1895 = vpack.c.b16 %v1887, %v1885
      %1904 = vmatprep.subr.bf16.mxu0 0
      %1905 = vmatpush1.bf16.msra.mxu0 %v763
      %1906 = vmatprep.subr.bf16.mxu0 0
      %1907 = vmatpush1.bf16.msra.mxu0 %v762
      %1908 = vmatprep.subr.bf16.mxu0 0
      %1909 = vmatpush1.bf16.msra.mxu0 %v761
      %1910 = vmatprep.subr.bf16.mxu0 0
      %1911 = vmatpush1.bf16.msra.mxu0 %v760
      %1912 = vmatprep.subr.bf16.mxu0 0
      %1913 = vmatpush1.bf16.msra.mxu0 %v759
      %1914 = vmatprep.subr.bf16.mxu0 0
      %1915 = vmatpush1.bf16.msra.mxu0 %v758
      %1916 = vmatprep.subr.bf16.mxu0 0
      %1917 = vmatpush1.bf16.msra.mxu0 %v757
      %1918 = vmatprep.subr.bf16.mxu0 0
      %1919 = vmatpush1.bf16.msra.mxu0 %v756
      %1920 = vmatprep.subr.bf16.mxu0 0
      %1921 = vmatpush2.bf16.msra.mxu0 %v771
      %1922 = vmatprep.subr.bf16.mxu0 0
      %1923 = vmatpush2.bf16.msra.mxu0 %v770
      %1924 = vmatprep.subr.bf16.mxu0 0
      %1925 = vmatpush2.bf16.msra.mxu0 %v769
      %1926 = vmatprep.subr.bf16.mxu0 0
      %1927 = vmatpush2.bf16.msra.mxu0 %v768
      %1928 = vmatprep.subr.bf16.mxu0 0
      %1929 = vmatpush2.bf16.msra.mxu0 %v767
      %1930 = vmatprep.subr.bf16.mxu0 0
      %1931 = vmatpush2.bf16.msra.mxu0 %v766
      %1932 = vmatprep.subr.bf16.mxu0 0
      %1933 = vmatpush2.bf16.msra.mxu0 %v765
      %1934 = vmatprep.subr.bf16.mxu0 0
      %1935 = vmatpush2.bf16.msra.mxu0 %v764
      %1936 = vmatprep.mubr.bf16.mxu0 %v1889
      %1937 = vmatmul.mubr.bf16.gmra.mxu0 %v1888
      %v1938 = vpop.f32.mrf.mxu0
      %v1939 = vadd.f32 0.0, %v1938
      %v1940 = vpop.f32.mrf.mxu0
      %v1941 = vpop.f32.mrf.mxu0
      %v1942 = vadd.f32 0.0, %v1941
      %v1943 = vpop.f32.mrf.mxu0
      %1944 = vmatprep.mubr.bf16.mxu0 %v1891
      %1945 = vmatmul.mubr.bf16.gmra.mxu0 %v1890
      %v1946 = vpop.f32.mrf.mxu0
      %v1947 = vadd.f32 0.0, %v1946
      %v1948 = vpop.f32.mrf.mxu0
      %v1949 = vpop.f32.mrf.mxu0
      %v1950 = vadd.f32 0.0, %v1949
      %v1951 = vpop.f32.mrf.mxu0
      %1952 = vmatprep.mubr.bf16.mxu0 %v1893
      %1953 = vmatmul.mubr.bf16.gmra.mxu0 %v1892
      %v1954 = vpop.f32.mrf.mxu0
      %v1955 = vadd.f32 0.0, %v1954
      %v1956 = vpop.f32.mrf.mxu0
      %v1957 = vpop.f32.mrf.mxu0
      %v1958 = vadd.f32 0.0, %v1957
      %v1959 = vpop.f32.mrf.mxu0
      %1960 = vmatprep.mubr.bf16.mxu0 %v1895
      %1961 = vmatmul.mubr.bf16.gmra.mxu0 %v1894
      %v1962 = vpop.f32.mrf.mxu0
      %v1963 = vadd.f32 0.0, %v1962
      %v1964 = vpop.f32.mrf.mxu0
      %v1965 = vpop.f32.mrf.mxu0
      %v1966 = vadd.f32 0.0, %v1965
      %v1967 = vpop.f32.mrf.mxu0
      %1968 = vdwg.mxu0
      %v1969 = vpack.c.bf16 %v1942, %v1939
      %v1970 = vpack.c.bf16 %v1950, %v1947
      %v1971 = vpack.c.bf16 %v1958, %v1955
      %v1972 = vpack.c.bf16 %v1966, %v1963
      %s1973 = scalar_lea.vmem %s4, 80
      %v1974 = vld [vmem:[%s1973] sm:$0xf]
      %v1975 = vld [vmem:[%s1973 + $0x4] sm:$0xf]
      %v1976 = vld [vmem:[%s1973 + $0x8] sm:$0xf]
      %v1977 = vld [vmem:[%s1973 + $0xc] sm:$0xf]
      %v1982 = vunpack.c.l.b16 %v1974
      %v1983 = vunpack.c.l.b16 %v1975
      %v1984 = vunpack.c.l.b16 %v1976
      %v1985 = vunpack.c.l.b16 %v1977
      %v1986 = vpack.c.b16 %v1983, %v1982
      %v1987 = vpack.c.b16 %v1985, %v1984
      %v1991 = vsel %vm1028, %v1969, 0
      %v1994 = vsel %vm1028, %v1970, 0
      %v1997 = vsel %vm1028, %v1971, 0
      %v2000 = vsel %vm1028, %v1972, 0
      %2002 = vmatprep.subr.bf16.mxu0 0
      %2003 = vmatpush1.bf16.msra.mxu0 0
      %2004 = vmatprep.subr.bf16.mxu0 0
      %2005 = vmatpush1.bf16.msra.mxu0 0
      %2006 = vmatprep.subr.bf16.mxu0 0
      %2007 = vmatpush1.bf16.msra.mxu0 0
      %2008 = vmatprep.subr.bf16.mxu0 0
      %2009 = vmatpush1.bf16.msra.mxu0 0
      %2010 = vmatprep.subr.bf16.mxu0 0
      %2011 = vmatpush1.bf16.msra.mxu0 0
      %2012 = vmatprep.subr.bf16.mxu0 0
      %2013 = vmatpush1.bf16.msra.mxu0 0
      %2014 = vmatprep.subr.bf16.mxu0 0
      %2015 = vmatpush1.bf16.msra.mxu0 %v1987
      %2016 = vmatprep.subr.bf16.mxu0 0
      %2017 = vmatpush1.bf16.msra.mxu0 %v1986
      %2018 = vmatprep.subr.bf16.mxu0 0
      %2019 = vmatpush2.bf16.msra.mxu0 0
      %2020 = vmatprep.subr.bf16.mxu0 0
      %2021 = vmatpush2.bf16.msra.mxu0 0
      %2022 = vmatprep.subr.bf16.mxu0 0
      %2023 = vmatpush2.bf16.msra.mxu0 0
      %2024 = vmatprep.subr.bf16.mxu0 0
      %2025 = vmatpush2.bf16.msra.mxu0 0
      %2026 = vmatprep.subr.bf16.mxu0 0
      %2027 = vmatpush2.bf16.msra.mxu0 0
      %2028 = vmatprep.subr.bf16.mxu0 0
      %2029 = vmatpush2.bf16.msra.mxu0 0
      %2030 = vmatprep.subr.bf16.mxu0 0
      %2031 = vmatpush2.bf16.msra.mxu0 0
      %2032 = vmatprep.subr.bf16.mxu0 0
      %2033 = vmatpush2.bf16.msra.mxu0 0
      %2034 = vmatprep.mubr.bf16.mxu0 0
      %2035 = vmatmul.mubr.bf16.gmra.mxu0 %v1991
      %v2036 = vpop.f32.mrf.mxu0
      %v2037 = vadd.f32 0.0, %v2036
      %v2038 = vpop.f32.mrf.mxu0
      %v2039 = vpop.f32.mrf.mxu0
      %v2040 = vadd.f32 0.0, %v2039
      %v2041 = vpop.f32.mrf.mxu0
      %2042 = vmatprep.mubr.bf16.mxu0 0
      %2043 = vmatmul.mubr.bf16.gmra.mxu0 %v1994
      %v2044 = vpop.f32.mrf.mxu0
      %v2045 = vadd.f32 0.0, %v2044
      %v2046 = vpop.f32.mrf.mxu0
      %v2047 = vpop.f32.mrf.mxu0
      %v2048 = vadd.f32 0.0, %v2047
      %v2049 = vpop.f32.mrf.mxu0
      %2050 = vmatprep.mubr.bf16.mxu0 0
      %2051 = vmatmul.mubr.bf16.gmra.mxu0 %v1997
      %v2052 = vpop.f32.mrf.mxu0
      %v2053 = vadd.f32 0.0, %v2052
      %v2054 = vpop.f32.mrf.mxu0
      %v2055 = vpop.f32.mrf.mxu0
      %v2056 = vadd.f32 0.0, %v2055
      %v2057 = vpop.f32.mrf.mxu0
      %2058 = vmatprep.mubr.bf16.mxu0 0
      %2059 = vmatmul.mubr.bf16.gmra.mxu0 %v2000
      %v2060 = vpop.f32.mrf.mxu0
      %v2061 = vadd.f32 0.0, %v2060
      %v2062 = vpop.f32.mrf.mxu0
      %v2063 = vpop.f32.mrf.mxu0
      %v2064 = vadd.f32 0.0, %v2063
      %v2065 = vpop.f32.mrf.mxu0
      %2066 = vdwg.mxu0
      %v2067 = vadd.f32 %v1847, %v2037
      %v2068 = vadd.f32 %v1848, %v2040
      %v2069 = vadd.f32 %v1849, %v2045
      %v2070 = vadd.f32 %v1850, %v2048
      %v2071 = vadd.f32 %v1851, %v2053
      %v2072 = vadd.f32 %v1852, %v2056
      %v2073 = vadd.f32 %v1853, %v2061
      %v2074 = vadd.f32 %v1854, %v2064
      %s2075 = scalar_lea.vmem %s3, 384
      %v2076 = vld [vmem:[%s2075] sm:$0xff]
      %v2077 = vld [vmem:[%s2075 + $0x8] sm:$0xff]
      %v2078 = vld [vmem:[%s2075 + $0x10] sm:$0xff]
      %v2079 = vld [vmem:[%s2075 + $0x18] sm:$0xff]
      %v2080 = vld [vmem:[%s2075 + $0x20] sm:$0xff]
      %v2081 = vld [vmem:[%s2075 + $0x28] sm:$0xff]
      %v2082 = vld [vmem:[%s2075 + $0x30] sm:$0xff]
      %v2083 = vld [vmem:[%s2075 + $0x38] sm:$0xff]
      %v2092 = vunpack.c.l.b16 %v2076
      %v2093 = vunpack.c.h.b16 %v2076
      %v2094 = vunpack.c.l.b16 %v2077
      %v2095 = vunpack.c.h.b16 %v2077
      %v2096 = vunpack.c.l.b16 %v2078
      %v2097 = vunpack.c.h.b16 %v2078
      %v2098 = vunpack.c.l.b16 %v2079
      %v2099 = vunpack.c.h.b16 %v2079
      %v2100 = vunpack.c.l.b16 %v2080
      %v2101 = vunpack.c.h.b16 %v2080
      %v2102 = vunpack.c.l.b16 %v2081
      %v2103 = vunpack.c.h.b16 %v2081
      %v2104 = vunpack.c.l.b16 %v2082
      %v2105 = vunpack.c.h.b16 %v2082
      %v2106 = vunpack.c.l.b16 %v2083
      %v2107 = vunpack.c.h.b16 %v2083
      %v2108 = vpack.c.b16 %v2094, %v2092
      %v2109 = vpack.c.b16 %v2095, %v2093
      %v2110 = vpack.c.b16 %v2098, %v2096
      %v2111 = vpack.c.b16 %v2099, %v2097
      %v2112 = vpack.c.b16 %v2102, %v2100
      %v2113 = vpack.c.b16 %v2103, %v2101
      %v2114 = vpack.c.b16 %v2106, %v2104
      %v2115 = vpack.c.b16 %v2107, %v2105
      %2124 = vmatprep.subr.bf16.mxu0 0
      %2125 = vmatpush1.bf16.msra.mxu0 %v763
      %2126 = vmatprep.subr.bf16.mxu0 0
      %2127 = vmatpush1.bf16.msra.mxu0 %v762
      %2128 = vmatprep.subr.bf16.mxu0 0
      %2129 = vmatpush1.bf16.msra.mxu0 %v761
      %2130 = vmatprep.subr.bf16.mxu0 0
      %2131 = vmatpush1.bf16.msra.mxu0 %v760
      %2132 = vmatprep.subr.bf16.mxu0 0
      %2133 = vmatpush1.bf16.msra.mxu0 %v759
      %2134 = vmatprep.subr.bf16.mxu0 0
      %2135 = vmatpush1.bf16.msra.mxu0 %v758
      %2136 = vmatprep.subr.bf16.mxu0 0
      %2137 = vmatpush1.bf16.msra.mxu0 %v757
      %2138 = vmatprep.subr.bf16.mxu0 0
      %2139 = vmatpush1.bf16.msra.mxu0 %v756
      %2140 = vmatprep.subr.bf16.mxu0 0
      %2141 = vmatpush2.bf16.msra.mxu0 %v771
      %2142 = vmatprep.subr.bf16.mxu0 0
      %2143 = vmatpush2.bf16.msra.mxu0 %v770
      %2144 = vmatprep.subr.bf16.mxu0 0
      %2145 = vmatpush2.bf16.msra.mxu0 %v769
      %2146 = vmatprep.subr.bf16.mxu0 0
      %2147 = vmatpush2.bf16.msra.mxu0 %v768
      %2148 = vmatprep.subr.bf16.mxu0 0
      %2149 = vmatpush2.bf16.msra.mxu0 %v767
      %2150 = vmatprep.subr.bf16.mxu0 0
      %2151 = vmatpush2.bf16.msra.mxu0 %v766
      %2152 = vmatprep.subr.bf16.mxu0 0
      %2153 = vmatpush2.bf16.msra.mxu0 %v765
      %2154 = vmatprep.subr.bf16.mxu0 0
      %2155 = vmatpush2.bf16.msra.mxu0 %v764
      %2156 = vmatprep.mubr.bf16.mxu0 %v2109
      %2157 = vmatmul.mubr.bf16.gmra.mxu0 %v2108
      %v2158 = vpop.f32.mrf.mxu0
      %v2159 = vadd.f32 0.0, %v2158
      %v2160 = vpop.f32.mrf.mxu0
      %v2161 = vpop.f32.mrf.mxu0
      %v2162 = vadd.f32 0.0, %v2161
      %v2163 = vpop.f32.mrf.mxu0
      %2164 = vmatprep.mubr.bf16.mxu0 %v2111
      %2165 = vmatmul.mubr.bf16.gmra.mxu0 %v2110
      %v2166 = vpop.f32.mrf.mxu0
      %v2167 = vadd.f32 0.0, %v2166
      %v2168 = vpop.f32.mrf.mxu0
      %v2169 = vpop.f32.mrf.mxu0
      %v2170 = vadd.f32 0.0, %v2169
      %v2171 = vpop.f32.mrf.mxu0
      %2172 = vmatprep.mubr.bf16.mxu0 %v2113
      %2173 = vmatmul.mubr.bf16.gmra.mxu0 %v2112
      %v2174 = vpop.f32.mrf.mxu0
      %v2175 = vadd.f32 0.0, %v2174
      %v2176 = vpop.f32.mrf.mxu0
      %v2177 = vpop.f32.mrf.mxu0
      %v2178 = vadd.f32 0.0, %v2177
      %v2179 = vpop.f32.mrf.mxu0
      %2180 = vmatprep.mubr.bf16.mxu0 %v2115
      %2181 = vmatmul.mubr.bf16.gmra.mxu0 %v2114
      %v2182 = vpop.f32.mrf.mxu0
      %v2183 = vadd.f32 0.0, %v2182
      %v2184 = vpop.f32.mrf.mxu0
      %v2185 = vpop.f32.mrf.mxu0
      %v2186 = vadd.f32 0.0, %v2185
      %v2187 = vpop.f32.mrf.mxu0
      %2188 = vdwg.mxu0
      %v2189 = vpack.c.bf16 %v2162, %v2159
      %v2190 = vpack.c.bf16 %v2170, %v2167
      %v2191 = vpack.c.bf16 %v2178, %v2175
      %v2192 = vpack.c.bf16 %v2186, %v2183
      %s2193 = scalar_lea.vmem %s4, 96
      %v2194 = vld [vmem:[%s2193] sm:$0xf]
      %v2195 = vld [vmem:[%s2193 + $0x4] sm:$0xf]
      %v2196 = vld [vmem:[%s2193 + $0x8] sm:$0xf]
      %v2197 = vld [vmem:[%s2193 + $0xc] sm:$0xf]
      %v2202 = vunpack.c.l.b16 %v2194
      %v2203 = vunpack.c.l.b16 %v2195
      %v2204 = vunpack.c.l.b16 %v2196
      %v2205 = vunpack.c.l.b16 %v2197
      %v2206 = vpack.c.b16 %v2203, %v2202
      %v2207 = vpack.c.b16 %v2205, %v2204
      %v2211 = vsel %vm1028, %v2189, 0
      %v2214 = vsel %vm1028, %v2190, 0
      %v2217 = vsel %vm1028, %v2191, 0
      %v2220 = vsel %vm1028, %v2192, 0
      %2222 = vmatprep.subr.bf16.mxu0 0
      %2223 = vmatpush1.bf16.msra.mxu0 0
      %2224 = vmatprep.subr.bf16.mxu0 0
      %2225 = vmatpush1.bf16.msra.mxu0 0
      %2226 = vmatprep.subr.bf16.mxu0 0
      %2227 = vmatpush1.bf16.msra.mxu0 0
      %2228 = vmatprep.subr.bf16.mxu0 0
      %2229 = vmatpush1.bf16.msra.mxu0 0
      %2230 = vmatprep.subr.bf16.mxu0 0
      %2231 = vmatpush1.bf16.msra.mxu0 0
      %2232 = vmatprep.subr.bf16.mxu0 0
      %2233 = vmatpush1.bf16.msra.mxu0 0
      %2234 = vmatprep.subr.bf16.mxu0 0
      %2235 = vmatpush1.bf16.msra.mxu0 %v2207
      %2236 = vmatprep.subr.bf16.mxu0 0
      %2237 = vmatpush1.bf16.msra.mxu0 %v2206
      %2238 = vmatprep.subr.bf16.mxu0 0
      %2239 = vmatpush2.bf16.msra.mxu0 0
      %2240 = vmatprep.subr.bf16.mxu0 0
      %2241 = vmatpush2.bf16.msra.mxu0 0
      %2242 = vmatprep.subr.bf16.mxu0 0
      %2243 = vmatpush2.bf16.msra.mxu0 0
      %2244 = vmatprep.subr.bf16.mxu0 0
      %2245 = vmatpush2.bf16.msra.mxu0 0
      %2246 = vmatprep.subr.bf16.mxu0 0
      %2247 = vmatpush2.bf16.msra.mxu0 0
      %2248 = vmatprep.subr.bf16.mxu0 0
      %2249 = vmatpush2.bf16.msra.mxu0 0
      %2250 = vmatprep.subr.bf16.mxu0 0
      %2251 = vmatpush2.bf16.msra.mxu0 0
      %2252 = vmatprep.subr.bf16.mxu0 0
      %2253 = vmatpush2.bf16.msra.mxu0 0
      %2254 = vmatprep.mubr.bf16.mxu0 0
      %2255 = vmatmul.mubr.bf16.gmra.mxu0 %v2211
      %v2256 = vpop.f32.mrf.mxu0
      %v2257 = vadd.f32 0.0, %v2256
      %v2258 = vpop.f32.mrf.mxu0
      %v2259 = vpop.f32.mrf.mxu0
      %v2260 = vadd.f32 0.0, %v2259
      %v2261 = vpop.f32.mrf.mxu0
      %2262 = vmatprep.mubr.bf16.mxu0 0
      %2263 = vmatmul.mubr.bf16.gmra.mxu0 %v2214
      %v2264 = vpop.f32.mrf.mxu0
      %v2265 = vadd.f32 0.0, %v2264
      %v2266 = vpop.f32.mrf.mxu0
      %v2267 = vpop.f32.mrf.mxu0
      %v2268 = vadd.f32 0.0, %v2267
      %v2269 = vpop.f32.mrf.mxu0
      %2270 = vmatprep.mubr.bf16.mxu0 0
      %2271 = vmatmul.mubr.bf16.gmra.mxu0 %v2217
      %v2272 = vpop.f32.mrf.mxu0
      %v2273 = vadd.f32 0.0, %v2272
      %v2274 = vpop.f32.mrf.mxu0
      %v2275 = vpop.f32.mrf.mxu0
      %v2276 = vadd.f32 0.0, %v2275
      %v2277 = vpop.f32.mrf.mxu0
      %2278 = vmatprep.mubr.bf16.mxu0 0
      %2279 = vmatmul.mubr.bf16.gmra.mxu0 %v2220
      %v2280 = vpop.f32.mrf.mxu0
      %v2281 = vadd.f32 0.0, %v2280
      %v2282 = vpop.f32.mrf.mxu0
      %v2283 = vpop.f32.mrf.mxu0
      %v2284 = vadd.f32 0.0, %v2283
      %v2285 = vpop.f32.mrf.mxu0
      %2286 = vdwg.mxu0
      %v2287 = vadd.f32 %v2067, %v2257
      %v2288 = vadd.f32 %v2068, %v2260
      %v2289 = vadd.f32 %v2069, %v2265
      %v2290 = vadd.f32 %v2070, %v2268
      %v2291 = vadd.f32 %v2071, %v2273
      %v2292 = vadd.f32 %v2072, %v2276
      %v2293 = vadd.f32 %v2073, %v2281
      %v2294 = vadd.f32 %v2074, %v2284
      %s2295 = scalar_lea.vmem %s3, 448
      %v2296 = vld [vmem:[%s2295] sm:$0xff]
      %v2297 = vld [vmem:[%s2295 + $0x8] sm:$0xff]
      %v2298 = vld [vmem:[%s2295 + $0x10] sm:$0xff]
      %v2299 = vld [vmem:[%s2295 + $0x18] sm:$0xff]
      %v2300 = vld [vmem:[%s2295 + $0x20] sm:$0xff]
      %v2301 = vld [vmem:[%s2295 + $0x28] sm:$0xff]
      %v2302 = vld [vmem:[%s2295 + $0x30] sm:$0xff]
      %v2303 = vld [vmem:[%s2295 + $0x38] sm:$0xff]
      %v2312 = vunpack.c.l.b16 %v2296
      %v2313 = vunpack.c.h.b16 %v2296
      %v2314 = vunpack.c.l.b16 %v2297
      %v2315 = vunpack.c.h.b16 %v2297
      %v2316 = vunpack.c.l.b16 %v2298
      %v2317 = vunpack.c.h.b16 %v2298
      %v2318 = vunpack.c.l.b16 %v2299
      %v2319 = vunpack.c.h.b16 %v2299
      %v2320 = vunpack.c.l.b16 %v2300
      %v2321 = vunpack.c.h.b16 %v2300
      %v2322 = vunpack.c.l.b16 %v2301
      %v2323 = vunpack.c.h.b16 %v2301
      %v2324 = vunpack.c.l.b16 %v2302
      %v2325 = vunpack.c.h.b16 %v2302
      %v2326 = vunpack.c.l.b16 %v2303
      %v2327 = vunpack.c.h.b16 %v2303
      %v2328 = vpack.c.b16 %v2314, %v2312
      %v2329 = vpack.c.b16 %v2315, %v2313
      %v2330 = vpack.c.b16 %v2318, %v2316
      %v2331 = vpack.c.b16 %v2319, %v2317
      %v2332 = vpack.c.b16 %v2322, %v2320
      %v2333 = vpack.c.b16 %v2323, %v2321
      %v2334 = vpack.c.b16 %v2326, %v2324
      %v2335 = vpack.c.b16 %v2327, %v2325
      %2344 = vmatprep.subr.bf16.mxu0 0
      %2345 = vmatpush1.bf16.msra.mxu0 %v763
      %2346 = vmatprep.subr.bf16.mxu0 0
      %2347 = vmatpush1.bf16.msra.mxu0 %v762
      %2348 = vmatprep.subr.bf16.mxu0 0
      %2349 = vmatpush1.bf16.msra.mxu0 %v761
      %2350 = vmatprep.subr.bf16.mxu0 0
      %2351 = vmatpush1.bf16.msra.mxu0 %v760
      %2352 = vmatprep.subr.bf16.mxu0 0
      %2353 = vmatpush1.bf16.msra.mxu0 %v759
      %2354 = vmatprep.subr.bf16.mxu0 0
      %2355 = vmatpush1.bf16.msra.mxu0 %v758
      %2356 = vmatprep.subr.bf16.mxu0 0
      %2357 = vmatpush1.bf16.msra.mxu0 %v757
      %2358 = vmatprep.subr.bf16.mxu0 0
      %2359 = vmatpush1.bf16.msra.mxu0 %v756
      %2360 = vmatprep.subr.bf16.mxu0 0
      %2361 = vmatpush2.bf16.msra.mxu0 %v771
      %2362 = vmatprep.subr.bf16.mxu0 0
      %2363 = vmatpush2.bf16.msra.mxu0 %v770
      %2364 = vmatprep.subr.bf16.mxu0 0
      %2365 = vmatpush2.bf16.msra.mxu0 %v769
      %2366 = vmatprep.subr.bf16.mxu0 0
      %2367 = vmatpush2.bf16.msra.mxu0 %v768
      %2368 = vmatprep.subr.bf16.mxu0 0
      %2369 = vmatpush2.bf16.msra.mxu0 %v767
      %2370 = vmatprep.subr.bf16.mxu0 0
      %2371 = vmatpush2.bf16.msra.mxu0 %v766
      %2372 = vmatprep.subr.bf16.mxu0 0
      %2373 = vmatpush2.bf16.msra.mxu0 %v765
      %2374 = vmatprep.subr.bf16.mxu0 0
      %2375 = vmatpush2.bf16.msra.mxu0 %v764
      %2376 = vmatprep.mubr.bf16.mxu0 %v2329
      %2377 = vmatmul.mubr.bf16.gmra.mxu0 %v2328
      %v2378 = vpop.f32.mrf.mxu0
      %v2379 = vadd.f32 0.0, %v2378
      %v2380 = vpop.f32.mrf.mxu0
      %v2381 = vpop.f32.mrf.mxu0
      %v2382 = vadd.f32 0.0, %v2381
      %v2383 = vpop.f32.mrf.mxu0
      %2384 = vmatprep.mubr.bf16.mxu0 %v2331
      %2385 = vmatmul.mubr.bf16.gmra.mxu0 %v2330
      %v2386 = vpop.f32.mrf.mxu0
      %v2387 = vadd.f32 0.0, %v2386
      %v2388 = vpop.f32.mrf.mxu0
      %v2389 = vpop.f32.mrf.mxu0
      %v2390 = vadd.f32 0.0, %v2389
      %v2391 = vpop.f32.mrf.mxu0
      %2392 = vmatprep.mubr.bf16.mxu0 %v2333
      %2393 = vmatmul.mubr.bf16.gmra.mxu0 %v2332
      %v2394 = vpop.f32.mrf.mxu0
      %v2395 = vadd.f32 0.0, %v2394
      %v2396 = vpop.f32.mrf.mxu0
      %v2397 = vpop.f32.mrf.mxu0
      %v2398 = vadd.f32 0.0, %v2397
      %v2399 = vpop.f32.mrf.mxu0
      %2400 = vmatprep.mubr.bf16.mxu0 %v2335
      %2401 = vmatmul.mubr.bf16.gmra.mxu0 %v2334
      %v2402 = vpop.f32.mrf.mxu0
      %v2403 = vadd.f32 0.0, %v2402
      %v2404 = vpop.f32.mrf.mxu0
      %v2405 = vpop.f32.mrf.mxu0
      %v2406 = vadd.f32 0.0, %v2405
      %v2407 = vpop.f32.mrf.mxu0
      %2408 = vdwg.mxu0
      %v2409 = vpack.c.bf16 %v2382, %v2379
      %v2410 = vpack.c.bf16 %v2390, %v2387
      %v2411 = vpack.c.bf16 %v2398, %v2395
      %v2412 = vpack.c.bf16 %v2406, %v2403
      %s2413 = scalar_lea.vmem %s4, 112
      %v2414 = vld [vmem:[%s2413] sm:$0xf]
      %v2415 = vld [vmem:[%s2413 + $0x4] sm:$0xf]
      %v2416 = vld [vmem:[%s2413 + $0x8] sm:$0xf]
      %v2417 = vld [vmem:[%s2413 + $0xc] sm:$0xf]
      %v2422 = vunpack.c.l.b16 %v2414
      %v2423 = vunpack.c.l.b16 %v2415
      %v2424 = vunpack.c.l.b16 %v2416
      %v2425 = vunpack.c.l.b16 %v2417
      %v2426 = vpack.c.b16 %v2423, %v2422
      %v2427 = vpack.c.b16 %v2425, %v2424
      %v2431 = vsel %vm1028, %v2409, 0
      %v2434 = vsel %vm1028, %v2410, 0
      %v2437 = vsel %vm1028, %v2411, 0
      %v2440 = vsel %vm1028, %v2412, 0
      %2442 = vmatprep.subr.bf16.mxu0 0
      %2443 = vmatpush1.bf16.msra.mxu0 0
      %2444 = vmatprep.subr.bf16.mxu0 0
      %2445 = vmatpush1.bf16.msra.mxu0 0
      %2446 = vmatprep.subr.bf16.mxu0 0
      %2447 = vmatpush1.bf16.msra.mxu0 0
      %2448 = vmatprep.subr.bf16.mxu0 0
      %2449 = vmatpush1.bf16.msra.mxu0 0
      %2450 = vmatprep.subr.bf16.mxu0 0
      %2451 = vmatpush1.bf16.msra.mxu0 0
      %2452 = vmatprep.subr.bf16.mxu0 0
      %2453 = vmatpush1.bf16.msra.mxu0 0
      %2454 = vmatprep.subr.bf16.mxu0 0
      %2455 = vmatpush1.bf16.msra.mxu0 %v2427
      %2456 = vmatprep.subr.bf16.mxu0 0
      %2457 = vmatpush1.bf16.msra.mxu0 %v2426
      %2458 = vmatprep.subr.bf16.mxu0 0
      %2459 = vmatpush2.bf16.msra.mxu0 0
      %2460 = vmatprep.subr.bf16.mxu0 0
      %2461 = vmatpush2.bf16.msra.mxu0 0
      %2462 = vmatprep.subr.bf16.mxu0 0
      %2463 = vmatpush2.bf16.msra.mxu0 0
      %2464 = vmatprep.subr.bf16.mxu0 0
      %2465 = vmatpush2.bf16.msra.mxu0 0
      %2466 = vmatprep.subr.bf16.mxu0 0
      %2467 = vmatpush2.bf16.msra.mxu0 0
      %2468 = vmatprep.subr.bf16.mxu0 0
      %2469 = vmatpush2.bf16.msra.mxu0 0
      %2470 = vmatprep.subr.bf16.mxu0 0
      %2471 = vmatpush2.bf16.msra.mxu0 0
      %2472 = vmatprep.subr.bf16.mxu0 0
      %2473 = vmatpush2.bf16.msra.mxu0 0
      %2474 = vmatprep.mubr.bf16.mxu0 0
      %2475 = vmatmul.mubr.bf16.gmra.mxu0 %v2431
      %v2476 = vpop.f32.mrf.mxu0
      %v2477 = vadd.f32 0.0, %v2476
      %v2478 = vpop.f32.mrf.mxu0
      %v2479 = vpop.f32.mrf.mxu0
      %v2480 = vadd.f32 0.0, %v2479
      %v2481 = vpop.f32.mrf.mxu0
      %2482 = vmatprep.mubr.bf16.mxu0 0
      %2483 = vmatmul.mubr.bf16.gmra.mxu0 %v2434
      %v2484 = vpop.f32.mrf.mxu0
      %v2485 = vadd.f32 0.0, %v2484
      %v2486 = vpop.f32.mrf.mxu0
      %v2487 = vpop.f32.mrf.mxu0
      %v2488 = vadd.f32 0.0, %v2487
      %v2489 = vpop.f32.mrf.mxu0
      %2490 = vmatprep.mubr.bf16.mxu0 0
      %2491 = vmatmul.mubr.bf16.gmra.mxu0 %v2437
      %v2492 = vpop.f32.mrf.mxu0
      %v2493 = vadd.f32 0.0, %v2492
      %v2494 = vpop.f32.mrf.mxu0
      %v2495 = vpop.f32.mrf.mxu0
      %v2496 = vadd.f32 0.0, %v2495
      %v2497 = vpop.f32.mrf.mxu0
      %2498 = vmatprep.mubr.bf16.mxu0 0
      %2499 = vmatmul.mubr.bf16.gmra.mxu0 %v2440
      %v2500 = vpop.f32.mrf.mxu0
      %v2501 = vadd.f32 0.0, %v2500
      %v2502 = vpop.f32.mrf.mxu0
      %v2503 = vpop.f32.mrf.mxu0
      %v2504 = vadd.f32 0.0, %v2503
      %v2505 = vpop.f32.mrf.mxu0
      %2506 = vdwg.mxu0
      %v2507 = vadd.f32 %v2287, %v2477
      %v2508 = vadd.f32 %v2288, %v2480
      %v2509 = vadd.f32 %v2289, %v2485
      %v2510 = vadd.f32 %v2290, %v2488
      %v2511 = vadd.f32 %v2291, %v2493
      %v2512 = vadd.f32 %v2292, %v2496
      %v2513 = vadd.f32 %v2293, %v2501
      %v2514 = vadd.f32 %v2294, %v2504
      %s2515 = scalar_lea.vmem %s3, 512
      %v2516 = vld [vmem:[%s2515] sm:$0xff]
      %v2517 = vld [vmem:[%s2515 + $0x8] sm:$0xff]
      %v2518 = vld [vmem:[%s2515 + $0x10] sm:$0xff]
      %v2519 = vld [vmem:[%s2515 + $0x18] sm:$0xff]
      %v2520 = vld [vmem:[%s2515 + $0x20] sm:$0xff]
      %v2521 = vld [vmem:[%s2515 + $0x28] sm:$0xff]
      %v2522 = vld [vmem:[%s2515 + $0x30] sm:$0xff]
      %v2523 = vld [vmem:[%s2515 + $0x38] sm:$0xff]
      %v2532 = vunpack.c.l.b16 %v2516
      %v2533 = vunpack.c.h.b16 %v2516
      %v2534 = vunpack.c.l.b16 %v2517
      %v2535 = vunpack.c.h.b16 %v2517
      %v2536 = vunpack.c.l.b16 %v2518
      %v2537 = vunpack.c.h.b16 %v2518
      %v2538 = vunpack.c.l.b16 %v2519
      %v2539 = vunpack.c.h.b16 %v2519
      %v2540 = vunpack.c.l.b16 %v2520
      %v2541 = vunpack.c.h.b16 %v2520
      %v2542 = vunpack.c.l.b16 %v2521
      %v2543 = vunpack.c.h.b16 %v2521
      %v2544 = vunpack.c.l.b16 %v2522
      %v2545 = vunpack.c.h.b16 %v2522
      %v2546 = vunpack.c.l.b16 %v2523
      %v2547 = vunpack.c.h.b16 %v2523
      %v2548 = vpack.c.b16 %v2534, %v2532
      %v2549 = vpack.c.b16 %v2535, %v2533
      %v2550 = vpack.c.b16 %v2538, %v2536
      %v2551 = vpack.c.b16 %v2539, %v2537
      %v2552 = vpack.c.b16 %v2542, %v2540
      %v2553 = vpack.c.b16 %v2543, %v2541
      %v2554 = vpack.c.b16 %v2546, %v2544
      %v2555 = vpack.c.b16 %v2547, %v2545
      %2564 = vmatprep.subr.bf16.mxu0 0
      %2565 = vmatpush1.bf16.msra.mxu0 %v763
      %2566 = vmatprep.subr.bf16.mxu0 0
      %2567 = vmatpush1.bf16.msra.mxu0 %v762
      %2568 = vmatprep.subr.bf16.mxu0 0
      %2569 = vmatpush1.bf16.msra.mxu0 %v761
      %2570 = vmatprep.subr.bf16.mxu0 0
      %2571 = vmatpush1.bf16.msra.mxu0 %v760
      %2572 = vmatprep.subr.bf16.mxu0 0
      %2573 = vmatpush1.bf16.msra.mxu0 %v759
      %2574 = vmatprep.subr.bf16.mxu0 0
      %2575 = vmatpush1.bf16.msra.mxu0 %v758
      %2576 = vmatprep.subr.bf16.mxu0 0
      %2577 = vmatpush1.bf16.msra.mxu0 %v757
      %2578 = vmatprep.subr.bf16.mxu0 0
      %2579 = vmatpush1.bf16.msra.mxu0 %v756
      %2580 = vmatprep.subr.bf16.mxu0 0
      %2581 = vmatpush2.bf16.msra.mxu0 %v771
      %2582 = vmatprep.subr.bf16.mxu0 0
      %2583 = vmatpush2.bf16.msra.mxu0 %v770
      %2584 = vmatprep.subr.bf16.mxu0 0
      %2585 = vmatpush2.bf16.msra.mxu0 %v769
      %2586 = vmatprep.subr.bf16.mxu0 0
      %2587 = vmatpush2.bf16.msra.mxu0 %v768
      %2588 = vmatprep.subr.bf16.mxu0 0
      %2589 = vmatpush2.bf16.msra.mxu0 %v767
      %2590 = vmatprep.subr.bf16.mxu0 0
      %2591 = vmatpush2.bf16.msra.mxu0 %v766
      %2592 = vmatprep.subr.bf16.mxu0 0
      %2593 = vmatpush2.bf16.msra.mxu0 %v765
      %2594 = vmatprep.subr.bf16.mxu0 0
      %2595 = vmatpush2.bf16.msra.mxu0 %v764
      %2596 = vmatprep.mubr.bf16.mxu0 %v2549
      %2597 = vmatmul.mubr.bf16.gmra.mxu0 %v2548
      %v2598 = vpop.f32.mrf.mxu0
      %v2599 = vadd.f32 0.0, %v2598
      %v2600 = vpop.f32.mrf.mxu0
      %v2601 = vpop.f32.mrf.mxu0
      %v2602 = vadd.f32 0.0, %v2601
      %v2603 = vpop.f32.mrf.mxu0
      %2604 = vmatprep.mubr.bf16.mxu0 %v2551
      %2605 = vmatmul.mubr.bf16.gmra.mxu0 %v2550
      %v2606 = vpop.f32.mrf.mxu0
      %v2607 = vadd.f32 0.0, %v2606
      %v2608 = vpop.f32.mrf.mxu0
      %v2609 = vpop.f32.mrf.mxu0
      %v2610 = vadd.f32 0.0, %v2609
      %v2611 = vpop.f32.mrf.mxu0
      %2612 = vmatprep.mubr.bf16.mxu0 %v2553
      %2613 = vmatmul.mubr.bf16.gmra.mxu0 %v2552
      %v2614 = vpop.f32.mrf.mxu0
      %v2615 = vadd.f32 0.0, %v2614
      %v2616 = vpop.f32.mrf.mxu0
      %v2617 = vpop.f32.mrf.mxu0
      %v2618 = vadd.f32 0.0, %v2617
      %v2619 = vpop.f32.mrf.mxu0
      %2620 = vmatprep.mubr.bf16.mxu0 %v2555
      %2621 = vmatmul.mubr.bf16.gmra.mxu0 %v2554
      %v2622 = vpop.f32.mrf.mxu0
      %v2623 = vadd.f32 0.0, %v2622
      %v2624 = vpop.f32.mrf.mxu0
      %v2625 = vpop.f32.mrf.mxu0
      %v2626 = vadd.f32 0.0, %v2625
      %v2627 = vpop.f32.mrf.mxu0
      %2628 = vdwg.mxu0
      %v2629 = vpack.c.bf16 %v2602, %v2599
      %v2630 = vpack.c.bf16 %v2610, %v2607
      %v2631 = vpack.c.bf16 %v2618, %v2615
      %v2632 = vpack.c.bf16 %v2626, %v2623
      %s2633 = scalar_lea.vmem %s4, 128
      %v2634 = vld [vmem:[%s2633] sm:$0xf]
      %v2635 = vld [vmem:[%s2633 + $0x4] sm:$0xf]
      %v2636 = vld [vmem:[%s2633 + $0x8] sm:$0xf]
      %v2637 = vld [vmem:[%s2633 + $0xc] sm:$0xf]
      %v2642 = vunpack.c.l.b16 %v2634
      %v2643 = vunpack.c.l.b16 %v2635
      %v2644 = vunpack.c.l.b16 %v2636
      %v2645 = vunpack.c.l.b16 %v2637
      %v2646 = vpack.c.b16 %v2643, %v2642
      %v2647 = vpack.c.b16 %v2645, %v2644
      %v2651 = vsel %vm1028, %v2629, 0
      %v2654 = vsel %vm1028, %v2630, 0
      %v2657 = vsel %vm1028, %v2631, 0
      %v2660 = vsel %vm1028, %v2632, 0
      %2662 = vmatprep.subr.bf16.mxu0 0
      %2663 = vmatpush1.bf16.msra.mxu0 0
      %2664 = vmatprep.subr.bf16.mxu0 0
      %2665 = vmatpush1.bf16.msra.mxu0 0
      %2666 = vmatprep.subr.bf16.mxu0 0
      %2667 = vmatpush1.bf16.msra.mxu0 0
      %2668 = vmatprep.subr.bf16.mxu0 0
      %2669 = vmatpush1.bf16.msra.mxu0 0
      %2670 = vmatprep.subr.bf16.mxu0 0
      %2671 = vmatpush1.bf16.msra.mxu0 0
      %2672 = vmatprep.subr.bf16.mxu0 0
      %2673 = vmatpush1.bf16.msra.mxu0 0
      %2674 = vmatprep.subr.bf16.mxu0 0
      %2675 = vmatpush1.bf16.msra.mxu0 %v2647
      %2676 = vmatprep.subr.bf16.mxu0 0
      %2677 = vmatpush1.bf16.msra.mxu0 %v2646
      %2678 = vmatprep.subr.bf16.mxu0 0
      %2679 = vmatpush2.bf16.msra.mxu0 0
      %2680 = vmatprep.subr.bf16.mxu0 0
      %2681 = vmatpush2.bf16.msra.mxu0 0
      %2682 = vmatprep.subr.bf16.mxu0 0
      %2683 = vmatpush2.bf16.msra.mxu0 0
      %2684 = vmatprep.subr.bf16.mxu0 0
      %2685 = vmatpush2.bf16.msra.mxu0 0
      %2686 = vmatprep.subr.bf16.mxu0 0
      %2687 = vmatpush2.bf16.msra.mxu0 0
      %2688 = vmatprep.subr.bf16.mxu0 0
      %2689 = vmatpush2.bf16.msra.mxu0 0
      %2690 = vmatprep.subr.bf16.mxu0 0
      %2691 = vmatpush2.bf16.msra.mxu0 0
      %2692 = vmatprep.subr.bf16.mxu0 0
      %2693 = vmatpush2.bf16.msra.mxu0 0
      %2694 = vmatprep.mubr.bf16.mxu0 0
      %2695 = vmatmul.mubr.bf16.gmra.mxu0 %v2651
      %v2696 = vpop.f32.mrf.mxu0
      %v2697 = vadd.f32 0.0, %v2696
      %v2698 = vpop.f32.mrf.mxu0
      %v2699 = vpop.f32.mrf.mxu0
      %v2700 = vadd.f32 0.0, %v2699
      %v2701 = vpop.f32.mrf.mxu0
      %2702 = vmatprep.mubr.bf16.mxu0 0
      %2703 = vmatmul.mubr.bf16.gmra.mxu0 %v2654
      %v2704 = vpop.f32.mrf.mxu0
      %v2705 = vadd.f32 0.0, %v2704
      %v2706 = vpop.f32.mrf.mxu0
      %v2707 = vpop.f32.mrf.mxu0
      %v2708 = vadd.f32 0.0, %v2707
      %v2709 = vpop.f32.mrf.mxu0
      %2710 = vmatprep.mubr.bf16.mxu0 0
      %2711 = vmatmul.mubr.bf16.gmra.mxu0 %v2657
      %v2712 = vpop.f32.mrf.mxu0
      %v2713 = vadd.f32 0.0, %v2712
      %v2714 = vpop.f32.mrf.mxu0
      %v2715 = vpop.f32.mrf.mxu0
      %v2716 = vadd.f32 0.0, %v2715
      %v2717 = vpop.f32.mrf.mxu0
      %2718 = vmatprep.mubr.bf16.mxu0 0
      %2719 = vmatmul.mubr.bf16.gmra.mxu0 %v2660
      %v2720 = vpop.f32.mrf.mxu0
      %v2721 = vadd.f32 0.0, %v2720
      %v2722 = vpop.f32.mrf.mxu0
      %v2723 = vpop.f32.mrf.mxu0
      %v2724 = vadd.f32 0.0, %v2723
      %v2725 = vpop.f32.mrf.mxu0
      %2726 = vdwg.mxu0
      %v2727 = vadd.f32 %v2507, %v2697
      %v2728 = vadd.f32 %v2508, %v2700
      %v2729 = vadd.f32 %v2509, %v2705
      %v2730 = vadd.f32 %v2510, %v2708
      %v2731 = vadd.f32 %v2511, %v2713
      %v2732 = vadd.f32 %v2512, %v2716
      %v2733 = vadd.f32 %v2513, %v2721
      %v2734 = vadd.f32 %v2514, %v2724
      %v2735 = vld [vmem:[%s5] sm:$0x1]
      %v2737 = vlaneseq
      %v2738 = vshrl.u32 %v2737, 7
      %v2739 = vsub.s32 0, %v2738
      %v2740 = vrot.slane %v2735, %v2739
      %v2742 = vadd.f32 %v2727, %v2740
      %v2743 = vadd.f32 %v2728, %v2740
      %v2744 = vadd.f32 %v2729, %v2740
      %v2745 = vadd.f32 %v2730, %v2740
      %v2746 = vadd.f32 %v2731, %v2740
      %v2747 = vadd.f32 %v2732, %v2740
      %v2748 = vadd.f32 %v2733, %v2740
      %v2749 = vadd.f32 %v2734, %v2740
      %v2750 = vmax.f32 %v2742, 0.0
      %v2751 = vmax.f32 %v2743, 0.0
      %v2752 = vmax.f32 %v2744, 0.0
      %v2753 = vmax.f32 %v2745, 0.0
      %v2754 = vmax.f32 %v2746, 0.0
      %v2755 = vmax.f32 %v2747, 0.0
      %v2756 = vmax.f32 %v2748, 0.0
      %v2757 = vmax.f32 %v2749, 0.0
      %v2758 = vpack.c.bf16 %v2751, %v2750
      %v2759 = vpack.c.bf16 %v2753, %v2752
      %v2760 = vpack.c.bf16 %v2755, %v2754
      %v2761 = vpack.c.bf16 %v2757, %v2756
      %v2762 = vld [vmem:[%s6] sm:$0xf]
      %v2763 = vld [vmem:[%s6 + $0x4] sm:$0xf]
      %v2764 = vld [vmem:[%s6 + $0x8] sm:$0xf]
      %v2765 = vld [vmem:[%s6 + $0xc] sm:$0xf]
      %v2766 = vld [vmem:[%s7] sm:$0x1]
      %v2768 = vlaneseq
      %v2769 = vshrl.u32 %v2768, 7
      %v2770 = vsub.s32 0, %v2769
      %v2771 = vrot.slane %v2766, %v2770
      %v2777 = vunpack.c.l.b16 %v2762
      %v2778 = vunpack.c.l.b16 %v2763
      %v2779 = vunpack.c.l.b16 %v2764
      %v2780 = vunpack.c.l.b16 %v2765
      %v2781 = vpack.c.b16 %v2778, %v2777
      %v2782 = vpack.c.b16 %v2780, %v2779
      %v2786 = vsel %vm1028, %v2758, 0
      %v2789 = vsel %vm1028, %v2759, 0
      %v2792 = vsel %vm1028, %v2760, 0
      %v2795 = vsel %vm1028, %v2761, 0
      %2797 = vmatprep.subr.bf16.mxu0 0
      %2798 = vmatpush1.bf16.msra.mxu0 0
      %2799 = vmatprep.subr.bf16.mxu0 0
      %2800 = vmatpush1.bf16.msra.mxu0 0
      %2801 = vmatprep.subr.bf16.mxu0 0
      %2802 = vmatpush1.bf16.msra.mxu0 0
      %2803 = vmatprep.subr.bf16.mxu0 0
      %2804 = vmatpush1.bf16.msra.mxu0 0
      %2805 = vmatprep.subr.bf16.mxu0 0
      %2806 = vmatpush1.bf16.msra.mxu0 0
      %2807 = vmatprep.subr.bf16.mxu0 0
      %2808 = vmatpush1.bf16.msra.mxu0 0
      %2809 = vmatprep.subr.bf16.mxu0 0
      %2810 = vmatpush1.bf16.msra.mxu0 %v2782
      %2811 = vmatprep.subr.bf16.mxu0 0
      %2812 = vmatpush1.bf16.msra.mxu0 %v2781
      %2813 = vmatprep.subr.bf16.mxu0 0
      %2814 = vmatpush2.bf16.msra.mxu0 0
      %2815 = vmatprep.subr.bf16.mxu0 0
      %2816 = vmatpush2.bf16.msra.mxu0 0
      %2817 = vmatprep.subr.bf16.mxu0 0
      %2818 = vmatpush2.bf16.msra.mxu0 0
      %2819 = vmatprep.subr.bf16.mxu0 0
      %2820 = vmatpush2.bf16.msra.mxu0 0
      %2821 = vmatprep.subr.bf16.mxu0 0
      %2822 = vmatpush2.bf16.msra.mxu0 0
      %2823 = vmatprep.subr.bf16.mxu0 0
      %2824 = vmatpush2.bf16.msra.mxu0 0
      %2825 = vmatprep.subr.bf16.mxu0 0
      %2826 = vmatpush2.bf16.msra.mxu0 0
      %2827 = vmatprep.subr.bf16.mxu0 0
      %2828 = vmatpush2.bf16.msra.mxu0 0
      %2829 = vmatprep.mubr.bf16.mxu0 0
      %2830 = vmatmul.mubr.bf16.gmra.mxu0 %v2786
      %v2831 = vpop.f32.mrf.mxu0
      %v2832 = vadd.f32 %v2771, %v2831
      %v2833 = vpop.f32.mrf.mxu0
      %v2834 = vpop.f32.mrf.mxu0
      %v2835 = vadd.f32 %v2771, %v2834
      %v2836 = vpop.f32.mrf.mxu0
      %2837 = vmatprep.mubr.bf16.mxu0 0
      %2838 = vmatmul.mubr.bf16.gmra.mxu0 %v2789
      %v2839 = vpop.f32.mrf.mxu0
      %v2840 = vadd.f32 %v2771, %v2839
      %v2841 = vpop.f32.mrf.mxu0
      %v2842 = vpop.f32.mrf.mxu0
      %v2843 = vadd.f32 %v2771, %v2842
      %v2844 = vpop.f32.mrf.mxu0
      %2845 = vmatprep.mubr.bf16.mxu0 0
      %2846 = vmatmul.mubr.bf16.gmra.mxu0 %v2792
      %v2847 = vpop.f32.mrf.mxu0
      %v2848 = vadd.f32 %v2771, %v2847
      %v2849 = vpop.f32.mrf.mxu0
      %v2850 = vpop.f32.mrf.mxu0
      %v2851 = vadd.f32 %v2771, %v2850
      %v2852 = vpop.f32.mrf.mxu0
      %2853 = vmatprep.mubr.bf16.mxu0 0
      %2854 = vmatmul.mubr.bf16.gmra.mxu0 %v2795
      %v2855 = vpop.f32.mrf.mxu0
      %v2856 = vadd.f32 %v2771, %v2855
      %v2857 = vpop.f32.mrf.mxu0
      %v2858 = vpop.f32.mrf.mxu0
      %v2859 = vadd.f32 %v2771, %v2858
      %v2860 = vpop.f32.mrf.mxu0
      %2861 = vdwg.mxu0
      %2862 = vmatprep.subr.bf16.mxu0 0
      %2863 = vmatpush1.bf16.msra.mxu0 %v490
      %2864 = vmatprep.subr.bf16.mxu0 0
      %2865 = vmatpush1.bf16.msra.mxu0 %v489
      %2866 = vmatprep.subr.bf16.mxu0 0
      %2867 = vmatpush1.bf16.msra.mxu0 %v488
      %2868 = vmatprep.subr.bf16.mxu0 0
      %2869 = vmatpush1.bf16.msra.mxu0 %v487
      %2870 = vmatprep.subr.bf16.mxu0 0
      %2871 = vmatpush1.bf16.msra.mxu0 %v486
      %2872 = vmatprep.subr.bf16.mxu0 0
      %2873 = vmatpush1.bf16.msra.mxu0 %v485
      %2874 = vmatprep.subr.bf16.mxu0 0
      %2875 = vmatpush1.bf16.msra.mxu0 %v484
      %2876 = vmatprep.subr.bf16.mxu0 0
      %2877 = vmatpush1.bf16.msra.mxu0 %v483
      %2878 = vmatprep.subr.bf16.mxu0 0
      %2879 = vmatpush2.bf16.msra.mxu0 %v498
      %2880 = vmatprep.subr.bf16.mxu0 0
      %2881 = vmatpush2.bf16.msra.mxu0 %v497
      %2882 = vmatprep.subr.bf16.mxu0 0
      %2883 = vmatpush2.bf16.msra.mxu0 %v496
      %2884 = vmatprep.subr.bf16.mxu0 0
      %2885 = vmatpush2.bf16.msra.mxu0 %v495
      %2886 = vmatprep.subr.bf16.mxu0 0
      %2887 = vmatpush2.bf16.msra.mxu0 %v494
      %2888 = vmatprep.subr.bf16.mxu0 0
      %2889 = vmatpush2.bf16.msra.mxu0 %v493
      %2890 = vmatprep.subr.bf16.mxu0 0
      %2891 = vmatpush2.bf16.msra.mxu0 %v492
      %2892 = vmatprep.subr.bf16.mxu0 0
      %2893 = vmatpush2.bf16.msra.mxu0 %v491
      %2894 = vmatprep.mubr.bf16.mxu0 %v1669
      %2895 = vmatmul.mubr.bf16.gmra.mxu0 %v1668
      %v2896 = vpop.f32.mrf.mxu0
      %v2897 = vadd.f32 0.0, %v2896
      %v2898 = vpop.f32.mrf.mxu0
      %v2899 = vpop.f32.mrf.mxu0
      %v2900 = vadd.f32 0.0, %v2899
      %v2901 = vpop.f32.mrf.mxu0
      %2902 = vmatprep.mubr.bf16.mxu0 %v1671
      %2903 = vmatmul.mubr.bf16.gmra.mxu0 %v1670
      %v2904 = vpop.f32.mrf.mxu0
      %v2905 = vadd.f32 0.0, %v2904
      %v2906 = vpop.f32.mrf.mxu0
      %v2907 = vpop.f32.mrf.mxu0
      %v2908 = vadd.f32 0.0, %v2907
      %v2909 = vpop.f32.mrf.mxu0
      %2910 = vmatprep.mubr.bf16.mxu0 %v1673
      %2911 = vmatmul.mubr.bf16.gmra.mxu0 %v1672
      %v2912 = vpop.f32.mrf.mxu0
      %v2913 = vadd.f32 0.0, %v2912
      %v2914 = vpop.f32.mrf.mxu0
      %v2915 = vpop.f32.mrf.mxu0
      %v2916 = vadd.f32 0.0, %v2915
      %v2917 = vpop.f32.mrf.mxu0
      %2918 = vmatprep.mubr.bf16.mxu0 %v1675
      %2919 = vmatmul.mubr.bf16.gmra.mxu0 %v1674
      %v2920 = vpop.f32.mrf.mxu0
      %v2921 = vadd.f32 0.0, %v2920
      %v2922 = vpop.f32.mrf.mxu0
      %v2923 = vpop.f32.mrf.mxu0
      %v2924 = vadd.f32 0.0, %v2923
      %v2925 = vpop.f32.mrf.mxu0
      %2926 = vdwg.mxu0
      %v2927 = vpack.c.bf16 %v2900, %v2897
      %v2928 = vpack.c.bf16 %v2908, %v2905
      %v2929 = vpack.c.bf16 %v2916, %v2913
      %v2930 = vpack.c.bf16 %v2924, %v2921
      %v2931 = vld [vmem:[%s8] sm:$0xf]
      %v2932 = vld [vmem:[%s8 + $0x4] sm:$0xf]
      %v2933 = vld [vmem:[%s8 + $0x8] sm:$0xf]
      %v2934 = vld [vmem:[%s8 + $0xc] sm:$0xf]
      %v2935 = vld [vmem:[%s8 + $0x10] sm:$0xf]
      %v2936 = vld [vmem:[%s8 + $0x14] sm:$0xf]
      %v2937 = vld [vmem:[%s8 + $0x18] sm:$0xf]
      %v2938 = vld [vmem:[%s8 + $0x1c] sm:$0xf]
      %v2939 = vld [vmem:[%s8 + $0x20] sm:$0xf]
      %v2940 = vld [vmem:[%s8 + $0x24] sm:$0xf]
      %v2941 = vld [vmem:[%s8 + $0x28] sm:$0xf]
      %v2942 = vld [vmem:[%s8 + $0x2c] sm:$0xf]
      %v2943 = vld [vmem:[%s8 + $0x30] sm:$0xf]
      %v2944 = vld [vmem:[%s8 + $0x34] sm:$0xf]
      %v2945 = vld [vmem:[%s8 + $0x38] sm:$0xf]
      %v2946 = vld [vmem:[%s8 + $0x3c] sm:$0xf]
      %v2947 = vld [vmem:[%s9] sm:$0x1]
      %v2949 = vlaneseq
      %v2950 = vshrl.u32 %v2949, 7
      %v2951 = vsub.s32 0, %v2950
      %v2952 = vrot.slane %v2947, %v2951
      %v2970 = vunpack.c.l.b16 %v2931
      %v2971 = vunpack.c.l.b16 %v2932
      %v2972 = vunpack.c.l.b16 %v2933
      %v2973 = vunpack.c.l.b16 %v2934
      %v2974 = vunpack.c.l.b16 %v2935
      %v2975 = vunpack.c.l.b16 %v2936
      %v2976 = vunpack.c.l.b16 %v2937
      %v2977 = vunpack.c.l.b16 %v2938
      %v2978 = vunpack.c.l.b16 %v2939
      %v2979 = vunpack.c.l.b16 %v2940
      %v2980 = vunpack.c.l.b16 %v2941
      %v2981 = vunpack.c.l.b16 %v2942
      %v2982 = vunpack.c.l.b16 %v2943
      %v2983 = vunpack.c.l.b16 %v2944
      %v2984 = vunpack.c.l.b16 %v2945
      %v2985 = vunpack.c.l.b16 %v2946
      %v2986 = vpack.c.b16 %v2971, %v2970
      %v2987 = vpack.c.b16 %v2973, %v2972
      %v2988 = vpack.c.b16 %v2975, %v2974
      %v2989 = vpack.c.b16 %v2977, %v2976
      %v2990 = vpack.c.b16 %v2979, %v2978
      %v2991 = vpack.c.b16 %v2981, %v2980
      %v2992 = vpack.c.b16 %v2983, %v2982
      %v2993 = vpack.c.b16 %v2985, %v2984
      %3002 = vmatprep.subr.bf16.mxu0 0
      %3003 = vmatpush1.bf16.msra.mxu0 %v2993
      %3004 = vmatprep.subr.bf16.mxu0 0
      %3005 = vmatpush1.bf16.msra.mxu0 %v2992
      %3006 = vmatprep.subr.bf16.mxu0 0
      %3007 = vmatpush1.bf16.msra.mxu0 %v2991
      %3008 = vmatprep.subr.bf16.mxu0 0
      %3009 = vmatpush1.bf16.msra.mxu0 %v2990
      %3010 = vmatprep.subr.bf16.mxu0 0
      %3011 = vmatpush1.bf16.msra.mxu0 %v2989
      %3012 = vmatprep.subr.bf16.mxu0 0
      %3013 = vmatpush1.bf16.msra.mxu0 %v2988
      %3014 = vmatprep.subr.bf16.mxu0 0
      %3015 = vmatpush1.bf16.msra.mxu0 %v2987
      %3016 = vmatprep.subr.bf16.mxu0 0
      %3017 = vmatpush1.bf16.msra.mxu0 %v2986
      %3018 = vmatprep.subr.bf16.mxu0 0
      %3019 = vmatpush2.bf16.msra.mxu0 0
      %3020 = vmatprep.subr.bf16.mxu0 0
      %3021 = vmatpush2.bf16.msra.mxu0 0
      %3022 = vmatprep.subr.bf16.mxu0 0
      %3023 = vmatpush2.bf16.msra.mxu0 0
      %3024 = vmatprep.subr.bf16.mxu0 0
      %3025 = vmatpush2.bf16.msra.mxu0 0
      %3026 = vmatprep.subr.bf16.mxu0 0
      %3027 = vmatpush2.bf16.msra.mxu0 0
      %3028 = vmatprep.subr.bf16.mxu0 0
      %3029 = vmatpush2.bf16.msra.mxu0 0
      %3030 = vmatprep.subr.bf16.mxu0 0
      %3031 = vmatpush2.bf16.msra.mxu0 0
      %3032 = vmatprep.subr.bf16.mxu0 0
      %3033 = vmatpush2.bf16.msra.mxu0 0
      %3034 = vmatprep.mubr.bf16.mxu0 0
      %3035 = vmatmul.mubr.bf16.gmra.mxu0 %v2927
      %v3036 = vpop.f32.mrf.mxu0
      %v3037 = vadd.f32 %v2952, %v3036
      %v3038 = vpop.f32.mrf.mxu0
      %v3039 = vpop.f32.mrf.mxu0
      %v3040 = vadd.f32 %v2952, %v3039
      %v3041 = vpop.f32.mrf.mxu0
      %3042 = vmatprep.mubr.bf16.mxu0 0
      %3043 = vmatmul.mubr.bf16.gmra.mxu0 %v2928
      %v3044 = vpop.f32.mrf.mxu0
      %v3045 = vadd.f32 %v2952, %v3044
      %v3046 = vpop.f32.mrf.mxu0
      %v3047 = vpop.f32.mrf.mxu0
      %v3048 = vadd.f32 %v2952, %v3047
      %v3049 = vpop.f32.mrf.mxu0
      %3050 = vmatprep.mubr.bf16.mxu0 0
      %3051 = vmatmul.mubr.bf16.gmra.mxu0 %v2929
      %v3052 = vpop.f32.mrf.mxu0
      %v3053 = vadd.f32 %v2952, %v3052
      %v3054 = vpop.f32.mrf.mxu0
      %v3055 = vpop.f32.mrf.mxu0
      %v3056 = vadd.f32 %v2952, %v3055
      %v3057 = vpop.f32.mrf.mxu0
      %3058 = vmatprep.mubr.bf16.mxu0 0
      %3059 = vmatmul.mubr.bf16.gmra.mxu0 %v2930
      %v3060 = vpop.f32.mrf.mxu0
      %v3061 = vadd.f32 %v2952, %v3060
      %v3062 = vpop.f32.mrf.mxu0
      %v3063 = vpop.f32.mrf.mxu0
      %v3064 = vadd.f32 %v2952, %v3063
      %v3065 = vpop.f32.mrf.mxu0
      %3066 = vdwg.mxu0
      %v3067 = vadd.f32 %v2832, %v3037
      %v3068 = vadd.f32 %v2835, %v3040
      %v3069 = vadd.f32 %v2840, %v3045
      %v3070 = vadd.f32 %v2843, %v3048
      %v3071 = vadd.f32 %v2848, %v3053
      %v3072 = vadd.f32 %v2851, %v3056
      %v3073 = vadd.f32 %v2856, %v3061
      %v3074 = vadd.f32 %v2859, %v3064
      %v3075 = vmax.f32 %v3067, 0.0
      %v3076 = vmax.f32 %v3068, 0.0
      %v3077 = vmax.f32 %v3069, 0.0
      %v3078 = vmax.f32 %v3070, 0.0
      %v3079 = vmax.f32 %v3071, 0.0
      %v3080 = vmax.f32 %v3072, 0.0
      %v3081 = vmax.f32 %v3073, 0.0
      %v3082 = vmax.f32 %v3074, 0.0
      %v3083 = vpack.c.bf16 %v3076, %v3075
      %v3084 = vpack.c.bf16 %v3078, %v3077
      %v3085 = vpack.c.bf16 %v3080, %v3079
      %v3086 = vpack.c.bf16 %v3082, %v3081
      %v3091 = vunpack.c.l.b16 %v3083
      %v3092 = vunpack.c.h.b16 %v3083
      %v3093 = vunpack.c.l.b16 %v3084
      %v3094 = vunpack.c.h.b16 %v3084
      %v3095 = vunpack.c.l.b16 %v3085
      %v3096 = vunpack.c.h.b16 %v3085
      %v3097 = vunpack.c.l.b16 %v3086
      %v3098 = vunpack.c.h.b16 %v3086
      %v3099 = vpack.c.b16 %v3091, %v3091
      %v3100 = vpack.c.b16 %v3092, %v3092
      %v3101 = vpack.c.b16 %v3093, %v3093
      %v3102 = vpack.c.b16 %v3094, %v3094
      %v3103 = vpack.c.b16 %v3095, %v3095
      %v3104 = vpack.c.b16 %v3096, %v3096
      %v3105 = vpack.c.b16 %v3097, %v3097
      %v3106 = vpack.c.b16 %v3098, %v3098
      %3115 = vst [vmem:[%s361] sm:$0xf] %v3099
      %3116 = vst [vmem:[%s361 + $0x4] sm:$0xf] %v3100
      %3117 = vst [vmem:[%s361 + $0x8] sm:$0xf] %v3101
      %3118 = vst [vmem:[%s361 + $0xc] sm:$0xf] %v3102
      %3119 = vst [vmem:[%s361 + $0x10] sm:$0xf] %v3103
      %3120 = vst [vmem:[%s361 + $0x14] sm:$0xf] %v3104
      %3121 = vst [vmem:[%s361 + $0x18] sm:$0xf] %v3105
      %3122 = vst [vmem:[%s361 + $0x1c] sm:$0xf] %v3106
      %s3123 = smul.u32 8, %s21
      %p3124 = scmp.lt.s32.totalorder %s3123, 15
      %s3125 = scalar_select %p3124, %s3123, 15
      %s3126 = smul.addr %s3125, 4
      %s3127 = scalar_lea.vmem %s10, %s3126
      // Predicated region
      $region61: #{_lambda_.9} parent=59 // pred_check
        %p3128 = pneg %p254
      $region62: #{_lambda_.9} parent=59 // pred_check_branch
        %3130 = sbr.rel (%p3128) target = $region64
      $region63: #{_lambda_.9} parent=59 // pred_region
        %s3131 = smul.u32 8, %s21
      $region64: #{_lambda_.9} parent=59 // pred_fallthru
        _
    $region60: #{_lambda_.9} parent=5 // pred_fallthru
      _
    %p3132 = scmp.le.s32.totalorder 2, %s16
    // Predicated region
    $region65: #{_lambda_.9} parent=5 // pred_check
      %p3133 = pneg %p3132
    $region66: #{_lambda_.9} parent=5 // pred_check_branch
      %3135 = sbr.rel (%p3133) target = $region68
    $region67: #{_lambda_.9} parent=5 // pred_region
      %s3136 = ssub.s32 %s16, 2
      // Predicated region
      $region69: #{_lambda_.9} parent=67 // pred_check
        %p3137 = pneg %p260
      $region70: #{_lambda_.9} parent=67 // pred_check_branch
        %3139 = sbr.rel (%p3137) target = $region72
      $region71: #{_lambda_.9} parent=67 // pred_region
        %s3140 = smul.u32 8, %s22
        %p3141 = scmp.lt.s32.totalorder %s3140, 15
        %s3142 = scalar_select %p3141, %s3140, 15
        %s3143 = smul.addr %s3142, 4
        %s3144 = scalar_lea.vmem %s10, %s3143
      $region72: #{_lambda_.9} parent=67 // pred_fallthru
        _
    $region68: #{_lambda_.9} parent=5 // pred_fallthru
      _
  $region6: #{_lambda_.9} parent=0 // loop_footer
    %s20 = sadd.s32 1, %s16
  $region7: #{_lambda_.9} parent=0 // loop_footer_branch
    %15 = sbr.rel target = $region3
  $region8: #{_lambda_.9} parent=0 // loop_exit
    _

// kernel: _lambda_.10
$region0: #{_lambda_.10}
  #allocation0 [shape = 'u32[]', space=smem, size = 0x4, offset = 0x4, fixed_abs, tag = 'smem constant byte address 0x4 - core index']
  #allocation1 [shape = 'u32[144,128]{1,0:T(1,128)}', space=vmem, size = 0x12000, scoped, tag = 'internal scratch']
  %s0 = inlined_call_operand.vmem [shape: bf16[128,128], index: 0, kind: input, shape index: {}]
  %s1 = inlined_call_operand.vmem [shape: bf16[128,32], index: 1, kind: input, shape index: {}]
  %s2 = inlined_call_operand.vmem [shape: f32[1,32], index: 2, kind: input, shape index: {}]
  %s3 = inlined_call_operand.vmem [shape: bf16[9,64,64], index: 3, kind: input, shape index: {}]
  %s4 = inlined_call_operand.vmem [shape: bf16[9,32,32], index: 4, kind: input, shape index: {}]
  %s5 = inlined_call_operand.vmem [shape: f32[1,32], index: 5, kind: input, shape index: {}]
  %s6 = inlined_call_operand.vmem [shape: bf16[32,128], index: 6, kind: input, shape index: {}]
  %s7 = inlined_call_operand.vmem [shape: f32[1,128], index: 7, kind: input, shape index: {}]
  %s8 = inlined_call_operand.vmem [shape: bf16[128,128], index: 8, kind: output, shape index: {}]
  %s9 = sld [smem:[#allocation0]]
  $region65: #{_lambda_.10} parent=0
    _
  %s11 = ssub.s32 1, %s9
  %s12 = scalar_select 0, %s11, %s9
  loop: start=0, step=1, limit=4
  $region2: #{_lambda_.10} parent=0 // loop_pre_header
    _
  $region3: #{_lambda_.10} parent=0 // loop_header
    %s14 = sphi 0, %s18
    %p15 = scmp.ge.s32.totalorder %s14, 4
    %s24 = sphi 0, %s26
    %s27 = sphi 0, %s24
    %s28 = sphi 0, %s27
    %s44 = sphi 0, %s28
    %s48 = sphi 0, %s48
    %s50 = sphi 0, %s48
    %s51 = sphi 0, %s50
    %s65 = sphi 0, %s51
    %s69 = sphi 0, %s69
    %s71 = sphi 0, %s69
    %s72 = sphi 0, %s71
    %s86 = sphi 0, %s72
    %s90 = sphi 0, %s90
    %s92 = sphi 0, %s90
    %s93 = sphi 0, %s92
    %s107 = sphi 0, %s93
    %s111 = sphi 0, %s111
    %s113 = sphi 0, %s111
    %s114 = sphi 0, %s113
    %s128 = sphi 0, %s114
    %s132 = sphi 0, %s132
    %s134 = sphi 0, %s132
    %s135 = sphi 0, %s134
    %s149 = sphi 0, %s135
    %s153 = sphi 0, %s153
    %s155 = sphi 0, %s153
    %s156 = sphi 0, %s155
    %s170 = sphi 0, %s156
    %s174 = sphi 0, %s174
    %s176 = sphi 0, %s174
    %s177 = sphi 0, %s176
    %s191 = sphi 0, %s177
    %s197 = sphi 0, %s199
    %s200 = sphi 0, %s197
    %s201 = sphi 0, %s200
    %s217 = sphi 0, %s201
  $region4: #{_lambda_.10} parent=0 // loop_header_branch
    %17 = sbr.rel (%p15) target = $region8
  $region5: #{_lambda_.10} parent=0 // loop_body
    %s19 = ssub.s32 %s14, 1
    %s20 = ssub.s32 %s14, 2
    %s21 = sadd.s32 %s14, 1
    %s22 = ssub.s32 %s14, %s21
    %p23 = scmp.eq.s32.totalorder %s22, 0
    %s25 = sadd.s32 %s24, 1
    %s26 = scalar_select %p23, %s24, %s25
    %p29 = pneg %p23
    %p30 = scmp.eq.s32.totalorder %s14, 1
    %p31 = por %p29, %p30
    %p32 = scmp.ne.s32.totalorder %s24, %s27
    %p33 = scmp.eq.s32.totalorder %s14, 0
    %p34 = por %p32, %p33
    %p35 = scmp.ne.s32.totalorder %s24, %s27
    %p36 = scmp.eq.s32.totalorder %s19, 1
    %p37 = por %p35, %p36
    %p38 = scmp.ne.s32.totalorder %s27, %s28
    %p39 = scmp.eq.s32.totalorder %s19, 0
    %p40 = por %p38, %p39
    %p41 = scmp.ne.s32.totalorder %s27, %s28
    %p42 = scmp.eq.s32.totalorder %s20, 1
    %p43 = por %p41, %p42
    %p45 = scmp.ne.s32.totalorder %s28, %s44
    %p46 = scmp.eq.s32.totalorder %s20, 0
    %p47 = por %p45, %p46
    %s49 = sadd.s32 %s48, 1
    %p52 = scmp.eq.s32.totalorder %s14, 1
    %p53 = scmp.ne.s32.totalorder %s48, %s50
    %p54 = scmp.eq.s32.totalorder %s14, 0
    %p55 = por %p53, %p54
    %p56 = scmp.ne.s32.totalorder %s48, %s50
    %p57 = scmp.eq.s32.totalorder %s19, 1
    %p58 = por %p56, %p57
    %p59 = scmp.ne.s32.totalorder %s50, %s51
    %p60 = scmp.eq.s32.totalorder %s19, 0
    %p61 = por %p59, %p60
    %p62 = scmp.ne.s32.totalorder %s50, %s51
    %p63 = scmp.eq.s32.totalorder %s20, 1
    %p64 = por %p62, %p63
    %p66 = scmp.ne.s32.totalorder %s51, %s65
    %p67 = scmp.eq.s32.totalorder %s20, 0
    %p68 = por %p66, %p67
    %s70 = sadd.s32 %s69, 1
    %p73 = scmp.eq.s32.totalorder %s14, 1
    %p74 = scmp.ne.s32.totalorder %s69, %s71
    %p75 = scmp.eq.s32.totalorder %s14, 0
    %p76 = por %p74, %p75
    %p77 = scmp.ne.s32.totalorder %s69, %s71
    %p78 = scmp.eq.s32.totalorder %s19, 1
    %p79 = por %p77, %p78
    %p80 = scmp.ne.s32.totalorder %s71, %s72
    %p81 = scmp.eq.s32.totalorder %s19, 0
    %p82 = por %p80, %p81
    %p83 = scmp.ne.s32.totalorder %s71, %s72
    %p84 = scmp.eq.s32.totalorder %s20, 1
    %p85 = por %p83, %p84
    %p87 = scmp.ne.s32.totalorder %s72, %s86
    %p88 = scmp.eq.s32.totalorder %s20, 0
    %p89 = por %p87, %p88
    %s91 = sadd.s32 %s90, 1
    %p94 = scmp.eq.s32.totalorder %s14, 1
    %p95 = scmp.ne.s32.totalorder %s90, %s92
    %p96 = scmp.eq.s32.totalorder %s14, 0
    %p97 = por %p95, %p96
    %p98 = scmp.ne.s32.totalorder %s90, %s92
    %p99 = scmp.eq.s32.totalorder %s19, 1
    %p100 = por %p98, %p99
    %p101 = scmp.ne.s32.totalorder %s92, %s93
    %p102 = scmp.eq.s32.totalorder %s19, 0
    %p103 = por %p101, %p102
    %p104 = scmp.ne.s32.totalorder %s92, %s93
    %p105 = scmp.eq.s32.totalorder %s20, 1
    %p106 = por %p104, %p105
    %p108 = scmp.ne.s32.totalorder %s93, %s107
    %p109 = scmp.eq.s32.totalorder %s20, 0
    %p110 = por %p108, %p109
    %s112 = sadd.s32 %s111, 1
    %p115 = scmp.eq.s32.totalorder %s14, 1
    %p116 = scmp.ne.s32.totalorder %s111, %s113
    %p117 = scmp.eq.s32.totalorder %s14, 0
    %p118 = por %p116, %p117
    %p119 = scmp.ne.s32.totalorder %s111, %s113
    %p120 = scmp.eq.s32.totalorder %s19, 1
    %p121 = por %p119, %p120
    %p122 = scmp.ne.s32.totalorder %s113, %s114
    %p123 = scmp.eq.s32.totalorder %s19, 0
    %p124 = por %p122, %p123
    %p125 = scmp.ne.s32.totalorder %s113, %s114
    %p126 = scmp.eq.s32.totalorder %s20, 1
    %p127 = por %p125, %p126
    %p129 = scmp.ne.s32.totalorder %s114, %s128
    %p130 = scmp.eq.s32.totalorder %s20, 0
    %p131 = por %p129, %p130
    %s133 = sadd.s32 %s132, 1
    %p136 = scmp.eq.s32.totalorder %s14, 1
    %p137 = scmp.ne.s32.totalorder %s132, %s134
    %p138 = scmp.eq.s32.totalorder %s14, 0
    %p139 = por %p137, %p138
    %p140 = scmp.ne.s32.totalorder %s132, %s134
    %p141 = scmp.eq.s32.totalorder %s19, 1
    %p142 = por %p140, %p141
    %p143 = scmp.ne.s32.totalorder %s134, %s135
    %p144 = scmp.eq.s32.totalorder %s19, 0
    %p145 = por %p143, %p144
    %p146 = scmp.ne.s32.totalorder %s134, %s135
    %p147 = scmp.eq.s32.totalorder %s20, 1
    %p148 = por %p146, %p147
    %p150 = scmp.ne.s32.totalorder %s135, %s149
    %p151 = scmp.eq.s32.totalorder %s20, 0
    %p152 = por %p150, %p151
    %s154 = sadd.s32 %s153, 1
    %p157 = scmp.eq.s32.totalorder %s14, 1
    %p158 = scmp.ne.s32.totalorder %s153, %s155
    %p159 = scmp.eq.s32.totalorder %s14, 0
    %p160 = por %p158, %p159
    %p161 = scmp.ne.s32.totalorder %s153, %s155
    %p162 = scmp.eq.s32.totalorder %s19, 1
    %p163 = por %p161, %p162
    %p164 = scmp.ne.s32.totalorder %s155, %s156
    %p165 = scmp.eq.s32.totalorder %s19, 0
    %p166 = por %p164, %p165
    %p167 = scmp.ne.s32.totalorder %s155, %s156
    %p168 = scmp.eq.s32.totalorder %s20, 1
    %p169 = por %p167, %p168
    %p171 = scmp.ne.s32.totalorder %s156, %s170
    %p172 = scmp.eq.s32.totalorder %s20, 0
    %p173 = por %p171, %p172
    %s175 = sadd.s32 %s174, 1
    %p178 = scmp.eq.s32.totalorder %s14, 1
    %p179 = scmp.ne.s32.totalorder %s174, %s176
    %p180 = scmp.eq.s32.totalorder %s14, 0
    %p181 = por %p179, %p180
    %p182 = scmp.ne.s32.totalorder %s174, %s176
    %p183 = scmp.eq.s32.totalorder %s19, 1
    %p184 = por %p182, %p183
    %p185 = scmp.ne.s32.totalorder %s176, %s177
    %p186 = scmp.eq.s32.totalorder %s19, 0
    %p187 = por %p185, %p186
    %p188 = scmp.ne.s32.totalorder %s176, %s177
    %p189 = scmp.eq.s32.totalorder %s20, 1
    %p190 = por %p188, %p189
    %p192 = scmp.ne.s32.totalorder %s177, %s191
    %p193 = scmp.eq.s32.totalorder %s20, 0
    %p194 = por %p192, %p193
    %s195 = ssub.s32 %s14, %s21
    %p196 = scmp.eq.s32.totalorder %s195, 0
    %s198 = sadd.s32 %s197, 1
    %s199 = scalar_select %p196, %s197, %s198
    %p202 = pneg %p196
    %p203 = scmp.eq.s32.totalorder %s14, 1
    %p204 = por %p202, %p203
    %p205 = scmp.ne.s32.totalorder %s197, %s200
    %p206 = scmp.eq.s32.totalorder %s14, 0
    %p207 = por %p205, %p206
    %p208 = scmp.ne.s32.totalorder %s197, %s200
    %p209 = scmp.eq.s32.totalorder %s19, 1
    %p210 = por %p208, %p209
    %p211 = scmp.ne.s32.totalorder %s200, %s201
    %p212 = scmp.eq.s32.totalorder %s19, 0
    %p213 = por %p211, %p212
    %p214 = scmp.ne.s32.totalorder %s200, %s201
    %p215 = scmp.eq.s32.totalorder %s20, 1
    %p216 = por %p214, %p215
    %p218 = scmp.ne.s32.totalorder %s201, %s217
    %p219 = scmp.eq.s32.totalorder %s20, 0
    %p220 = por %p218, %p219
    %p221 = scmp.le.s32.totalorder 1, %s14
    %p222 = scmp.lt.s32.totalorder %s14, 3
    %p223 = pnand %p221, %p222
    %p224 = pneg %p223
    // Predicated region
    $region9: #{_lambda_.10} parent=5 // pred_check
      _
    $region10: #{_lambda_.10} parent=5 // pred_check_branch
      %226 = sbr.rel (%p223) target = $region12
    $region11: #{_lambda_.10} parent=5 // pred_region
      %s227 = ssub.s32 %s14, 1
      // Predicated region
      $region13: #{_lambda_.10} parent=11 // pred_check
        %p228 = pneg %p61
      $region14: #{_lambda_.10} parent=11 // pred_check_branch
        %230 = sbr.rel (%p228) target = $region16
      $region15: #{_lambda_.10} parent=11 // pred_region
        _
      $region16: #{_lambda_.10} parent=11 // pred_fallthru
        _
      // Predicated region
      $region17: #{_lambda_.10} parent=11 // pred_check
        %p231 = pneg %p82
      $region18: #{_lambda_.10} parent=11 // pred_check_branch
        %233 = sbr.rel (%p231) target = $region20
      $region19: #{_lambda_.10} parent=11 // pred_region
        _
      $region20: #{_lambda_.10} parent=11 // pred_fallthru
        _
      // Predicated region
      $region21: #{_lambda_.10} parent=11 // pred_check
        %p234 = pneg %p103
      $region22: #{_lambda_.10} parent=11 // pred_check_branch
        %236 = sbr.rel (%p234) target = $region24
      $region23: #{_lambda_.10} parent=11 // pred_region
        _
      $region24: #{_lambda_.10} parent=11 // pred_fallthru
        _
      // Predicated region
      $region25: #{_lambda_.10} parent=11 // pred_check
        %p237 = pneg %p124
      $region26: #{_lambda_.10} parent=11 // pred_check_branch
        %239 = sbr.rel (%p237) target = $region28
      $region27: #{_lambda_.10} parent=11 // pred_region
        _
      $region28: #{_lambda_.10} parent=11 // pred_fallthru
        _
      // Predicated region
      $region29: #{_lambda_.10} parent=11 // pred_check
        %p240 = pneg %p145
      $region30: #{_lambda_.10} parent=11 // pred_check_branch
        %242 = sbr.rel (%p240) target = $region32
      $region31: #{_lambda_.10} parent=11 // pred_region
        _
      $region32: #{_lambda_.10} parent=11 // pred_fallthru
        _
      // Predicated region
      $region33: #{_lambda_.10} parent=11 // pred_check
        %p243 = pneg %p166
      $region34: #{_lambda_.10} parent=11 // pred_check_branch
        %245 = sbr.rel (%p243) target = $region36
      $region35: #{_lambda_.10} parent=11 // pred_region
        _
      $region36: #{_lambda_.10} parent=11 // pred_fallthru
        _
      // Predicated region
      $region37: #{_lambda_.10} parent=11 // pred_check
        %p246 = pneg %p187
      $region38: #{_lambda_.10} parent=11 // pred_check_branch
        %248 = sbr.rel (%p246) target = $region40
      $region39: #{_lambda_.10} parent=11 // pred_region
        _
      $region40: #{_lambda_.10} parent=11 // pred_fallthru
        _
    $region12: #{_lambda_.10} parent=5 // pred_fallthru
      _
    %p249 = scmp.lt.s32.totalorder %s14, 2
    // Predicated region
    $region41: #{_lambda_.10} parent=5 // pred_check
      %p250 = pneg %p249
    $region42: #{_lambda_.10} parent=5 // pred_check_branch
      %252 = sbr.rel (%p250) target = $region44
    $region43: #{_lambda_.10} parent=5 // pred_region
      // Predicated region
      $region45: #{_lambda_.10} parent=43 // pred_check
        %p253 = pneg %p34
      $region46: #{_lambda_.10} parent=43 // pred_check_branch
        %255 = sbr.rel (%p253) target = $region48
      $region47: #{_lambda_.10} parent=43 // pred_region
        %s256 = smul.u32 8, %s14
        %p257 = scmp.lt.s32.totalorder %s256, 15
        %s258 = scalar_select %p257, %s256, 15
        %s259 = smul.addr %s258, 4
        %s260 = scalar_lea.vmem %s0, %s259
        %s261 = smul.u32 8, %s14
      $region48: #{_lambda_.10} parent=43 // pred_fallthru
        _
    $region44: #{_lambda_.10} parent=5 // pred_fallthru
      _
    %p262 = scmp.le.s32.totalorder 1, %s14
    %p263 = scmp.lt.s32.totalorder %s14, 3
    %p264 = pnand %p262, %p263
    %p265 = pneg %p264
    // Predicated region
    $region49: #{_lambda_.10} parent=5 // pred_check
      _
    $region50: #{_lambda_.10} parent=5 // pred_check_branch
      %267 = sbr.rel (%p264) target = $region52
    $region51: #{_lambda_.10} parent=5 // pred_region
      %s268 = ssub.s32 %s14, 1
      %s269 = smul.u32 8, %s19
      %p270 = scmp.lt.s32.totalorder %s269, 15
      %s271 = scalar_select %p270, %s269, 15
      %s272 = smul.addr %s271, 4
      %s273 = scalar_lea.vmem %s0, %s272
      %p274 = pneg %p40
      %p275 = pneg %p37
      %p276 = pneg %p61
      %p277 = pneg %p58
      %p278 = pneg %p82
      %p279 = pneg %p79
      %p280 = pneg %p103
      %p281 = pneg %p100
      %p282 = pneg %p124
      %p283 = pneg %p121
      %p284 = pneg %p145
      %p285 = pneg %p142
      %p286 = pneg %p166
      %p287 = pneg %p163
      %p288 = pneg %p187
      %p289 = pneg %p184
      %p290 = pneg %p213
      %p291 = pneg %p210
      %s292 = smul.u32 8, %s19
      %p293 = scmp.lt.s32.totalorder %s292, 15
      %s294 = scalar_select %p293, %s292, 15
      %s295 = smul.addr %s294, 4
      %s296 = scalar_lea.vmem %s8, %s295
      %s297 = smul.u32 8, %s19
      %p298 = scmp.lt.s32.totalorder %s297, 15
      %s299 = scalar_select %p298, %s297, 15
      %s300 = smul.addr %s299, 4
      %s301 = scalar_lea.vmem %s0, %s300
      %s302 = smul.u32 8, %s19
      %s303 = smul.u32 8, %s19
      %p304 = scmp.lt.s32.totalorder %s303, 15
      %s305 = scalar_select %p304, %s303, 15
      %s306 = smul.addr %s305, 4
      %s307 = scalar_lea.vmem %s8, %s306
      %s308 = smul.u32 8, %s19
      %v310 = vld [vmem:[%s301] sm:$0xf]
      %v311 = vld [vmem:[%s301 + $0x4] sm:$0xf]
      %v312 = vld [vmem:[%s301 + $0x8] sm:$0xf]
      %v313 = vld [vmem:[%s301 + $0xc] sm:$0xf]
      %v314 = vld [vmem:[%s301 + $0x10] sm:$0xf]
      %v315 = vld [vmem:[%s301 + $0x14] sm:$0xf]
      %v316 = vld [vmem:[%s301 + $0x18] sm:$0xf]
      %v317 = vld [vmem:[%s301 + $0x1c] sm:$0xf]
      %v318 = vld [vmem:[%s1] sm:$0xf]
      %v319 = vld [vmem:[%s1 + $0x4] sm:$0xf]
      %v320 = vld [vmem:[%s1 + $0x8] sm:$0xf]
      %v321 = vld [vmem:[%s1 + $0xc] sm:$0xf]
      %v322 = vld [vmem:[%s1 + $0x10] sm:$0xf]
      %v323 = vld [vmem:[%s1 + $0x14] sm:$0xf]
      %v324 = vld [vmem:[%s1 + $0x18] sm:$0xf]
      %v325 = vld [vmem:[%s1 + $0x1c] sm:$0xf]
      %v326 = vld [vmem:[%s1 + $0x20] sm:$0xf]
      %v327 = vld [vmem:[%s1 + $0x24] sm:$0xf]
      %v328 = vld [vmem:[%s1 + $0x28] sm:$0xf]
      %v329 = vld [vmem:[%s1 + $0x2c] sm:$0xf]
      %v330 = vld [vmem:[%s1 + $0x30] sm:$0xf]
      %v331 = vld [vmem:[%s1 + $0x34] sm:$0xf]
      %v332 = vld [vmem:[%s1 + $0x38] sm:$0xf]
      %v333 = vld [vmem:[%s1 + $0x3c] sm:$0xf]
      %v334 = vld [vmem:[%s2] sm:$0x1]
      %v336 = vlaneseq
      %v337 = vshrl.u32 %v336, 7
      %v338 = vsub.s32 0, %v337
      %v339 = vrot.slane %v334, %v338
      %v349 = vunpack.c.l.b16 %v310
      %v350 = vunpack.c.l.b16 %v311
      %v351 = vunpack.c.l.b16 %v312
      %v352 = vunpack.c.l.b16 %v313
      %v353 = vunpack.c.l.b16 %v314
      %v354 = vunpack.c.l.b16 %v315
      %v355 = vunpack.c.l.b16 %v316
      %v356 = vunpack.c.l.b16 %v317
      %v357 = vpack.c.b16 %v350, %v349
      %v358 = vpack.c.b16 %v352, %v351
      %v359 = vpack.c.b16 %v354, %v353
      %v360 = vpack.c.b16 %v356, %v355
      %v381 = vunpack.c.l.b16 %v318
      %v382 = vunpack.c.l.b16 %v319
      %v383 = vunpack.c.l.b16 %v320
      %v384 = vunpack.c.l.b16 %v321
      %v385 = vunpack.c.l.b16 %v322
      %v386 = vunpack.c.l.b16 %v323
      %v387 = vunpack.c.l.b16 %v324
      %v388 = vunpack.c.l.b16 %v325
      %v389 = vunpack.c.l.b16 %v326
      %v390 = vunpack.c.l.b16 %v327
      %v391 = vunpack.c.l.b16 %v328
      %v392 = vunpack.c.l.b16 %v329
      %v393 = vunpack.c.l.b16 %v330
      %v394 = vunpack.c.l.b16 %v331
      %v395 = vunpack.c.l.b16 %v332
      %v396 = vunpack.c.l.b16 %v333
      %v397 = vpack.c.b16 %v382, %v381
      %v398 = vpack.c.b16 %v384, %v383
      %v399 = vpack.c.b16 %v386, %v385
      %v400 = vpack.c.b16 %v388, %v387
      %v401 = vpack.c.b16 %v390, %v389
      %v402 = vpack.c.b16 %v392, %v391
      %v403 = vpack.c.b16 %v394, %v393
      %v404 = vpack.c.b16 %v396, %v395
      %413 = vmatprep.subr.bf16.mxu0 0
      %414 = vmatpush1.bf16.msra.mxu0 %v404
      %415 = vmatprep.subr.bf16.mxu0 0
      %416 = vmatpush1.bf16.msra.mxu0 %v403
      %417 = vmatprep.subr.bf16.mxu0 0
      %418 = vmatpush1.bf16.msra.mxu0 %v402
      %419 = vmatprep.subr.bf16.mxu0 0
      %420 = vmatpush1.bf16.msra.mxu0 %v401
      %421 = vmatprep.subr.bf16.mxu0 0
      %422 = vmatpush1.bf16.msra.mxu0 %v400
      %423 = vmatprep.subr.bf16.mxu0 0
      %424 = vmatpush1.bf16.msra.mxu0 %v399
      %425 = vmatprep.subr.bf16.mxu0 0
      %426 = vmatpush1.bf16.msra.mxu0 %v398
      %427 = vmatprep.subr.bf16.mxu0 0
      %428 = vmatpush1.bf16.msra.mxu0 %v397
      %429 = vmatprep.subr.bf16.mxu0 0
      %430 = vmatpush2.bf16.msra.mxu0 0
      %431 = vmatprep.subr.bf16.mxu0 0
      %432 = vmatpush2.bf16.msra.mxu0 0
      %433 = vmatprep.subr.bf16.mxu0 0
      %434 = vmatpush2.bf16.msra.mxu0 0
      %435 = vmatprep.subr.bf16.mxu0 0
      %436 = vmatpush2.bf16.msra.mxu0 0
      %437 = vmatprep.subr.bf16.mxu0 0
      %438 = vmatpush2.bf16.msra.mxu0 0
      %439 = vmatprep.subr.bf16.mxu0 0
      %440 = vmatpush2.bf16.msra.mxu0 0
      %441 = vmatprep.subr.bf16.mxu0 0
      %442 = vmatpush2.bf16.msra.mxu0 0
      %443 = vmatprep.subr.bf16.mxu0 0
      %444 = vmatpush2.bf16.msra.mxu0 0
      %445 = vmatprep.mubr.bf16.mxu0 0
      %446 = vmatmul.mubr.bf16.gmra.mxu0 %v357
      %v447 = vpop.f32.mrf.mxu0
      %v448 = vadd.f32 %v339, %v447
      %v449 = vpop.f32.mrf.mxu0
      %v450 = vpop.f32.mrf.mxu0
      %v451 = vadd.f32 %v339, %v450
      %v452 = vpop.f32.mrf.mxu0
      %453 = vmatprep.mubr.bf16.mxu0 0
      %454 = vmatmul.mubr.bf16.gmra.mxu0 %v358
      %v455 = vpop.f32.mrf.mxu0
      %v456 = vadd.f32 %v339, %v455
      %v457 = vpop.f32.mrf.mxu0
      %v458 = vpop.f32.mrf.mxu0
      %v459 = vadd.f32 %v339, %v458
      %v460 = vpop.f32.mrf.mxu0
      %461 = vmatprep.mubr.bf16.mxu0 0
      %462 = vmatmul.mubr.bf16.gmra.mxu0 %v359
      %v463 = vpop.f32.mrf.mxu0
      %v464 = vadd.f32 %v339, %v463
      %v465 = vpop.f32.mrf.mxu0
      %v466 = vpop.f32.mrf.mxu0
      %v467 = vadd.f32 %v339, %v466
      %v468 = vpop.f32.mrf.mxu0
      %469 = vmatprep.mubr.bf16.mxu0 0
      %470 = vmatmul.mubr.bf16.gmra.mxu0 %v360
      %v471 = vpop.f32.mrf.mxu0
      %v472 = vadd.f32 %v339, %v471
      %v473 = vpop.f32.mrf.mxu0
      %v474 = vpop.f32.mrf.mxu0
      %v475 = vadd.f32 %v339, %v474
      %v476 = vpop.f32.mrf.mxu0
      %477 = vdwg.mxu0
      %v478 = vmax.f32 %v448, 0.0
      %v479 = vmax.f32 %v451, 0.0
      %v480 = vmax.f32 %v456, 0.0
      %v481 = vmax.f32 %v459, 0.0
      %v482 = vmax.f32 %v464, 0.0
      %v483 = vmax.f32 %v467, 0.0
      %v484 = vmax.f32 %v472, 0.0
      %v485 = vmax.f32 %v475, 0.0
      %v486 = vpack.c.bf16 %v479, %v478
      %v487 = vpack.c.bf16 %v481, %v480
      %v488 = vpack.c.bf16 %v483, %v482
      %v489 = vpack.c.bf16 %v485, %v484
      %v490 = vld [vmem:[%s3] sm:$0xf]
      %v491 = vld [vmem:[%s3 + $0x4] sm:$0xf]
      %v492 = vld [vmem:[%s3 + $0x8] sm:$0xf]
      %v493 = vld [vmem:[%s3 + $0xc] sm:$0xf]
      %v494 = vld [vmem:[%s3 + $0x10] sm:$0xf]
      %v495 = vld [vmem:[%s3 + $0x14] sm:$0xf]
      %v496 = vld [vmem:[%s3 + $0x18] sm:$0xf]
      %v497 = vld [vmem:[%s3 + $0x1c] sm:$0xf]
      %v506 = vunpack.c.l.b16 %v490
      %v507 = vunpack.c.l.b16 %v491
      %v508 = vunpack.c.l.b16 %v492
      %v509 = vunpack.c.l.b16 %v493
      %v510 = vunpack.c.l.b16 %v494
      %v511 = vunpack.c.l.b16 %v495
      %v512 = vunpack.c.l.b16 %v496
      %v513 = vunpack.c.l.b16 %v497
      %v514 = vpack.c.b16 %v507, %v506
      %v515 = vpack.c.b16 %v509, %v508
      %v516 = vpack.c.b16 %v511, %v510
      %v517 = vpack.c.b16 %v513, %v512
      %vm518 = vcmask 523264
      %v520 = vsel %vm518, %v514, 0
      %v523 = vsel %vm518, %v515, 0
      %v526 = vsel %vm518, %v516, 0
      %v529 = vsel %vm518, %v517, 0
      %531 = vmatprep.subr.bf16.mxu0 0
      %532 = vmatpush1.bf16.msra.mxu0 0
      %533 = vmatprep.subr.bf16.mxu0 0
      %534 = vmatpush1.bf16.msra.mxu0 0
      %535 = vmatprep.subr.bf16.mxu0 0
      %536 = vmatpush1.bf16.msra.mxu0 0
      %537 = vmatprep.subr.bf16.mxu0 0
      %538 = vmatpush1.bf16.msra.mxu0 0
      %539 = vmatprep.subr.bf16.mxu0 0
      %540 = vmatpush1.bf16.msra.mxu0 %v489
      %541 = vmatprep.subr.bf16.mxu0 0
      %542 = vmatpush1.bf16.msra.mxu0 %v488
      %543 = vmatprep.subr.bf16.mxu0 0
      %544 = vmatpush1.bf16.msra.mxu0 %v487
      %545 = vmatprep.subr.bf16.mxu0 0
      %546 = vmatpush1.bf16.msra.mxu0 %v486
      %547 = vmatprep.subr.bf16.mxu0 0
      %548 = vmatpush2.bf16.msra.mxu0 0
      %549 = vmatprep.subr.bf16.mxu0 0
      %550 = vmatpush2.bf16.msra.mxu0 0
      %551 = vmatprep.subr.bf16.mxu0 0
      %552 = vmatpush2.bf16.msra.mxu0 0
      %553 = vmatprep.subr.bf16.mxu0 0
      %554 = vmatpush2.bf16.msra.mxu0 0
      %555 = vmatprep.subr.bf16.mxu0 0
      %556 = vmatpush2.bf16.msra.mxu0 0
      %557 = vmatprep.subr.bf16.mxu0 0
      %558 = vmatpush2.bf16.msra.mxu0 0
      %559 = vmatprep.subr.bf16.mxu0 0
      %560 = vmatpush2.bf16.msra.mxu0 0
      %561 = vmatprep.subr.bf16.mxu0 0
      %562 = vmatpush2.bf16.msra.mxu0 0
      %563 = vmatprep.mubr.bf16.mxu0 0
      %564 = vmatmul.mubr.bf16.gmra.mxu0 %v520
      %v565 = vpop.f32.mrf.mxu0
      %v566 = vadd.f32 0.0, %v565
      %v567 = vpop.f32.mrf.mxu0
      %v568 = vpop.f32.mrf.mxu0
      %v569 = vadd.f32 0.0, %v568
      %v570 = vpop.f32.mrf.mxu0
      %571 = vmatprep.mubr.bf16.mxu0 0
      %572 = vmatmul.mubr.bf16.gmra.mxu0 %v523
      %v573 = vpop.f32.mrf.mxu0
      %v574 = vadd.f32 0.0, %v573
      %v575 = vpop.f32.mrf.mxu0
      %v576 = vpop.f32.mrf.mxu0
      %v577 = vadd.f32 0.0, %v576
      %v578 = vpop.f32.mrf.mxu0
      %579 = vmatprep.mubr.bf16.mxu0 0
      %580 = vmatmul.mubr.bf16.gmra.mxu0 %v526
      %v581 = vpop.f32.mrf.mxu0
      %v582 = vadd.f32 0.0, %v581
      %v583 = vpop.f32.mrf.mxu0
      %v584 = vpop.f32.mrf.mxu0
      %v585 = vadd.f32 0.0, %v584
      %v586 = vpop.f32.mrf.mxu0
      %587 = vmatprep.mubr.bf16.mxu0 0
      %588 = vmatmul.mubr.bf16.gmra.mxu0 %v529
      %v589 = vpop.f32.mrf.mxu0
      %v590 = vadd.f32 0.0, %v589
      %v591 = vpop.f32.mrf.mxu0
      %v592 = vpop.f32.mrf.mxu0
      %v593 = vadd.f32 0.0, %v592
      %v594 = vpop.f32.mrf.mxu0
      %595 = vdwg.mxu0
      %v596 = vpack.c.bf16 %v569, %v566
      %v597 = vpack.c.bf16 %v577, %v574
      %v598 = vpack.c.bf16 %v585, %v582
      %v599 = vpack.c.bf16 %v593, %v590
      %v600 = vld [vmem:[%s4] sm:$0xf]
      %v601 = vld [vmem:[%s4 + $0x4] sm:$0xf]
      %v602 = vld [vmem:[%s4 + $0x8] sm:$0xf]
      %v603 = vld [vmem:[%s4 + $0xc] sm:$0xf]
      %s604 = scalar_lea.vmem %s3, 32
      %v605 = vld [vmem:[%s604] sm:$0xf]
      %v606 = vld [vmem:[%s604 + $0x4] sm:$0xf]
      %v607 = vld [vmem:[%s604 + $0x8] sm:$0xf]
      %v608 = vld [vmem:[%s604 + $0xc] sm:$0xf]
      %v609 = vld [vmem:[%s604 + $0x10] sm:$0xf]
      %v610 = vld [vmem:[%s604 + $0x14] sm:$0xf]
      %v611 = vld [vmem:[%s604 + $0x18] sm:$0xf]
      %v612 = vld [vmem:[%s604 + $0x1c] sm:$0xf]
      %v621 = vunpack.c.l.b16 %v605
      %v622 = vunpack.c.l.b16 %v606
      %v623 = vunpack.c.l.b16 %v607
      %v624 = vunpack.c.l.b16 %v608
      %v625 = vunpack.c.l.b16 %v609
      %v626 = vunpack.c.l.b16 %v610
      %v627 = vunpack.c.l.b16 %v611
      %v628 = vunpack.c.l.b16 %v612
      %v629 = vpack.c.b16 %v622, %v621
      %v630 = vpack.c.b16 %v624, %v623
      %v631 = vpack.c.b16 %v626, %v625
      %v632 = vpack.c.b16 %v628, %v627
      %v634 = vsel %vm518, %v629, 0
      %v637 = vsel %vm518, %v630, 0
      %v640 = vsel %vm518, %v631, 0
      %v643 = vsel %vm518, %v632, 0
      %645 = vmatprep.subr.bf16.mxu0 0
      %646 = vmatpush1.bf16.msra.mxu0 0
      %647 = vmatprep.subr.bf16.mxu0 0
      %648 = vmatpush1.bf16.msra.mxu0 0
      %649 = vmatprep.subr.bf16.mxu0 0
      %650 = vmatpush1.bf16.msra.mxu0 0
      %651 = vmatprep.subr.bf16.mxu0 0
      %652 = vmatpush1.bf16.msra.mxu0 0
      %653 = vmatprep.subr.bf16.mxu0 0
      %654 = vmatpush1.bf16.msra.mxu0 %v489
      %655 = vmatprep.subr.bf16.mxu0 0
      %656 = vmatpush1.bf16.msra.mxu0 %v488
      %657 = vmatprep.subr.bf16.mxu0 0
      %658 = vmatpush1.bf16.msra.mxu0 %v487
      %659 = vmatprep.subr.bf16.mxu0 0
      %660 = vmatpush1.bf16.msra.mxu0 %v486
      %661 = vmatprep.subr.bf16.mxu0 0
      %662 = vmatpush2.bf16.msra.mxu0 0
      %663 = vmatprep.subr.bf16.mxu0 0
      %664 = vmatpush2.bf16.msra.mxu0 0
      %665 = vmatprep.subr.bf16.mxu0 0
      %666 = vmatpush2.bf16.msra.mxu0 0
      %667 = vmatprep.subr.bf16.mxu0 0
      %668 = vmatpush2.bf16.msra.mxu0 0
      %669 = vmatprep.subr.bf16.mxu0 0
      %670 = vmatpush2.bf16.msra.mxu0 0
      %671 = vmatprep.subr.bf16.mxu0 0
      %672 = vmatpush2.bf16.msra.mxu0 0
      %673 = vmatprep.subr.bf16.mxu0 0
      %674 = vmatpush2.bf16.msra.mxu0 0
      %675 = vmatprep.subr.bf16.mxu0 0
      %676 = vmatpush2.bf16.msra.mxu0 0
      %677 = vmatprep.mubr.bf16.mxu0 0
      %678 = vmatmul.mubr.bf16.gmra.mxu0 %v634
      %v679 = vpop.f32.mrf.mxu0
      %v680 = vadd.f32 0.0, %v679
      %v681 = vpop.f32.mrf.mxu0
      %v682 = vpop.f32.mrf.mxu0
      %v683 = vadd.f32 0.0, %v682
      %v684 = vpop.f32.mrf.mxu0
      %685 = vmatprep.mubr.bf16.mxu0 0
      %686 = vmatmul.mubr.bf16.gmra.mxu0 %v637
      %v687 = vpop.f32.mrf.mxu0
      %v688 = vadd.f32 0.0, %v687
      %v689 = vpop.f32.mrf.mxu0
      %v690 = vpop.f32.mrf.mxu0
      %v691 = vadd.f32 0.0, %v690
      %v692 = vpop.f32.mrf.mxu0
      %693 = vmatprep.mubr.bf16.mxu0 0
      %694 = vmatmul.mubr.bf16.gmra.mxu0 %v640
      %v695 = vpop.f32.mrf.mxu0
      %v696 = vadd.f32 0.0, %v695
      %v697 = vpop.f32.mrf.mxu0
      %v698 = vpop.f32.mrf.mxu0
      %v699 = vadd.f32 0.0, %v698
      %v700 = vpop.f32.mrf.mxu0
      %701 = vmatprep.mubr.bf16.mxu0 0
      %702 = vmatmul.mubr.bf16.gmra.mxu0 %v643
      %v703 = vpop.f32.mrf.mxu0
      %v704 = vadd.f32 0.0, %v703
      %v705 = vpop.f32.mrf.mxu0
      %v706 = vpop.f32.mrf.mxu0
      %v707 = vadd.f32 0.0, %v706
      %v708 = vpop.f32.mrf.mxu0
      %709 = vdwg.mxu0
      %v710 = vpack.c.bf16 %v683, %v680
      %v711 = vpack.c.bf16 %v691, %v688
      %v712 = vpack.c.bf16 %v699, %v696
      %v713 = vpack.c.bf16 %v707, %v704
      %s714 = scalar_lea.vmem %s4, 16
      %v715 = vld [vmem:[%s714] sm:$0xf]
      %v716 = vld [vmem:[%s714 + $0x4] sm:$0xf]
      %v717 = vld [vmem:[%s714 + $0x8] sm:$0xf]
      %v718 = vld [vmem:[%s714 + $0xc] sm:$0xf]
      %v723 = vunpack.c.l.b16 %v715
      %v724 = vunpack.c.l.b16 %v716
      %v725 = vunpack.c.l.b16 %v717
      %v726 = vunpack.c.l.b16 %v718
      %v727 = vpack.c.b16 %v724, %v723
      %v728 = vpack.c.b16 %v726, %v725
      %vm731 = vcmask 261120
      %v733 = vsel %vm731, %v710, 0
      %v736 = vsel %vm731, %v711, 0
      %v739 = vsel %vm731, %v712, 0
      %v742 = vsel %vm731, %v713, 0
      %744 = vmatprep.subr.bf16.mxu0 0
      %745 = vmatpush1.bf16.msra.mxu0 0
      %746 = vmatprep.subr.bf16.mxu0 0
      %747 = vmatpush1.bf16.msra.mxu0 0
      %748 = vmatprep.subr.bf16.mxu0 0
      %749 = vmatpush1.bf16.msra.mxu0 0
      %750 = vmatprep.subr.bf16.mxu0 0
      %751 = vmatpush1.bf16.msra.mxu0 0
      %752 = vmatprep.subr.bf16.mxu0 0
      %753 = vmatpush1.bf16.msra.mxu0 0
      %754 = vmatprep.subr.bf16.mxu0 0
      %755 = vmatpush1.bf16.msra.mxu0 0
      %756 = vmatprep.subr.bf16.mxu0 0
      %757 = vmatpush1.bf16.msra.mxu0 %v728
      %758 = vmatprep.subr.bf16.mxu0 0
      %759 = vmatpush1.bf16.msra.mxu0 %v727
      %760 = vmatprep.subr.bf16.mxu0 0
      %761 = vmatpush2.bf16.msra.mxu0 0
      %762 = vmatprep.subr.bf16.mxu0 0
      %763 = vmatpush2.bf16.msra.mxu0 0
      %764 = vmatprep.subr.bf16.mxu0 0
      %765 = vmatpush2.bf16.msra.mxu0 0
      %766 = vmatprep.subr.bf16.mxu0 0
      %767 = vmatpush2.bf16.msra.mxu0 0
      %768 = vmatprep.subr.bf16.mxu0 0
      %769 = vmatpush2.bf16.msra.mxu0 0
      %770 = vmatprep.subr.bf16.mxu0 0
      %771 = vmatpush2.bf16.msra.mxu0 0
      %772 = vmatprep.subr.bf16.mxu0 0
      %773 = vmatpush2.bf16.msra.mxu0 0
      %774 = vmatprep.subr.bf16.mxu0 0
      %775 = vmatpush2.bf16.msra.mxu0 0
      %776 = vmatprep.mubr.bf16.mxu0 0
      %777 = vmatmul.mubr.bf16.gmra.mxu0 %v733
      %v778 = vpop.f32.mrf.mxu0
      %v779 = vadd.f32 0.0, %v778
      %v780 = vpop.f32.mrf.mxu0
      %v781 = vpop.f32.mrf.mxu0
      %v782 = vadd.f32 0.0, %v781
      %v783 = vpop.f32.mrf.mxu0
      %784 = vmatprep.mubr.bf16.mxu0 0
      %785 = vmatmul.mubr.bf16.gmra.mxu0 %v736
      %v786 = vpop.f32.mrf.mxu0
      %v787 = vadd.f32 0.0, %v786
      %v788 = vpop.f32.mrf.mxu0
      %v789 = vpop.f32.mrf.mxu0
      %v790 = vadd.f32 0.0, %v789
      %v791 = vpop.f32.mrf.mxu0
      %792 = vmatprep.mubr.bf16.mxu0 0
      %793 = vmatmul.mubr.bf16.gmra.mxu0 %v739
      %v794 = vpop.f32.mrf.mxu0
      %v795 = vadd.f32 0.0, %v794
      %v796 = vpop.f32.mrf.mxu0
      %v797 = vpop.f32.mrf.mxu0
      %v798 = vadd.f32 0.0, %v797
      %v799 = vpop.f32.mrf.mxu0
      %800 = vmatprep.mubr.bf16.mxu0 0
      %801 = vmatmul.mubr.bf16.gmra.mxu0 %v742
      %v802 = vpop.f32.mrf.mxu0
      %v803 = vadd.f32 0.0, %v802
      %v804 = vpop.f32.mrf.mxu0
      %v805 = vpop.f32.mrf.mxu0
      %v806 = vadd.f32 0.0, %v805
      %v807 = vpop.f32.mrf.mxu0
      %808 = vdwg.mxu0
      %v813 = vunpack.c.l.b16 %v600
      %v814 = vunpack.c.l.b16 %v601
      %v815 = vunpack.c.l.b16 %v602
      %v816 = vunpack.c.l.b16 %v603
      %v817 = vpack.c.b16 %v814, %v813
      %v818 = vpack.c.b16 %v816, %v815
      %v822 = vsel %vm731, %v596, 0
      %v825 = vsel %vm731, %v597, 0
      %v828 = vsel %vm731, %v598, 0
      %v831 = vsel %vm731, %v599, 0
      %833 = vmatprep.subr.bf16.mxu0 0
      %834 = vmatpush1.bf16.msra.mxu0 0
      %835 = vmatprep.subr.bf16.mxu0 0
      %836 = vmatpush1.bf16.msra.mxu0 0
      %837 = vmatprep.subr.bf16.mxu0 0
      %838 = vmatpush1.bf16.msra.mxu0 0
      %839 = vmatprep.subr.bf16.mxu0 0
      %840 = vmatpush1.bf16.msra.mxu0 0
      %841 = vmatprep.subr.bf16.mxu0 0
      %842 = vmatpush1.bf16.msra.mxu0 0
      %843 = vmatprep.subr.bf16.mxu0 0
      %844 = vmatpush1.bf16.msra.mxu0 0
      %845 = vmatprep.subr.bf16.mxu0 0
      %846 = vmatpush1.bf16.msra.mxu0 %v818
      %847 = vmatprep.subr.bf16.mxu0 0
      %848 = vmatpush1.bf16.msra.mxu0 %v817
      %849 = vmatprep.subr.bf16.mxu0 0
      %850 = vmatpush2.bf16.msra.mxu0 0
      %851 = vmatprep.subr.bf16.mxu0 0
      %852 = vmatpush2.bf16.msra.mxu0 0
      %853 = vmatprep.subr.bf16.mxu0 0
      %854 = vmatpush2.bf16.msra.mxu0 0
      %855 = vmatprep.subr.bf16.mxu0 0
      %856 = vmatpush2.bf16.msra.mxu0 0
      %857 = vmatprep.subr.bf16.mxu0 0
      %858 = vmatpush2.bf16.msra.mxu0 0
      %859 = vmatprep.subr.bf16.mxu0 0
      %860 = vmatpush2.bf16.msra.mxu0 0
      %861 = vmatprep.subr.bf16.mxu0 0
      %862 = vmatpush2.bf16.msra.mxu0 0
      %863 = vmatprep.subr.bf16.mxu0 0
      %864 = vmatpush2.bf16.msra.mxu0 0
      %865 = vmatprep.mubr.bf16.mxu0 0
      %866 = vmatmul.mubr.bf16.gmra.mxu0 %v822
      %v867 = vpop.f32.mrf.mxu0
      %v868 = vadd.f32 %v779, %v867
      %v869 = vpop.f32.mrf.mxu0
      %v870 = vpop.f32.mrf.mxu0
      %v871 = vadd.f32 %v782, %v870
      %v872 = vpop.f32.mrf.mxu0
      %873 = vmatprep.mubr.bf16.mxu0 0
      %874 = vmatmul.mubr.bf16.gmra.mxu0 %v825
      %v875 = vpop.f32.mrf.mxu0
      %v876 = vadd.f32 %v787, %v875
      %v877 = vpop.f32.mrf.mxu0
      %v878 = vpop.f32.mrf.mxu0
      %v879 = vadd.f32 %v790, %v878
      %v880 = vpop.f32.mrf.mxu0
      %881 = vmatprep.mubr.bf16.mxu0 0
      %882 = vmatmul.mubr.bf16.gmra.mxu0 %v828
      %v883 = vpop.f32.mrf.mxu0
      %v884 = vadd.f32 %v795, %v883
      %v885 = vpop.f32.mrf.mxu0
      %v886 = vpop.f32.mrf.mxu0
      %v887 = vadd.f32 %v798, %v886
      %v888 = vpop.f32.mrf.mxu0
      %889 = vmatprep.mubr.bf16.mxu0 0
      %890 = vmatmul.mubr.bf16.gmra.mxu0 %v831
      %v891 = vpop.f32.mrf.mxu0
      %v892 = vadd.f32 %v803, %v891
      %v893 = vpop.f32.mrf.mxu0
      %v894 = vpop.f32.mrf.mxu0
      %v895 = vadd.f32 %v806, %v894
      %v896 = vpop.f32.mrf.mxu0
      %897 = vdwg.mxu0
      %s898 = scalar_lea.vmem %s3, 64
      %v899 = vld [vmem:[%s898] sm:$0xf]
      %v900 = vld [vmem:[%s898 + $0x4] sm:$0xf]
      %v901 = vld [vmem:[%s898 + $0x8] sm:$0xf]
      %v902 = vld [vmem:[%s898 + $0xc] sm:$0xf]
      %v903 = vld [vmem:[%s898 + $0x10] sm:$0xf]
      %v904 = vld [vmem:[%s898 + $0x14] sm:$0xf]
      %v905 = vld [vmem:[%s898 + $0x18] sm:$0xf]
      %v906 = vld [vmem:[%s898 + $0x1c] sm:$0xf]
      %v915 = vunpack.c.l.b16 %v899
      %v916 = vunpack.c.l.b16 %v900
      %v917 = vunpack.c.l.b16 %v901
      %v918 = vunpack.c.l.b16 %v902
      %v919 = vunpack.c.l.b16 %v903
      %v920 = vunpack.c.l.b16 %v904
      %v921 = vunpack.c.l.b16 %v905
      %v922 = vunpack.c.l.b16 %v906
      %v923 = vpack.c.b16 %v916, %v915
      %v924 = vpack.c.b16 %v918, %v917
      %v925 = vpack.c.b16 %v920, %v919
      %v926 = vpack.c.b16 %v922, %v921
      %v928 = vsel %vm518, %v923, 0
      %v931 = vsel %vm518, %v924, 0
      %v934 = vsel %vm518, %v925, 0
      %v937 = vsel %vm518, %v926, 0
      %939 = vmatprep.subr.bf16.mxu0 0
      %940 = vmatpush1.bf16.msra.mxu0 0
      %941 = vmatprep.subr.bf16.mxu0 0
      %942 = vmatpush1.bf16.msra.mxu0 0
      %943 = vmatprep.subr.bf16.mxu0 0
      %944 = vmatpush1.bf16.msra.mxu0 0
      %945 = vmatprep.subr.bf16.mxu0 0
      %946 = vmatpush1.bf16.msra.mxu0 0
      %947 = vmatprep.subr.bf16.mxu0 0
      %948 = vmatpush1.bf16.msra.mxu0 %v489
      %949 = vmatprep.subr.bf16.mxu0 0
      %950 = vmatpush1.bf16.msra.mxu0 %v488
      %951 = vmatprep.subr.bf16.mxu0 0
      %952 = vmatpush1.bf16.msra.mxu0 %v487
      %953 = vmatprep.subr.bf16.mxu0 0
      %954 = vmatpush1.bf16.msra.mxu0 %v486
      %955 = vmatprep.subr.bf16.mxu0 0
      %956 = vmatpush2.bf16.msra.mxu0 0
      %957 = vmatprep.subr.bf16.mxu0 0
      %958 = vmatpush2.bf16.msra.mxu0 0
      %959 = vmatprep.subr.bf16.mxu0 0
      %960 = vmatpush2.bf16.msra.mxu0 0
      %961 = vmatprep.subr.bf16.mxu0 0
      %962 = vmatpush2.bf16.msra.mxu0 0
      %963 = vmatprep.subr.bf16.mxu0 0
      %964 = vmatpush2.bf16.msra.mxu0 0
      %965 = vmatprep.subr.bf16.mxu0 0
      %966 = vmatpush2.bf16.msra.mxu0 0
      %967 = vmatprep.subr.bf16.mxu0 0
      %968 = vmatpush2.bf16.msra.mxu0 0
      %969 = vmatprep.subr.bf16.mxu0 0
      %970 = vmatpush2.bf16.msra.mxu0 0
      %971 = vmatprep.mubr.bf16.mxu0 0
      %972 = vmatmul.mubr.bf16.gmra.mxu0 %v928
      %v973 = vpop.f32.mrf.mxu0
      %v974 = vadd.f32 0.0, %v973
      %v975 = vpop.f32.mrf.mxu0
      %v976 = vpop.f32.mrf.mxu0
      %v977 = vadd.f32 0.0, %v976
      %v978 = vpop.f32.mrf.mxu0
      %979 = vmatprep.mubr.bf16.mxu0 0
      %980 = vmatmul.mubr.bf16.gmra.mxu0 %v931
      %v981 = vpop.f32.mrf.mxu0
      %v982 = vadd.f32 0.0, %v981
      %v983 = vpop.f32.mrf.mxu0
      %v984 = vpop.f32.mrf.mxu0
      %v985 = vadd.f32 0.0, %v984
      %v986 = vpop.f32.mrf.mxu0
      %987 = vmatprep.mubr.bf16.mxu0 0
      %988 = vmatmul.mubr.bf16.gmra.mxu0 %v934
      %v989 = vpop.f32.mrf.mxu0
      %v990 = vadd.f32 0.0, %v989
      %v991 = vpop.f32.mrf.mxu0
      %v992 = vpop.f32.mrf.mxu0
      %v993 = vadd.f32 0.0, %v992
      %v994 = vpop.f32.mrf.mxu0
      %995 = vmatprep.mubr.bf16.mxu0 0
      %996 = vmatmul.mubr.bf16.gmra.mxu0 %v937
      %v997 = vpop.f32.mrf.mxu0
      %v998 = vadd.f32 0.0, %v997
      %v999 = vpop.f32.mrf.mxu0
      %v1000 = vpop.f32.mrf.mxu0
      %v1001 = vadd.f32 0.0, %v1000
      %v1002 = vpop.f32.mrf.mxu0
      %1003 = vdwg.mxu0
      %v1004 = vpack.c.bf16 %v977, %v974
      %v1005 = vpack.c.bf16 %v985, %v982
      %v1006 = vpack.c.bf16 %v993, %v990
      %v1007 = vpack.c.bf16 %v1001, %v998
      %s1008 = scalar_lea.vmem %s4, 32
      %v1009 = vld [vmem:[%s1008] sm:$0xf]
      %v1010 = vld [vmem:[%s1008 + $0x4] sm:$0xf]
      %v1011 = vld [vmem:[%s1008 + $0x8] sm:$0xf]
      %v1012 = vld [vmem:[%s1008 + $0xc] sm:$0xf]
      %v1017 = vunpack.c.l.b16 %v1009
      %v1018 = vunpack.c.l.b16 %v1010
      %v1019 = vunpack.c.l.b16 %v1011
      %v1020 = vunpack.c.l.b16 %v1012
      %v1021 = vpack.c.b16 %v1018, %v1017
      %v1022 = vpack.c.b16 %v1020, %v1019
      %v1026 = vsel %vm731, %v1004, 0
      %v1029 = vsel %vm731, %v1005, 0
      %v1032 = vsel %vm731, %v1006, 0
      %v1035 = vsel %vm731, %v1007, 0
      %1037 = vmatprep.subr.bf16.mxu0 0
      %1038 = vmatpush1.bf16.msra.mxu0 0
      %1039 = vmatprep.subr.bf16.mxu0 0
      %1040 = vmatpush1.bf16.msra.mxu0 0
      %1041 = vmatprep.subr.bf16.mxu0 0
      %1042 = vmatpush1.bf16.msra.mxu0 0
      %1043 = vmatprep.subr.bf16.mxu0 0
      %1044 = vmatpush1.bf16.msra.mxu0 0
      %1045 = vmatprep.subr.bf16.mxu0 0
      %1046 = vmatpush1.bf16.msra.mxu0 0
      %1047 = vmatprep.subr.bf16.mxu0 0
      %1048 = vmatpush1.bf16.msra.mxu0 0
      %1049 = vmatprep.subr.bf16.mxu0 0
      %1050 = vmatpush1.bf16.msra.mxu0 %v1022
      %1051 = vmatprep.subr.bf16.mxu0 0
      %1052 = vmatpush1.bf16.msra.mxu0 %v1021
      %1053 = vmatprep.subr.bf16.mxu0 0
      %1054 = vmatpush2.bf16.msra.mxu0 0
      %1055 = vmatprep.subr.bf16.mxu0 0
      %1056 = vmatpush2.bf16.msra.mxu0 0
      %1057 = vmatprep.subr.bf16.mxu0 0
      %1058 = vmatpush2.bf16.msra.mxu0 0
      %1059 = vmatprep.subr.bf16.mxu0 0
      %1060 = vmatpush2.bf16.msra.mxu0 0
      %1061 = vmatprep.subr.bf16.mxu0 0
      %1062 = vmatpush2.bf16.msra.mxu0 0
      %1063 = vmatprep.subr.bf16.mxu0 0
      %1064 = vmatpush2.bf16.msra.mxu0 0
      %1065 = vmatprep.subr.bf16.mxu0 0
      %1066 = vmatpush2.bf16.msra.mxu0 0
      %1067 = vmatprep.subr.bf16.mxu0 0
      %1068 = vmatpush2.bf16.msra.mxu0 0
      %1069 = vmatprep.mubr.bf16.mxu0 0
      %1070 = vmatmul.mubr.bf16.gmra.mxu0 %v1026
      %v1071 = vpop.f32.mrf.mxu0
      %v1072 = vadd.f32 0.0, %v1071
      %v1073 = vpop.f32.mrf.mxu0
      %v1074 = vpop.f32.mrf.mxu0
      %v1075 = vadd.f32 0.0, %v1074
      %v1076 = vpop.f32.mrf.mxu0
      %1077 = vmatprep.mubr.bf16.mxu0 0
      %1078 = vmatmul.mubr.bf16.gmra.mxu0 %v1029
      %v1079 = vpop.f32.mrf.mxu0
      %v1080 = vadd.f32 0.0, %v1079
      %v1081 = vpop.f32.mrf.mxu0
      %v1082 = vpop.f32.mrf.mxu0
      %v1083 = vadd.f32 0.0, %v1082
      %v1084 = vpop.f32.mrf.mxu0
      %1085 = vmatprep.mubr.bf16.mxu0 0
      %1086 = vmatmul.mubr.bf16.gmra.mxu0 %v1032
      %v1087 = vpop.f32.mrf.mxu0
      %v1088 = vadd.f32 0.0, %v1087
      %v1089 = vpop.f32.mrf.mxu0
      %v1090 = vpop.f32.mrf.mxu0
      %v1091 = vadd.f32 0.0, %v1090
      %v1092 = vpop.f32.mrf.mxu0
      %1093 = vmatprep.mubr.bf16.mxu0 0
      %1094 = vmatmul.mubr.bf16.gmra.mxu0 %v1035
      %v1095 = vpop.f32.mrf.mxu0
      %v1096 = vadd.f32 0.0, %v1095
      %v1097 = vpop.f32.mrf.mxu0
      %v1098 = vpop.f32.mrf.mxu0
      %v1099 = vadd.f32 0.0, %v1098
      %v1100 = vpop.f32.mrf.mxu0
      %1101 = vdwg.mxu0
      %v1102 = vadd.f32 %v868, %v1072
      %v1103 = vadd.f32 %v871, %v1075
      %v1104 = vadd.f32 %v876, %v1080
      %v1105 = vadd.f32 %v879, %v1083
      %v1106 = vadd.f32 %v884, %v1088
      %v1107 = vadd.f32 %v887, %v1091
      %v1108 = vadd.f32 %v892, %v1096
      %v1109 = vadd.f32 %v895, %v1099
      %s1110 = scalar_lea.vmem %s3, 96
      %v1111 = vld [vmem:[%s1110] sm:$0xf]
      %v1112 = vld [vmem:[%s1110 + $0x4] sm:$0xf]
      %v1113 = vld [vmem:[%s1110 + $0x8] sm:$0xf]
      %v1114 = vld [vmem:[%s1110 + $0xc] sm:$0xf]
      %v1115 = vld [vmem:[%s1110 + $0x10] sm:$0xf]
      %v1116 = vld [vmem:[%s1110 + $0x14] sm:$0xf]
      %v1117 = vld [vmem:[%s1110 + $0x18] sm:$0xf]
      %v1118 = vld [vmem:[%s1110 + $0x1c] sm:$0xf]
      %v1127 = vunpack.c.l.b16 %v1111
      %v1128 = vunpack.c.l.b16 %v1112
      %v1129 = vunpack.c.l.b16 %v1113
      %v1130 = vunpack.c.l.b16 %v1114
      %v1131 = vunpack.c.l.b16 %v1115
      %v1132 = vunpack.c.l.b16 %v1116
      %v1133 = vunpack.c.l.b16 %v1117
      %v1134 = vunpack.c.l.b16 %v1118
      %v1135 = vpack.c.b16 %v1128, %v1127
      %v1136 = vpack.c.b16 %v1130, %v1129
      %v1137 = vpack.c.b16 %v1132, %v1131
      %v1138 = vpack.c.b16 %v1134, %v1133
      %v1140 = vsel %vm518, %v1135, 0
      %v1143 = vsel %vm518, %v1136, 0
      %v1146 = vsel %vm518, %v1137, 0
      %v1149 = vsel %vm518, %v1138, 0
      %1151 = vmatprep.subr.bf16.mxu0 0
      %1152 = vmatpush1.bf16.msra.mxu0 0
      %1153 = vmatprep.subr.bf16.mxu0 0
      %1154 = vmatpush1.bf16.msra.mxu0 0
      %1155 = vmatprep.subr.bf16.mxu0 0
      %1156 = vmatpush1.bf16.msra.mxu0 0
      %1157 = vmatprep.subr.bf16.mxu0 0
      %1158 = vmatpush1.bf16.msra.mxu0 0
      %1159 = vmatprep.subr.bf16.mxu0 0
      %1160 = vmatpush1.bf16.msra.mxu0 %v489
      %1161 = vmatprep.subr.bf16.mxu0 0
      %1162 = vmatpush1.bf16.msra.mxu0 %v488
      %1163 = vmatprep.subr.bf16.mxu0 0
      %1164 = vmatpush1.bf16.msra.mxu0 %v487
      %1165 = vmatprep.subr.bf16.mxu0 0
      %1166 = vmatpush1.bf16.msra.mxu0 %v486
      %1167 = vmatprep.subr.bf16.mxu0 0
      %1168 = vmatpush2.bf16.msra.mxu0 0
      %1169 = vmatprep.subr.bf16.mxu0 0
      %1170 = vmatpush2.bf16.msra.mxu0 0
      %1171 = vmatprep.subr.bf16.mxu0 0
      %1172 = vmatpush2.bf16.msra.mxu0 0
      %1173 = vmatprep.subr.bf16.mxu0 0
      %1174 = vmatpush2.bf16.msra.mxu0 0
      %1175 = vmatprep.subr.bf16.mxu0 0
      %1176 = vmatpush2.bf16.msra.mxu0 0
      %1177 = vmatprep.subr.bf16.mxu0 0
      %1178 = vmatpush2.bf16.msra.mxu0 0
      %1179 = vmatprep.subr.bf16.mxu0 0
      %1180 = vmatpush2.bf16.msra.mxu0 0
      %1181 = vmatprep.subr.bf16.mxu0 0
      %1182 = vmatpush2.bf16.msra.mxu0 0
      %1183 = vmatprep.mubr.bf16.mxu0 0
      %1184 = vmatmul.mubr.bf16.gmra.mxu0 %v1140
      %v1185 = vpop.f32.mrf.mxu0
      %v1186 = vadd.f32 0.0, %v1185
      %v1187 = vpop.f32.mrf.mxu0
      %v1188 = vpop.f32.mrf.mxu0
      %v1189 = vadd.f32 0.0, %v1188
      %v1190 = vpop.f32.mrf.mxu0
      %1191 = vmatprep.mubr.bf16.mxu0 0
      %1192 = vmatmul.mubr.bf16.gmra.mxu0 %v1143
      %v1193 = vpop.f32.mrf.mxu0
      %v1194 = vadd.f32 0.0, %v1193
      %v1195 = vpop.f32.mrf.mxu0
      %v1196 = vpop.f32.mrf.mxu0
      %v1197 = vadd.f32 0.0, %v1196
      %v1198 = vpop.f32.mrf.mxu0
      %1199 = vmatprep.mubr.bf16.mxu0 0
      %1200 = vmatmul.mubr.bf16.gmra.mxu0 %v1146
      %v1201 = vpop.f32.mrf.mxu0
      %v1202 = vadd.f32 0.0, %v1201
      %v1203 = vpop.f32.mrf.mxu0
      %v1204 = vpop.f32.mrf.mxu0
      %v1205 = vadd.f32 0.0, %v1204
      %v1206 = vpop.f32.mrf.mxu0
      %1207 = vmatprep.mubr.bf16.mxu0 0
      %1208 = vmatmul.mubr.bf16.gmra.mxu0 %v1149
      %v1209 = vpop.f32.mrf.mxu0
      %v1210 = vadd.f32 0.0, %v1209
      %v1211 = vpop.f32.mrf.mxu0
      %v1212 = vpop.f32.mrf.mxu0
      %v1213 = vadd.f32 0.0, %v1212
      %v1214 = vpop.f32.mrf.mxu0
      %1215 = vdwg.mxu0
      %v1216 = vpack.c.bf16 %v1189, %v1186
      %v1217 = vpack.c.bf16 %v1197, %v1194
      %v1218 = vpack.c.bf16 %v1205, %v1202
      %v1219 = vpack.c.bf16 %v1213, %v1210
      %s1220 = scalar_lea.vmem %s4, 48
      %v1221 = vld [vmem:[%s1220] sm:$0xf]
      %v1222 = vld [vmem:[%s1220 + $0x4] sm:$0xf]
      %v1223 = vld [vmem:[%s1220 + $0x8] sm:$0xf]
      %v1224 = vld [vmem:[%s1220 + $0xc] sm:$0xf]
      %v1229 = vunpack.c.l.b16 %v1221
      %v1230 = vunpack.c.l.b16 %v1222
      %v1231 = vunpack.c.l.b16 %v1223
      %v1232 = vunpack.c.l.b16 %v1224
      %v1233 = vpack.c.b16 %v1230, %v1229
      %v1234 = vpack.c.b16 %v1232, %v1231
      %v1238 = vsel %vm731, %v1216, 0
      %v1241 = vsel %vm731, %v1217, 0
      %v1244 = vsel %vm731, %v1218, 0
      %v1247 = vsel %vm731, %v1219, 0
      %1249 = vmatprep.subr.bf16.mxu0 0
      %1250 = vmatpush1.bf16.msra.mxu0 0
      %1251 = vmatprep.subr.bf16.mxu0 0
      %1252 = vmatpush1.bf16.msra.mxu0 0
      %1253 = vmatprep.subr.bf16.mxu0 0
      %1254 = vmatpush1.bf16.msra.mxu0 0
      %1255 = vmatprep.subr.bf16.mxu0 0
      %1256 = vmatpush1.bf16.msra.mxu0 0
      %1257 = vmatprep.subr.bf16.mxu0 0
      %1258 = vmatpush1.bf16.msra.mxu0 0
      %1259 = vmatprep.subr.bf16.mxu0 0
      %1260 = vmatpush1.bf16.msra.mxu0 0
      %1261 = vmatprep.subr.bf16.mxu0 0
      %1262 = vmatpush1.bf16.msra.mxu0 %v1234
      %1263 = vmatprep.subr.bf16.mxu0 0
      %1264 = vmatpush1.bf16.msra.mxu0 %v1233
      %1265 = vmatprep.subr.bf16.mxu0 0
      %1266 = vmatpush2.bf16.msra.mxu0 0
      %1267 = vmatprep.subr.bf16.mxu0 0
      %1268 = vmatpush2.bf16.msra.mxu0 0
      %1269 = vmatprep.subr.bf16.mxu0 0
      %1270 = vmatpush2.bf16.msra.mxu0 0
      %1271 = vmatprep.subr.bf16.mxu0 0
      %1272 = vmatpush2.bf16.msra.mxu0 0
      %1273 = vmatprep.subr.bf16.mxu0 0
      %1274 = vmatpush2.bf16.msra.mxu0 0
      %1275 = vmatprep.subr.bf16.mxu0 0
      %1276 = vmatpush2.bf16.msra.mxu0 0
      %1277 = vmatprep.subr.bf16.mxu0 0
      %1278 = vmatpush2.bf16.msra.mxu0 0
      %1279 = vmatprep.subr.bf16.mxu0 0
      %1280 = vmatpush2.bf16.msra.mxu0 0
      %1281 = vmatprep.mubr.bf16.mxu0 0
      %1282 = vmatmul.mubr.bf16.gmra.mxu0 %v1238
      %v1283 = vpop.f32.mrf.mxu0
      %v1284 = vadd.f32 0.0, %v1283
      %v1285 = vpop.f32.mrf.mxu0
      %v1286 = vpop.f32.mrf.mxu0
      %v1287 = vadd.f32 0.0, %v1286
      %v1288 = vpop.f32.mrf.mxu0
      %1289 = vmatprep.mubr.bf16.mxu0 0
      %1290 = vmatmul.mubr.bf16.gmra.mxu0 %v1241
      %v1291 = vpop.f32.mrf.mxu0
      %v1292 = vadd.f32 0.0, %v1291
      %v1293 = vpop.f32.mrf.mxu0
      %v1294 = vpop.f32.mrf.mxu0
      %v1295 = vadd.f32 0.0, %v1294
      %v1296 = vpop.f32.mrf.mxu0
      %1297 = vmatprep.mubr.bf16.mxu0 0
      %1298 = vmatmul.mubr.bf16.gmra.mxu0 %v1244
      %v1299 = vpop.f32.mrf.mxu0
      %v1300 = vadd.f32 0.0, %v1299
      %v1301 = vpop.f32.mrf.mxu0
      %v1302 = vpop.f32.mrf.mxu0
      %v1303 = vadd.f32 0.0, %v1302
      %v1304 = vpop.f32.mrf.mxu0
      %1305 = vmatprep.mubr.bf16.mxu0 0
      %1306 = vmatmul.mubr.bf16.gmra.mxu0 %v1247
      %v1307 = vpop.f32.mrf.mxu0
      %v1308 = vadd.f32 0.0, %v1307
      %v1309 = vpop.f32.mrf.mxu0
      %v1310 = vpop.f32.mrf.mxu0
      %v1311 = vadd.f32 0.0, %v1310
      %v1312 = vpop.f32.mrf.mxu0
      %1313 = vdwg.mxu0
      %v1314 = vadd.f32 %v1102, %v1284
      %v1315 = vadd.f32 %v1103, %v1287
      %v1316 = vadd.f32 %v1104, %v1292
      %v1317 = vadd.f32 %v1105, %v1295
      %v1318 = vadd.f32 %v1106, %v1300
      %v1319 = vadd.f32 %v1107, %v1303
      %v1320 = vadd.f32 %v1108, %v1308
      %v1321 = vadd.f32 %v1109, %v1311
      %s1322 = scalar_lea.vmem %s3, 128
      %v1323 = vld [vmem:[%s1322] sm:$0xf]
      %v1324 = vld [vmem:[%s1322 + $0x4] sm:$0xf]
      %v1325 = vld [vmem:[%s1322 + $0x8] sm:$0xf]
      %v1326 = vld [vmem:[%s1322 + $0xc] sm:$0xf]
      %v1327 = vld [vmem:[%s1322 + $0x10] sm:$0xf]
      %v1328 = vld [vmem:[%s1322 + $0x14] sm:$0xf]
      %v1329 = vld [vmem:[%s1322 + $0x18] sm:$0xf]
      %v1330 = vld [vmem:[%s1322 + $0x1c] sm:$0xf]
      %v1339 = vunpack.c.l.b16 %v1323
      %v1340 = vunpack.c.l.b16 %v1324
      %v1341 = vunpack.c.l.b16 %v1325
      %v1342 = vunpack.c.l.b16 %v1326
      %v1343 = vunpack.c.l.b16 %v1327
      %v1344 = vunpack.c.l.b16 %v1328
      %v1345 = vunpack.c.l.b16 %v1329
      %v1346 = vunpack.c.l.b16 %v1330
      %v1347 = vpack.c.b16 %v1340, %v1339
      %v1348 = vpack.c.b16 %v1342, %v1341
      %v1349 = vpack.c.b16 %v1344, %v1343
      %v1350 = vpack.c.b16 %v1346, %v1345
      %v1352 = vsel %vm518, %v1347, 0
      %v1355 = vsel %vm518, %v1348, 0
      %v1358 = vsel %vm518, %v1349, 0
      %v1361 = vsel %vm518, %v1350, 0
      %1363 = vmatprep.subr.bf16.mxu0 0
      %1364 = vmatpush1.bf16.msra.mxu0 0
      %1365 = vmatprep.subr.bf16.mxu0 0
      %1366 = vmatpush1.bf16.msra.mxu0 0
      %1367 = vmatprep.subr.bf16.mxu0 0
      %1368 = vmatpush1.bf16.msra.mxu0 0
      %1369 = vmatprep.subr.bf16.mxu0 0
      %1370 = vmatpush1.bf16.msra.mxu0 0
      %1371 = vmatprep.subr.bf16.mxu0 0
      %1372 = vmatpush1.bf16.msra.mxu0 %v489
      %1373 = vmatprep.subr.bf16.mxu0 0
      %1374 = vmatpush1.bf16.msra.mxu0 %v488
      %1375 = vmatprep.subr.bf16.mxu0 0
      %1376 = vmatpush1.bf16.msra.mxu0 %v487
      %1377 = vmatprep.subr.bf16.mxu0 0
      %1378 = vmatpush1.bf16.msra.mxu0 %v486
      %1379 = vmatprep.subr.bf16.mxu0 0
      %1380 = vmatpush2.bf16.msra.mxu0 0
      %1381 = vmatprep.subr.bf16.mxu0 0
      %1382 = vmatpush2.bf16.msra.mxu0 0
      %1383 = vmatprep.subr.bf16.mxu0 0
      %1384 = vmatpush2.bf16.msra.mxu0 0
      %1385 = vmatprep.subr.bf16.mxu0 0
      %1386 = vmatpush2.bf16.msra.mxu0 0
      %1387 = vmatprep.subr.bf16.mxu0 0
      %1388 = vmatpush2.bf16.msra.mxu0 0
      %1389 = vmatprep.subr.bf16.mxu0 0
      %1390 = vmatpush2.bf16.msra.mxu0 0
      %1391 = vmatprep.subr.bf16.mxu0 0
      %1392 = vmatpush2.bf16.msra.mxu0 0
      %1393 = vmatprep.subr.bf16.mxu0 0
      %1394 = vmatpush2.bf16.msra.mxu0 0
      %1395 = vmatprep.mubr.bf16.mxu0 0
      %1396 = vmatmul.mubr.bf16.gmra.mxu0 %v1352
      %v1397 = vpop.f32.mrf.mxu0
      %v1398 = vadd.f32 0.0, %v1397
      %v1399 = vpop.f32.mrf.mxu0
      %v1400 = vpop.f32.mrf.mxu0
      %v1401 = vadd.f32 0.0, %v1400
      %v1402 = vpop.f32.mrf.mxu0
      %1403 = vmatprep.mubr.bf16.mxu0 0
      %1404 = vmatmul.mubr.bf16.gmra.mxu0 %v1355
      %v1405 = vpop.f32.mrf.mxu0
      %v1406 = vadd.f32 0.0, %v1405
      %v1407 = vpop.f32.mrf.mxu0
      %v1408 = vpop.f32.mrf.mxu0
      %v1409 = vadd.f32 0.0, %v1408
      %v1410 = vpop.f32.mrf.mxu0
      %1411 = vmatprep.mubr.bf16.mxu0 0
      %1412 = vmatmul.mubr.bf16.gmra.mxu0 %v1358
      %v1413 = vpop.f32.mrf.mxu0
      %v1414 = vadd.f32 0.0, %v1413
      %v1415 = vpop.f32.mrf.mxu0
      %v1416 = vpop.f32.mrf.mxu0
      %v1417 = vadd.f32 0.0, %v1416
      %v1418 = vpop.f32.mrf.mxu0
      %1419 = vmatprep.mubr.bf16.mxu0 0
      %1420 = vmatmul.mubr.bf16.gmra.mxu0 %v1361
      %v1421 = vpop.f32.mrf.mxu0
      %v1422 = vadd.f32 0.0, %v1421
      %v1423 = vpop.f32.mrf.mxu0
      %v1424 = vpop.f32.mrf.mxu0
      %v1425 = vadd.f32 0.0, %v1424
      %v1426 = vpop.f32.mrf.mxu0
      %1427 = vdwg.mxu0
      %v1428 = vpack.c.bf16 %v1401, %v1398
      %v1429 = vpack.c.bf16 %v1409, %v1406
      %v1430 = vpack.c.bf16 %v1417, %v1414
      %v1431 = vpack.c.bf16 %v1425, %v1422
      %s1432 = scalar_lea.vmem %s4, 64
      %v1433 = vld [vmem:[%s1432] sm:$0xf]
      %v1434 = vld [vmem:[%s1432 + $0x4] sm:$0xf]
      %v1435 = vld [vmem:[%s1432 + $0x8] sm:$0xf]
      %v1436 = vld [vmem:[%s1432 + $0xc] sm:$0xf]
      %v1441 = vunpack.c.l.b16 %v1433
      %v1442 = vunpack.c.l.b16 %v1434
      %v1443 = vunpack.c.l.b16 %v1435
      %v1444 = vunpack.c.l.b16 %v1436
      %v1445 = vpack.c.b16 %v1442, %v1441
      %v1446 = vpack.c.b16 %v1444, %v1443
      %v1450 = vsel %vm731, %v1428, 0
      %v1453 = vsel %vm731, %v1429, 0
      %v1456 = vsel %vm731, %v1430, 0
      %v1459 = vsel %vm731, %v1431, 0
      %1461 = vmatprep.subr.bf16.mxu0 0
      %1462 = vmatpush1.bf16.msra.mxu0 0
      %1463 = vmatprep.subr.bf16.mxu0 0
      %1464 = vmatpush1.bf16.msra.mxu0 0
      %1465 = vmatprep.subr.bf16.mxu0 0
      %1466 = vmatpush1.bf16.msra.mxu0 0
      %1467 = vmatprep.subr.bf16.mxu0 0
      %1468 = vmatpush1.bf16.msra.mxu0 0
      %1469 = vmatprep.subr.bf16.mxu0 0
      %1470 = vmatpush1.bf16.msra.mxu0 0
      %1471 = vmatprep.subr.bf16.mxu0 0
      %1472 = vmatpush1.bf16.msra.mxu0 0
      %1473 = vmatprep.subr.bf16.mxu0 0
      %1474 = vmatpush1.bf16.msra.mxu0 %v1446
      %1475 = vmatprep.subr.bf16.mxu0 0
      %1476 = vmatpush1.bf16.msra.mxu0 %v1445
      %1477 = vmatprep.subr.bf16.mxu0 0
      %1478 = vmatpush2.bf16.msra.mxu0 0
      %1479 = vmatprep.subr.bf16.mxu0 0
      %1480 = vmatpush2.bf16.msra.mxu0 0
      %1481 = vmatprep.subr.bf16.mxu0 0
      %1482 = vmatpush2.bf16.msra.mxu0 0
      %1483 = vmatprep.subr.bf16.mxu0 0
      %1484 = vmatpush2.bf16.msra.mxu0 0
      %1485 = vmatprep.subr.bf16.mxu0 0
      %1486 = vmatpush2.bf16.msra.mxu0 0
      %1487 = vmatprep.subr.bf16.mxu0 0
      %1488 = vmatpush2.bf16.msra.mxu0 0
      %1489 = vmatprep.subr.bf16.mxu0 0
      %1490 = vmatpush2.bf16.msra.mxu0 0
      %1491 = vmatprep.subr.bf16.mxu0 0
      %1492 = vmatpush2.bf16.msra.mxu0 0
      %1493 = vmatprep.mubr.bf16.mxu0 0
      %1494 = vmatmul.mubr.bf16.gmra.mxu0 %v1450
      %v1495 = vpop.f32.mrf.mxu0
      %v1496 = vadd.f32 0.0, %v1495
      %v1497 = vpop.f32.mrf.mxu0
      %v1498 = vpop.f32.mrf.mxu0
      %v1499 = vadd.f32 0.0, %v1498
      %v1500 = vpop.f32.mrf.mxu0
      %1501 = vmatprep.mubr.bf16.mxu0 0
      %1502 = vmatmul.mubr.bf16.gmra.mxu0 %v1453
      %v1503 = vpop.f32.mrf.mxu0
      %v1504 = vadd.f32 0.0, %v1503
      %v1505 = vpop.f32.mrf.mxu0
      %v1506 = vpop.f32.mrf.mxu0
      %v1507 = vadd.f32 0.0, %v1506
      %v1508 = vpop.f32.mrf.mxu0
      %1509 = vmatprep.mubr.bf16.mxu0 0
      %1510 = vmatmul.mubr.bf16.gmra.mxu0 %v1456
      %v1511 = vpop.f32.mrf.mxu0
      %v1512 = vadd.f32 0.0, %v1511
      %v1513 = vpop.f32.mrf.mxu0
      %v1514 = vpop.f32.mrf.mxu0
      %v1515 = vadd.f32 0.0, %v1514
      %v1516 = vpop.f32.mrf.mxu0
      %1517 = vmatprep.mubr.bf16.mxu0 0
      %1518 = vmatmul.mubr.bf16.gmra.mxu0 %v1459
      %v1519 = vpop.f32.mrf.mxu0
      %v1520 = vadd.f32 0.0, %v1519
      %v1521 = vpop.f32.mrf.mxu0
      %v1522 = vpop.f32.mrf.mxu0
      %v1523 = vadd.f32 0.0, %v1522
      %v1524 = vpop.f32.mrf.mxu0
      %1525 = vdwg.mxu0
      %v1526 = vadd.f32 %v1314, %v1496
      %v1527 = vadd.f32 %v1315, %v1499
      %v1528 = vadd.f32 %v1316, %v1504
      %v1529 = vadd.f32 %v1317, %v1507
      %v1530 = vadd.f32 %v1318, %v1512
      %v1531 = vadd.f32 %v1319, %v1515
      %v1532 = vadd.f32 %v1320, %v1520
      %v1533 = vadd.f32 %v1321, %v1523
      %s1534 = scalar_lea.vmem %s3, 160
      %v1535 = vld [vmem:[%s1534] sm:$0xf]
      %v1536 = vld [vmem:[%s1534 + $0x4] sm:$0xf]
      %v1537 = vld [vmem:[%s1534 + $0x8] sm:$0xf]
      %v1538 = vld [vmem:[%s1534 + $0xc] sm:$0xf]
      %v1539 = vld [vmem:[%s1534 + $0x10] sm:$0xf]
      %v1540 = vld [vmem:[%s1534 + $0x14] sm:$0xf]
      %v1541 = vld [vmem:[%s1534 + $0x18] sm:$0xf]
      %v1542 = vld [vmem:[%s1534 + $0x1c] sm:$0xf]
      %v1551 = vunpack.c.l.b16 %v1535
      %v1552 = vunpack.c.l.b16 %v1536
      %v1553 = vunpack.c.l.b16 %v1537
      %v1554 = vunpack.c.l.b16 %v1538
      %v1555 = vunpack.c.l.b16 %v1539
      %v1556 = vunpack.c.l.b16 %v1540
      %v1557 = vunpack.c.l.b16 %v1541
      %v1558 = vunpack.c.l.b16 %v1542
      %v1559 = vpack.c.b16 %v1552, %v1551
      %v1560 = vpack.c.b16 %v1554, %v1553
      %v1561 = vpack.c.b16 %v1556, %v1555
      %v1562 = vpack.c.b16 %v1558, %v1557
      %v1564 = vsel %vm518, %v1559, 0
      %v1567 = vsel %vm518, %v1560, 0
      %v1570 = vsel %vm518, %v1561, 0
      %v1573 = vsel %vm518, %v1562, 0
      %1575 = vmatprep.subr.bf16.mxu0 0
      %1576 = vmatpush1.bf16.msra.mxu0 0
      %1577 = vmatprep.subr.bf16.mxu0 0
      %1578 = vmatpush1.bf16.msra.mxu0 0
      %1579 = vmatprep.subr.bf16.mxu0 0
      %1580 = vmatpush1.bf16.msra.mxu0 0
      %1581 = vmatprep.subr.bf16.mxu0 0
      %1582 = vmatpush1.bf16.msra.mxu0 0
      %1583 = vmatprep.subr.bf16.mxu0 0
      %1584 = vmatpush1.bf16.msra.mxu0 %v489
      %1585 = vmatprep.subr.bf16.mxu0 0
      %1586 = vmatpush1.bf16.msra.mxu0 %v488
      %1587 = vmatprep.subr.bf16.mxu0 0
      %1588 = vmatpush1.bf16.msra.mxu0 %v487
      %1589 = vmatprep.subr.bf16.mxu0 0
      %1590 = vmatpush1.bf16.msra.mxu0 %v486
      %1591 = vmatprep.subr.bf16.mxu0 0
      %1592 = vmatpush2.bf16.msra.mxu0 0
      %1593 = vmatprep.subr.bf16.mxu0 0
      %1594 = vmatpush2.bf16.msra.mxu0 0
      %1595 = vmatprep.subr.bf16.mxu0 0
      %1596 = vmatpush2.bf16.msra.mxu0 0
      %1597 = vmatprep.subr.bf16.mxu0 0
      %1598 = vmatpush2.bf16.msra.mxu0 0
      %1599 = vmatprep.subr.bf16.mxu0 0
      %1600 = vmatpush2.bf16.msra.mxu0 0
      %1601 = vmatprep.subr.bf16.mxu0 0
      %1602 = vmatpush2.bf16.msra.mxu0 0
      %1603 = vmatprep.subr.bf16.mxu0 0
      %1604 = vmatpush2.bf16.msra.mxu0 0
      %1605 = vmatprep.subr.bf16.mxu0 0
      %1606 = vmatpush2.bf16.msra.mxu0 0
      %1607 = vmatprep.mubr.bf16.mxu0 0
      %1608 = vmatmul.mubr.bf16.gmra.mxu0 %v1564
      %v1609 = vpop.f32.mrf.mxu0
      %v1610 = vadd.f32 0.0, %v1609
      %v1611 = vpop.f32.mrf.mxu0
      %v1612 = vpop.f32.mrf.mxu0
      %v1613 = vadd.f32 0.0, %v1612
      %v1614 = vpop.f32.mrf.mxu0
      %1615 = vmatprep.mubr.bf16.mxu0 0
      %1616 = vmatmul.mubr.bf16.gmra.mxu0 %v1567
      %v1617 = vpop.f32.mrf.mxu0
      %v1618 = vadd.f32 0.0, %v1617
      %v1619 = vpop.f32.mrf.mxu0
      %v1620 = vpop.f32.mrf.mxu0
      %v1621 = vadd.f32 0.0, %v1620
      %v1622 = vpop.f32.mrf.mxu0
      %1623 = vmatprep.mubr.bf16.mxu0 0
      %1624 = vmatmul.mubr.bf16.gmra.mxu0 %v1570
      %v1625 = vpop.f32.mrf.mxu0
      %v1626 = vadd.f32 0.0, %v1625
      %v1627 = vpop.f32.mrf.mxu0
      %v1628 = vpop.f32.mrf.mxu0
      %v1629 = vadd.f32 0.0, %v1628
      %v1630 = vpop.f32.mrf.mxu0
      %1631 = vmatprep.mubr.bf16.mxu0 0
      %1632 = vmatmul.mubr.bf16.gmra.mxu0 %v1573
      %v1633 = vpop.f32.mrf.mxu0
      %v1634 = vadd.f32 0.0, %v1633
      %v1635 = vpop.f32.mrf.mxu0
      %v1636 = vpop.f32.mrf.mxu0
      %v1637 = vadd.f32 0.0, %v1636
      %v1638 = vpop.f32.mrf.mxu0
      %1639 = vdwg.mxu0
      %v1640 = vpack.c.bf16 %v1613, %v1610
      %v1641 = vpack.c.bf16 %v1621, %v1618
      %v1642 = vpack.c.bf16 %v1629, %v1626
      %v1643 = vpack.c.bf16 %v1637, %v1634
      %s1644 = scalar_lea.vmem %s4, 80
      %v1645 = vld [vmem:[%s1644] sm:$0xf]
      %v1646 = vld [vmem:[%s1644 + $0x4] sm:$0xf]
      %v1647 = vld [vmem:[%s1644 + $0x8] sm:$0xf]
      %v1648 = vld [vmem:[%s1644 + $0xc] sm:$0xf]
      %v1653 = vunpack.c.l.b16 %v1645
      %v1654 = vunpack.c.l.b16 %v1646
      %v1655 = vunpack.c.l.b16 %v1647
      %v1656 = vunpack.c.l.b16 %v1648
      %v1657 = vpack.c.b16 %v1654, %v1653
      %v1658 = vpack.c.b16 %v1656, %v1655
      %v1662 = vsel %vm731, %v1640, 0
      %v1665 = vsel %vm731, %v1641, 0
      %v1668 = vsel %vm731, %v1642, 0
      %v1671 = vsel %vm731, %v1643, 0
      %1673 = vmatprep.subr.bf16.mxu0 0
      %1674 = vmatpush1.bf16.msra.mxu0 0
      %1675 = vmatprep.subr.bf16.mxu0 0
      %1676 = vmatpush1.bf16.msra.mxu0 0
      %1677 = vmatprep.subr.bf16.mxu0 0
      %1678 = vmatpush1.bf16.msra.mxu0 0
      %1679 = vmatprep.subr.bf16.mxu0 0
      %1680 = vmatpush1.bf16.msra.mxu0 0
      %1681 = vmatprep.subr.bf16.mxu0 0
      %1682 = vmatpush1.bf16.msra.mxu0 0
      %1683 = vmatprep.subr.bf16.mxu0 0
      %1684 = vmatpush1.bf16.msra.mxu0 0
      %1685 = vmatprep.subr.bf16.mxu0 0
      %1686 = vmatpush1.bf16.msra.mxu0 %v1658
      %1687 = vmatprep.subr.bf16.mxu0 0
      %1688 = vmatpush1.bf16.msra.mxu0 %v1657
      %1689 = vmatprep.subr.bf16.mxu0 0
      %1690 = vmatpush2.bf16.msra.mxu0 0
      %1691 = vmatprep.subr.bf16.mxu0 0
      %1692 = vmatpush2.bf16.msra.mxu0 0
      %1693 = vmatprep.subr.bf16.mxu0 0
      %1694 = vmatpush2.bf16.msra.mxu0 0
      %1695 = vmatprep.subr.bf16.mxu0 0
      %1696 = vmatpush2.bf16.msra.mxu0 0
      %1697 = vmatprep.subr.bf16.mxu0 0
      %1698 = vmatpush2.bf16.msra.mxu0 0
      %1699 = vmatprep.subr.bf16.mxu0 0
      %1700 = vmatpush2.bf16.msra.mxu0 0
      %1701 = vmatprep.subr.bf16.mxu0 0
      %1702 = vmatpush2.bf16.msra.mxu0 0
      %1703 = vmatprep.subr.bf16.mxu0 0
      %1704 = vmatpush2.bf16.msra.mxu0 0
      %1705 = vmatprep.mubr.bf16.mxu0 0
      %1706 = vmatmul.mubr.bf16.gmra.mxu0 %v1662
      %v1707 = vpop.f32.mrf.mxu0
      %v1708 = vadd.f32 0.0, %v1707
      %v1709 = vpop.f32.mrf.mxu0
      %v1710 = vpop.f32.mrf.mxu0
      %v1711 = vadd.f32 0.0, %v1710
      %v1712 = vpop.f32.mrf.mxu0
      %1713 = vmatprep.mubr.bf16.mxu0 0
      %1714 = vmatmul.mubr.bf16.gmra.mxu0 %v1665
      %v1715 = vpop.f32.mrf.mxu0
      %v1716 = vadd.f32 0.0, %v1715
      %v1717 = vpop.f32.mrf.mxu0
      %v1718 = vpop.f32.mrf.mxu0
      %v1719 = vadd.f32 0.0, %v1718
      %v1720 = vpop.f32.mrf.mxu0
      %1721 = vmatprep.mubr.bf16.mxu0 0
      %1722 = vmatmul.mubr.bf16.gmra.mxu0 %v1668
      %v1723 = vpop.f32.mrf.mxu0
      %v1724 = vadd.f32 0.0, %v1723
      %v1725 = vpop.f32.mrf.mxu0
      %v1726 = vpop.f32.mrf.mxu0
      %v1727 = vadd.f32 0.0, %v1726
      %v1728 = vpop.f32.mrf.mxu0
      %1729 = vmatprep.mubr.bf16.mxu0 0
      %1730 = vmatmul.mubr.bf16.gmra.mxu0 %v1671
      %v1731 = vpop.f32.mrf.mxu0
      %v1732 = vadd.f32 0.0, %v1731
      %v1733 = vpop.f32.mrf.mxu0
      %v1734 = vpop.f32.mrf.mxu0
      %v1735 = vadd.f32 0.0, %v1734
      %v1736 = vpop.f32.mrf.mxu0
      %1737 = vdwg.mxu0
      %v1738 = vadd.f32 %v1526, %v1708
      %v1739 = vadd.f32 %v1527, %v1711
      %v1740 = vadd.f32 %v1528, %v1716
      %v1741 = vadd.f32 %v1529, %v1719
      %v1742 = vadd.f32 %v1530, %v1724
      %v1743 = vadd.f32 %v1531, %v1727
      %v1744 = vadd.f32 %v1532, %v1732
      %v1745 = vadd.f32 %v1533, %v1735
      %s1746 = scalar_lea.vmem %s3, 192
      %v1747 = vld [vmem:[%s1746] sm:$0xf]
      %v1748 = vld [vmem:[%s1746 + $0x4] sm:$0xf]
      %v1749 = vld [vmem:[%s1746 + $0x8] sm:$0xf]
      %v1750 = vld [vmem:[%s1746 + $0xc] sm:$0xf]
      %v1751 = vld [vmem:[%s1746 + $0x10] sm:$0xf]
      %v1752 = vld [vmem:[%s1746 + $0x14] sm:$0xf]
      %v1753 = vld [vmem:[%s1746 + $0x18] sm:$0xf]
      %v1754 = vld [vmem:[%s1746 + $0x1c] sm:$0xf]
      %v1763 = vunpack.c.l.b16 %v1747
      %v1764 = vunpack.c.l.b16 %v1748
      %v1765 = vunpack.c.l.b16 %v1749
      %v1766 = vunpack.c.l.b16 %v1750
      %v1767 = vunpack.c.l.b16 %v1751
      %v1768 = vunpack.c.l.b16 %v1752
      %v1769 = vunpack.c.l.b16 %v1753
      %v1770 = vunpack.c.l.b16 %v1754
      %v1771 = vpack.c.b16 %v1764, %v1763
      %v1772 = vpack.c.b16 %v1766, %v1765
      %v1773 = vpack.c.b16 %v1768, %v1767
      %v1774 = vpack.c.b16 %v1770, %v1769
      %v1776 = vsel %vm518, %v1771, 0
      %v1779 = vsel %vm518, %v1772, 0
      %v1782 = vsel %vm518, %v1773, 0
      %v1785 = vsel %vm518, %v1774, 0
      %1787 = vmatprep.subr.bf16.mxu0 0
      %1788 = vmatpush1.bf16.msra.mxu0 0
      %1789 = vmatprep.subr.bf16.mxu0 0
      %1790 = vmatpush1.bf16.msra.mxu0 0
      %1791 = vmatprep.subr.bf16.mxu0 0
      %1792 = vmatpush1.bf16.msra.mxu0 0
      %1793 = vmatprep.subr.bf16.mxu0 0
      %1794 = vmatpush1.bf16.msra.mxu0 0
      %1795 = vmatprep.subr.bf16.mxu0 0
      %1796 = vmatpush1.bf16.msra.mxu0 %v489
      %1797 = vmatprep.subr.bf16.mxu0 0
      %1798 = vmatpush1.bf16.msra.mxu0 %v488
      %1799 = vmatprep.subr.bf16.mxu0 0
      %1800 = vmatpush1.bf16.msra.mxu0 %v487
      %1801 = vmatprep.subr.bf16.mxu0 0
      %1802 = vmatpush1.bf16.msra.mxu0 %v486
      %1803 = vmatprep.subr.bf16.mxu0 0
      %1804 = vmatpush2.bf16.msra.mxu0 0
      %1805 = vmatprep.subr.bf16.mxu0 0
      %1806 = vmatpush2.bf16.msra.mxu0 0
      %1807 = vmatprep.subr.bf16.mxu0 0
      %1808 = vmatpush2.bf16.msra.mxu0 0
      %1809 = vmatprep.subr.bf16.mxu0 0
      %1810 = vmatpush2.bf16.msra.mxu0 0
      %1811 = vmatprep.subr.bf16.mxu0 0
      %1812 = vmatpush2.bf16.msra.mxu0 0
      %1813 = vmatprep.subr.bf16.mxu0 0
      %1814 = vmatpush2.bf16.msra.mxu0 0
      %1815 = vmatprep.subr.bf16.mxu0 0
      %1816 = vmatpush2.bf16.msra.mxu0 0
      %1817 = vmatprep.subr.bf16.mxu0 0
      %1818 = vmatpush2.bf16.msra.mxu0 0
      %1819 = vmatprep.mubr.bf16.mxu0 0
      %1820 = vmatmul.mubr.bf16.gmra.mxu0 %v1776
      %v1821 = vpop.f32.mrf.mxu0
      %v1822 = vadd.f32 0.0, %v1821
      %v1823 = vpop.f32.mrf.mxu0
      %v1824 = vpop.f32.mrf.mxu0
      %v1825 = vadd.f32 0.0, %v1824
      %v1826 = vpop.f32.mrf.mxu0
      %1827 = vmatprep.mubr.bf16.mxu0 0
      %1828 = vmatmul.mubr.bf16.gmra.mxu0 %v1779
      %v1829 = vpop.f32.mrf.mxu0
      %v1830 = vadd.f32 0.0, %v1829
      %v1831 = vpop.f32.mrf.mxu0
      %v1832 = vpop.f32.mrf.mxu0
      %v1833 = vadd.f32 0.0, %v1832
      %v1834 = vpop.f32.mrf.mxu0
      %1835 = vmatprep.mubr.bf16.mxu0 0
      %1836 = vmatmul.mubr.bf16.gmra.mxu0 %v1782
      %v1837 = vpop.f32.mrf.mxu0
      %v1838 = vadd.f32 0.0, %v1837
      %v1839 = vpop.f32.mrf.mxu0
      %v1840 = vpop.f32.mrf.mxu0
      %v1841 = vadd.f32 0.0, %v1840
      %v1842 = vpop.f32.mrf.mxu0
      %1843 = vmatprep.mubr.bf16.mxu0 0
      %1844 = vmatmul.mubr.bf16.gmra.mxu0 %v1785
      %v1845 = vpop.f32.mrf.mxu0
      %v1846 = vadd.f32 0.0, %v1845
      %v1847 = vpop.f32.mrf.mxu0
      %v1848 = vpop.f32.mrf.mxu0
      %v1849 = vadd.f32 0.0, %v1848
      %v1850 = vpop.f32.mrf.mxu0
      %1851 = vdwg.mxu0
      %v1852 = vpack.c.bf16 %v1825, %v1822
      %v1853 = vpack.c.bf16 %v1833, %v1830
      %v1854 = vpack.c.bf16 %v1841, %v1838
      %v1855 = vpack.c.bf16 %v1849, %v1846
      %s1856 = scalar_lea.vmem %s4, 96
      %v1857 = vld [vmem:[%s1856] sm:$0xf]
      %v1858 = vld [vmem:[%s1856 + $0x4] sm:$0xf]
      %v1859 = vld [vmem:[%s1856 + $0x8] sm:$0xf]
      %v1860 = vld [vmem:[%s1856 + $0xc] sm:$0xf]
      %v1865 = vunpack.c.l.b16 %v1857
      %v1866 = vunpack.c.l.b16 %v1858
      %v1867 = vunpack.c.l.b16 %v1859
      %v1868 = vunpack.c.l.b16 %v1860
      %v1869 = vpack.c.b16 %v1866, %v1865
      %v1870 = vpack.c.b16 %v1868, %v1867
      %v1874 = vsel %vm731, %v1852, 0
      %v1877 = vsel %vm731, %v1853, 0
      %v1880 = vsel %vm731, %v1854, 0
      %v1883 = vsel %vm731, %v1855, 0
      %1885 = vmatprep.subr.bf16.mxu0 0
      %1886 = vmatpush1.bf16.msra.mxu0 0
      %1887 = vmatprep.subr.bf16.mxu0 0
      %1888 = vmatpush1.bf16.msra.mxu0 0
      %1889 = vmatprep.subr.bf16.mxu0 0
      %1890 = vmatpush1.bf16.msra.mxu0 0
      %1891 = vmatprep.subr.bf16.mxu0 0
      %1892 = vmatpush1.bf16.msra.mxu0 0
      %1893 = vmatprep.subr.bf16.mxu0 0
      %1894 = vmatpush1.bf16.msra.mxu0 0
      %1895 = vmatprep.subr.bf16.mxu0 0
      %1896 = vmatpush1.bf16.msra.mxu0 0
      %1897 = vmatprep.subr.bf16.mxu0 0
      %1898 = vmatpush1.bf16.msra.mxu0 %v1870
      %1899 = vmatprep.subr.bf16.mxu0 0
      %1900 = vmatpush1.bf16.msra.mxu0 %v1869
      %1901 = vmatprep.subr.bf16.mxu0 0
      %1902 = vmatpush2.bf16.msra.mxu0 0
      %1903 = vmatprep.subr.bf16.mxu0 0
      %1904 = vmatpush2.bf16.msra.mxu0 0
      %1905 = vmatprep.subr.bf16.mxu0 0
      %1906 = vmatpush2.bf16.msra.mxu0 0
      %1907 = vmatprep.subr.bf16.mxu0 0
      %1908 = vmatpush2.bf16.msra.mxu0 0
      %1909 = vmatprep.subr.bf16.mxu0 0
      %1910 = vmatpush2.bf16.msra.mxu0 0
      %1911 = vmatprep.subr.bf16.mxu0 0
      %1912 = vmatpush2.bf16.msra.mxu0 0
      %1913 = vmatprep.subr.bf16.mxu0 0
      %1914 = vmatpush2.bf16.msra.mxu0 0
      %1915 = vmatprep.subr.bf16.mxu0 0
      %1916 = vmatpush2.bf16.msra.mxu0 0
      %1917 = vmatprep.mubr.bf16.mxu0 0
      %1918 = vmatmul.mubr.bf16.gmra.mxu0 %v1874
      %v1919 = vpop.f32.mrf.mxu0
      %v1920 = vadd.f32 0.0, %v1919
      %v1921 = vpop.f32.mrf.mxu0
      %v1922 = vpop.f32.mrf.mxu0
      %v1923 = vadd.f32 0.0, %v1922
      %v1924 = vpop.f32.mrf.mxu0
      %1925 = vmatprep.mubr.bf16.mxu0 0
      %1926 = vmatmul.mubr.bf16.gmra.mxu0 %v1877
      %v1927 = vpop.f32.mrf.mxu0
      %v1928 = vadd.f32 0.0, %v1927
      %v1929 = vpop.f32.mrf.mxu0
      %v1930 = vpop.f32.mrf.mxu0
      %v1931 = vadd.f32 0.0, %v1930
      %v1932 = vpop.f32.mrf.mxu0
      %1933 = vmatprep.mubr.bf16.mxu0 0
      %1934 = vmatmul.mubr.bf16.gmra.mxu0 %v1880
      %v1935 = vpop.f32.mrf.mxu0
      %v1936 = vadd.f32 0.0, %v1935
      %v1937 = vpop.f32.mrf.mxu0
      %v1938 = vpop.f32.mrf.mxu0
      %v1939 = vadd.f32 0.0, %v1938
      %v1940 = vpop.f32.mrf.mxu0
      %1941 = vmatprep.mubr.bf16.mxu0 0
      %1942 = vmatmul.mubr.bf16.gmra.mxu0 %v1883
      %v1943 = vpop.f32.mrf.mxu0
      %v1944 = vadd.f32 0.0, %v1943
      %v1945 = vpop.f32.mrf.mxu0
      %v1946 = vpop.f32.mrf.mxu0
      %v1947 = vadd.f32 0.0, %v1946
      %v1948 = vpop.f32.mrf.mxu0
      %1949 = vdwg.mxu0
      %v1950 = vadd.f32 %v1738, %v1920
      %v1951 = vadd.f32 %v1739, %v1923
      %v1952 = vadd.f32 %v1740, %v1928
      %v1953 = vadd.f32 %v1741, %v1931
      %v1954 = vadd.f32 %v1742, %v1936
      %v1955 = vadd.f32 %v1743, %v1939
      %v1956 = vadd.f32 %v1744, %v1944
      %v1957 = vadd.f32 %v1745, %v1947
      %s1958 = scalar_lea.vmem %s3, 224
      %v1959 = vld [vmem:[%s1958] sm:$0xf]
      %v1960 = vld [vmem:[%s1958 + $0x4] sm:$0xf]
      %v1961 = vld [vmem:[%s1958 + $0x8] sm:$0xf]
      %v1962 = vld [vmem:[%s1958 + $0xc] sm:$0xf]
      %v1963 = vld [vmem:[%s1958 + $0x10] sm:$0xf]
      %v1964 = vld [vmem:[%s1958 + $0x14] sm:$0xf]
      %v1965 = vld [vmem:[%s1958 + $0x18] sm:$0xf]
      %v1966 = vld [vmem:[%s1958 + $0x1c] sm:$0xf]
      %v1975 = vunpack.c.l.b16 %v1959
      %v1976 = vunpack.c.l.b16 %v1960
      %v1977 = vunpack.c.l.b16 %v1961
      %v1978 = vunpack.c.l.b16 %v1962
      %v1979 = vunpack.c.l.b16 %v1963
      %v1980 = vunpack.c.l.b16 %v1964
      %v1981 = vunpack.c.l.b16 %v1965
      %v1982 = vunpack.c.l.b16 %v1966
      %v1983 = vpack.c.b16 %v1976, %v1975
      %v1984 = vpack.c.b16 %v1978, %v1977
      %v1985 = vpack.c.b16 %v1980, %v1979
      %v1986 = vpack.c.b16 %v1982, %v1981
      %v1988 = vsel %vm518, %v1983, 0
      %v1991 = vsel %vm518, %v1984, 0
      %v1994 = vsel %vm518, %v1985, 0
      %v1997 = vsel %vm518, %v1986, 0
      %1999 = vmatprep.subr.bf16.mxu0 0
      %2000 = vmatpush1.bf16.msra.mxu0 0
      %2001 = vmatprep.subr.bf16.mxu0 0
      %2002 = vmatpush1.bf16.msra.mxu0 0
      %2003 = vmatprep.subr.bf16.mxu0 0
      %2004 = vmatpush1.bf16.msra.mxu0 0
      %2005 = vmatprep.subr.bf16.mxu0 0
      %2006 = vmatpush1.bf16.msra.mxu0 0
      %2007 = vmatprep.subr.bf16.mxu0 0
      %2008 = vmatpush1.bf16.msra.mxu0 %v489
      %2009 = vmatprep.subr.bf16.mxu0 0
      %2010 = vmatpush1.bf16.msra.mxu0 %v488
      %2011 = vmatprep.subr.bf16.mxu0 0
      %2012 = vmatpush1.bf16.msra.mxu0 %v487
      %2013 = vmatprep.subr.bf16.mxu0 0
      %2014 = vmatpush1.bf16.msra.mxu0 %v486
      %2015 = vmatprep.subr.bf16.mxu0 0
      %2016 = vmatpush2.bf16.msra.mxu0 0
      %2017 = vmatprep.subr.bf16.mxu0 0
      %2018 = vmatpush2.bf16.msra.mxu0 0
      %2019 = vmatprep.subr.bf16.mxu0 0
      %2020 = vmatpush2.bf16.msra.mxu0 0
      %2021 = vmatprep.subr.bf16.mxu0 0
      %2022 = vmatpush2.bf16.msra.mxu0 0
      %2023 = vmatprep.subr.bf16.mxu0 0
      %2024 = vmatpush2.bf16.msra.mxu0 0
      %2025 = vmatprep.subr.bf16.mxu0 0
      %2026 = vmatpush2.bf16.msra.mxu0 0
      %2027 = vmatprep.subr.bf16.mxu0 0
      %2028 = vmatpush2.bf16.msra.mxu0 0
      %2029 = vmatprep.subr.bf16.mxu0 0
      %2030 = vmatpush2.bf16.msra.mxu0 0
      %2031 = vmatprep.mubr.bf16.mxu0 0
      %2032 = vmatmul.mubr.bf16.gmra.mxu0 %v1988
      %v2033 = vpop.f32.mrf.mxu0
      %v2034 = vadd.f32 0.0, %v2033
      %v2035 = vpop.f32.mrf.mxu0
      %v2036 = vpop.f32.mrf.mxu0
      %v2037 = vadd.f32 0.0, %v2036
      %v2038 = vpop.f32.mrf.mxu0
      %2039 = vmatprep.mubr.bf16.mxu0 0
      %2040 = vmatmul.mubr.bf16.gmra.mxu0 %v1991
      %v2041 = vpop.f32.mrf.mxu0
      %v2042 = vadd.f32 0.0, %v2041
      %v2043 = vpop.f32.mrf.mxu0
      %v2044 = vpop.f32.mrf.mxu0
      %v2045 = vadd.f32 0.0, %v2044
      %v2046 = vpop.f32.mrf.mxu0
      %2047 = vmatprep.mubr.bf16.mxu0 0
      %2048 = vmatmul.mubr.bf16.gmra.mxu0 %v1994
      %v2049 = vpop.f32.mrf.mxu0
      %v2050 = vadd.f32 0.0, %v2049
      %v2051 = vpop.f32.mrf.mxu0
      %v2052 = vpop.f32.mrf.mxu0
      %v2053 = vadd.f32 0.0, %v2052
      %v2054 = vpop.f32.mrf.mxu0
      %2055 = vmatprep.mubr.bf16.mxu0 0
      %2056 = vmatmul.mubr.bf16.gmra.mxu0 %v1997
      %v2057 = vpop.f32.mrf.mxu0
      %v2058 = vadd.f32 0.0, %v2057
      %v2059 = vpop.f32.mrf.mxu0
      %v2060 = vpop.f32.mrf.mxu0
      %v2061 = vadd.f32 0.0, %v2060
      %v2062 = vpop.f32.mrf.mxu0
      %2063 = vdwg.mxu0
      %v2064 = vpack.c.bf16 %v2037, %v2034
      %v2065 = vpack.c.bf16 %v2045, %v2042
      %v2066 = vpack.c.bf16 %v2053, %v2050
      %v2067 = vpack.c.bf16 %v2061, %v2058
      %s2068 = scalar_lea.vmem %s4, 112
      %v2069 = vld [vmem:[%s2068] sm:$0xf]
      %v2070 = vld [vmem:[%s2068 + $0x4] sm:$0xf]
      %v2071 = vld [vmem:[%s2068 + $0x8] sm:$0xf]
      %v2072 = vld [vmem:[%s2068 + $0xc] sm:$0xf]
      %v2077 = vunpack.c.l.b16 %v2069
      %v2078 = vunpack.c.l.b16 %v2070
      %v2079 = vunpack.c.l.b16 %v2071
      %v2080 = vunpack.c.l.b16 %v2072
      %v2081 = vpack.c.b16 %v2078, %v2077
      %v2082 = vpack.c.b16 %v2080, %v2079
      %v2086 = vsel %vm731, %v2064, 0
      %v2089 = vsel %vm731, %v2065, 0
      %v2092 = vsel %vm731, %v2066, 0
      %v2095 = vsel %vm731, %v2067, 0
      %2097 = vmatprep.subr.bf16.mxu0 0
      %2098 = vmatpush1.bf16.msra.mxu0 0
      %2099 = vmatprep.subr.bf16.mxu0 0
      %2100 = vmatpush1.bf16.msra.mxu0 0
      %2101 = vmatprep.subr.bf16.mxu0 0
      %2102 = vmatpush1.bf16.msra.mxu0 0
      %2103 = vmatprep.subr.bf16.mxu0 0
      %2104 = vmatpush1.bf16.msra.mxu0 0
      %2105 = vmatprep.subr.bf16.mxu0 0
      %2106 = vmatpush1.bf16.msra.mxu0 0
      %2107 = vmatprep.subr.bf16.mxu0 0
      %2108 = vmatpush1.bf16.msra.mxu0 0
      %2109 = vmatprep.subr.bf16.mxu0 0
      %2110 = vmatpush1.bf16.msra.mxu0 %v2082
      %2111 = vmatprep.subr.bf16.mxu0 0
      %2112 = vmatpush1.bf16.msra.mxu0 %v2081
      %2113 = vmatprep.subr.bf16.mxu0 0
      %2114 = vmatpush2.bf16.msra.mxu0 0
      %2115 = vmatprep.subr.bf16.mxu0 0
      %2116 = vmatpush2.bf16.msra.mxu0 0
      %2117 = vmatprep.subr.bf16.mxu0 0
      %2118 = vmatpush2.bf16.msra.mxu0 0
      %2119 = vmatprep.subr.bf16.mxu0 0
      %2120 = vmatpush2.bf16.msra.mxu0 0
      %2121 = vmatprep.subr.bf16.mxu0 0
      %2122 = vmatpush2.bf16.msra.mxu0 0
      %2123 = vmatprep.subr.bf16.mxu0 0
      %2124 = vmatpush2.bf16.msra.mxu0 0
      %2125 = vmatprep.subr.bf16.mxu0 0
      %2126 = vmatpush2.bf16.msra.mxu0 0
      %2127 = vmatprep.subr.bf16.mxu0 0
      %2128 = vmatpush2.bf16.msra.mxu0 0
      %2129 = vmatprep.mubr.bf16.mxu0 0
      %2130 = vmatmul.mubr.bf16.gmra.mxu0 %v2086
      %v2131 = vpop.f32.mrf.mxu0
      %v2132 = vadd.f32 0.0, %v2131
      %v2133 = vpop.f32.mrf.mxu0
      %v2134 = vpop.f32.mrf.mxu0
      %v2135 = vadd.f32 0.0, %v2134
      %v2136 = vpop.f32.mrf.mxu0
      %2137 = vmatprep.mubr.bf16.mxu0 0
      %2138 = vmatmul.mubr.bf16.gmra.mxu0 %v2089
      %v2139 = vpop.f32.mrf.mxu0
      %v2140 = vadd.f32 0.0, %v2139
      %v2141 = vpop.f32.mrf.mxu0
      %v2142 = vpop.f32.mrf.mxu0
      %v2143 = vadd.f32 0.0, %v2142
      %v2144 = vpop.f32.mrf.mxu0
      %2145 = vmatprep.mubr.bf16.mxu0 0
      %2146 = vmatmul.mubr.bf16.gmra.mxu0 %v2092
      %v2147 = vpop.f32.mrf.mxu0
      %v2148 = vadd.f32 0.0, %v2147
      %v2149 = vpop.f32.mrf.mxu0
      %v2150 = vpop.f32.mrf.mxu0
      %v2151 = vadd.f32 0.0, %v2150
      %v2152 = vpop.f32.mrf.mxu0
      %2153 = vmatprep.mubr.bf16.mxu0 0
      %2154 = vmatmul.mubr.bf16.gmra.mxu0 %v2095
      %v2155 = vpop.f32.mrf.mxu0
      %v2156 = vadd.f32 0.0, %v2155
      %v2157 = vpop.f32.mrf.mxu0
      %v2158 = vpop.f32.mrf.mxu0
      %v2159 = vadd.f32 0.0, %v2158
      %v2160 = vpop.f32.mrf.mxu0
      %2161 = vdwg.mxu0
      %v2162 = vadd.f32 %v1950, %v2132
      %v2163 = vadd.f32 %v1951, %v2135
      %v2164 = vadd.f32 %v1952, %v2140
      %v2165 = vadd.f32 %v1953, %v2143
      %v2166 = vadd.f32 %v1954, %v2148
      %v2167 = vadd.f32 %v1955, %v2151
      %v2168 = vadd.f32 %v1956, %v2156
      %v2169 = vadd.f32 %v1957, %v2159
      %s2170 = scalar_lea.vmem %s3, 256
      %v2171 = vld [vmem:[%s2170] sm:$0xf]
      %v2172 = vld [vmem:[%s2170 + $0x4] sm:$0xf]
      %v2173 = vld [vmem:[%s2170 + $0x8] sm:$0xf]
      %v2174 = vld [vmem:[%s2170 + $0xc] sm:$0xf]
      %v2175 = vld [vmem:[%s2170 + $0x10] sm:$0xf]
      %v2176 = vld [vmem:[%s2170 + $0x14] sm:$0xf]
      %v2177 = vld [vmem:[%s2170 + $0x18] sm:$0xf]
      %v2178 = vld [vmem:[%s2170 + $0x1c] sm:$0xf]
      %v2187 = vunpack.c.l.b16 %v2171
      %v2188 = vunpack.c.l.b16 %v2172
      %v2189 = vunpack.c.l.b16 %v2173
      %v2190 = vunpack.c.l.b16 %v2174
      %v2191 = vunpack.c.l.b16 %v2175
      %v2192 = vunpack.c.l.b16 %v2176
      %v2193 = vunpack.c.l.b16 %v2177
      %v2194 = vunpack.c.l.b16 %v2178
      %v2195 = vpack.c.b16 %v2188, %v2187
      %v2196 = vpack.c.b16 %v2190, %v2189
      %v2197 = vpack.c.b16 %v2192, %v2191
      %v2198 = vpack.c.b16 %v2194, %v2193
      %v2200 = vsel %vm518, %v2195, 0
      %v2203 = vsel %vm518, %v2196, 0
      %v2206 = vsel %vm518, %v2197, 0
      %v2209 = vsel %vm518, %v2198, 0
      %2211 = vmatprep.subr.bf16.mxu0 0
      %2212 = vmatpush1.bf16.msra.mxu0 0
      %2213 = vmatprep.subr.bf16.mxu0 0
      %2214 = vmatpush1.bf16.msra.mxu0 0
      %2215 = vmatprep.subr.bf16.mxu0 0
      %2216 = vmatpush1.bf16.msra.mxu0 0
      %2217 = vmatprep.subr.bf16.mxu0 0
      %2218 = vmatpush1.bf16.msra.mxu0 0
      %2219 = vmatprep.subr.bf16.mxu0 0
      %2220 = vmatpush1.bf16.msra.mxu0 %v489
      %2221 = vmatprep.subr.bf16.mxu0 0
      %2222 = vmatpush1.bf16.msra.mxu0 %v488
      %2223 = vmatprep.subr.bf16.mxu0 0
      %2224 = vmatpush1.bf16.msra.mxu0 %v487
      %2225 = vmatprep.subr.bf16.mxu0 0
      %2226 = vmatpush1.bf16.msra.mxu0 %v486
      %2227 = vmatprep.subr.bf16.mxu0 0
      %2228 = vmatpush2.bf16.msra.mxu0 0
      %2229 = vmatprep.subr.bf16.mxu0 0
      %2230 = vmatpush2.bf16.msra.mxu0 0
      %2231 = vmatprep.subr.bf16.mxu0 0
      %2232 = vmatpush2.bf16.msra.mxu0 0
      %2233 = vmatprep.subr.bf16.mxu0 0
      %2234 = vmatpush2.bf16.msra.mxu0 0
      %2235 = vmatprep.subr.bf16.mxu0 0
      %2236 = vmatpush2.bf16.msra.mxu0 0
      %2237 = vmatprep.subr.bf16.mxu0 0
      %2238 = vmatpush2.bf16.msra.mxu0 0
      %2239 = vmatprep.subr.bf16.mxu0 0
      %2240 = vmatpush2.bf16.msra.mxu0 0
      %2241 = vmatprep.subr.bf16.mxu0 0
      %2242 = vmatpush2.bf16.msra.mxu0 0
      %2243 = vmatprep.mubr.bf16.mxu0 0
      %2244 = vmatmul.mubr.bf16.gmra.mxu0 %v2200
      %v2245 = vpop.f32.mrf.mxu0
      %v2246 = vadd.f32 0.0, %v2245
      %v2247 = vpop.f32.mrf.mxu0
      %v2248 = vpop.f32.mrf.mxu0
      %v2249 = vadd.f32 0.0, %v2248
      %v2250 = vpop.f32.mrf.mxu0
      %2251 = vmatprep.mubr.bf16.mxu0 0
      %2252 = vmatmul.mubr.bf16.gmra.mxu0 %v2203
      %v2253 = vpop.f32.mrf.mxu0
      %v2254 = vadd.f32 0.0, %v2253
      %v2255 = vpop.f32.mrf.mxu0
      %v2256 = vpop.f32.mrf.mxu0
      %v2257 = vadd.f32 0.0, %v2256
      %v2258 = vpop.f32.mrf.mxu0
      %2259 = vmatprep.mubr.bf16.mxu0 0
      %2260 = vmatmul.mubr.bf16.gmra.mxu0 %v2206
      %v2261 = vpop.f32.mrf.mxu0
      %v2262 = vadd.f32 0.0, %v2261
      %v2263 = vpop.f32.mrf.mxu0
      %v2264 = vpop.f32.mrf.mxu0
      %v2265 = vadd.f32 0.0, %v2264
      %v2266 = vpop.f32.mrf.mxu0
      %2267 = vmatprep.mubr.bf16.mxu0 0
      %2268 = vmatmul.mubr.bf16.gmra.mxu0 %v2209
      %v2269 = vpop.f32.mrf.mxu0
      %v2270 = vadd.f32 0.0, %v2269
      %v2271 = vpop.f32.mrf.mxu0
      %v2272 = vpop.f32.mrf.mxu0
      %v2273 = vadd.f32 0.0, %v2272
      %v2274 = vpop.f32.mrf.mxu0
      %2275 = vdwg.mxu0
      %v2276 = vpack.c.bf16 %v2249, %v2246
      %v2277 = vpack.c.bf16 %v2257, %v2254
      %v2278 = vpack.c.bf16 %v2265, %v2262
      %v2279 = vpack.c.bf16 %v2273, %v2270
      %s2280 = scalar_lea.vmem %s4, 128
      %v2281 = vld [vmem:[%s2280] sm:$0xf]
      %v2282 = vld [vmem:[%s2280 + $0x4] sm:$0xf]
      %v2283 = vld [vmem:[%s2280 + $0x8] sm:$0xf]
      %v2284 = vld [vmem:[%s2280 + $0xc] sm:$0xf]
      %v2289 = vunpack.c.l.b16 %v2281
      %v2290 = vunpack.c.l.b16 %v2282
      %v2291 = vunpack.c.l.b16 %v2283
      %v2292 = vunpack.c.l.b16 %v2284
      %v2293 = vpack.c.b16 %v2290, %v2289
      %v2294 = vpack.c.b16 %v2292, %v2291
      %v2298 = vsel %vm731, %v2276, 0
      %v2301 = vsel %vm731, %v2277, 0
      %v2304 = vsel %vm731, %v2278, 0
      %v2307 = vsel %vm731, %v2279, 0
      %2309 = vmatprep.subr.bf16.mxu0 0
      %2310 = vmatpush1.bf16.msra.mxu0 0
      %2311 = vmatprep.subr.bf16.mxu0 0
      %2312 = vmatpush1.bf16.msra.mxu0 0
      %2313 = vmatprep.subr.bf16.mxu0 0
      %2314 = vmatpush1.bf16.msra.mxu0 0
      %2315 = vmatprep.subr.bf16.mxu0 0
      %2316 = vmatpush1.bf16.msra.mxu0 0
      %2317 = vmatprep.subr.bf16.mxu0 0
      %2318 = vmatpush1.bf16.msra.mxu0 0
      %2319 = vmatprep.subr.bf16.mxu0 0
      %2320 = vmatpush1.bf16.msra.mxu0 0
      %2321 = vmatprep.subr.bf16.mxu0 0
      %2322 = vmatpush1.bf16.msra.mxu0 %v2294
      %2323 = vmatprep.subr.bf16.mxu0 0
      %2324 = vmatpush1.bf16.msra.mxu0 %v2293
      %2325 = vmatprep.subr.bf16.mxu0 0
      %2326 = vmatpush2.bf16.msra.mxu0 0
      %2327 = vmatprep.subr.bf16.mxu0 0
      %2328 = vmatpush2.bf16.msra.mxu0 0
      %2329 = vmatprep.subr.bf16.mxu0 0
      %2330 = vmatpush2.bf16.msra.mxu0 0
      %2331 = vmatprep.subr.bf16.mxu0 0
      %2332 = vmatpush2.bf16.msra.mxu0 0
      %2333 = vmatprep.subr.bf16.mxu0 0
      %2334 = vmatpush2.bf16.msra.mxu0 0
      %2335 = vmatprep.subr.bf16.mxu0 0
      %2336 = vmatpush2.bf16.msra.mxu0 0
      %2337 = vmatprep.subr.bf16.mxu0 0
      %2338 = vmatpush2.bf16.msra.mxu0 0
      %2339 = vmatprep.subr.bf16.mxu0 0
      %2340 = vmatpush2.bf16.msra.mxu0 0
      %2341 = vmatprep.mubr.bf16.mxu0 0
      %2342 = vmatmul.mubr.bf16.gmra.mxu0 %v2298
      %v2343 = vpop.f32.mrf.mxu0
      %v2344 = vadd.f32 0.0, %v2343
      %v2345 = vpop.f32.mrf.mxu0
      %v2346 = vpop.f32.mrf.mxu0
      %v2347 = vadd.f32 0.0, %v2346
      %v2348 = vpop.f32.mrf.mxu0
      %2349 = vmatprep.mubr.bf16.mxu0 0
      %2350 = vmatmul.mubr.bf16.gmra.mxu0 %v2301
      %v2351 = vpop.f32.mrf.mxu0
      %v2352 = vadd.f32 0.0, %v2351
      %v2353 = vpop.f32.mrf.mxu0
      %v2354 = vpop.f32.mrf.mxu0
      %v2355 = vadd.f32 0.0, %v2354
      %v2356 = vpop.f32.mrf.mxu0
      %2357 = vmatprep.mubr.bf16.mxu0 0
      %2358 = vmatmul.mubr.bf16.gmra.mxu0 %v2304
      %v2359 = vpop.f32.mrf.mxu0
      %v2360 = vadd.f32 0.0, %v2359
      %v2361 = vpop.f32.mrf.mxu0
      %v2362 = vpop.f32.mrf.mxu0
      %v2363 = vadd.f32 0.0, %v2362
      %v2364 = vpop.f32.mrf.mxu0
      %2365 = vmatprep.mubr.bf16.mxu0 0
      %2366 = vmatmul.mubr.bf16.gmra.mxu0 %v2307
      %v2367 = vpop.f32.mrf.mxu0
      %v2368 = vadd.f32 0.0, %v2367
      %v2369 = vpop.f32.mrf.mxu0
      %v2370 = vpop.f32.mrf.mxu0
      %v2371 = vadd.f32 0.0, %v2370
      %v2372 = vpop.f32.mrf.mxu0
      %2373 = vdwg.mxu0
      %v2374 = vadd.f32 %v2162, %v2344
      %v2375 = vadd.f32 %v2163, %v2347
      %v2376 = vadd.f32 %v2164, %v2352
      %v2377 = vadd.f32 %v2165, %v2355
      %v2378 = vadd.f32 %v2166, %v2360
      %v2379 = vadd.f32 %v2167, %v2363
      %v2380 = vadd.f32 %v2168, %v2368
      %v2381 = vadd.f32 %v2169, %v2371
      %v2382 = vld [vmem:[%s5] sm:$0x1]
      %v2384 = vlaneseq
      %v2385 = vshrl.u32 %v2384, 7
      %v2386 = vsub.s32 0, %v2385
      %v2387 = vrot.slane %v2382, %v2386
      %v2389 = vadd.f32 %v2374, %v2387
      %v2390 = vadd.f32 %v2375, %v2387
      %v2391 = vadd.f32 %v2376, %v2387
      %v2392 = vadd.f32 %v2377, %v2387
      %v2393 = vadd.f32 %v2378, %v2387
      %v2394 = vadd.f32 %v2379, %v2387
      %v2395 = vadd.f32 %v2380, %v2387
      %v2396 = vadd.f32 %v2381, %v2387
      %v2397 = vmax.f32 %v2389, 0.0
      %v2398 = vmax.f32 %v2390, 0.0
      %v2399 = vmax.f32 %v2391, 0.0
      %v2400 = vmax.f32 %v2392, 0.0
      %v2401 = vmax.f32 %v2393, 0.0
      %v2402 = vmax.f32 %v2394, 0.0
      %v2403 = vmax.f32 %v2395, 0.0
      %v2404 = vmax.f32 %v2396, 0.0
      %v2405 = vpack.c.bf16 %v2398, %v2397
      %v2406 = vpack.c.bf16 %v2400, %v2399
      %v2407 = vpack.c.bf16 %v2402, %v2401
      %v2408 = vpack.c.bf16 %v2404, %v2403
      %v2409 = vld [vmem:[%s6] sm:$0xf]
      %v2410 = vld [vmem:[%s6 + $0x4] sm:$0xf]
      %v2411 = vld [vmem:[%s6 + $0x8] sm:$0xf]
      %v2412 = vld [vmem:[%s6 + $0xc] sm:$0xf]
      %v2413 = vld [vmem:[%s7] sm:$0x1]
      %v2415 = vlaneseq
      %v2416 = vshrl.u32 %v2415, 7
      %v2417 = vsub.s32 0, %v2416
      %v2418 = vrot.slane %v2413, %v2417
      %v2424 = vunpack.c.l.b16 %v2409
      %v2425 = vunpack.c.l.b16 %v2410
      %v2426 = vunpack.c.l.b16 %v2411
      %v2427 = vunpack.c.l.b16 %v2412
      %v2428 = vpack.c.b16 %v2425, %v2424
      %v2429 = vpack.c.b16 %v2427, %v2426
      %v2433 = vsel %vm731, %v2405, 0
      %v2436 = vsel %vm731, %v2406, 0
      %v2439 = vsel %vm731, %v2407, 0
      %v2442 = vsel %vm731, %v2408, 0
      %2444 = vmatprep.subr.bf16.mxu0 0
      %2445 = vmatpush1.bf16.msra.mxu0 0
      %2446 = vmatprep.subr.bf16.mxu0 0
      %2447 = vmatpush1.bf16.msra.mxu0 0
      %2448 = vmatprep.subr.bf16.mxu0 0
      %2449 = vmatpush1.bf16.msra.mxu0 0
      %2450 = vmatprep.subr.bf16.mxu0 0
      %2451 = vmatpush1.bf16.msra.mxu0 0
      %2452 = vmatprep.subr.bf16.mxu0 0
      %2453 = vmatpush1.bf16.msra.mxu0 0
      %2454 = vmatprep.subr.bf16.mxu0 0
      %2455 = vmatpush1.bf16.msra.mxu0 0
      %2456 = vmatprep.subr.bf16.mxu0 0
      %2457 = vmatpush1.bf16.msra.mxu0 %v2429
      %2458 = vmatprep.subr.bf16.mxu0 0
      %2459 = vmatpush1.bf16.msra.mxu0 %v2428
      %2460 = vmatprep.subr.bf16.mxu0 0
      %2461 = vmatpush2.bf16.msra.mxu0 0
      %2462 = vmatprep.subr.bf16.mxu0 0
      %2463 = vmatpush2.bf16.msra.mxu0 0
      %2464 = vmatprep.subr.bf16.mxu0 0
      %2465 = vmatpush2.bf16.msra.mxu0 0
      %2466 = vmatprep.subr.bf16.mxu0 0
      %2467 = vmatpush2.bf16.msra.mxu0 0
      %2468 = vmatprep.subr.bf16.mxu0 0
      %2469 = vmatpush2.bf16.msra.mxu0 0
      %2470 = vmatprep.subr.bf16.mxu0 0
      %2471 = vmatpush2.bf16.msra.mxu0 0
      %2472 = vmatprep.subr.bf16.mxu0 0
      %2473 = vmatpush2.bf16.msra.mxu0 0
      %2474 = vmatprep.subr.bf16.mxu0 0
      %2475 = vmatpush2.bf16.msra.mxu0 0
      %2476 = vmatprep.mubr.bf16.mxu0 0
      %2477 = vmatmul.mubr.bf16.gmra.mxu0 %v2433
      %v2478 = vpop.f32.mrf.mxu0
      %v2479 = vadd.f32 %v2418, %v2478
      %v2480 = vpop.f32.mrf.mxu0
      %v2481 = vpop.f32.mrf.mxu0
      %v2482 = vadd.f32 %v2418, %v2481
      %v2483 = vpop.f32.mrf.mxu0
      %2484 = vmatprep.mubr.bf16.mxu0 0
      %2485 = vmatmul.mubr.bf16.gmra.mxu0 %v2436
      %v2486 = vpop.f32.mrf.mxu0
      %v2487 = vadd.f32 %v2418, %v2486
      %v2488 = vpop.f32.mrf.mxu0
      %v2489 = vpop.f32.mrf.mxu0
      %v2490 = vadd.f32 %v2418, %v2489
      %v2491 = vpop.f32.mrf.mxu0
      %2492 = vmatprep.mubr.bf16.mxu0 0
      %2493 = vmatmul.mubr.bf16.gmra.mxu0 %v2439
      %v2494 = vpop.f32.mrf.mxu0
      %v2495 = vadd.f32 %v2418, %v2494
      %v2496 = vpop.f32.mrf.mxu0
      %v2497 = vpop.f32.mrf.mxu0
      %v2498 = vadd.f32 %v2418, %v2497
      %v2499 = vpop.f32.mrf.mxu0
      %2500 = vmatprep.mubr.bf16.mxu0 0
      %2501 = vmatmul.mubr.bf16.gmra.mxu0 %v2442
      %v2502 = vpop.f32.mrf.mxu0
      %v2503 = vadd.f32 %v2418, %v2502
      %v2504 = vpop.f32.mrf.mxu0
      %v2505 = vpop.f32.mrf.mxu0
      %v2506 = vadd.f32 %v2418, %v2505
      %v2507 = vpop.f32.mrf.mxu0
      %2508 = vdwg.mxu0
      %v2509 = vunpack.c.l.bf16 %v310
      %v2510 = vunpack.c.l.bf16 %v311
      %v2511 = vunpack.c.l.bf16 %v312
      %v2512 = vunpack.c.l.bf16 %v313
      %v2513 = vunpack.c.l.bf16 %v314
      %v2514 = vunpack.c.l.bf16 %v315
      %v2515 = vunpack.c.l.bf16 %v316
      %v2516 = vunpack.c.l.bf16 %v317
      %v2517 = vadd.f32 %v2479, %v2509
      %v2518 = vadd.f32 %v2482, %v2510
      %v2519 = vadd.f32 %v2487, %v2511
      %v2520 = vadd.f32 %v2490, %v2512
      %v2521 = vadd.f32 %v2495, %v2513
      %v2522 = vadd.f32 %v2498, %v2514
      %v2523 = vadd.f32 %v2503, %v2515
      %v2524 = vadd.f32 %v2506, %v2516
      %v2525 = vmax.f32 %v2517, 0.0
      %v2526 = vmax.f32 %v2518, 0.0
      %v2527 = vmax.f32 %v2519, 0.0
      %v2528 = vmax.f32 %v2520, 0.0
      %v2529 = vmax.f32 %v2521, 0.0
      %v2530 = vmax.f32 %v2522, 0.0
      %v2531 = vmax.f32 %v2523, 0.0
      %v2532 = vmax.f32 %v2524, 0.0
      %v2533 = vpack.c.bf16 %v2526, %v2525
      %v2534 = vpack.c.bf16 %v2528, %v2527
      %v2535 = vpack.c.bf16 %v2530, %v2529
      %v2536 = vpack.c.bf16 %v2532, %v2531
      %v2541 = vunpack.c.l.b16 %v2533
      %v2542 = vunpack.c.h.b16 %v2533
      %v2543 = vunpack.c.l.b16 %v2534
      %v2544 = vunpack.c.h.b16 %v2534
      %v2545 = vunpack.c.l.b16 %v2535
      %v2546 = vunpack.c.h.b16 %v2535
      %v2547 = vunpack.c.l.b16 %v2536
      %v2548 = vunpack.c.h.b16 %v2536
      %v2549 = vpack.c.b16 %v2541, %v2541
      %v2550 = vpack.c.b16 %v2542, %v2542
      %v2551 = vpack.c.b16 %v2543, %v2543
      %v2552 = vpack.c.b16 %v2544, %v2544
      %v2553 = vpack.c.b16 %v2545, %v2545
      %v2554 = vpack.c.b16 %v2546, %v2546
      %v2555 = vpack.c.b16 %v2547, %v2547
      %v2556 = vpack.c.b16 %v2548, %v2548
      %2565 = vst [vmem:[%s307] sm:$0xf] %v2549
      %2566 = vst [vmem:[%s307 + $0x4] sm:$0xf] %v2550
      %2567 = vst [vmem:[%s307 + $0x8] sm:$0xf] %v2551
      %2568 = vst [vmem:[%s307 + $0xc] sm:$0xf] %v2552
      %2569 = vst [vmem:[%s307 + $0x10] sm:$0xf] %v2553
      %2570 = vst [vmem:[%s307 + $0x14] sm:$0xf] %v2554
      %2571 = vst [vmem:[%s307 + $0x18] sm:$0xf] %v2555
      %2572 = vst [vmem:[%s307 + $0x1c] sm:$0xf] %v2556
      %s2573 = smul.u32 8, %s19
      %p2574 = scmp.lt.s32.totalorder %s2573, 15
      %s2575 = scalar_select %p2574, %s2573, 15
      %s2576 = smul.addr %s2575, 4
      %s2577 = scalar_lea.vmem %s8, %s2576
      // Predicated region
      $region53: #{_lambda_.10} parent=51 // pred_check
        %p2578 = pneg %p210
      $region54: #{_lambda_.10} parent=51 // pred_check_branch
        %2580 = sbr.rel (%p2578) target = $region56
      $region55: #{_lambda_.10} parent=51 // pred_region
        %s2581 = smul.u32 8, %s19
      $region56: #{_lambda_.10} parent=51 // pred_fallthru
        _
    $region52: #{_lambda_.10} parent=5 // pred_fallthru
      _
    %p2582 = scmp.le.s32.totalorder 2, %s14
    // Predicated region
    $region57: #{_lambda_.10} parent=5 // pred_check
      %p2583 = pneg %p2582
    $region58: #{_lambda_.10} parent=5 // pred_check_branch
      %2585 = sbr.rel (%p2583) target = $region60
    $region59: #{_lambda_.10} parent=5 // pred_region
      %s2586 = ssub.s32 %s14, 2
      // Predicated region
      $region61: #{_lambda_.10} parent=59 // pred_check
        %p2587 = pneg %p216
      $region62: #{_lambda_.10} parent=59 // pred_check_branch
        %2589 = sbr.rel (%p2587) target = $region64
      $region63: #{_lambda_.10} parent=59 // pred_region
        %s2590 = smul.u32 8, %s20
        %p2591 = scmp.lt.s32.totalorder %s2590, 15
        %s2592 = scalar_select %p2591, %s2590, 15
        %s2593 = smul.addr %s2592, 4
        %s2594 = scalar_lea.vmem %s8, %s2593
      $region64: #{_lambda_.10} parent=59 // pred_fallthru
        _
    $region60: #{_lambda_.10} parent=5 // pred_fallthru
      _
  $region6: #{_lambda_.10} parent=0 // loop_footer
    %s18 = sadd.s32 1, %s14
  $region7: #{_lambda_.10} parent=0 // loop_footer_branch
    %13 = sbr.rel target = $region3
  $region8: #{_lambda_.10} parent=0 // loop_exit
    _

// kernel: _lambda_.16
$region0: #{_lambda_.16}
  #allocation0 [shape = 'u32[]', space=smem, size = 0x4, offset = 0x4, fixed_abs, tag = 'smem constant byte address 0x4 - core index']
  #allocation1 [shape = 'u32[144,128]{1,0:T(1,128)}', space=vmem, size = 0x12000, scoped, tag = 'internal scratch']
  %s0 = inlined_call_operand.vmem [shape: bf16[32,256], index: 0, kind: input, shape index: {}]
  %s1 = inlined_call_operand.vmem [shape: bf16[256,64], index: 1, kind: input, shape index: {}]
  %s2 = inlined_call_operand.vmem [shape: f32[1,64], index: 2, kind: input, shape index: {}]
  %s3 = inlined_call_operand.vmem [shape: bf16[9,16,16], index: 3, kind: input, shape index: {}]
  %s4 = inlined_call_operand.vmem [shape: bf16[9,64,64], index: 4, kind: input, shape index: {}]
  %s5 = inlined_call_operand.vmem [shape: f32[1,64], index: 5, kind: input, shape index: {}]
  %s6 = inlined_call_operand.vmem [shape: bf16[64,256], index: 6, kind: input, shape index: {}]
  %s7 = inlined_call_operand.vmem [shape: f32[1,256], index: 7, kind: input, shape index: {}]
  %s8 = inlined_call_operand.vmem [shape: bf16[32,256], index: 8, kind: output, shape index: {}]
  %s9 = sld [smem:[#allocation0]]
  $region65: #{_lambda_.16} parent=0
    _
  %s11 = ssub.s32 1, %s9
  %s12 = scalar_select 0, %s11, %s9
  loop: start=0, step=1, limit=4
  $region2: #{_lambda_.16} parent=0 // loop_pre_header
    _
  $region3: #{_lambda_.16} parent=0 // loop_header
    %s14 = sphi 0, %s18
    %p15 = scmp.ge.s32.totalorder %s14, 4
    %s24 = sphi 0, %s26
    %s27 = sphi 0, %s24
    %s28 = sphi 0, %s27
    %s44 = sphi 0, %s28
    %s48 = sphi 0, %s48
    %s50 = sphi 0, %s48
    %s51 = sphi 0, %s50
    %s65 = sphi 0, %s51
    %s69 = sphi 0, %s69
    %s71 = sphi 0, %s69
    %s72 = sphi 0, %s71
    %s86 = sphi 0, %s72
    %s90 = sphi 0, %s90
    %s92 = sphi 0, %s90
    %s93 = sphi 0, %s92
    %s107 = sphi 0, %s93
    %s111 = sphi 0, %s111
    %s113 = sphi 0, %s111
    %s114 = sphi 0, %s113
    %s128 = sphi 0, %s114
    %s132 = sphi 0, %s132
    %s134 = sphi 0, %s132
    %s135 = sphi 0, %s134
    %s149 = sphi 0, %s135
    %s153 = sphi 0, %s153
    %s155 = sphi 0, %s153
    %s156 = sphi 0, %s155
    %s170 = sphi 0, %s156
    %s174 = sphi 0, %s174
    %s176 = sphi 0, %s174
    %s177 = sphi 0, %s176
    %s191 = sphi 0, %s177
    %s197 = sphi 0, %s199
    %s200 = sphi 0, %s197
    %s201 = sphi 0, %s200
    %s217 = sphi 0, %s201
  $region4: #{_lambda_.16} parent=0 // loop_header_branch
    %17 = sbr.rel (%p15) target = $region8
  $region5: #{_lambda_.16} parent=0 // loop_body
    %s19 = ssub.s32 %s14, 1
    %s20 = ssub.s32 %s14, 2
    %s21 = sadd.s32 %s14, 1
    %s22 = ssub.s32 %s14, %s21
    %p23 = scmp.eq.s32.totalorder %s22, 0
    %s25 = sadd.s32 %s24, 1
    %s26 = scalar_select %p23, %s24, %s25
    %p29 = pneg %p23
    %p30 = scmp.eq.s32.totalorder %s14, 1
    %p31 = por %p29, %p30
    %p32 = scmp.ne.s32.totalorder %s24, %s27
    %p33 = scmp.eq.s32.totalorder %s14, 0
    %p34 = por %p32, %p33
    %p35 = scmp.ne.s32.totalorder %s24, %s27
    %p36 = scmp.eq.s32.totalorder %s19, 1
    %p37 = por %p35, %p36
    %p38 = scmp.ne.s32.totalorder %s27, %s28
    %p39 = scmp.eq.s32.totalorder %s19, 0
    %p40 = por %p38, %p39
    %p41 = scmp.ne.s32.totalorder %s27, %s28
    %p42 = scmp.eq.s32.totalorder %s20, 1
    %p43 = por %p41, %p42
    %p45 = scmp.ne.s32.totalorder %s28, %s44
    %p46 = scmp.eq.s32.totalorder %s20, 0
    %p47 = por %p45, %p46
    %s49 = sadd.s32 %s48, 1
    %p52 = scmp.eq.s32.totalorder %s14, 1
    %p53 = scmp.ne.s32.totalorder %s48, %s50
    %p54 = scmp.eq.s32.totalorder %s14, 0
    %p55 = por %p53, %p54
    %p56 = scmp.ne.s32.totalorder %s48, %s50
    %p57 = scmp.eq.s32.totalorder %s19, 1
    %p58 = por %p56, %p57
    %p59 = scmp.ne.s32.totalorder %s50, %s51
    %p60 = scmp.eq.s32.totalorder %s19, 0
    %p61 = por %p59, %p60
    %p62 = scmp.ne.s32.totalorder %s50, %s51
    %p63 = scmp.eq.s32.totalorder %s20, 1
    %p64 = por %p62, %p63
    %p66 = scmp.ne.s32.totalorder %s51, %s65
    %p67 = scmp.eq.s32.totalorder %s20, 0
    %p68 = por %p66, %p67
    %s70 = sadd.s32 %s69, 1
    %p73 = scmp.eq.s32.totalorder %s14, 1
    %p74 = scmp.ne.s32.totalorder %s69, %s71
    %p75 = scmp.eq.s32.totalorder %s14, 0
    %p76 = por %p74, %p75
    %p77 = scmp.ne.s32.totalorder %s69, %s71
    %p78 = scmp.eq.s32.totalorder %s19, 1
    %p79 = por %p77, %p78
    %p80 = scmp.ne.s32.totalorder %s71, %s72
    %p81 = scmp.eq.s32.totalorder %s19, 0
    %p82 = por %p80, %p81
    %p83 = scmp.ne.s32.totalorder %s71, %s72
    %p84 = scmp.eq.s32.totalorder %s20, 1
    %p85 = por %p83, %p84
    %p87 = scmp.ne.s32.totalorder %s72, %s86
    %p88 = scmp.eq.s32.totalorder %s20, 0
    %p89 = por %p87, %p88
    %s91 = sadd.s32 %s90, 1
    %p94 = scmp.eq.s32.totalorder %s14, 1
    %p95 = scmp.ne.s32.totalorder %s90, %s92
    %p96 = scmp.eq.s32.totalorder %s14, 0
    %p97 = por %p95, %p96
    %p98 = scmp.ne.s32.totalorder %s90, %s92
    %p99 = scmp.eq.s32.totalorder %s19, 1
    %p100 = por %p98, %p99
    %p101 = scmp.ne.s32.totalorder %s92, %s93
    %p102 = scmp.eq.s32.totalorder %s19, 0
    %p103 = por %p101, %p102
    %p104 = scmp.ne.s32.totalorder %s92, %s93
    %p105 = scmp.eq.s32.totalorder %s20, 1
    %p106 = por %p104, %p105
    %p108 = scmp.ne.s32.totalorder %s93, %s107
    %p109 = scmp.eq.s32.totalorder %s20, 0
    %p110 = por %p108, %p109
    %s112 = sadd.s32 %s111, 1
    %p115 = scmp.eq.s32.totalorder %s14, 1
    %p116 = scmp.ne.s32.totalorder %s111, %s113
    %p117 = scmp.eq.s32.totalorder %s14, 0
    %p118 = por %p116, %p117
    %p119 = scmp.ne.s32.totalorder %s111, %s113
    %p120 = scmp.eq.s32.totalorder %s19, 1
    %p121 = por %p119, %p120
    %p122 = scmp.ne.s32.totalorder %s113, %s114
    %p123 = scmp.eq.s32.totalorder %s19, 0
    %p124 = por %p122, %p123
    %p125 = scmp.ne.s32.totalorder %s113, %s114
    %p126 = scmp.eq.s32.totalorder %s20, 1
    %p127 = por %p125, %p126
    %p129 = scmp.ne.s32.totalorder %s114, %s128
    %p130 = scmp.eq.s32.totalorder %s20, 0
    %p131 = por %p129, %p130
    %s133 = sadd.s32 %s132, 1
    %p136 = scmp.eq.s32.totalorder %s14, 1
    %p137 = scmp.ne.s32.totalorder %s132, %s134
    %p138 = scmp.eq.s32.totalorder %s14, 0
    %p139 = por %p137, %p138
    %p140 = scmp.ne.s32.totalorder %s132, %s134
    %p141 = scmp.eq.s32.totalorder %s19, 1
    %p142 = por %p140, %p141
    %p143 = scmp.ne.s32.totalorder %s134, %s135
    %p144 = scmp.eq.s32.totalorder %s19, 0
    %p145 = por %p143, %p144
    %p146 = scmp.ne.s32.totalorder %s134, %s135
    %p147 = scmp.eq.s32.totalorder %s20, 1
    %p148 = por %p146, %p147
    %p150 = scmp.ne.s32.totalorder %s135, %s149
    %p151 = scmp.eq.s32.totalorder %s20, 0
    %p152 = por %p150, %p151
    %s154 = sadd.s32 %s153, 1
    %p157 = scmp.eq.s32.totalorder %s14, 1
    %p158 = scmp.ne.s32.totalorder %s153, %s155
    %p159 = scmp.eq.s32.totalorder %s14, 0
    %p160 = por %p158, %p159
    %p161 = scmp.ne.s32.totalorder %s153, %s155
    %p162 = scmp.eq.s32.totalorder %s19, 1
    %p163 = por %p161, %p162
    %p164 = scmp.ne.s32.totalorder %s155, %s156
    %p165 = scmp.eq.s32.totalorder %s19, 0
    %p166 = por %p164, %p165
    %p167 = scmp.ne.s32.totalorder %s155, %s156
    %p168 = scmp.eq.s32.totalorder %s20, 1
    %p169 = por %p167, %p168
    %p171 = scmp.ne.s32.totalorder %s156, %s170
    %p172 = scmp.eq.s32.totalorder %s20, 0
    %p173 = por %p171, %p172
    %s175 = sadd.s32 %s174, 1
    %p178 = scmp.eq.s32.totalorder %s14, 1
    %p179 = scmp.ne.s32.totalorder %s174, %s176
    %p180 = scmp.eq.s32.totalorder %s14, 0
    %p181 = por %p179, %p180
    %p182 = scmp.ne.s32.totalorder %s174, %s176
    %p183 = scmp.eq.s32.totalorder %s19, 1
    %p184 = por %p182, %p183
    %p185 = scmp.ne.s32.totalorder %s176, %s177
    %p186 = scmp.eq.s32.totalorder %s19, 0
    %p187 = por %p185, %p186
    %p188 = scmp.ne.s32.totalorder %s176, %s177
    %p189 = scmp.eq.s32.totalorder %s20, 1
    %p190 = por %p188, %p189
    %p192 = scmp.ne.s32.totalorder %s177, %s191
    %p193 = scmp.eq.s32.totalorder %s20, 0
    %p194 = por %p192, %p193
    %s195 = ssub.s32 %s14, %s21
    %p196 = scmp.eq.s32.totalorder %s195, 0
    %s198 = sadd.s32 %s197, 1
    %s199 = scalar_select %p196, %s197, %s198
    %p202 = pneg %p196
    %p203 = scmp.eq.s32.totalorder %s14, 1
    %p204 = por %p202, %p203
    %p205 = scmp.ne.s32.totalorder %s197, %s200
    %p206 = scmp.eq.s32.totalorder %s14, 0
    %p207 = por %p205, %p206
    %p208 = scmp.ne.s32.totalorder %s197, %s200
    %p209 = scmp.eq.s32.totalorder %s19, 1
    %p210 = por %p208, %p209
    %p211 = scmp.ne.s32.totalorder %s200, %s201
    %p212 = scmp.eq.s32.totalorder %s19, 0
    %p213 = por %p211, %p212
    %p214 = scmp.ne.s32.totalorder %s200, %s201
    %p215 = scmp.eq.s32.totalorder %s20, 1
    %p216 = por %p214, %p215
    %p218 = scmp.ne.s32.totalorder %s201, %s217
    %p219 = scmp.eq.s32.totalorder %s20, 0
    %p220 = por %p218, %p219
    %p221 = scmp.le.s32.totalorder 1, %s14
    %p222 = scmp.lt.s32.totalorder %s14, 3
    %p223 = pnand %p221, %p222
    %p224 = pneg %p223
    // Predicated region
    $region9: #{_lambda_.16} parent=5 // pred_check
      _
    $region10: #{_lambda_.16} parent=5 // pred_check_branch
      %226 = sbr.rel (%p223) target = $region12
    $region11: #{_lambda_.16} parent=5 // pred_region
      %s227 = ssub.s32 %s14, 1
      // Predicated region
      $region13: #{_lambda_.16} parent=11 // pred_check
        %p228 = pneg %p61
      $region14: #{_lambda_.16} parent=11 // pred_check_branch
        %230 = sbr.rel (%p228) target = $region16
      $region15: #{_lambda_.16} parent=11 // pred_region
        _
      $region16: #{_lambda_.16} parent=11 // pred_fallthru
        _
      // Predicated region
      $region17: #{_lambda_.16} parent=11 // pred_check
        %p231 = pneg %p82
      $region18: #{_lambda_.16} parent=11 // pred_check_branch
        %233 = sbr.rel (%p231) target = $region20
      $region19: #{_lambda_.16} parent=11 // pred_region
        _
      $region20: #{_lambda_.16} parent=11 // pred_fallthru
        _
      // Predicated region
      $region21: #{_lambda_.16} parent=11 // pred_check
        %p234 = pneg %p103
      $region22: #{_lambda_.16} parent=11 // pred_check_branch
        %236 = sbr.rel (%p234) target = $region24
      $region23: #{_lambda_.16} parent=11 // pred_region
        _
      $region24: #{_lambda_.16} parent=11 // pred_fallthru
        _
      // Predicated region
      $region25: #{_lambda_.16} parent=11 // pred_check
        %p237 = pneg %p124
      $region26: #{_lambda_.16} parent=11 // pred_check_branch
        %239 = sbr.rel (%p237) target = $region28
      $region27: #{_lambda_.16} parent=11 // pred_region
        _
      $region28: #{_lambda_.16} parent=11 // pred_fallthru
        _
      // Predicated region
      $region29: #{_lambda_.16} parent=11 // pred_check
        %p240 = pneg %p145
      $region30: #{_lambda_.16} parent=11 // pred_check_branch
        %242 = sbr.rel (%p240) target = $region32
      $region31: #{_lambda_.16} parent=11 // pred_region
        _
      $region32: #{_lambda_.16} parent=11 // pred_fallthru
        _
      // Predicated region
      $region33: #{_lambda_.16} parent=11 // pred_check
        %p243 = pneg %p166
      $region34: #{_lambda_.16} parent=11 // pred_check_branch
        %245 = sbr.rel (%p243) target = $region36
      $region35: #{_lambda_.16} parent=11 // pred_region
        _
      $region36: #{_lambda_.16} parent=11 // pred_fallthru
        _
      // Predicated region
      $region37: #{_lambda_.16} parent=11 // pred_check
        %p246 = pneg %p187
      $region38: #{_lambda_.16} parent=11 // pred_check_branch
        %248 = sbr.rel (%p246) target = $region40
      $region39: #{_lambda_.16} parent=11 // pred_region
        _
      $region40: #{_lambda_.16} parent=11 // pred_fallthru
        _
    $region12: #{_lambda_.16} parent=5 // pred_fallthru
      _
    %p249 = scmp.lt.s32.totalorder %s14, 2
    // Predicated region
    $region41: #{_lambda_.16} parent=5 // pred_check
      %p250 = pneg %p249
    $region42: #{_lambda_.16} parent=5 // pred_check_branch
      %252 = sbr.rel (%p250) target = $region44
    $region43: #{_lambda_.16} parent=5 // pred_region
      // Predicated region
      $region45: #{_lambda_.16} parent=43 // pred_check
        %p253 = pneg %p34
      $region46: #{_lambda_.16} parent=43 // pred_check_branch
        %255 = sbr.rel (%p253) target = $region48
      $region47: #{_lambda_.16} parent=43 // pred_region
        %s256 = smul.u32 2, %s14
        %p257 = scmp.lt.s32.totalorder %s256, 3
        %s258 = scalar_select %p257, %s256, 3
        %s259 = smul.addr %s258, 2
        %s260 = smul.addr %s259, 4
        %s261 = scalar_lea.vmem %s0, %s260
        %s262 = smul.u32 2, %s14
      $region48: #{_lambda_.16} parent=43 // pred_fallthru
        _
    $region44: #{_lambda_.16} parent=5 // pred_fallthru
      _
    %p263 = scmp.le.s32.totalorder 1, %s14
    %p264 = scmp.lt.s32.totalorder %s14, 3
    %p265 = pnand %p263, %p264
    %p266 = pneg %p265
    // Predicated region
    $region49: #{_lambda_.16} parent=5 // pred_check
      _
    $region50: #{_lambda_.16} parent=5 // pred_check_branch
      %268 = sbr.rel (%p265) target = $region52
    $region51: #{_lambda_.16} parent=5 // pred_region
      %s269 = ssub.s32 %s14, 1
      %s270 = smul.u32 2, %s19
      %p271 = scmp.lt.s32.totalorder %s270, 3
      %s272 = scalar_select %p271, %s270, 3
      %s273 = smul.addr %s272, 2
      %s274 = smul.addr %s273, 4
      %s275 = scalar_lea.vmem %s0, %s274
      %p276 = pneg %p40
      %p277 = pneg %p37
      %p278 = pneg %p61
      %p279 = pneg %p58
      %p280 = pneg %p82
      %p281 = pneg %p79
      %p282 = pneg %p103
      %p283 = pneg %p100
      %p284 = pneg %p124
      %p285 = pneg %p121
      %p286 = pneg %p145
      %p287 = pneg %p142
      %p288 = pneg %p166
      %p289 = pneg %p163
      %p290 = pneg %p187
      %p291 = pneg %p184
      %p292 = pneg %p213
      %p293 = pneg %p210
      %s294 = smul.u32 2, %s19
      %p295 = scmp.lt.s32.totalorder %s294, 3
      %s296 = scalar_select %p295, %s294, 3
      %s297 = smul.addr %s296, 2
      %s298 = smul.addr %s297, 4
      %s299 = scalar_lea.vmem %s8, %s298
      %s300 = smul.u32 2, %s19
      %p301 = scmp.lt.s32.totalorder %s300, 3
      %s302 = scalar_select %p301, %s300, 3
      %s303 = smul.addr %s302, 2
      %s304 = smul.addr %s303, 4
      %s305 = scalar_lea.vmem %s0, %s304
      %s306 = smul.u32 2, %s19
      %s307 = smul.u32 2, %s19
      %p308 = scmp.lt.s32.totalorder %s307, 3
      %s309 = scalar_select %p308, %s307, 3
      %s310 = smul.addr %s309, 2
      %s311 = smul.addr %s310, 4
      %s312 = scalar_lea.vmem %s8, %s311
      %s313 = smul.u32 2, %s19
      %v315 = vld [vmem:[%s305] sm:$0xff]
      %v316 = vld [vmem:[%s305 + $0x8] sm:$0xff]
      %v317 = vld [vmem:[%s1] sm:$0xf]
      %v318 = vld [vmem:[%s1 + $0x4] sm:$0xf]
      %v319 = vld [vmem:[%s1 + $0x8] sm:$0xf]
      %v320 = vld [vmem:[%s1 + $0xc] sm:$0xf]
      %v321 = vld [vmem:[%s1 + $0x10] sm:$0xf]
      %v322 = vld [vmem:[%s1 + $0x14] sm:$0xf]
      %v323 = vld [vmem:[%s1 + $0x18] sm:$0xf]
      %v324 = vld [vmem:[%s1 + $0x1c] sm:$0xf]
      %v325 = vld [vmem:[%s1 + $0x20] sm:$0xf]
      %v326 = vld [vmem:[%s1 + $0x24] sm:$0xf]
      %v327 = vld [vmem:[%s1 + $0x28] sm:$0xf]
      %v328 = vld [vmem:[%s1 + $0x2c] sm:$0xf]
      %v329 = vld [vmem:[%s1 + $0x30] sm:$0xf]
      %v330 = vld [vmem:[%s1 + $0x34] sm:$0xf]
      %v331 = vld [vmem:[%s1 + $0x38] sm:$0xf]
      %v332 = vld [vmem:[%s1 + $0x3c] sm:$0xf]
      %v333 = vld [vmem:[%s1 + $0x40] sm:$0xf]
      %v334 = vld [vmem:[%s1 + $0x44] sm:$0xf]
      %v335 = vld [vmem:[%s1 + $0x48] sm:$0xf]
      %v336 = vld [vmem:[%s1 + $0x4c] sm:$0xf]
      %v337 = vld [vmem:[%s1 + $0x50] sm:$0xf]
      %v338 = vld [vmem:[%s1 + $0x54] sm:$0xf]
      %v339 = vld [vmem:[%s1 + $0x58] sm:$0xf]
      %v340 = vld [vmem:[%s1 + $0x5c] sm:$0xf]
      %v341 = vld [vmem:[%s1 + $0x60] sm:$0xf]
      %v342 = vld [vmem:[%s1 + $0x64] sm:$0xf]
      %v343 = vld [vmem:[%s1 + $0x68] sm:$0xf]
      %v344 = vld [vmem:[%s1 + $0x6c] sm:$0xf]
      %v345 = vld [vmem:[%s1 + $0x70] sm:$0xf]
      %v346 = vld [vmem:[%s1 + $0x74] sm:$0xf]
      %v347 = vld [vmem:[%s1 + $0x78] sm:$0xf]
      %v348 = vld [vmem:[%s1 + $0x7c] sm:$0xf]
      %v349 = vld [vmem:[%s2] sm:$0x1]
      %v351 = vlaneseq
      %v352 = vshrl.u32 %v351, 7
      %v353 = vsub.s32 0, %v352
      %v354 = vrot.slane %v349, %v353
      %v358 = vunpack.c.l.b16 %v315
      %v359 = vunpack.c.h.b16 %v315
      %v360 = vunpack.c.l.b16 %v316
      %v361 = vunpack.c.h.b16 %v316
      %v362 = vpack.c.b16 %v360, %v358
      %v363 = vpack.c.b16 %v361, %v359
      %v398 = vunpack.c.l.b16 %v317
      %v399 = vunpack.c.l.b16 %v318
      %v400 = vunpack.c.l.b16 %v319
      %v401 = vunpack.c.l.b16 %v320
      %v402 = vunpack.c.l.b16 %v321
      %v403 = vunpack.c.l.b16 %v322
      %v404 = vunpack.c.l.b16 %v323
      %v405 = vunpack.c.l.b16 %v324
      %v406 = vunpack.c.l.b16 %v325
      %v407 = vunpack.c.l.b16 %v326
      %v408 = vunpack.c.l.b16 %v327
      %v409 = vunpack.c.l.b16 %v328
      %v410 = vunpack.c.l.b16 %v329
      %v411 = vunpack.c.l.b16 %v330
      %v412 = vunpack.c.l.b16 %v331
      %v413 = vunpack.c.l.b16 %v332
      %v414 = vunpack.c.l.b16 %v333
      %v415 = vunpack.c.l.b16 %v334
      %v416 = vunpack.c.l.b16 %v335
      %v417 = vunpack.c.l.b16 %v336
      %v418 = vunpack.c.l.b16 %v337
      %v419 = vunpack.c.l.b16 %v338
      %v420 = vunpack.c.l.b16 %v339
      %v421 = vunpack.c.l.b16 %v340
      %v422 = vunpack.c.l.b16 %v341
      %v423 = vunpack.c.l.b16 %v342
      %v424 = vunpack.c.l.b16 %v343
      %v425 = vunpack.c.l.b16 %v344
      %v426 = vunpack.c.l.b16 %v345
      %v427 = vunpack.c.l.b16 %v346
      %v428 = vunpack.c.l.b16 %v347
      %v429 = vunpack.c.l.b16 %v348
      %v430 = vpack.c.b16 %v399, %v398
      %v431 = vpack.c.b16 %v401, %v400
      %v432 = vpack.c.b16 %v403, %v402
      %v433 = vpack.c.b16 %v405, %v404
      %v434 = vpack.c.b16 %v407, %v406
      %v435 = vpack.c.b16 %v409, %v408
      %v436 = vpack.c.b16 %v411, %v410
      %v437 = vpack.c.b16 %v413, %v412
      %v438 = vpack.c.b16 %v415, %v414
      %v439 = vpack.c.b16 %v417, %v416
      %v440 = vpack.c.b16 %v419, %v418
      %v441 = vpack.c.b16 %v421, %v420
      %v442 = vpack.c.b16 %v423, %v422
      %v443 = vpack.c.b16 %v425, %v424
      %v444 = vpack.c.b16 %v427, %v426
      %v445 = vpack.c.b16 %v429, %v428
      %462 = vmatprep.subr.bf16.mxu0 0
      %463 = vmatpush1.bf16.msra.mxu0 %v437
      %464 = vmatprep.subr.bf16.mxu0 0
      %465 = vmatpush1.bf16.msra.mxu0 %v436
      %466 = vmatprep.subr.bf16.mxu0 0
      %467 = vmatpush1.bf16.msra.mxu0 %v435
      %468 = vmatprep.subr.bf16.mxu0 0
      %469 = vmatpush1.bf16.msra.mxu0 %v434
      %470 = vmatprep.subr.bf16.mxu0 0
      %471 = vmatpush1.bf16.msra.mxu0 %v433
      %472 = vmatprep.subr.bf16.mxu0 0
      %473 = vmatpush1.bf16.msra.mxu0 %v432
      %474 = vmatprep.subr.bf16.mxu0 0
      %475 = vmatpush1.bf16.msra.mxu0 %v431
      %476 = vmatprep.subr.bf16.mxu0 0
      %477 = vmatpush1.bf16.msra.mxu0 %v430
      %478 = vmatprep.subr.bf16.mxu0 0
      %479 = vmatpush2.bf16.msra.mxu0 %v445
      %480 = vmatprep.subr.bf16.mxu0 0
      %481 = vmatpush2.bf16.msra.mxu0 %v444
      %482 = vmatprep.subr.bf16.mxu0 0
      %483 = vmatpush2.bf16.msra.mxu0 %v443
      %484 = vmatprep.subr.bf16.mxu0 0
      %485 = vmatpush2.bf16.msra.mxu0 %v442
      %486 = vmatprep.subr.bf16.mxu0 0
      %487 = vmatpush2.bf16.msra.mxu0 %v441
      %488 = vmatprep.subr.bf16.mxu0 0
      %489 = vmatpush2.bf16.msra.mxu0 %v440
      %490 = vmatprep.subr.bf16.mxu0 0
      %491 = vmatpush2.bf16.msra.mxu0 %v439
      %492 = vmatprep.subr.bf16.mxu0 0
      %493 = vmatpush2.bf16.msra.mxu0 %v438
      %494 = vmatprep.mubr.bf16.mxu0 %v363
      %495 = vmatmul.mubr.bf16.gmra.mxu0 %v362
      %v496 = vpop.f32.mrf.mxu0
      %v497 = vadd.f32 %v354, %v496
      %v498 = vpop.f32.mrf.mxu0
      %v499 = vpop.f32.mrf.mxu0
      %v500 = vadd.f32 %v354, %v499
      %v501 = vpop.f32.mrf.mxu0
      %502 = vdwg.mxu0
      %v503 = vmax.f32 %v497, 0.0
      %v504 = vmax.f32 %v500, 0.0
      %v505 = vpack.c.bf16 %v504, %v503
      %v506 = vld [vmem:[%s3] sm:$0xf]
      %v507 = vld [vmem:[%s3 + $0x4] sm:$0xf]
      %v510 = vunpack.c.l.b16 %v506
      %v511 = vunpack.c.l.b16 %v507
      %v512 = vpack.c.b16 %v511, %v510
      %vm513 = vcmask 130048
      %v515 = vsel %vm513, %v512, 0
      %517 = vmatprep.subr.bf16.mxu0 0
      %518 = vmatpush1.bf16.msra.mxu0 0
      %519 = vmatprep.subr.bf16.mxu0 0
      %520 = vmatpush1.bf16.msra.mxu0 0
      %521 = vmatprep.subr.bf16.mxu0 0
      %522 = vmatpush1.bf16.msra.mxu0 0
      %523 = vmatprep.subr.bf16.mxu0 0
      %524 = vmatpush1.bf16.msra.mxu0 0
      %525 = vmatprep.subr.bf16.mxu0 0
      %526 = vmatpush1.bf16.msra.mxu0 0
      %527 = vmatprep.subr.bf16.mxu0 0
      %528 = vmatpush1.bf16.msra.mxu0 0
      %529 = vmatprep.subr.bf16.mxu0 0
      %530 = vmatpush1.bf16.msra.mxu0 0
      %531 = vmatprep.subr.bf16.mxu0 0
      %532 = vmatpush1.bf16.msra.mxu0 %v505
      %533 = vmatprep.subr.bf16.mxu0 0
      %534 = vmatpush2.bf16.msra.mxu0 0
      %535 = vmatprep.subr.bf16.mxu0 0
      %536 = vmatpush2.bf16.msra.mxu0 0
      %537 = vmatprep.subr.bf16.mxu0 0
      %538 = vmatpush2.bf16.msra.mxu0 0
      %539 = vmatprep.subr.bf16.mxu0 0
      %540 = vmatpush2.bf16.msra.mxu0 0
      %541 = vmatprep.subr.bf16.mxu0 0
      %542 = vmatpush2.bf16.msra.mxu0 0
      %543 = vmatprep.subr.bf16.mxu0 0
      %544 = vmatpush2.bf16.msra.mxu0 0
      %545 = vmatprep.subr.bf16.mxu0 0
      %546 = vmatpush2.bf16.msra.mxu0 0
      %547 = vmatprep.subr.bf16.mxu0 0
      %548 = vmatpush2.bf16.msra.mxu0 0
      %549 = vmatprep.mubr.bf16.mxu0 0
      %550 = vmatmul.mubr.bf16.gmra.mxu0 %v515
      %v551 = vpop.f32.mrf.mxu0
      %v552 = vadd.f32 0.0, %v551
      %v553 = vpop.f32.mrf.mxu0
      %v554 = vpop.f32.mrf.mxu0
      %v555 = vadd.f32 0.0, %v554
      %v556 = vpop.f32.mrf.mxu0
      %557 = vdwg.mxu0
      %v558 = vpack.c.bf16 %v555, %v552
      %v559 = vld [vmem:[%s4] sm:$0xf]
      %v560 = vld [vmem:[%s4 + $0x4] sm:$0xf]
      %v561 = vld [vmem:[%s4 + $0x8] sm:$0xf]
      %v562 = vld [vmem:[%s4 + $0xc] sm:$0xf]
      %v563 = vld [vmem:[%s4 + $0x10] sm:$0xf]
      %v564 = vld [vmem:[%s4 + $0x14] sm:$0xf]
      %v565 = vld [vmem:[%s4 + $0x18] sm:$0xf]
      %v566 = vld [vmem:[%s4 + $0x1c] sm:$0xf]
      %s567 = scalar_lea.vmem %s3, 8
      %v568 = vld [vmem:[%s567] sm:$0xf]
      %v569 = vld [vmem:[%s567 + $0x4] sm:$0xf]
      %v572 = vunpack.c.l.b16 %v568
      %v573 = vunpack.c.l.b16 %v569
      %v574 = vpack.c.b16 %v573, %v572
      %v576 = vsel %vm513, %v574, 0
      %578 = vmatprep.subr.bf16.mxu0 0
      %579 = vmatpush1.bf16.msra.mxu0 0
      %580 = vmatprep.subr.bf16.mxu0 0
      %581 = vmatpush1.bf16.msra.mxu0 0
      %582 = vmatprep.subr.bf16.mxu0 0
      %583 = vmatpush1.bf16.msra.mxu0 0
      %584 = vmatprep.subr.bf16.mxu0 0
      %585 = vmatpush1.bf16.msra.mxu0 0
      %586 = vmatprep.subr.bf16.mxu0 0
      %587 = vmatpush1.bf16.msra.mxu0 0
      %588 = vmatprep.subr.bf16.mxu0 0
      %589 = vmatpush1.bf16.msra.mxu0 0
      %590 = vmatprep.subr.bf16.mxu0 0
      %591 = vmatpush1.bf16.msra.mxu0 0
      %592 = vmatprep.subr.bf16.mxu0 0
      %593 = vmatpush1.bf16.msra.mxu0 %v505
      %594 = vmatprep.subr.bf16.mxu0 0
      %595 = vmatpush2.bf16.msra.mxu0 0
      %596 = vmatprep.subr.bf16.mxu0 0
      %597 = vmatpush2.bf16.msra.mxu0 0
      %598 = vmatprep.subr.bf16.mxu0 0
      %599 = vmatpush2.bf16.msra.mxu0 0
      %600 = vmatprep.subr.bf16.mxu0 0
      %601 = vmatpush2.bf16.msra.mxu0 0
      %602 = vmatprep.subr.bf16.mxu0 0
      %603 = vmatpush2.bf16.msra.mxu0 0
      %604 = vmatprep.subr.bf16.mxu0 0
      %605 = vmatpush2.bf16.msra.mxu0 0
      %606 = vmatprep.subr.bf16.mxu0 0
      %607 = vmatpush2.bf16.msra.mxu0 0
      %608 = vmatprep.subr.bf16.mxu0 0
      %609 = vmatpush2.bf16.msra.mxu0 0
      %610 = vmatprep.mubr.bf16.mxu0 0
      %611 = vmatmul.mubr.bf16.gmra.mxu0 %v576
      %v612 = vpop.f32.mrf.mxu0
      %v613 = vadd.f32 0.0, %v612
      %v614 = vpop.f32.mrf.mxu0
      %v615 = vpop.f32.mrf.mxu0
      %v616 = vadd.f32 0.0, %v615
      %v617 = vpop.f32.mrf.mxu0
      %618 = vdwg.mxu0
      %v619 = vpack.c.bf16 %v616, %v613
      %s620 = scalar_lea.vmem %s4, 32
      %v621 = vld [vmem:[%s620] sm:$0xf]
      %v622 = vld [vmem:[%s620 + $0x4] sm:$0xf]
      %v623 = vld [vmem:[%s620 + $0x8] sm:$0xf]
      %v624 = vld [vmem:[%s620 + $0xc] sm:$0xf]
      %v625 = vld [vmem:[%s620 + $0x10] sm:$0xf]
      %v626 = vld [vmem:[%s620 + $0x14] sm:$0xf]
      %v627 = vld [vmem:[%s620 + $0x18] sm:$0xf]
      %v628 = vld [vmem:[%s620 + $0x1c] sm:$0xf]
      %v637 = vunpack.c.l.b16 %v621
      %v638 = vunpack.c.l.b16 %v622
      %v639 = vunpack.c.l.b16 %v623
      %v640 = vunpack.c.l.b16 %v624
      %v641 = vunpack.c.l.b16 %v625
      %v642 = vunpack.c.l.b16 %v626
      %v643 = vunpack.c.l.b16 %v627
      %v644 = vunpack.c.l.b16 %v628
      %v645 = vpack.c.b16 %v638, %v637
      %v646 = vpack.c.b16 %v640, %v639
      %v647 = vpack.c.b16 %v642, %v641
      %v648 = vpack.c.b16 %v644, %v643
      %vm653 = vcmask 523264
      %v655 = vsel %vm653, %v619, 0
      %657 = vmatprep.subr.bf16.mxu0 0
      %658 = vmatpush1.bf16.msra.mxu0 0
      %659 = vmatprep.subr.bf16.mxu0 0
      %660 = vmatpush1.bf16.msra.mxu0 0
      %661 = vmatprep.subr.bf16.mxu0 0
      %662 = vmatpush1.bf16.msra.mxu0 0
      %663 = vmatprep.subr.bf16.mxu0 0
      %664 = vmatpush1.bf16.msra.mxu0 0
      %665 = vmatprep.subr.bf16.mxu0 0
      %666 = vmatpush1.bf16.msra.mxu0 %v648
      %667 = vmatprep.subr.bf16.mxu0 0
      %668 = vmatpush1.bf16.msra.mxu0 %v647
      %669 = vmatprep.subr.bf16.mxu0 0
      %670 = vmatpush1.bf16.msra.mxu0 %v646
      %671 = vmatprep.subr.bf16.mxu0 0
      %672 = vmatpush1.bf16.msra.mxu0 %v645
      %673 = vmatprep.subr.bf16.mxu0 0
      %674 = vmatpush2.bf16.msra.mxu0 0
      %675 = vmatprep.subr.bf16.mxu0 0
      %676 = vmatpush2.bf16.msra.mxu0 0
      %677 = vmatprep.subr.bf16.mxu0 0
      %678 = vmatpush2.bf16.msra.mxu0 0
      %679 = vmatprep.subr.bf16.mxu0 0
      %680 = vmatpush2.bf16.msra.mxu0 0
      %681 = vmatprep.subr.bf16.mxu0 0
      %682 = vmatpush2.bf16.msra.mxu0 0
      %683 = vmatprep.subr.bf16.mxu0 0
      %684 = vmatpush2.bf16.msra.mxu0 0
      %685 = vmatprep.subr.bf16.mxu0 0
      %686 = vmatpush2.bf16.msra.mxu0 0
      %687 = vmatprep.subr.bf16.mxu0 0
      %688 = vmatpush2.bf16.msra.mxu0 0
      %689 = vmatprep.mubr.bf16.mxu0 0
      %690 = vmatmul.mubr.bf16.gmra.mxu0 %v655
      %v691 = vpop.f32.mrf.mxu0
      %v692 = vadd.f32 0.0, %v691
      %v693 = vpop.f32.mrf.mxu0
      %v694 = vpop.f32.mrf.mxu0
      %v695 = vadd.f32 0.0, %v694
      %v696 = vpop.f32.mrf.mxu0
      %697 = vdwg.mxu0
      %v706 = vunpack.c.l.b16 %v559
      %v707 = vunpack.c.l.b16 %v560
      %v708 = vunpack.c.l.b16 %v561
      %v709 = vunpack.c.l.b16 %v562
      %v710 = vunpack.c.l.b16 %v563
      %v711 = vunpack.c.l.b16 %v564
      %v712 = vunpack.c.l.b16 %v565
      %v713 = vunpack.c.l.b16 %v566
      %v714 = vpack.c.b16 %v707, %v706
      %v715 = vpack.c.b16 %v709, %v708
      %v716 = vpack.c.b16 %v711, %v710
      %v717 = vpack.c.b16 %v713, %v712
      %v723 = vsel %vm653, %v558, 0
      %725 = vmatprep.subr.bf16.mxu0 0
      %726 = vmatpush1.bf16.msra.mxu0 0
      %727 = vmatprep.subr.bf16.mxu0 0
      %728 = vmatpush1.bf16.msra.mxu0 0
      %729 = vmatprep.subr.bf16.mxu0 0
      %730 = vmatpush1.bf16.msra.mxu0 0
      %731 = vmatprep.subr.bf16.mxu0 0
      %732 = vmatpush1.bf16.msra.mxu0 0
      %733 = vmatprep.subr.bf16.mxu0 0
      %734 = vmatpush1.bf16.msra.mxu0 %v717
      %735 = vmatprep.subr.bf16.mxu0 0
      %736 = vmatpush1.bf16.msra.mxu0 %v716
      %737 = vmatprep.subr.bf16.mxu0 0
      %738 = vmatpush1.bf16.msra.mxu0 %v715
      %739 = vmatprep.subr.bf16.mxu0 0
      %740 = vmatpush1.bf16.msra.mxu0 %v714
      %741 = vmatprep.subr.bf16.mxu0 0
      %742 = vmatpush2.bf16.msra.mxu0 0
      %743 = vmatprep.subr.bf16.mxu0 0
      %744 = vmatpush2.bf16.msra.mxu0 0
      %745 = vmatprep.subr.bf16.mxu0 0
      %746 = vmatpush2.bf16.msra.mxu0 0
      %747 = vmatprep.subr.bf16.mxu0 0
      %748 = vmatpush2.bf16.msra.mxu0 0
      %749 = vmatprep.subr.bf16.mxu0 0
      %750 = vmatpush2.bf16.msra.mxu0 0
      %751 = vmatprep.subr.bf16.mxu0 0
      %752 = vmatpush2.bf16.msra.mxu0 0
      %753 = vmatprep.subr.bf16.mxu0 0
      %754 = vmatpush2.bf16.msra.mxu0 0
      %755 = vmatprep.subr.bf16.mxu0 0
      %756 = vmatpush2.bf16.msra.mxu0 0
      %757 = vmatprep.mubr.bf16.mxu0 0
      %758 = vmatmul.mubr.bf16.gmra.mxu0 %v723
      %v759 = vpop.f32.mrf.mxu0
      %v760 = vadd.f32 %v692, %v759
      %v761 = vpop.f32.mrf.mxu0
      %v762 = vpop.f32.mrf.mxu0
      %v763 = vadd.f32 %v695, %v762
      %v764 = vpop.f32.mrf.mxu0
      %765 = vdwg.mxu0
      %s766 = scalar_lea.vmem %s3, 16
      %v767 = vld [vmem:[%s766] sm:$0xf]
      %v768 = vld [vmem:[%s766 + $0x4] sm:$0xf]
      %v771 = vunpack.c.l.b16 %v767
      %v772 = vunpack.c.l.b16 %v768
      %v773 = vpack.c.b16 %v772, %v771
      %v775 = vsel %vm513, %v773, 0
      %777 = vmatprep.subr.bf16.mxu0 0
      %778 = vmatpush1.bf16.msra.mxu0 0
      %779 = vmatprep.subr.bf16.mxu0 0
      %780 = vmatpush1.bf16.msra.mxu0 0
      %781 = vmatprep.subr.bf16.mxu0 0
      %782 = vmatpush1.bf16.msra.mxu0 0
      %783 = vmatprep.subr.bf16.mxu0 0
      %784 = vmatpush1.bf16.msra.mxu0 0
      %785 = vmatprep.subr.bf16.mxu0 0
      %786 = vmatpush1.bf16.msra.mxu0 0
      %787 = vmatprep.subr.bf16.mxu0 0
      %788 = vmatpush1.bf16.msra.mxu0 0
      %789 = vmatprep.subr.bf16.mxu0 0
      %790 = vmatpush1.bf16.msra.mxu0 0
      %791 = vmatprep.subr.bf16.mxu0 0
      %792 = vmatpush1.bf16.msra.mxu0 %v505
      %793 = vmatprep.subr.bf16.mxu0 0
      %794 = vmatpush2.bf16.msra.mxu0 0
      %795 = vmatprep.subr.bf16.mxu0 0
      %796 = vmatpush2.bf16.msra.mxu0 0
      %797 = vmatprep.subr.bf16.mxu0 0
      %798 = vmatpush2.bf16.msra.mxu0 0
      %799 = vmatprep.subr.bf16.mxu0 0
      %800 = vmatpush2.bf16.msra.mxu0 0
      %801 = vmatprep.subr.bf16.mxu0 0
      %802 = vmatpush2.bf16.msra.mxu0 0
      %803 = vmatprep.subr.bf16.mxu0 0
      %804 = vmatpush2.bf16.msra.mxu0 0
      %805 = vmatprep.subr.bf16.mxu0 0
      %806 = vmatpush2.bf16.msra.mxu0 0
      %807 = vmatprep.subr.bf16.mxu0 0
      %808 = vmatpush2.bf16.msra.mxu0 0
      %809 = vmatprep.mubr.bf16.mxu0 0
      %810 = vmatmul.mubr.bf16.gmra.mxu0 %v775
      %v811 = vpop.f32.mrf.mxu0
      %v812 = vadd.f32 0.0, %v811
      %v813 = vpop.f32.mrf.mxu0
      %v814 = vpop.f32.mrf.mxu0
      %v815 = vadd.f32 0.0, %v814
      %v816 = vpop.f32.mrf.mxu0
      %817 = vdwg.mxu0
      %v818 = vpack.c.bf16 %v815, %v812
      %s819 = scalar_lea.vmem %s4, 64
      %v820 = vld [vmem:[%s819] sm:$0xf]
      %v821 = vld [vmem:[%s819 + $0x4] sm:$0xf]
      %v822 = vld [vmem:[%s819 + $0x8] sm:$0xf]
      %v823 = vld [vmem:[%s819 + $0xc] sm:$0xf]
      %v824 = vld [vmem:[%s819 + $0x10] sm:$0xf]
      %v825 = vld [vmem:[%s819 + $0x14] sm:$0xf]
      %v826 = vld [vmem:[%s819 + $0x18] sm:$0xf]
      %v827 = vld [vmem:[%s819 + $0x1c] sm:$0xf]
      %v836 = vunpack.c.l.b16 %v820
      %v837 = vunpack.c.l.b16 %v821
      %v838 = vunpack.c.l.b16 %v822
      %v839 = vunpack.c.l.b16 %v823
      %v840 = vunpack.c.l.b16 %v824
      %v841 = vunpack.c.l.b16 %v825
      %v842 = vunpack.c.l.b16 %v826
      %v843 = vunpack.c.l.b16 %v827
      %v844 = vpack.c.b16 %v837, %v836
      %v845 = vpack.c.b16 %v839, %v838
      %v846 = vpack.c.b16 %v841, %v840
      %v847 = vpack.c.b16 %v843, %v842
      %v853 = vsel %vm653, %v818, 0
      %855 = vmatprep.subr.bf16.mxu0 0
      %856 = vmatpush1.bf16.msra.mxu0 0
      %857 = vmatprep.subr.bf16.mxu0 0
      %858 = vmatpush1.bf16.msra.mxu0 0
      %859 = vmatprep.subr.bf16.mxu0 0
      %860 = vmatpush1.bf16.msra.mxu0 0
      %861 = vmatprep.subr.bf16.mxu0 0
      %862 = vmatpush1.bf16.msra.mxu0 0
      %863 = vmatprep.subr.bf16.mxu0 0
      %864 = vmatpush1.bf16.msra.mxu0 %v847
      %865 = vmatprep.subr.bf16.mxu0 0
      %866 = vmatpush1.bf16.msra.mxu0 %v846
      %867 = vmatprep.subr.bf16.mxu0 0
      %868 = vmatpush1.bf16.msra.mxu0 %v845
      %869 = vmatprep.subr.bf16.mxu0 0
      %870 = vmatpush1.bf16.msra.mxu0 %v844
      %871 = vmatprep.subr.bf16.mxu0 0
      %872 = vmatpush2.bf16.msra.mxu0 0
      %873 = vmatprep.subr.bf16.mxu0 0
      %874 = vmatpush2.bf16.msra.mxu0 0
      %875 = vmatprep.subr.bf16.mxu0 0
      %876 = vmatpush2.bf16.msra.mxu0 0
      %877 = vmatprep.subr.bf16.mxu0 0
      %878 = vmatpush2.bf16.msra.mxu0 0
      %879 = vmatprep.subr.bf16.mxu0 0
      %880 = vmatpush2.bf16.msra.mxu0 0
      %881 = vmatprep.subr.bf16.mxu0 0
      %882 = vmatpush2.bf16.msra.mxu0 0
      %883 = vmatprep.subr.bf16.mxu0 0
      %884 = vmatpush2.bf16.msra.mxu0 0
      %885 = vmatprep.subr.bf16.mxu0 0
      %886 = vmatpush2.bf16.msra.mxu0 0
      %887 = vmatprep.mubr.bf16.mxu0 0
      %888 = vmatmul.mubr.bf16.gmra.mxu0 %v853
      %v889 = vpop.f32.mrf.mxu0
      %v890 = vadd.f32 0.0, %v889
      %v891 = vpop.f32.mrf.mxu0
      %v892 = vpop.f32.mrf.mxu0
      %v893 = vadd.f32 0.0, %v892
      %v894 = vpop.f32.mrf.mxu0
      %895 = vdwg.mxu0
      %v896 = vadd.f32 %v760, %v890
      %v897 = vadd.f32 %v763, %v893
      %s898 = scalar_lea.vmem %s3, 24
      %v899 = vld [vmem:[%s898] sm:$0xf]
      %v900 = vld [vmem:[%s898 + $0x4] sm:$0xf]
      %v903 = vunpack.c.l.b16 %v899
      %v904 = vunpack.c.l.b16 %v900
      %v905 = vpack.c.b16 %v904, %v903
      %v907 = vsel %vm513, %v905, 0
      %909 = vmatprep.subr.bf16.mxu0 0
      %910 = vmatpush1.bf16.msra.mxu0 0
      %911 = vmatprep.subr.bf16.mxu0 0
      %912 = vmatpush1.bf16.msra.mxu0 0
      %913 = vmatprep.subr.bf16.mxu0 0
      %914 = vmatpush1.bf16.msra.mxu0 0
      %915 = vmatprep.subr.bf16.mxu0 0
      %916 = vmatpush1.bf16.msra.mxu0 0
      %917 = vmatprep.subr.bf16.mxu0 0
      %918 = vmatpush1.bf16.msra.mxu0 0
      %919 = vmatprep.subr.bf16.mxu0 0
      %920 = vmatpush1.bf16.msra.mxu0 0
      %921 = vmatprep.subr.bf16.mxu0 0
      %922 = vmatpush1.bf16.msra.mxu0 0
      %923 = vmatprep.subr.bf16.mxu0 0
      %924 = vmatpush1.bf16.msra.mxu0 %v505
      %925 = vmatprep.subr.bf16.mxu0 0
      %926 = vmatpush2.bf16.msra.mxu0 0
      %927 = vmatprep.subr.bf16.mxu0 0
      %928 = vmatpush2.bf16.msra.mxu0 0
      %929 = vmatprep.subr.bf16.mxu0 0
      %930 = vmatpush2.bf16.msra.mxu0 0
      %931 = vmatprep.subr.bf16.mxu0 0
      %932 = vmatpush2.bf16.msra.mxu0 0
      %933 = vmatprep.subr.bf16.mxu0 0
      %934 = vmatpush2.bf16.msra.mxu0 0
      %935 = vmatprep.subr.bf16.mxu0 0
      %936 = vmatpush2.bf16.msra.mxu0 0
      %937 = vmatprep.subr.bf16.mxu0 0
      %938 = vmatpush2.bf16.msra.mxu0 0
      %939 = vmatprep.subr.bf16.mxu0 0
      %940 = vmatpush2.bf16.msra.mxu0 0
      %941 = vmatprep.mubr.bf16.mxu0 0
      %942 = vmatmul.mubr.bf16.gmra.mxu0 %v907
      %v943 = vpop.f32.mrf.mxu0
      %v944 = vadd.f32 0.0, %v943
      %v945 = vpop.f32.mrf.mxu0
      %v946 = vpop.f32.mrf.mxu0
      %v947 = vadd.f32 0.0, %v946
      %v948 = vpop.f32.mrf.mxu0
      %949 = vdwg.mxu0
      %v950 = vpack.c.bf16 %v947, %v944
      %s951 = scalar_lea.vmem %s4, 96
      %v952 = vld [vmem:[%s951] sm:$0xf]
      %v953 = vld [vmem:[%s951 + $0x4] sm:$0xf]
      %v954 = vld [vmem:[%s951 + $0x8] sm:$0xf]
      %v955 = vld [vmem:[%s951 + $0xc] sm:$0xf]
      %v956 = vld [vmem:[%s951 + $0x10] sm:$0xf]
      %v957 = vld [vmem:[%s951 + $0x14] sm:$0xf]
      %v958 = vld [vmem:[%s951 + $0x18] sm:$0xf]
      %v959 = vld [vmem:[%s951 + $0x1c] sm:$0xf]
      %v968 = vunpack.c.l.b16 %v952
      %v969 = vunpack.c.l.b16 %v953
      %v970 = vunpack.c.l.b16 %v954
      %v971 = vunpack.c.l.b16 %v955
      %v972 = vunpack.c.l.b16 %v956
      %v973 = vunpack.c.l.b16 %v957
      %v974 = vunpack.c.l.b16 %v958
      %v975 = vunpack.c.l.b16 %v959
      %v976 = vpack.c.b16 %v969, %v968
      %v977 = vpack.c.b16 %v971, %v970
      %v978 = vpack.c.b16 %v973, %v972
      %v979 = vpack.c.b16 %v975, %v974
      %v985 = vsel %vm653, %v950, 0
      %987 = vmatprep.subr.bf16.mxu0 0
      %988 = vmatpush1.bf16.msra.mxu0 0
      %989 = vmatprep.subr.bf16.mxu0 0
      %990 = vmatpush1.bf16.msra.mxu0 0
      %991 = vmatprep.subr.bf16.mxu0 0
      %992 = vmatpush1.bf16.msra.mxu0 0
      %993 = vmatprep.subr.bf16.mxu0 0
      %994 = vmatpush1.bf16.msra.mxu0 0
      %995 = vmatprep.subr.bf16.mxu0 0
      %996 = vmatpush1.bf16.msra.mxu0 %v979
      %997 = vmatprep.subr.bf16.mxu0 0
      %998 = vmatpush1.bf16.msra.mxu0 %v978
      %999 = vmatprep.subr.bf16.mxu0 0
      %1000 = vmatpush1.bf16.msra.mxu0 %v977
      %1001 = vmatprep.subr.bf16.mxu0 0
      %1002 = vmatpush1.bf16.msra.mxu0 %v976
      %1003 = vmatprep.subr.bf16.mxu0 0
      %1004 = vmatpush2.bf16.msra.mxu0 0
      %1005 = vmatprep.subr.bf16.mxu0 0
      %1006 = vmatpush2.bf16.msra.mxu0 0
      %1007 = vmatprep.subr.bf16.mxu0 0
      %1008 = vmatpush2.bf16.msra.mxu0 0
      %1009 = vmatprep.subr.bf16.mxu0 0
      %1010 = vmatpush2.bf16.msra.mxu0 0
      %1011 = vmatprep.subr.bf16.mxu0 0
      %1012 = vmatpush2.bf16.msra.mxu0 0
      %1013 = vmatprep.subr.bf16.mxu0 0
      %1014 = vmatpush2.bf16.msra.mxu0 0
      %1015 = vmatprep.subr.bf16.mxu0 0
      %1016 = vmatpush2.bf16.msra.mxu0 0
      %1017 = vmatprep.subr.bf16.mxu0 0
      %1018 = vmatpush2.bf16.msra.mxu0 0
      %1019 = vmatprep.mubr.bf16.mxu0 0
      %1020 = vmatmul.mubr.bf16.gmra.mxu0 %v985
      %v1021 = vpop.f32.mrf.mxu0
      %v1022 = vadd.f32 0.0, %v1021
      %v1023 = vpop.f32.mrf.mxu0
      %v1024 = vpop.f32.mrf.mxu0
      %v1025 = vadd.f32 0.0, %v1024
      %v1026 = vpop.f32.mrf.mxu0
      %1027 = vdwg.mxu0
      %v1028 = vadd.f32 %v896, %v1022
      %v1029 = vadd.f32 %v897, %v1025
      %s1030 = scalar_lea.vmem %s3, 32
      %v1031 = vld [vmem:[%s1030] sm:$0xf]
      %v1032 = vld [vmem:[%s1030 + $0x4] sm:$0xf]
      %v1035 = vunpack.c.l.b16 %v1031
      %v1036 = vunpack.c.l.b16 %v1032
      %v1037 = vpack.c.b16 %v1036, %v1035
      %v1039 = vsel %vm513, %v1037, 0
      %1041 = vmatprep.subr.bf16.mxu0 0
      %1042 = vmatpush1.bf16.msra.mxu0 0
      %1043 = vmatprep.subr.bf16.mxu0 0
      %1044 = vmatpush1.bf16.msra.mxu0 0
      %1045 = vmatprep.subr.bf16.mxu0 0
      %1046 = vmatpush1.bf16.msra.mxu0 0
      %1047 = vmatprep.subr.bf16.mxu0 0
      %1048 = vmatpush1.bf16.msra.mxu0 0
      %1049 = vmatprep.subr.bf16.mxu0 0
      %1050 = vmatpush1.bf16.msra.mxu0 0
      %1051 = vmatprep.subr.bf16.mxu0 0
      %1052 = vmatpush1.bf16.msra.mxu0 0
      %1053 = vmatprep.subr.bf16.mxu0 0
      %1054 = vmatpush1.bf16.msra.mxu0 0
      %1055 = vmatprep.subr.bf16.mxu0 0
      %1056 = vmatpush1.bf16.msra.mxu0 %v505
      %1057 = vmatprep.subr.bf16.mxu0 0
      %1058 = vmatpush2.bf16.msra.mxu0 0
      %1059 = vmatprep.subr.bf16.mxu0 0
      %1060 = vmatpush2.bf16.msra.mxu0 0
      %1061 = vmatprep.subr.bf16.mxu0 0
      %1062 = vmatpush2.bf16.msra.mxu0 0
      %1063 = vmatprep.subr.bf16.mxu0 0
      %1064 = vmatpush2.bf16.msra.mxu0 0
      %1065 = vmatprep.subr.bf16.mxu0 0
      %1066 = vmatpush2.bf16.msra.mxu0 0
      %1067 = vmatprep.subr.bf16.mxu0 0
      %1068 = vmatpush2.bf16.msra.mxu0 0
      %1069 = vmatprep.subr.bf16.mxu0 0
      %1070 = vmatpush2.bf16.msra.mxu0 0
      %1071 = vmatprep.subr.bf16.mxu0 0
      %1072 = vmatpush2.bf16.msra.mxu0 0
      %1073 = vmatprep.mubr.bf16.mxu0 0
      %1074 = vmatmul.mubr.bf16.gmra.mxu0 %v1039
      %v1075 = vpop.f32.mrf.mxu0
      %v1076 = vadd.f32 0.0, %v1075
      %v1077 = vpop.f32.mrf.mxu0
      %v1078 = vpop.f32.mrf.mxu0
      %v1079 = vadd.f32 0.0, %v1078
      %v1080 = vpop.f32.mrf.mxu0
      %1081 = vdwg.mxu0
      %v1082 = vpack.c.bf16 %v1079, %v1076
      %s1083 = scalar_lea.vmem %s4, 128
      %v1084 = vld [vmem:[%s1083] sm:$0xf]
      %v1085 = vld [vmem:[%s1083 + $0x4] sm:$0xf]
      %v1086 = vld [vmem:[%s1083 + $0x8] sm:$0xf]
      %v1087 = vld [vmem:[%s1083 + $0xc] sm:$0xf]
      %v1088 = vld [vmem:[%s1083 + $0x10] sm:$0xf]
      %v1089 = vld [vmem:[%s1083 + $0x14] sm:$0xf]
      %v1090 = vld [vmem:[%s1083 + $0x18] sm:$0xf]
      %v1091 = vld [vmem:[%s1083 + $0x1c] sm:$0xf]
      %v1100 = vunpack.c.l.b16 %v1084
      %v1101 = vunpack.c.l.b16 %v1085
      %v1102 = vunpack.c.l.b16 %v1086
      %v1103 = vunpack.c.l.b16 %v1087
      %v1104 = vunpack.c.l.b16 %v1088
      %v1105 = vunpack.c.l.b16 %v1089
      %v1106 = vunpack.c.l.b16 %v1090
      %v1107 = vunpack.c.l.b16 %v1091
      %v1108 = vpack.c.b16 %v1101, %v1100
      %v1109 = vpack.c.b16 %v1103, %v1102
      %v1110 = vpack.c.b16 %v1105, %v1104
      %v1111 = vpack.c.b16 %v1107, %v1106
      %v1117 = vsel %vm653, %v1082, 0
      %1119 = vmatprep.subr.bf16.mxu0 0
      %1120 = vmatpush1.bf16.msra.mxu0 0
      %1121 = vmatprep.subr.bf16.mxu0 0
      %1122 = vmatpush1.bf16.msra.mxu0 0
      %1123 = vmatprep.subr.bf16.mxu0 0
      %1124 = vmatpush1.bf16.msra.mxu0 0
      %1125 = vmatprep.subr.bf16.mxu0 0
      %1126 = vmatpush1.bf16.msra.mxu0 0
      %1127 = vmatprep.subr.bf16.mxu0 0
      %1128 = vmatpush1.bf16.msra.mxu0 %v1111
      %1129 = vmatprep.subr.bf16.mxu0 0
      %1130 = vmatpush1.bf16.msra.mxu0 %v1110
      %1131 = vmatprep.subr.bf16.mxu0 0
      %1132 = vmatpush1.bf16.msra.mxu0 %v1109
      %1133 = vmatprep.subr.bf16.mxu0 0
      %1134 = vmatpush1.bf16.msra.mxu0 %v1108
      %1135 = vmatprep.subr.bf16.mxu0 0
      %1136 = vmatpush2.bf16.msra.mxu0 0
      %1137 = vmatprep.subr.bf16.mxu0 0
      %1138 = vmatpush2.bf16.msra.mxu0 0
      %1139 = vmatprep.subr.bf16.mxu0 0
      %1140 = vmatpush2.bf16.msra.mxu0 0
      %1141 = vmatprep.subr.bf16.mxu0 0
      %1142 = vmatpush2.bf16.msra.mxu0 0
      %1143 = vmatprep.subr.bf16.mxu0 0
      %1144 = vmatpush2.bf16.msra.mxu0 0
      %1145 = vmatprep.subr.bf16.mxu0 0
      %1146 = vmatpush2.bf16.msra.mxu0 0
      %1147 = vmatprep.subr.bf16.mxu0 0
      %1148 = vmatpush2.bf16.msra.mxu0 0
      %1149 = vmatprep.subr.bf16.mxu0 0
      %1150 = vmatpush2.bf16.msra.mxu0 0
      %1151 = vmatprep.mubr.bf16.mxu0 0
      %1152 = vmatmul.mubr.bf16.gmra.mxu0 %v1117
      %v1153 = vpop.f32.mrf.mxu0
      %v1154 = vadd.f32 0.0, %v1153
      %v1155 = vpop.f32.mrf.mxu0
      %v1156 = vpop.f32.mrf.mxu0
      %v1157 = vadd.f32 0.0, %v1156
      %v1158 = vpop.f32.mrf.mxu0
      %1159 = vdwg.mxu0
      %v1160 = vadd.f32 %v1028, %v1154
      %v1161 = vadd.f32 %v1029, %v1157
      %s1162 = scalar_lea.vmem %s3, 40
      %v1163 = vld [vmem:[%s1162] sm:$0xf]
      %v1164 = vld [vmem:[%s1162 + $0x4] sm:$0xf]
      %v1167 = vunpack.c.l.b16 %v1163
      %v1168 = vunpack.c.l.b16 %v1164
      %v1169 = vpack.c.b16 %v1168, %v1167
      %v1171 = vsel %vm513, %v1169, 0
      %1173 = vmatprep.subr.bf16.mxu0 0
      %1174 = vmatpush1.bf16.msra.mxu0 0
      %1175 = vmatprep.subr.bf16.mxu0 0
      %1176 = vmatpush1.bf16.msra.mxu0 0
      %1177 = vmatprep.subr.bf16.mxu0 0
      %1178 = vmatpush1.bf16.msra.mxu0 0
      %1179 = vmatprep.subr.bf16.mxu0 0
      %1180 = vmatpush1.bf16.msra.mxu0 0
      %1181 = vmatprep.subr.bf16.mxu0 0
      %1182 = vmatpush1.bf16.msra.mxu0 0
      %1183 = vmatprep.subr.bf16.mxu0 0
      %1184 = vmatpush1.bf16.msra.mxu0 0
      %1185 = vmatprep.subr.bf16.mxu0 0
      %1186 = vmatpush1.bf16.msra.mxu0 0
      %1187 = vmatprep.subr.bf16.mxu0 0
      %1188 = vmatpush1.bf16.msra.mxu0 %v505
      %1189 = vmatprep.subr.bf16.mxu0 0
      %1190 = vmatpush2.bf16.msra.mxu0 0
      %1191 = vmatprep.subr.bf16.mxu0 0
      %1192 = vmatpush2.bf16.msra.mxu0 0
      %1193 = vmatprep.subr.bf16.mxu0 0
      %1194 = vmatpush2.bf16.msra.mxu0 0
      %1195 = vmatprep.subr.bf16.mxu0 0
      %1196 = vmatpush2.bf16.msra.mxu0 0
      %1197 = vmatprep.subr.bf16.mxu0 0
      %1198 = vmatpush2.bf16.msra.mxu0 0
      %1199 = vmatprep.subr.bf16.mxu0 0
      %1200 = vmatpush2.bf16.msra.mxu0 0
      %1201 = vmatprep.subr.bf16.mxu0 0
      %1202 = vmatpush2.bf16.msra.mxu0 0
      %1203 = vmatprep.subr.bf16.mxu0 0
      %1204 = vmatpush2.bf16.msra.mxu0 0
      %1205 = vmatprep.mubr.bf16.mxu0 0
      %1206 = vmatmul.mubr.bf16.gmra.mxu0 %v1171
      %v1207 = vpop.f32.mrf.mxu0
      %v1208 = vadd.f32 0.0, %v1207
      %v1209 = vpop.f32.mrf.mxu0
      %v1210 = vpop.f32.mrf.mxu0
      %v1211 = vadd.f32 0.0, %v1210
      %v1212 = vpop.f32.mrf.mxu0
      %1213 = vdwg.mxu0
      %v1214 = vpack.c.bf16 %v1211, %v1208
      %s1215 = scalar_lea.vmem %s4, 160
      %v1216 = vld [vmem:[%s1215] sm:$0xf]
      %v1217 = vld [vmem:[%s1215 + $0x4] sm:$0xf]
      %v1218 = vld [vmem:[%s1215 + $0x8] sm:$0xf]
      %v1219 = vld [vmem:[%s1215 + $0xc] sm:$0xf]
      %v1220 = vld [vmem:[%s1215 + $0x10] sm:$0xf]
      %v1221 = vld [vmem:[%s1215 + $0x14] sm:$0xf]
      %v1222 = vld [vmem:[%s1215 + $0x18] sm:$0xf]
      %v1223 = vld [vmem:[%s1215 + $0x1c] sm:$0xf]
      %v1232 = vunpack.c.l.b16 %v1216
      %v1233 = vunpack.c.l.b16 %v1217
      %v1234 = vunpack.c.l.b16 %v1218
      %v1235 = vunpack.c.l.b16 %v1219
      %v1236 = vunpack.c.l.b16 %v1220
      %v1237 = vunpack.c.l.b16 %v1221
      %v1238 = vunpack.c.l.b16 %v1222
      %v1239 = vunpack.c.l.b16 %v1223
      %v1240 = vpack.c.b16 %v1233, %v1232
      %v1241 = vpack.c.b16 %v1235, %v1234
      %v1242 = vpack.c.b16 %v1237, %v1236
      %v1243 = vpack.c.b16 %v1239, %v1238
      %v1249 = vsel %vm653, %v1214, 0
      %1251 = vmatprep.subr.bf16.mxu0 0
      %1252 = vmatpush1.bf16.msra.mxu0 0
      %1253 = vmatprep.subr.bf16.mxu0 0
      %1254 = vmatpush1.bf16.msra.mxu0 0
      %1255 = vmatprep.subr.bf16.mxu0 0
      %1256 = vmatpush1.bf16.msra.mxu0 0
      %1257 = vmatprep.subr.bf16.mxu0 0
      %1258 = vmatpush1.bf16.msra.mxu0 0
      %1259 = vmatprep.subr.bf16.mxu0 0
      %1260 = vmatpush1.bf16.msra.mxu0 %v1243
      %1261 = vmatprep.subr.bf16.mxu0 0
      %1262 = vmatpush1.bf16.msra.mxu0 %v1242
      %1263 = vmatprep.subr.bf16.mxu0 0
      %1264 = vmatpush1.bf16.msra.mxu0 %v1241
      %1265 = vmatprep.subr.bf16.mxu0 0
      %1266 = vmatpush1.bf16.msra.mxu0 %v1240
      %1267 = vmatprep.subr.bf16.mxu0 0
      %1268 = vmatpush2.bf16.msra.mxu0 0
      %1269 = vmatprep.subr.bf16.mxu0 0
      %1270 = vmatpush2.bf16.msra.mxu0 0
      %1271 = vmatprep.subr.bf16.mxu0 0
      %1272 = vmatpush2.bf16.msra.mxu0 0
      %1273 = vmatprep.subr.bf16.mxu0 0
      %1274 = vmatpush2.bf16.msra.mxu0 0
      %1275 = vmatprep.subr.bf16.mxu0 0
      %1276 = vmatpush2.bf16.msra.mxu0 0
      %1277 = vmatprep.subr.bf16.mxu0 0
      %1278 = vmatpush2.bf16.msra.mxu0 0
      %1279 = vmatprep.subr.bf16.mxu0 0
      %1280 = vmatpush2.bf16.msra.mxu0 0
      %1281 = vmatprep.subr.bf16.mxu0 0
      %1282 = vmatpush2.bf16.msra.mxu0 0
      %1283 = vmatprep.mubr.bf16.mxu0 0
      %1284 = vmatmul.mubr.bf16.gmra.mxu0 %v1249
      %v1285 = vpop.f32.mrf.mxu0
      %v1286 = vadd.f32 0.0, %v1285
      %v1287 = vpop.f32.mrf.mxu0
      %v1288 = vpop.f32.mrf.mxu0
      %v1289 = vadd.f32 0.0, %v1288
      %v1290 = vpop.f32.mrf.mxu0
      %1291 = vdwg.mxu0
      %v1292 = vadd.f32 %v1160, %v1286
      %v1293 = vadd.f32 %v1161, %v1289
      %s1294 = scalar_lea.vmem %s3, 48
      %v1295 = vld [vmem:[%s1294] sm:$0xf]
      %v1296 = vld [vmem:[%s1294 + $0x4] sm:$0xf]
      %v1299 = vunpack.c.l.b16 %v1295
      %v1300 = vunpack.c.l.b16 %v1296
      %v1301 = vpack.c.b16 %v1300, %v1299
      %v1303 = vsel %vm513, %v1301, 0
      %1305 = vmatprep.subr.bf16.mxu0 0
      %1306 = vmatpush1.bf16.msra.mxu0 0
      %1307 = vmatprep.subr.bf16.mxu0 0
      %1308 = vmatpush1.bf16.msra.mxu0 0
      %1309 = vmatprep.subr.bf16.mxu0 0
      %1310 = vmatpush1.bf16.msra.mxu0 0
      %1311 = vmatprep.subr.bf16.mxu0 0
      %1312 = vmatpush1.bf16.msra.mxu0 0
      %1313 = vmatprep.subr.bf16.mxu0 0
      %1314 = vmatpush1.bf16.msra.mxu0 0
      %1315 = vmatprep.subr.bf16.mxu0 0
      %1316 = vmatpush1.bf16.msra.mxu0 0
      %1317 = vmatprep.subr.bf16.mxu0 0
      %1318 = vmatpush1.bf16.msra.mxu0 0
      %1319 = vmatprep.subr.bf16.mxu0 0
      %1320 = vmatpush1.bf16.msra.mxu0 %v505
      %1321 = vmatprep.subr.bf16.mxu0 0
      %1322 = vmatpush2.bf16.msra.mxu0 0
      %1323 = vmatprep.subr.bf16.mxu0 0
      %1324 = vmatpush2.bf16.msra.mxu0 0
      %1325 = vmatprep.subr.bf16.mxu0 0
      %1326 = vmatpush2.bf16.msra.mxu0 0
      %1327 = vmatprep.subr.bf16.mxu0 0
      %1328 = vmatpush2.bf16.msra.mxu0 0
      %1329 = vmatprep.subr.bf16.mxu0 0
      %1330 = vmatpush2.bf16.msra.mxu0 0
      %1331 = vmatprep.subr.bf16.mxu0 0
      %1332 = vmatpush2.bf16.msra.mxu0 0
      %1333 = vmatprep.subr.bf16.mxu0 0
      %1334 = vmatpush2.bf16.msra.mxu0 0
      %1335 = vmatprep.subr.bf16.mxu0 0
      %1336 = vmatpush2.bf16.msra.mxu0 0
      %1337 = vmatprep.mubr.bf16.mxu0 0
      %1338 = vmatmul.mubr.bf16.gmra.mxu0 %v1303
      %v1339 = vpop.f32.mrf.mxu0
      %v1340 = vadd.f32 0.0, %v1339
      %v1341 = vpop.f32.mrf.mxu0
      %v1342 = vpop.f32.mrf.mxu0
      %v1343 = vadd.f32 0.0, %v1342
      %v1344 = vpop.f32.mrf.mxu0
      %1345 = vdwg.mxu0
      %v1346 = vpack.c.bf16 %v1343, %v1340
      %s1347 = scalar_lea.vmem %s4, 192
      %v1348 = vld [vmem:[%s1347] sm:$0xf]
      %v1349 = vld [vmem:[%s1347 + $0x4] sm:$0xf]
      %v1350 = vld [vmem:[%s1347 + $0x8] sm:$0xf]
      %v1351 = vld [vmem:[%s1347 + $0xc] sm:$0xf]
      %v1352 = vld [vmem:[%s1347 + $0x10] sm:$0xf]
      %v1353 = vld [vmem:[%s1347 + $0x14] sm:$0xf]
      %v1354 = vld [vmem:[%s1347 + $0x18] sm:$0xf]
      %v1355 = vld [vmem:[%s1347 + $0x1c] sm:$0xf]
      %v1364 = vunpack.c.l.b16 %v1348
      %v1365 = vunpack.c.l.b16 %v1349
      %v1366 = vunpack.c.l.b16 %v1350
      %v1367 = vunpack.c.l.b16 %v1351
      %v1368 = vunpack.c.l.b16 %v1352
      %v1369 = vunpack.c.l.b16 %v1353
      %v1370 = vunpack.c.l.b16 %v1354
      %v1371 = vunpack.c.l.b16 %v1355
      %v1372 = vpack.c.b16 %v1365, %v1364
      %v1373 = vpack.c.b16 %v1367, %v1366
      %v1374 = vpack.c.b16 %v1369, %v1368
      %v1375 = vpack.c.b16 %v1371, %v1370
      %v1381 = vsel %vm653, %v1346, 0
      %1383 = vmatprep.subr.bf16.mxu0 0
      %1384 = vmatpush1.bf16.msra.mxu0 0
      %1385 = vmatprep.subr.bf16.mxu0 0
      %1386 = vmatpush1.bf16.msra.mxu0 0
      %1387 = vmatprep.subr.bf16.mxu0 0
      %1388 = vmatpush1.bf16.msra.mxu0 0
      %1389 = vmatprep.subr.bf16.mxu0 0
      %1390 = vmatpush1.bf16.msra.mxu0 0
      %1391 = vmatprep.subr.bf16.mxu0 0
      %1392 = vmatpush1.bf16.msra.mxu0 %v1375
      %1393 = vmatprep.subr.bf16.mxu0 0
      %1394 = vmatpush1.bf16.msra.mxu0 %v1374
      %1395 = vmatprep.subr.bf16.mxu0 0
      %1396 = vmatpush1.bf16.msra.mxu0 %v1373
      %1397 = vmatprep.subr.bf16.mxu0 0
      %1398 = vmatpush1.bf16.msra.mxu0 %v1372
      %1399 = vmatprep.subr.bf16.mxu0 0
      %1400 = vmatpush2.bf16.msra.mxu0 0
      %1401 = vmatprep.subr.bf16.mxu0 0
      %1402 = vmatpush2.bf16.msra.mxu0 0
      %1403 = vmatprep.subr.bf16.mxu0 0
      %1404 = vmatpush2.bf16.msra.mxu0 0
      %1405 = vmatprep.subr.bf16.mxu0 0
      %1406 = vmatpush2.bf16.msra.mxu0 0
      %1407 = vmatprep.subr.bf16.mxu0 0
      %1408 = vmatpush2.bf16.msra.mxu0 0
      %1409 = vmatprep.subr.bf16.mxu0 0
      %1410 = vmatpush2.bf16.msra.mxu0 0
      %1411 = vmatprep.subr.bf16.mxu0 0
      %1412 = vmatpush2.bf16.msra.mxu0 0
      %1413 = vmatprep.subr.bf16.mxu0 0
      %1414 = vmatpush2.bf16.msra.mxu0 0
      %1415 = vmatprep.mubr.bf16.mxu0 0
      %1416 = vmatmul.mubr.bf16.gmra.mxu0 %v1381
      %v1417 = vpop.f32.mrf.mxu0
      %v1418 = vadd.f32 0.0, %v1417
      %v1419 = vpop.f32.mrf.mxu0
      %v1420 = vpop.f32.mrf.mxu0
      %v1421 = vadd.f32 0.0, %v1420
      %v1422 = vpop.f32.mrf.mxu0
      %1423 = vdwg.mxu0
      %v1424 = vadd.f32 %v1292, %v1418
      %v1425 = vadd.f32 %v1293, %v1421
      %s1426 = scalar_lea.vmem %s3, 56
      %v1427 = vld [vmem:[%s1426] sm:$0xf]
      %v1428 = vld [vmem:[%s1426 + $0x4] sm:$0xf]
      %v1431 = vunpack.c.l.b16 %v1427
      %v1432 = vunpack.c.l.b16 %v1428
      %v1433 = vpack.c.b16 %v1432, %v1431
      %v1435 = vsel %vm513, %v1433, 0
      %1437 = vmatprep.subr.bf16.mxu0 0
      %1438 = vmatpush1.bf16.msra.mxu0 0
      %1439 = vmatprep.subr.bf16.mxu0 0
      %1440 = vmatpush1.bf16.msra.mxu0 0
      %1441 = vmatprep.subr.bf16.mxu0 0
      %1442 = vmatpush1.bf16.msra.mxu0 0
      %1443 = vmatprep.subr.bf16.mxu0 0
      %1444 = vmatpush1.bf16.msra.mxu0 0
      %1445 = vmatprep.subr.bf16.mxu0 0
      %1446 = vmatpush1.bf16.msra.mxu0 0
      %1447 = vmatprep.subr.bf16.mxu0 0
      %1448 = vmatpush1.bf16.msra.mxu0 0
      %1449 = vmatprep.subr.bf16.mxu0 0
      %1450 = vmatpush1.bf16.msra.mxu0 0
      %1451 = vmatprep.subr.bf16.mxu0 0
      %1452 = vmatpush1.bf16.msra.mxu0 %v505
      %1453 = vmatprep.subr.bf16.mxu0 0
      %1454 = vmatpush2.bf16.msra.mxu0 0
      %1455 = vmatprep.subr.bf16.mxu0 0
      %1456 = vmatpush2.bf16.msra.mxu0 0
      %1457 = vmatprep.subr.bf16.mxu0 0
      %1458 = vmatpush2.bf16.msra.mxu0 0
      %1459 = vmatprep.subr.bf16.mxu0 0
      %1460 = vmatpush2.bf16.msra.mxu0 0
      %1461 = vmatprep.subr.bf16.mxu0 0
      %1462 = vmatpush2.bf16.msra.mxu0 0
      %1463 = vmatprep.subr.bf16.mxu0 0
      %1464 = vmatpush2.bf16.msra.mxu0 0
      %1465 = vmatprep.subr.bf16.mxu0 0
      %1466 = vmatpush2.bf16.msra.mxu0 0
      %1467 = vmatprep.subr.bf16.mxu0 0
      %1468 = vmatpush2.bf16.msra.mxu0 0
      %1469 = vmatprep.mubr.bf16.mxu0 0
      %1470 = vmatmul.mubr.bf16.gmra.mxu0 %v1435
      %v1471 = vpop.f32.mrf.mxu0
      %v1472 = vadd.f32 0.0, %v1471
      %v1473 = vpop.f32.mrf.mxu0
      %v1474 = vpop.f32.mrf.mxu0
      %v1475 = vadd.f32 0.0, %v1474
      %v1476 = vpop.f32.mrf.mxu0
      %1477 = vdwg.mxu0
      %v1478 = vpack.c.bf16 %v1475, %v1472
      %s1479 = scalar_lea.vmem %s4, 224
      %v1480 = vld [vmem:[%s1479] sm:$0xf]
      %v1481 = vld [vmem:[%s1479 + $0x4] sm:$0xf]
      %v1482 = vld [vmem:[%s1479 + $0x8] sm:$0xf]
      %v1483 = vld [vmem:[%s1479 + $0xc] sm:$0xf]
      %v1484 = vld [vmem:[%s1479 + $0x10] sm:$0xf]
      %v1485 = vld [vmem:[%s1479 + $0x14] sm:$0xf]
      %v1486 = vld [vmem:[%s1479 + $0x18] sm:$0xf]
      %v1487 = vld [vmem:[%s1479 + $0x1c] sm:$0xf]
      %v1496 = vunpack.c.l.b16 %v1480
      %v1497 = vunpack.c.l.b16 %v1481
      %v1498 = vunpack.c.l.b16 %v1482
      %v1499 = vunpack.c.l.b16 %v1483
      %v1500 = vunpack.c.l.b16 %v1484
      %v1501 = vunpack.c.l.b16 %v1485
      %v1502 = vunpack.c.l.b16 %v1486
      %v1503 = vunpack.c.l.b16 %v1487
      %v1504 = vpack.c.b16 %v1497, %v1496
      %v1505 = vpack.c.b16 %v1499, %v1498
      %v1506 = vpack.c.b16 %v1501, %v1500
      %v1507 = vpack.c.b16 %v1503, %v1502
      %v1513 = vsel %vm653, %v1478, 0
      %1515 = vmatprep.subr.bf16.mxu0 0
      %1516 = vmatpush1.bf16.msra.mxu0 0
      %1517 = vmatprep.subr.bf16.mxu0 0
      %1518 = vmatpush1.bf16.msra.mxu0 0
      %1519 = vmatprep.subr.bf16.mxu0 0
      %1520 = vmatpush1.bf16.msra.mxu0 0
      %1521 = vmatprep.subr.bf16.mxu0 0
      %1522 = vmatpush1.bf16.msra.mxu0 0
      %1523 = vmatprep.subr.bf16.mxu0 0
      %1524 = vmatpush1.bf16.msra.mxu0 %v1507
      %1525 = vmatprep.subr.bf16.mxu0 0
      %1526 = vmatpush1.bf16.msra.mxu0 %v1506
      %1527 = vmatprep.subr.bf16.mxu0 0
      %1528 = vmatpush1.bf16.msra.mxu0 %v1505
      %1529 = vmatprep.subr.bf16.mxu0 0
      %1530 = vmatpush1.bf16.msra.mxu0 %v1504
      %1531 = vmatprep.subr.bf16.mxu0 0
      %1532 = vmatpush2.bf16.msra.mxu0 0
      %1533 = vmatprep.subr.bf16.mxu0 0
      %1534 = vmatpush2.bf16.msra.mxu0 0
      %1535 = vmatprep.subr.bf16.mxu0 0
      %1536 = vmatpush2.bf16.msra.mxu0 0
      %1537 = vmatprep.subr.bf16.mxu0 0
      %1538 = vmatpush2.bf16.msra.mxu0 0
      %1539 = vmatprep.subr.bf16.mxu0 0
      %1540 = vmatpush2.bf16.msra.mxu0 0
      %1541 = vmatprep.subr.bf16.mxu0 0
      %1542 = vmatpush2.bf16.msra.mxu0 0
      %1543 = vmatprep.subr.bf16.mxu0 0
      %1544 = vmatpush2.bf16.msra.mxu0 0
      %1545 = vmatprep.subr.bf16.mxu0 0
      %1546 = vmatpush2.bf16.msra.mxu0 0
      %1547 = vmatprep.mubr.bf16.mxu0 0
      %1548 = vmatmul.mubr.bf16.gmra.mxu0 %v1513
      %v1549 = vpop.f32.mrf.mxu0
      %v1550 = vadd.f32 0.0, %v1549
      %v1551 = vpop.f32.mrf.mxu0
      %v1552 = vpop.f32.mrf.mxu0
      %v1553 = vadd.f32 0.0, %v1552
      %v1554 = vpop.f32.mrf.mxu0
      %1555 = vdwg.mxu0
      %v1556 = vadd.f32 %v1424, %v1550
      %v1557 = vadd.f32 %v1425, %v1553
      %s1558 = scalar_lea.vmem %s3, 64
      %v1559 = vld [vmem:[%s1558] sm:$0xf]
      %v1560 = vld [vmem:[%s1558 + $0x4] sm:$0xf]
      %v1563 = vunpack.c.l.b16 %v1559
      %v1564 = vunpack.c.l.b16 %v1560
      %v1565 = vpack.c.b16 %v1564, %v1563
      %v1567 = vsel %vm513, %v1565, 0
      %1569 = vmatprep.subr.bf16.mxu0 0
      %1570 = vmatpush1.bf16.msra.mxu0 0
      %1571 = vmatprep.subr.bf16.mxu0 0
      %1572 = vmatpush1.bf16.msra.mxu0 0
      %1573 = vmatprep.subr.bf16.mxu0 0
      %1574 = vmatpush1.bf16.msra.mxu0 0
      %1575 = vmatprep.subr.bf16.mxu0 0
      %1576 = vmatpush1.bf16.msra.mxu0 0
      %1577 = vmatprep.subr.bf16.mxu0 0
      %1578 = vmatpush1.bf16.msra.mxu0 0
      %1579 = vmatprep.subr.bf16.mxu0 0
      %1580 = vmatpush1.bf16.msra.mxu0 0
      %1581 = vmatprep.subr.bf16.mxu0 0
      %1582 = vmatpush1.bf16.msra.mxu0 0
      %1583 = vmatprep.subr.bf16.mxu0 0
      %1584 = vmatpush1.bf16.msra.mxu0 %v505
      %1585 = vmatprep.subr.bf16.mxu0 0
      %1586 = vmatpush2.bf16.msra.mxu0 0
      %1587 = vmatprep.subr.bf16.mxu0 0
      %1588 = vmatpush2.bf16.msra.mxu0 0
      %1589 = vmatprep.subr.bf16.mxu0 0
      %1590 = vmatpush2.bf16.msra.mxu0 0
      %1591 = vmatprep.subr.bf16.mxu0 0
      %1592 = vmatpush2.bf16.msra.mxu0 0
      %1593 = vmatprep.subr.bf16.mxu0 0
      %1594 = vmatpush2.bf16.msra.mxu0 0
      %1595 = vmatprep.subr.bf16.mxu0 0
      %1596 = vmatpush2.bf16.msra.mxu0 0
      %1597 = vmatprep.subr.bf16.mxu0 0
      %1598 = vmatpush2.bf16.msra.mxu0 0
      %1599 = vmatprep.subr.bf16.mxu0 0
      %1600 = vmatpush2.bf16.msra.mxu0 0
      %1601 = vmatprep.mubr.bf16.mxu0 0
      %1602 = vmatmul.mubr.bf16.gmra.mxu0 %v1567
      %v1603 = vpop.f32.mrf.mxu0
      %v1604 = vadd.f32 0.0, %v1603
      %v1605 = vpop.f32.mrf.mxu0
      %v1606 = vpop.f32.mrf.mxu0
      %v1607 = vadd.f32 0.0, %v1606
      %v1608 = vpop.f32.mrf.mxu0
      %1609 = vdwg.mxu0
      %v1610 = vpack.c.bf16 %v1607, %v1604
      %s1611 = scalar_lea.vmem %s4, 256
      %v1612 = vld [vmem:[%s1611] sm:$0xf]
      %v1613 = vld [vmem:[%s1611 + $0x4] sm:$0xf]
      %v1614 = vld [vmem:[%s1611 + $0x8] sm:$0xf]
      %v1615 = vld [vmem:[%s1611 + $0xc] sm:$0xf]
      %v1616 = vld [vmem:[%s1611 + $0x10] sm:$0xf]
      %v1617 = vld [vmem:[%s1611 + $0x14] sm:$0xf]
      %v1618 = vld [vmem:[%s1611 + $0x18] sm:$0xf]
      %v1619 = vld [vmem:[%s1611 + $0x1c] sm:$0xf]
      %v1628 = vunpack.c.l.b16 %v1612
      %v1629 = vunpack.c.l.b16 %v1613
      %v1630 = vunpack.c.l.b16 %v1614
      %v1631 = vunpack.c.l.b16 %v1615
      %v1632 = vunpack.c.l.b16 %v1616
      %v1633 = vunpack.c.l.b16 %v1617
      %v1634 = vunpack.c.l.b16 %v1618
      %v1635 = vunpack.c.l.b16 %v1619
      %v1636 = vpack.c.b16 %v1629, %v1628
      %v1637 = vpack.c.b16 %v1631, %v1630
      %v1638 = vpack.c.b16 %v1633, %v1632
      %v1639 = vpack.c.b16 %v1635, %v1634
      %v1645 = vsel %vm653, %v1610, 0
      %1647 = vmatprep.subr.bf16.mxu0 0
      %1648 = vmatpush1.bf16.msra.mxu0 0
      %1649 = vmatprep.subr.bf16.mxu0 0
      %1650 = vmatpush1.bf16.msra.mxu0 0
      %1651 = vmatprep.subr.bf16.mxu0 0
      %1652 = vmatpush1.bf16.msra.mxu0 0
      %1653 = vmatprep.subr.bf16.mxu0 0
      %1654 = vmatpush1.bf16.msra.mxu0 0
      %1655 = vmatprep.subr.bf16.mxu0 0
      %1656 = vmatpush1.bf16.msra.mxu0 %v1639
      %1657 = vmatprep.subr.bf16.mxu0 0
      %1658 = vmatpush1.bf16.msra.mxu0 %v1638
      %1659 = vmatprep.subr.bf16.mxu0 0
      %1660 = vmatpush1.bf16.msra.mxu0 %v1637
      %1661 = vmatprep.subr.bf16.mxu0 0
      %1662 = vmatpush1.bf16.msra.mxu0 %v1636
      %1663 = vmatprep.subr.bf16.mxu0 0
      %1664 = vmatpush2.bf16.msra.mxu0 0
      %1665 = vmatprep.subr.bf16.mxu0 0
      %1666 = vmatpush2.bf16.msra.mxu0 0
      %1667 = vmatprep.subr.bf16.mxu0 0
      %1668 = vmatpush2.bf16.msra.mxu0 0
      %1669 = vmatprep.subr.bf16.mxu0 0
      %1670 = vmatpush2.bf16.msra.mxu0 0
      %1671 = vmatprep.subr.bf16.mxu0 0
      %1672 = vmatpush2.bf16.msra.mxu0 0
      %1673 = vmatprep.subr.bf16.mxu0 0
      %1674 = vmatpush2.bf16.msra.mxu0 0
      %1675 = vmatprep.subr.bf16.mxu0 0
      %1676 = vmatpush2.bf16.msra.mxu0 0
      %1677 = vmatprep.subr.bf16.mxu0 0
      %1678 = vmatpush2.bf16.msra.mxu0 0
      %1679 = vmatprep.mubr.bf16.mxu0 0
      %1680 = vmatmul.mubr.bf16.gmra.mxu0 %v1645
      %v1681 = vpop.f32.mrf.mxu0
      %v1682 = vadd.f32 0.0, %v1681
      %v1683 = vpop.f32.mrf.mxu0
      %v1684 = vpop.f32.mrf.mxu0
      %v1685 = vadd.f32 0.0, %v1684
      %v1686 = vpop.f32.mrf.mxu0
      %1687 = vdwg.mxu0
      %v1688 = vadd.f32 %v1556, %v1682
      %v1689 = vadd.f32 %v1557, %v1685
      %v1690 = vld [vmem:[%s5] sm:$0x1]
      %v1692 = vlaneseq
      %v1693 = vshrl.u32 %v1692, 7
      %v1694 = vsub.s32 0, %v1693
      %v1695 = vrot.slane %v1690, %v1694
      %v1697 = vadd.f32 %v1688, %v1695
      %v1698 = vadd.f32 %v1689, %v1695
      %v1699 = vmax.f32 %v1697, 0.0
      %v1700 = vmax.f32 %v1698, 0.0
      %v1701 = vpack.c.bf16 %v1700, %v1699
      %v1702 = vld [vmem:[%s6] sm:$0xff]
      %v1703 = vld [vmem:[%s6 + $0x8] sm:$0xff]
      %v1704 = vld [vmem:[%s6 + $0x10] sm:$0xff]
      %v1705 = vld [vmem:[%s6 + $0x18] sm:$0xff]
      %v1706 = vld [vmem:[%s6 + $0x20] sm:$0xff]
      %v1707 = vld [vmem:[%s6 + $0x28] sm:$0xff]
      %v1708 = vld [vmem:[%s6 + $0x30] sm:$0xff]
      %v1709 = vld [vmem:[%s6 + $0x38] sm:$0xff]
      %v1710 = vld [vmem:[%s7] sm:$0x3]
      %v1712 = vlaneseq
      %v1713 = vshrl.u32 %v1712, 7
      %v1714 = vsub.s32 0, %v1713
      %v1715 = vrot.slane %v1710, %v1714
      %v1716 = vlaneseq
      %v1717 = vshrl.u32 %v1716, 7
      %v1718 = vsub.s32 1, %v1717
      %v1719 = vrot.slane %v1710, %v1718
      %v1730 = vunpack.c.l.b16 %v1702
      %v1731 = vunpack.c.h.b16 %v1702
      %v1732 = vunpack.c.l.b16 %v1703
      %v1733 = vunpack.c.h.b16 %v1703
      %v1734 = vunpack.c.l.b16 %v1704
      %v1735 = vunpack.c.h.b16 %v1704
      %v1736 = vunpack.c.l.b16 %v1705
      %v1737 = vunpack.c.h.b16 %v1705
      %v1738 = vunpack.c.l.b16 %v1706
      %v1739 = vunpack.c.h.b16 %v1706
      %v1740 = vunpack.c.l.b16 %v1707
      %v1741 = vunpack.c.h.b16 %v1707
      %v1742 = vunpack.c.l.b16 %v1708
      %v1743 = vunpack.c.h.b16 %v1708
      %v1744 = vunpack.c.l.b16 %v1709
      %v1745 = vunpack.c.h.b16 %v1709
      %v1746 = vpack.c.b16 %v1732, %v1730
      %v1747 = vpack.c.b16 %v1733, %v1731
      %v1748 = vpack.c.b16 %v1736, %v1734
      %v1749 = vpack.c.b16 %v1737, %v1735
      %v1750 = vpack.c.b16 %v1740, %v1738
      %v1751 = vpack.c.b16 %v1741, %v1739
      %v1752 = vpack.c.b16 %v1744, %v1742
      %v1753 = vpack.c.b16 %v1745, %v1743
      %v1763 = vsel %vm653, %v1701, 0
      %1765 = vmatprep.subr.bf16.mxu0 0
      %1766 = vmatpush1.bf16.msra.mxu0 0
      %1767 = vmatprep.subr.bf16.mxu0 0
      %1768 = vmatpush1.bf16.msra.mxu0 0
      %1769 = vmatprep.subr.bf16.mxu0 0
      %1770 = vmatpush1.bf16.msra.mxu0 0
      %1771 = vmatprep.subr.bf16.mxu0 0
      %1772 = vmatpush1.bf16.msra.mxu0 0
      %1773 = vmatprep.subr.bf16.mxu0 %v1753
      %1774 = vmatpush1.bf16.msra.mxu0 %v1752
      %1775 = vmatprep.subr.bf16.mxu0 %v1751
      %1776 = vmatpush1.bf16.msra.mxu0 %v1750
      %1777 = vmatprep.subr.bf16.mxu0 %v1749
      %1778 = vmatpush1.bf16.msra.mxu0 %v1748
      %1779 = vmatprep.subr.bf16.mxu0 %v1747
      %1780 = vmatpush1.bf16.msra.mxu0 %v1746
      %1781 = vmatprep.subr.bf16.mxu0 0
      %1782 = vmatpush2.bf16.msra.mxu0 0
      %1783 = vmatprep.subr.bf16.mxu0 0
      %1784 = vmatpush2.bf16.msra.mxu0 0
      %1785 = vmatprep.subr.bf16.mxu0 0
      %1786 = vmatpush2.bf16.msra.mxu0 0
      %1787 = vmatprep.subr.bf16.mxu0 0
      %1788 = vmatpush2.bf16.msra.mxu0 0
      %1789 = vmatprep.subr.bf16.mxu0 0
      %1790 = vmatpush2.bf16.msra.mxu0 0
      %1791 = vmatprep.subr.bf16.mxu0 0
      %1792 = vmatpush2.bf16.msra.mxu0 0
      %1793 = vmatprep.subr.bf16.mxu0 0
      %1794 = vmatpush2.bf16.msra.mxu0 0
      %1795 = vmatprep.subr.bf16.mxu0 0
      %1796 = vmatpush2.bf16.msra.mxu0 0
      %1797 = vmatprep.mubr.bf16.mxu0 0
      %1798 = vmatmul.mubr.bf16.gmra.mxu0 %v1763
      %v1799 = vpop.f32.mrf.mxu0
      %v1800 = vadd.f32 %v1715, %v1799
      %v1801 = vpop.f32.mrf.mxu0
      %v1802 = vadd.f32 %v1719, %v1801
      %v1803 = vpop.f32.mrf.mxu0
      %v1804 = vadd.f32 %v1715, %v1803
      %v1805 = vpop.f32.mrf.mxu0
      %v1806 = vadd.f32 %v1719, %v1805
      %1807 = vdwg.mxu0
      %v1808 = vunpack.c.l.bf16 %v315
      %v1809 = vunpack.c.h.bf16 %v315
      %v1810 = vunpack.c.l.bf16 %v316
      %v1811 = vunpack.c.h.bf16 %v316
      %v1812 = vadd.f32 %v1800, %v1808
      %v1813 = vadd.f32 %v1802, %v1809
      %v1814 = vadd.f32 %v1804, %v1810
      %v1815 = vadd.f32 %v1806, %v1811
      %v1816 = vmax.f32 %v1812, 0.0
      %v1817 = vmax.f32 %v1813, 0.0
      %v1818 = vmax.f32 %v1814, 0.0
      %v1819 = vmax.f32 %v1815, 0.0
      %v1820 = vpack.c.bf16 %v1818, %v1816
      %v1821 = vpack.c.bf16 %v1819, %v1817
      %v1824 = vunpack.c.l.b16 %v1820
      %v1825 = vunpack.c.l.b16 %v1821
      %v1826 = vunpack.c.h.b16 %v1820
      %v1827 = vunpack.c.h.b16 %v1821
      %v1828 = vpack.c.b16 %v1825, %v1824
      %v1829 = vpack.c.b16 %v1827, %v1826
      %1832 = vst [vmem:[%s312] sm:$0xff] %v1828
      %1833 = vst [vmem:[%s312 + $0x8] sm:$0xff] %v1829
      %s1834 = smul.u32 2, %s19
      %p1835 = scmp.lt.s32.totalorder %s1834, 3
      %s1836 = scalar_select %p1835, %s1834, 3
      %s1837 = smul.addr %s1836, 2
      %s1838 = smul.addr %s1837, 4
      %s1839 = scalar_lea.vmem %s8, %s1838
      // Predicated region
      $region53: #{_lambda_.16} parent=51 // pred_check
        %p1840 = pneg %p210
      $region54: #{_lambda_.16} parent=51 // pred_check_branch
        %1842 = sbr.rel (%p1840) target = $region56
      $region55: #{_lambda_.16} parent=51 // pred_region
        %s1843 = smul.u32 2, %s19
      $region56: #{_lambda_.16} parent=51 // pred_fallthru
        _
    $region52: #{_lambda_.16} parent=5 // pred_fallthru
      _
    %p1844 = scmp.le.s32.totalorder 2, %s14
    // Predicated region
    $region57: #{_lambda_.16} parent=5 // pred_check
      %p1845 = pneg %p1844
    $region58: #{_lambda_.16} parent=5 // pred_check_branch
      %1847 = sbr.rel (%p1845) target = $region60
    $region59: #{_lambda_.16} parent=5 // pred_region
      %s1848 = ssub.s32 %s14, 2
      // Predicated region
      $region61: #{_lambda_.16} parent=59 // pred_check
        %p1849 = pneg %p216
      $region62: #{_lambda_.16} parent=59 // pred_check_branch
        %1851 = sbr.rel (%p1849) target = $region64
      $region63: #{_lambda_.16} parent=59 // pred_region
        %s1852 = smul.u32 2, %s20
        %p1853 = scmp.lt.s32.totalorder %s1852, 3
        %s1854 = scalar_select %p1853, %s1852, 3
        %s1855 = smul.addr %s1854, 2
        %s1856 = smul.addr %s1855, 4
        %s1857 = scalar_lea.vmem %s8, %s1856
      $region64: #{_lambda_.16} parent=59 // pred_fallthru
        _
    $region60: #{_lambda_.16} parent=5 // pred_fallthru
      _
  $region6: #{_lambda_.16} parent=0 // loop_footer
    %s18 = sadd.s32 1, %s14
  $region7: #{_lambda_.16} parent=0 // loop_footer_branch
    %13 = sbr.rel target = $region3
  $region8: #{_lambda_.16} parent=0 // loop_exit
    _

</llo_original>
